<compile_context>
chip_gen: v6e
topology: v6e:2x2x1
jax: 0.10.0
libtpu: 0.0.40
codegen_flags: <defaults>
</compile_context>

<pallas_src>
import jax
import jax.numpy as jnp
from jax.experimental import pallas as pl
from jax.experimental.pallas import tpu as pltpu


def _make_kernel(H, Wp, Cp):
    """Build the fused residual-block kernel for static H, padded pitch Wp, Cp."""
    HWp = H * Wp

    def kernel(xp_ref, w1_ref, w2_ref, mask_ref, o_ref, y1_ref, acc_ref):
        # xp_ref  : (1, (H+2)*Wp, Cp) f32  spatially+channel padded x, row pitch Wp
        # w1_ref  : (9, Cp, Cp)      bf16  conv1 weights, tap-major (kh*3+kw, Cin, Cout)
        # w2_ref  : (9, Cp, Cp)      bf16  conv2 weights
        # mask_ref: (HWp, 1)          f32  1.0 on real output columns (1..W), 0.0 on halo
        # o_ref   : (1, HWp, Cp)      f32  full-width output (+residual); cols 1..W valid
        # y1_ref  : ((H+2)*Wp, Cp)    f32  zero-haloed relu(conv1(x)) scratch (never HBM)
        # acc_ref : (HWp, Cp)         f32  accumulator

        def conv3x3(load_slab, w_ref):
            """Accumulate the 9 taps of a SAME 3x3 conv into acc_ref (peeled)."""
            for kh in range(3):
                slab = load_slab(kh)                               # aligned (HWp, Cp)
                taps = (pltpu.roll(slab, shift=1, axis=0),         # kw=0: src col w'-1
                        slab,                                      # kw=1: src col w'
                        pltpu.roll(slab, shift=HWp - 1, axis=0))   # kw=2: src col w'+1
                for kw in range(3):
                    d = jnp.dot(taps[kw].astype(jnp.bfloat16),
                                w_ref[kh * 3 + kw],
                                preferred_element_type=jnp.float32)
                    if kh == 0 and kw == 0:
                        acc_ref[...] = d          # peeled first tap: no zero-fill pass
                    else:
                        acc_ref[...] += d

        # Keep y1's top/bottom halo row-bands zero (interior fully overwritten
        # below; left/right halo columns handled by the column mask).
        zero_band = jnp.zeros((Wp, Cp), jnp.float32)
        y1_ref[0:Wp, :] = zero_band
        y1_ref[(H + 1) * Wp:(H + 2) * Wp, :] = zero_band

        # ---- conv1 (3x3 SAME) + ReLU -> zero-haloed y1 scratch ----
        conv3x3(lambda kh: xp_ref[0, kh * Wp:kh * Wp + HWp, :], w1_ref)
        y1_ref[Wp:Wp + HWp, :] = jnp.maximum(acc_ref[...], 0.0) * mask_ref[...]

        # ---- conv2 (3x3 SAME) on y1 + residual add ----
        conv3x3(lambda kh: y1_ref[kh * Wp:kh * Wp + HWp, :], w2_ref)
        o_ref[0] = (acc_ref[...] + xp_ref[0, Wp:Wp + HWp, :]).astype(o_ref.dtype)

    return kernel


def _prep_weight(w_oihw, C, Cp):
    """OIHW -> (kh*3+kw, Cin, Cout), zero-padded to (9, Cp, Cp), bf16 (MXU dtype)."""
    w = jnp.transpose(w_oihw, (2, 3, 1, 0)).reshape(9, C, C)
    w = jnp.pad(w, ((0, 0), (0, Cp - C), (0, Cp - C)))
    return w.astype(jnp.bfloat16)


def residual_block_forward(x_nchw, w1_oihw, w2_oihw, drop_rate=0.0):
    """Forward of ResidualBlock (PyTorch OIHW weights, bias=False, dropRate=0)."""
    N, C, H, W = x_nchw.shape
    Cp = ((C + 127) // 128) * 128          # lane-dense channel padding
    Wp = ((W + 2 + 7) // 8) * 8            # sublane-aligned padded row pitch (>= W+2)
    HWp = H * Wp

    x = jnp.transpose(x_nchw, (0, 2, 3, 1)).astype(jnp.float32)       # NHWC
    # SAME halo (1 top/bottom, 1 left) + right pad to pitch Wp + channel pad.
    xp = jnp.pad(x, ((0, 0), (1, 1), (1, Wp - W - 1), (0, Cp - C)))
    xp_flat = xp.reshape(N, (H + 2) * Wp, Cp)

    w1m = _prep_weight(w1_oihw, C, Cp)
    w2m = _prep_weight(w2_oihw, C, Cp)

    # 1.0 on real output columns (acc columns 1..W of each padded row), else 0.
    col = jnp.arange(HWp, dtype=jnp.int32) % Wp
    col_mask = ((col >= 1) & (col <= W)).astype(jnp.float32).reshape(HWp, 1)

    # vmem_limit sized from the actual working set (double-buffered blocks +
    # resident weights + scratch), with 2x headroom; floor at 32 MiB.
    xp_blk = (H + 2) * Wp * Cp * 4
    out_blk = HWp * Cp * 4
    w_bytes = 2 * 9 * Cp * Cp * 2
    scratch = (H + 2) * Wp * Cp * 4 + HWp * Cp * 4
    vmem_limit = int(min(100 * 1024 * 1024,
                         max(32 * 1024 * 1024,
                             2 * (2 * xp_blk + 2 * out_blk + 2 * w_bytes + scratch))))

    out_flat = pl.pallas_call(
        _make_kernel(H, Wp, Cp),
        out_shape=jax.ShapeDtypeStruct((N, HWp, Cp), jnp.float32),
        grid=(N,),
        in_specs=[
            pl.BlockSpec((1, (H + 2) * Wp, Cp), lambda n: (n, 0, 0)),  # padded x
            pl.BlockSpec((9, Cp, Cp), lambda n: (0, 0, 0)),            # w1 (resident)
            pl.BlockSpec((9, Cp, Cp), lambda n: (0, 0, 0)),            # w2 (resident)
            pl.BlockSpec((HWp, 1), lambda n: (0, 0)),                  # column mask
        ],
        out_specs=pl.BlockSpec((1, HWp, Cp), lambda n: (n, 0, 0)),
        scratch_shapes=[
            pltpu.VMEM(((H + 2) * Wp, Cp), jnp.float32),   # zero-haloed y1
            pltpu.VMEM((HWp, Cp), jnp.float32),            # f32 accumulator
        ],
        compiler_params=pltpu.CompilerParams(
            dimension_semantics=("parallel",),
            vmem_limit_bytes=vmem_limit),
    )(xp_flat, w1m, w2m, col_mask)

    out = out_flat.reshape(N, H, Wp, Cp)[:, :, 1:W + 1, :C]   # drop halo/pad
    # TODO(synk): drop_rate > 0 (training-mode double F.dropout) not implemented;
    # the module default dropRate=0.0 makes both dropout calls identity ops.
    return jnp.transpose(out, (0, 3, 1, 2))                   # back to NCHW


def _reference_forward(x, w1, w2):
    dn = jax.lax.conv_dimension_numbers(x.shape, w1.shape,
                                        ("NCHW", "OIHW", "NCHW"))
    y1 = jax.lax.conv_general_dilated(x, w1, (1, 1), "SAME",
                                      dimension_numbers=dn)
    y1 = jnp.maximum(y1, 0.0)
    y2 = jax.lax.conv_general_dilated(y1, w2, (1, 1), "SAME",
                                      dimension_numbers=dn)
    return x + y2


if __name__ == "__main__":
    N, C, H, W = 2, 4, 16, 16
    key = jax.random.PRNGKey(0)
    kx, k1, k2 = jax.random.split(key, 3)

    x = jax.random.normal(kx, (N, C, H, W), dtype=jnp.float32)
    # Deterministic He-style init for the two 3x3 conv weights (OIHW, bias=False)
    scale = (2.0 / (9 * C)) ** 0.5
    w1 = jax.random.normal(k1, (C, C, 3, 3), dtype=jnp.float32) * scale
    w2 = jax.random.normal(k2, (C, C, 3, 3), dtype=jnp.float32) * scale

    fwd = jax.jit(residual_block_forward)
    out = jax.block_until_ready(fwd(x, w1, w2))

    ref = jax.block_until_ready(_reference_forward(x, w1, w2))
    assert out.shape == (N, C, H, W), out.shape
    # Tolerance loosened for bf16 MXU operands (accumulation is still f32).
    max_err = float(jnp.max(jnp.abs(out - ref)))
    assert jnp.allclose(out, ref, atol=1e-1, rtol=1e-1), max_err

    print("KERNEL_OK")
</pallas_src>

<mosaic_0001>
module attributes {stable_mosaic.version = 11 : i64} {
  func.func @kernel(%arg0: i32, %arg1: memref<1x432x128xf32, #tpu.memory_space<vmem>>, %arg2: memref<9x128x128xbf16, #tpu.memory_space<vmem>>, %arg3: memref<9x128x128xbf16, #tpu.memory_space<vmem>>, %arg4: memref<384x1xf32, #tpu.memory_space<vmem>>, %arg5: memref<1x384x128xf32, #tpu.memory_space<vmem>>, %arg6: memref<432x128xf32, #tpu.memory_space<vmem>>, %arg7: memref<384x128xf32, #tpu.memory_space<vmem>>) attributes {dimension_semantics = [#tpu.dimension_semantics<parallel>], iteration_bounds = array<i64: 2>, scalar_prefetch = 0 : i64, scratch_operands = 2 : i64, tpu.core_type = #tpu.core_type<tc>, window_params = [{transform_indices = @transform_0, window_bounds = array<i64: 1, 432, 128>}, {pipeline_mode = #tpu.pipeline_mode<synchronous>, transform_indices = @transform_1, window_bounds = array<i64: 9, 128, 128>}, {pipeline_mode = #tpu.pipeline_mode<synchronous>, transform_indices = @transform_2, window_bounds = array<i64: 9, 128, 128>}, {pipeline_mode = #tpu.pipeline_mode<synchronous>, transform_indices = @transform_3, window_bounds = array<i64: 384, 1>}, {transform_indices = @transform_4, window_bounds = array<i64: 1, 384, 128>}]} {
    %cst = arith.constant 0.000000e+00 : f32
    %0 = vector.broadcast %cst : f32 to vector<24x128xf32>
    %c0 = arith.constant 0 : index
    %c0_0 = arith.constant 0 : index
    %1 = vector.load %arg6[%c0, %c0_0] : memref<432x128xf32, #tpu.memory_space<vmem>>, vector<24x128xf32>
    tpu.vector_store %arg6[%c0, %c0_0], %0 {strides = array<i32>} : memref<432x128xf32, #tpu.memory_space<vmem>>, vector<24x128xf32>,
    %c408 = arith.constant 408 : index
    %c0_1 = arith.constant 0 : index
    %2 = vector.load %arg6[%c408, %c0_1] : memref<432x128xf32, #tpu.memory_space<vmem>>, vector<24x128xf32>
    tpu.vector_store %arg6[%c408, %c0_1], %0 {strides = array<i32>} : memref<432x128xf32, #tpu.memory_space<vmem>>, vector<24x128xf32>,
    %c0_2 = arith.constant 0 : index
    %c0_3 = arith.constant 0 : index
    %c0_4 = arith.constant 0 : index
    %3 = vector.load %arg1[%c0_2, %c0_3, %c0_4] : memref<1x432x128xf32, #tpu.memory_space<vmem>>, vector<1x384x128xf32>
    %4 = vector.shape_cast %3 : vector<1x384x128xf32> to vector<384x128xf32>
    %c1_i32 = arith.constant 1 : i32
    %5 = tpu.dynamic_rotate %4 by %c1_i32 dim 0 : vector<384x128xf32>, i32 -> vector<384x128xf32>
    %c383_i32 = arith.constant 383 : i32
    %6 = tpu.dynamic_rotate %4 by %c383_i32 dim 0 : vector<384x128xf32>, i32 -> vector<384x128xf32>
    %7 = arith.truncf %5 : vector<384x128xf32> to vector<384x128xbf16>
    %c0_5 = arith.constant 0 : index
    %c0_6 = arith.constant 0 : index
    %c0_7 = arith.constant 0 : index
    %8 = vector.load %arg2[%c0_5, %c0_6, %c0_7] : memref<9x128x128xbf16, #tpu.memory_space<vmem>>, vector<1x128x128xbf16>
    %9 = vector.shape_cast %8 : vector<1x128x128xbf16> to vector<128x128xbf16>
    %cst_8 = arith.constant dense<0.000000e+00> : vector<384x128xf32>
    %10 = tpu.matmul %7, %9, %cst_8 {dimension_numbers = #tpu.dot_dimension_numbers<[1], [0], [0], [1], [0, 0, 1, 1], [], []>} : vector<384x128xbf16>, vector<128x128xbf16>, vector<384x128xf32> -> vector<384x128xf32>
    %c0_9 = arith.constant 0 : index
    %c0_10 = arith.constant 0 : index
    %11 = vector.load %arg7[%c0_9, %c0_10] : memref<384x128xf32, #tpu.memory_space<vmem>>, vector<384x128xf32>
    tpu.vector_store %arg7[%c0_9, %c0_10], %10 {strides = array<i32>} : memref<384x128xf32, #tpu.memory_space<vmem>>, vector<384x128xf32>,
    %12 = arith.truncf %4 : vector<384x128xf32> to vector<384x128xbf16>
    %c1 = arith.constant 1 : index
    %c0_11 = arith.constant 0 : index
    %c0_12 = arith.constant 0 : index
    %13 = vector.load %arg2[%c1, %c0_11, %c0_12] : memref<9x128x128xbf16, #tpu.memory_space<vmem>>, vector<1x128x128xbf16>
    %14 = vector.shape_cast %13 : vector<1x128x128xbf16> to vector<128x128xbf16>
    %cst_13 = arith.constant dense<0.000000e+00> : vector<384x128xf32>
    %15 = tpu.matmul %12, %14, %cst_13 {dimension_numbers = #tpu.dot_dimension_numbers<[1], [0], [0], [1], [0, 0, 1, 1], [], []>} : vector<384x128xbf16>, vector<128x128xbf16>, vector<384x128xf32> -> vector<384x128xf32>
    %c0_14 = arith.constant 0 : index
    %c0_15 = arith.constant 0 : index
    %16 = vector.load %arg7[%c0_14, %c0_15] : memref<384x128xf32, #tpu.memory_space<vmem>>, vector<384x128xf32>
    %17 = arith.addf %16, %15 : vector<384x128xf32>
    %c0_16 = arith.constant 0 : index
    %c0_17 = arith.constant 0 : index
    %18 = vector.load %arg7[%c0_16, %c0_17] : memref<384x128xf32, #tpu.memory_space<vmem>>, vector<384x128xf32>
    tpu.vector_store %arg7[%c0_16, %c0_17], %17 {strides = array<i32>} : memref<384x128xf32, #tpu.memory_space<vmem>>, vector<384x128xf32>,
    %19 = arith.truncf %6 : vector<384x128xf32> to vector<384x128xbf16>
    %c2 = arith.constant 2 : index
    %c0_18 = arith.constant 0 : index
    %c0_19 = arith.constant 0 : index
    %20 = vector.load %arg2[%c2, %c0_18, %c0_19] : memref<9x128x128xbf16, #tpu.memory_space<vmem>>, vector<1x128x128xbf16>
    %21 = vector.shape_cast %20 : vector<1x128x128xbf16> to vector<128x128xbf16>
    %cst_20 = arith.constant dense<0.000000e+00> : vector<384x128xf32>
    %22 = tpu.matmul %19, %21, %cst_20 {dimension_numbers = #tpu.dot_dimension_numbers<[1], [0], [0], [1], [0, 0, 1, 1], [], []>} : vector<384x128xbf16>, vector<128x128xbf16>, vector<384x128xf32> -> vector<384x128xf32>
    %c0_21 = arith.constant 0 : index
    %c0_22 = arith.constant 0 : index
    %23 = vector.load %arg7[%c0_21, %c0_22] : memref<384x128xf32, #tpu.memory_space<vmem>>, vector<384x128xf32>
    %24 = arith.addf %23, %22 : vector<384x128xf32>
    %c0_23 = arith.constant 0 : index
    %c0_24 = arith.constant 0 : index
    %25 = vector.load %arg7[%c0_23, %c0_24] : memref<384x128xf32, #tpu.memory_space<vmem>>, vector<384x128xf32>
    tpu.vector_store %arg7[%c0_23, %c0_24], %24 {strides = array<i32>} : memref<384x128xf32, #tpu.memory_space<vmem>>, vector<384x128xf32>,
    %c0_25 = arith.constant 0 : index
    %c24 = arith.constant 24 : index
    %c0_26 = arith.constant 0 : index
    %26 = vector.load %arg1[%c0_25, %c24, %c0_26] : memref<1x432x128xf32, #tpu.memory_space<vmem>>, vector<1x384x128xf32>
    %27 = vector.shape_cast %26 : vector<1x384x128xf32> to vector<384x128xf32>
    %c1_i32_27 = arith.constant 1 : i32
    %28 = tpu.dynamic_rotate %27 by %c1_i32_27 dim 0 : vector<384x128xf32>, i32 -> vector<384x128xf32>
    %c383_i32_28 = arith.constant 383 : i32
    %29 = tpu.dynamic_rotate %27 by %c383_i32_28 dim 0 : vector<384x128xf32>, i32 -> vector<384x128xf32>
    %30 = arith.truncf %28 : vector<384x128xf32> to vector<384x128xbf16>
    %c3 = arith.constant 3 : index
    %c0_29 = arith.constant 0 : index
    %c0_30 = arith.constant 0 : index
    %31 = vector.load %arg2[%c3, %c0_29, %c0_30] : memref<9x128x128xbf16, #tpu.memory_space<vmem>>, vector<1x128x128xbf16>
    %32 = vector.shape_cast %31 : vector<1x128x128xbf16> to vector<128x128xbf16>
    %cst_31 = arith.constant dense<0.000000e+00> : vector<384x128xf32>
    %33 = tpu.matmul %30, %32, %cst_31 {dimension_numbers = #tpu.dot_dimension_numbers<[1], [0], [0], [1], [0, 0, 1, 1], [], []>} : vector<384x128xbf16>, vector<128x128xbf16>, vector<384x128xf32> -> vector<384x128xf32>
    %c0_32 = arith.constant 0 : index
    %c0_33 = arith.constant 0 : index
    %34 = vector.load %arg7[%c0_32, %c0_33] : memref<384x128xf32, #tpu.memory_space<vmem>>, vector<384x128xf32>
    %35 = arith.addf %34, %33 : vector<384x128xf32>
    %c0_34 = arith.constant 0 : index
    %c0_35 = arith.constant 0 : index
    %36 = vector.load %arg7[%c0_34, %c0_35] : memref<384x128xf32, #tpu.memory_space<vmem>>, vector<384x128xf32>
    tpu.vector_store %arg7[%c0_34, %c0_35], %35 {strides = array<i32>} : memref<384x128xf32, #tpu.memory_space<vmem>>, vector<384x128xf32>,
    %37 = arith.truncf %27 : vector<384x128xf32> to vector<384x128xbf16>
    %c4 = arith.constant 4 : index
    %c0_36 = arith.constant 0 : index
    %c0_37 = arith.constant 0 : index
    %38 = vector.load %arg2[%c4, %c0_36, %c0_37] : memref<9x128x128xbf16, #tpu.memory_space<vmem>>, vector<1x128x128xbf16>
    %39 = vector.shape_cast %38 : vector<1x128x128xbf16> to vector<128x128xbf16>
    %cst_38 = arith.constant dense<0.000000e+00> : vector<384x128xf32>
    %40 = tpu.matmul %37, %39, %cst_38 {dimension_numbers = #tpu.dot_dimension_numbers<[1], [0], [0], [1], [0, 0, 1, 1], [], []>} : vector<384x128xbf16>, vector<128x128xbf16>, vector<384x128xf32> -> vector<384x128xf32>
    %c0_39 = arith.constant 0 : index
    %c0_40 = arith.constant 0 : index
    %41 = vector.load %arg7[%c0_39, %c0_40] : memref<384x128xf32, #tpu.memory_space<vmem>>, vector<384x128xf32>
    %42 = arith.addf %41, %40 : vector<384x128xf32>
    %c0_41 = arith.constant 0 : index
    %c0_42 = arith.constant 0 : index
    %43 = vector.load %arg7[%c0_41, %c0_42] : memref<384x128xf32, #tpu.memory_space<vmem>>, vector<384x128xf32>
    tpu.vector_store %arg7[%c0_41, %c0_42], %42 {strides = array<i32>} : memref<384x128xf32, #tpu.memory_space<vmem>>, vector<384x128xf32>,
    %44 = arith.truncf %29 : vector<384x128xf32> to vector<384x128xbf16>
    %c5 = arith.constant 5 : index
    %c0_43 = arith.constant 0 : index
    %c0_44 = arith.constant 0 : index
    %45 = vector.load %arg2[%c5, %c0_43, %c0_44] : memref<9x128x128xbf16, #tpu.memory_space<vmem>>, vector<1x128x128xbf16>
    %46 = vector.shape_cast %45 : vector<1x128x128xbf16> to vector<128x128xbf16>
    %cst_45 = arith.constant dense<0.000000e+00> : vector<384x128xf32>
    %47 = tpu.matmul %44, %46, %cst_45 {dimension_numbers = #tpu.dot_dimension_numbers<[1], [0], [0], [1], [0, 0, 1, 1], [], []>} : vector<384x128xbf16>, vector<128x128xbf16>, vector<384x128xf32> -> vector<384x128xf32>
    %c0_46 = arith.constant 0 : index
    %c0_47 = arith.constant 0 : index
    %48 = vector.load %arg7[%c0_46, %c0_47] : memref<384x128xf32, #tpu.memory_space<vmem>>, vector<384x128xf32>
    %49 = arith.addf %48, %47 : vector<384x128xf32>
    %c0_48 = arith.constant 0 : index
    %c0_49 = arith.constant 0 : index
    %50 = vector.load %arg7[%c0_48, %c0_49] : memref<384x128xf32, #tpu.memory_space<vmem>>, vector<384x128xf32>
    tpu.vector_store %arg7[%c0_48, %c0_49], %49 {strides = array<i32>} : memref<384x128xf32, #tpu.memory_space<vmem>>, vector<384x128xf32>,
    %c0_50 = arith.constant 0 : index
    %c48 = arith.constant 48 : index
    %c0_51 = arith.constant 0 : index
    %51 = vector.load %arg1[%c0_50, %c48, %c0_51] : memref<1x432x128xf32, #tpu.memory_space<vmem>>, vector<1x384x128xf32>
    %52 = vector.shape_cast %51 : vector<1x384x128xf32> to vector<384x128xf32>
    %c1_i32_52 = arith.constant 1 : i32
    %53 = tpu.dynamic_rotate %52 by %c1_i32_52 dim 0 : vector<384x128xf32>, i32 -> vector<384x128xf32>
    %c383_i32_53 = arith.constant 383 : i32
    %54 = tpu.dynamic_rotate %52 by %c383_i32_53 dim 0 : vector<384x128xf32>, i32 -> vector<384x128xf32>
    %55 = arith.truncf %53 : vector<384x128xf32> to vector<384x128xbf16>
    %c6 = arith.constant 6 : index
    %c0_54 = arith.constant 0 : index
    %c0_55 = arith.constant 0 : index
    %56 = vector.load %arg2[%c6, %c0_54, %c0_55] : memref<9x128x128xbf16, #tpu.memory_space<vmem>>, vector<1x128x128xbf16>
    %57 = vector.shape_cast %56 : vector<1x128x128xbf16> to vector<128x128xbf16>
    %cst_56 = arith.constant dense<0.000000e+00> : vector<384x128xf32>
    %58 = tpu.matmul %55, %57, %cst_56 {dimension_numbers = #tpu.dot_dimension_numbers<[1], [0], [0], [1], [0, 0, 1, 1], [], []>} : vector<384x128xbf16>, vector<128x128xbf16>, vector<384x128xf32> -> vector<384x128xf32>
    %c0_57 = arith.constant 0 : index
    %c0_58 = arith.constant 0 : index
    %59 = vector.load %arg7[%c0_57, %c0_58] : memref<384x128xf32, #tpu.memory_space<vmem>>, vector<384x128xf32>
    %60 = arith.addf %59, %58 : vector<384x128xf32>
    %c0_59 = arith.constant 0 : index
    %c0_60 = arith.constant 0 : index
    %61 = vector.load %arg7[%c0_59, %c0_60] : memref<384x128xf32, #tpu.memory_space<vmem>>, vector<384x128xf32>
    tpu.vector_store %arg7[%c0_59, %c0_60], %60 {strides = array<i32>} : memref<384x128xf32, #tpu.memory_space<vmem>>, vector<384x128xf32>,
    %62 = arith.truncf %52 : vector<384x128xf32> to vector<384x128xbf16>
    %c7 = arith.constant 7 : index
    %c0_61 = arith.constant 0 : index
    %c0_62 = arith.constant 0 : index
    %63 = vector.load %arg2[%c7, %c0_61, %c0_62] : memref<9x128x128xbf16, #tpu.memory_space<vmem>>, vector<1x128x128xbf16>
    %64 = vector.shape_cast %63 : vector<1x128x128xbf16> to vector<128x128xbf16>
    %cst_63 = arith.constant dense<0.000000e+00> : vector<384x128xf32>
    %65 = tpu.matmul %62, %64, %cst_63 {dimension_numbers = #tpu.dot_dimension_numbers<[1], [0], [0], [1], [0, 0, 1, 1], [], []>} : vector<384x128xbf16>, vector<128x128xbf16>, vector<384x128xf32> -> vector<384x128xf32>
    %c0_64 = arith.constant 0 : index
    %c0_65 = arith.constant 0 : index
    %66 = vector.load %arg7[%c0_64, %c0_65] : memref<384x128xf32, #tpu.memory_space<vmem>>, vector<384x128xf32>
    %67 = arith.addf %66, %65 : vector<384x128xf32>
    %c0_66 = arith.constant 0 : index
    %c0_67 = arith.constant 0 : index
    %68 = vector.load %arg7[%c0_66, %c0_67] : memref<384x128xf32, #tpu.memory_space<vmem>>, vector<384x128xf32>
    tpu.vector_store %arg7[%c0_66, %c0_67], %67 {strides = array<i32>} : memref<384x128xf32, #tpu.memory_space<vmem>>, vector<384x128xf32>,
    %69 = arith.truncf %54 : vector<384x128xf32> to vector<384x128xbf16>
    %c8 = arith.constant 8 : index
    %c0_68 = arith.constant 0 : index
    %c0_69 = arith.constant 0 : index
    %70 = vector.load %arg2[%c8, %c0_68, %c0_69] : memref<9x128x128xbf16, #tpu.memory_space<vmem>>, vector<1x128x128xbf16>
    %71 = vector.shape_cast %70 : vector<1x128x128xbf16> to vector<128x128xbf16>
    %cst_70 = arith.constant dense<0.000000e+00> : vector<384x128xf32>
    %72 = tpu.matmul %69, %71, %cst_70 {dimension_numbers = #tpu.dot_dimension_numbers<[1], [0], [0], [1], [0, 0, 1, 1], [], []>} : vector<384x128xbf16>, vector<128x128xbf16>, vector<384x128xf32> -> vector<384x128xf32>
    %c0_71 = arith.constant 0 : index
    %c0_72 = arith.constant 0 : index
    %73 = vector.load %arg7[%c0_71, %c0_72] : memref<384x128xf32, #tpu.memory_space<vmem>>, vector<384x128xf32>
    %74 = arith.addf %73, %72 : vector<384x128xf32>
    %c0_73 = arith.constant 0 : index
    %c0_74 = arith.constant 0 : index
    %75 = vector.load %arg7[%c0_73, %c0_74] : memref<384x128xf32, #tpu.memory_space<vmem>>, vector<384x128xf32>
    tpu.vector_store %arg7[%c0_73, %c0_74], %74 {strides = array<i32>} : memref<384x128xf32, #tpu.memory_space<vmem>>, vector<384x128xf32>,
    %c0_75 = arith.constant 0 : index
    %c0_76 = arith.constant 0 : index
    %76 = vector.load %arg7[%c0_75, %c0_76] : memref<384x128xf32, #tpu.memory_space<vmem>>, vector<384x128xf32>
    %cst_77 = arith.constant 0.000000e+00 : f32
    %77 = vector.broadcast %cst_77 : f32 to vector<384x128xf32>
    %78 = arith.maximumf %76, %77 : vector<384x128xf32>
    %c0_78 = arith.constant 0 : index
    %c0_79 = arith.constant 0 : index
    %79 = vector.load %arg4[%c0_78, %c0_79] : memref<384x1xf32, #tpu.memory_space<vmem>>, vector<384x1xf32>
    %80 = vector.broadcast %79 : vector<384x1xf32> to vector<384x128xf32>
    %81 = arith.mulf %78, %80 : vector<384x128xf32>
    %c24_80 = arith.constant 24 : index
    %c0_81 = arith.constant 0 : index
    %82 = vector.load %arg6[%c24_80, %c0_81] : memref<432x128xf32, #tpu.memory_space<vmem>>, vector<384x128xf32>
    tpu.vector_store %arg6[%c24_80, %c0_81], %81 {strides = array<i32>} : memref<432x128xf32, #tpu.memory_space<vmem>>, vector<384x128xf32>,
    %c0_82 = arith.constant 0 : index
    %c0_83 = arith.constant 0 : index
    %83 = vector.load %arg6[%c0_82, %c0_83] : memref<432x128xf32, #tpu.memory_space<vmem>>, vector<384x128xf32>
    %c1_i32_84 = arith.constant 1 : i32
    %84 = tpu.dynamic_rotate %83 by %c1_i32_84 dim 0 : vector<384x128xf32>, i32 -> vector<384x128xf32>
    %c383_i32_85 = arith.constant 383 : i32
    %85 = tpu.dynamic_rotate %83 by %c383_i32_85 dim 0 : vector<384x128xf32>, i32 -> vector<384x128xf32>
    %86 = arith.truncf %84 : vector<384x128xf32> to vector<384x128xbf16>
    %c0_86 = arith.constant 0 : index
    %c0_87 = arith.constant 0 : index
    %c0_88 = arith.constant 0 : index
    %87 = vector.load %arg3[%c0_86, %c0_87, %c0_88] : memref<9x128x128xbf16, #tpu.memory_space<vmem>>, vector<1x128x128xbf16>
    %88 = vector.shape_cast %87 : vector<1x128x128xbf16> to vector<128x128xbf16>
    %cst_89 = arith.constant dense<0.000000e+00> : vector<384x128xf32>
    %89 = tpu.matmul %86, %88, %cst_89 {dimension_numbers = #tpu.dot_dimension_numbers<[1], [0], [0], [1], [0, 0, 1, 1], [], []>} : vector<384x128xbf16>, vector<128x128xbf16>, vector<384x128xf32> -> vector<384x128xf32>
    %c0_90 = arith.constant 0 : index
    %c0_91 = arith.constant 0 : index
    %90 = vector.load %arg7[%c0_90, %c0_91] : memref<384x128xf32, #tpu.memory_space<vmem>>, vector<384x128xf32>
    tpu.vector_store %arg7[%c0_90, %c0_91], %89 {strides = array<i32>} : memref<384x128xf32, #tpu.memory_space<vmem>>, vector<384x128xf32>,
    %91 = arith.truncf %83 : vector<384x128xf32> to vector<384x128xbf16>
    %c1_92 = arith.constant 1 : index
    %c0_93 = arith.constant 0 : index
    %c0_94 = arith.constant 0 : index
    %92 = vector.load %arg3[%c1_92, %c0_93, %c0_94] : memref<9x128x128xbf16, #tpu.memory_space<vmem>>, vector<1x128x128xbf16>
    %93 = vector.shape_cast %92 : vector<1x128x128xbf16> to vector<128x128xbf16>
    %cst_95 = arith.constant dense<0.000000e+00> : vector<384x128xf32>
    %94 = tpu.matmul %91, %93, %cst_95 {dimension_numbers = #tpu.dot_dimension_numbers<[1], [0], [0], [1], [0, 0, 1, 1], [], []>} : vector<384x128xbf16>, vector<128x128xbf16>, vector<384x128xf32> -> vector<384x128xf32>
    %c0_96 = arith.constant 0 : index
    %c0_97 = arith.constant 0 : index
    %95 = vector.load %arg7[%c0_96, %c0_97] : memref<384x128xf32, #tpu.memory_space<vmem>>, vector<384x128xf32>
    %96 = arith.addf %95, %94 : vector<384x128xf32>
    %c0_98 = arith.constant 0 : index
    %c0_99 = arith.constant 0 : index
    %97 = vector.load %arg7[%c0_98, %c0_99] : memref<384x128xf32, #tpu.memory_space<vmem>>, vector<384x128xf32>
    tpu.vector_store %arg7[%c0_98, %c0_99], %96 {strides = array<i32>} : memref<384x128xf32, #tpu.memory_space<vmem>>, vector<384x128xf32>,
    %98 = arith.truncf %85 : vector<384x128xf32> to vector<384x128xbf16>
    %c2_100 = arith.constant 2 : index
    %c0_101 = arith.constant 0 : index
    %c0_102 = arith.constant 0 : index
    %99 = vector.load %arg3[%c2_100, %c0_101, %c0_102] : memref<9x128x128xbf16, #tpu.memory_space<vmem>>, vector<1x128x128xbf16>
    %100 = vector.shape_cast %99 : vector<1x128x128xbf16> to vector<128x128xbf16>
    %cst_103 = arith.constant dense<0.000000e+00> : vector<384x128xf32>
    %101 = tpu.matmul %98, %100, %cst_103 {dimension_numbers = #tpu.dot_dimension_numbers<[1], [0], [0], [1], [0, 0, 1, 1], [], []>} : vector<384x128xbf16>, vector<128x128xbf16>, vector<384x128xf32> -> vector<384x128xf32>
    %c0_104 = arith.constant 0 : index
    %c0_105 = arith.constant 0 : index
    %102 = vector.load %arg7[%c0_104, %c0_105] : memref<384x128xf32, #tpu.memory_space<vmem>>, vector<384x128xf32>
    %103 = arith.addf %102, %101 : vector<384x128xf32>
    %c0_106 = arith.constant 0 : index
    %c0_107 = arith.constant 0 : index
    %104 = vector.load %arg7[%c0_106, %c0_107] : memref<384x128xf32, #tpu.memory_space<vmem>>, vector<384x128xf32>
    tpu.vector_store %arg7[%c0_106, %c0_107], %103 {strides = array<i32>} : memref<384x128xf32, #tpu.memory_space<vmem>>, vector<384x128xf32>,
    %c24_108 = arith.constant 24 : index
    %c0_109 = arith.constant 0 : index
    %105 = vector.load %arg6[%c24_108, %c0_109] : memref<432x128xf32, #tpu.memory_space<vmem>>, vector<384x128xf32>
    %c1_i32_110 = arith.constant 1 : i32
    %106 = tpu.dynamic_rotate %105 by %c1_i32_110 dim 0 : vector<384x128xf32>, i32 -> vector<384x128xf32>
    %c383_i32_111 = arith.constant 383 : i32
    %107 = tpu.dynamic_rotate %105 by %c383_i32_111 dim 0 : vector<384x128xf32>, i32 -> vector<384x128xf32>
    %108 = arith.truncf %106 : vector<384x128xf32> to vector<384x128xbf16>
    %c3_112 = arith.constant 3 : index
    %c0_113 = arith.constant 0 : index
    %c0_114 = arith.constant 0 : index
    %109 = vector.load %arg3[%c3_112, %c0_113, %c0_114] : memref<9x128x128xbf16, #tpu.memory_space<vmem>>, vector<1x128x128xbf16>
    %110 = vector.shape_cast %109 : vector<1x128x128xbf16> to vector<128x128xbf16>
    %cst_115 = arith.constant dense<0.000000e+00> : vector<384x128xf32>
    %111 = tpu.matmul %108, %110, %cst_115 {dimension_numbers = #tpu.dot_dimension_numbers<[1], [0], [0], [1], [0, 0, 1, 1], [], []>} : vector<384x128xbf16>, vector<128x128xbf16>, vector<384x128xf32> -> vector<384x128xf32>
    %c0_116 = arith.constant 0 : index
    %c0_117 = arith.constant 0 : index
    %112 = vector.load %arg7[%c0_116, %c0_117] : memref<384x128xf32, #tpu.memory_space<vmem>>, vector<384x128xf32>
    %113 = arith.addf %112, %111 : vector<384x128xf32>
    %c0_118 = arith.constant 0 : index
    %c0_119 = arith.constant 0 : index
    %114 = vector.load %arg7[%c0_118, %c0_119] : memref<384x128xf32, #tpu.memory_space<vmem>>, vector<384x128xf32>
    tpu.vector_store %arg7[%c0_118, %c0_119], %113 {strides = array<i32>} : memref<384x128xf32, #tpu.memory_space<vmem>>, vector<384x128xf32>,
    %115 = arith.truncf %105 : vector<384x128xf32> to vector<384x128xbf16>
    %c4_120 = arith.constant 4 : index
    %c0_121 = arith.constant 0 : index
    %c0_122 = arith.constant 0 : index
    %116 = vector.load %arg3[%c4_120, %c0_121, %c0_122] : memref<9x128x128xbf16, #tpu.memory_space<vmem>>, vector<1x128x128xbf16>
    %117 = vector.shape_cast %116 : vector<1x128x128xbf16> to vector<128x128xbf16>
    %cst_123 = arith.constant dense<0.000000e+00> : vector<384x128xf32>
    %118 = tpu.matmul %115, %117, %cst_123 {dimension_numbers = #tpu.dot_dimension_numbers<[1], [0], [0], [1], [0, 0, 1, 1], [], []>} : vector<384x128xbf16>, vector<128x128xbf16>, vector<384x128xf32> -> vector<384x128xf32>
    %c0_124 = arith.constant 0 : index
    %c0_125 = arith.constant 0 : index
    %119 = vector.load %arg7[%c0_124, %c0_125] : memref<384x128xf32, #tpu.memory_space<vmem>>, vector<384x128xf32>
    %120 = arith.addf %119, %118 : vector<384x128xf32>
    %c0_126 = arith.constant 0 : index
    %c0_127 = arith.constant 0 : index
    %121 = vector.load %arg7[%c0_126, %c0_127] : memref<384x128xf32, #tpu.memory_space<vmem>>, vector<384x128xf32>
    tpu.vector_store %arg7[%c0_126, %c0_127], %120 {strides = array<i32>} : memref<384x128xf32, #tpu.memory_space<vmem>>, vector<384x128xf32>,
    %122 = arith.truncf %107 : vector<384x128xf32> to vector<384x128xbf16>
    %c5_128 = arith.constant 5 : index
    %c0_129 = arith.constant 0 : index
    %c0_130 = arith.constant 0 : index
    %123 = vector.load %arg3[%c5_128, %c0_129, %c0_130] : memref<9x128x128xbf16, #tpu.memory_space<vmem>>, vector<1x128x128xbf16>
    %124 = vector.shape_cast %123 : vector<1x128x128xbf16> to vector<128x128xbf16>
    %cst_131 = arith.constant dense<0.000000e+00> : vector<384x128xf32>
    %125 = tpu.matmul %122, %124, %cst_131 {dimension_numbers = #tpu.dot_dimension_numbers<[1], [0], [0], [1], [0, 0, 1, 1], [], []>} : vector<384x128xbf16>, vector<128x128xbf16>, vector<384x128xf32> -> vector<384x128xf32>
    %c0_132 = arith.constant 0 : index
    %c0_133 = arith.constant 0 : index
    %126 = vector.load %arg7[%c0_132, %c0_133] : memref<384x128xf32, #tpu.memory_space<vmem>>, vector<384x128xf32>
    %127 = arith.addf %126, %125 : vector<384x128xf32>
    %c0_134 = arith.constant 0 : index
    %c0_135 = arith.constant 0 : index
    %128 = vector.load %arg7[%c0_134, %c0_135] : memref<384x128xf32, #tpu.memory_space<vmem>>, vector<384x128xf32>
    tpu.vector_store %arg7[%c0_134, %c0_135], %127 {strides = array<i32>} : memref<384x128xf32, #tpu.memory_space<vmem>>, vector<384x128xf32>,
    %c48_136 = arith.constant 48 : index
    %c0_137 = arith.constant 0 : index
    %129 = vector.load %arg6[%c48_136, %c0_137] : memref<432x128xf32, #tpu.memory_space<vmem>>, vector<384x128xf32>
    %c1_i32_138 = arith.constant 1 : i32
    %130 = tpu.dynamic_rotate %129 by %c1_i32_138 dim 0 : vector<384x128xf32>, i32 -> vector<384x128xf32>
    %c383_i32_139 = arith.constant 383 : i32
    %131 = tpu.dynamic_rotate %129 by %c383_i32_139 dim 0 : vector<384x128xf32>, i32 -> vector<384x128xf32>
    %132 = arith.truncf %130 : vector<384x128xf32> to vector<384x128xbf16>
    %c6_140 = arith.constant 6 : index
    %c0_141 = arith.constant 0 : index
    %c0_142 = arith.constant 0 : index
    %133 = vector.load %arg3[%c6_140, %c0_141, %c0_142] : memref<9x128x128xbf16, #tpu.memory_space<vmem>>, vector<1x128x128xbf16>
    %134 = vector.shape_cast %133 : vector<1x128x128xbf16> to vector<128x128xbf16>
    %cst_143 = arith.constant dense<0.000000e+00> : vector<384x128xf32>
    %135 = tpu.matmul %132, %134, %cst_143 {dimension_numbers = #tpu.dot_dimension_numbers<[1], [0], [0], [1], [0, 0, 1, 1], [], []>} : vector<384x128xbf16>, vector<128x128xbf16>, vector<384x128xf32> -> vector<384x128xf32>
    %c0_144 = arith.constant 0 : index
    %c0_145 = arith.constant 0 : index
    %136 = vector.load %arg7[%c0_144, %c0_145] : memref<384x128xf32, #tpu.memory_space<vmem>>, vector<384x128xf32>
    %137 = arith.addf %136, %135 : vector<384x128xf32>
    %c0_146 = arith.constant 0 : index
    %c0_147 = arith.constant 0 : index
    %138 = vector.load %arg7[%c0_146, %c0_147] : memref<384x128xf32, #tpu.memory_space<vmem>>, vector<384x128xf32>
    tpu.vector_store %arg7[%c0_146, %c0_147], %137 {strides = array<i32>} : memref<384x128xf32, #tpu.memory_space<vmem>>, vector<384x128xf32>,
    %139 = arith.truncf %129 : vector<384x128xf32> to vector<384x128xbf16>
    %c7_148 = arith.constant 7 : index
    %c0_149 = arith.constant 0 : index
    %c0_150 = arith.constant 0 : index
    %140 = vector.load %arg3[%c7_148, %c0_149, %c0_150] : memref<9x128x128xbf16, #tpu.memory_space<vmem>>, vector<1x128x128xbf16>
    %141 = vector.shape_cast %140 : vector<1x128x128xbf16> to vector<128x128xbf16>
    %cst_151 = arith.constant dense<0.000000e+00> : vector<384x128xf32>
    %142 = tpu.matmul %139, %141, %cst_151 {dimension_numbers = #tpu.dot_dimension_numbers<[1], [0], [0], [1], [0, 0, 1, 1], [], []>} : vector<384x128xbf16>, vector<128x128xbf16>, vector<384x128xf32> -> vector<384x128xf32>
    %c0_152 = arith.constant 0 : index
    %c0_153 = arith.constant 0 : index
    %143 = vector.load %arg7[%c0_152, %c0_153] : memref<384x128xf32, #tpu.memory_space<vmem>>, vector<384x128xf32>
    %144 = arith.addf %143, %142 : vector<384x128xf32>
    %c0_154 = arith.constant 0 : index
    %c0_155 = arith.constant 0 : index
    %145 = vector.load %arg7[%c0_154, %c0_155] : memref<384x128xf32, #tpu.memory_space<vmem>>, vector<384x128xf32>
    tpu.vector_store %arg7[%c0_154, %c0_155], %144 {strides = array<i32>} : memref<384x128xf32, #tpu.memory_space<vmem>>, vector<384x128xf32>,
    %146 = arith.truncf %131 : vector<384x128xf32> to vector<384x128xbf16>
    %c8_156 = arith.constant 8 : index
    %c0_157 = arith.constant 0 : index
    %c0_158 = arith.constant 0 : index
    %147 = vector.load %arg3[%c8_156, %c0_157, %c0_158] : memref<9x128x128xbf16, #tpu.memory_space<vmem>>, vector<1x128x128xbf16>
    %148 = vector.shape_cast %147 : vector<1x128x128xbf16> to vector<128x128xbf16>
    %cst_159 = arith.constant dense<0.000000e+00> : vector<384x128xf32>
    %149 = tpu.matmul %146, %148, %cst_159 {dimension_numbers = #tpu.dot_dimension_numbers<[1], [0], [0], [1], [0, 0, 1, 1], [], []>} : vector<384x128xbf16>, vector<128x128xbf16>, vector<384x128xf32> -> vector<384x128xf32>
    %c0_160 = arith.constant 0 : index
    %c0_161 = arith.constant 0 : index
    %150 = vector.load %arg7[%c0_160, %c0_161] : memref<384x128xf32, #tpu.memory_space<vmem>>, vector<384x128xf32>
    %151 = arith.addf %150, %149 : vector<384x128xf32>
    %c0_162 = arith.constant 0 : index
    %c0_163 = arith.constant 0 : index
    %152 = vector.load %arg7[%c0_162, %c0_163] : memref<384x128xf32, #tpu.memory_space<vmem>>, vector<384x128xf32>
    tpu.vector_store %arg7[%c0_162, %c0_163], %151 {strides = array<i32>} : memref<384x128xf32, #tpu.memory_space<vmem>>, vector<384x128xf32>,
    %c0_164 = arith.constant 0 : index
    %c0_165 = arith.constant 0 : index
    %153 = vector.load %arg7[%c0_164, %c0_165] : memref<384x128xf32, #tpu.memory_space<vmem>>, vector<384x128xf32>
    %c0_166 = arith.constant 0 : index
    %c24_167 = arith.constant 24 : index
    %c0_168 = arith.constant 0 : index
    %154 = vector.load %arg1[%c0_166, %c24_167, %c0_168] : memref<1x432x128xf32, #tpu.memory_space<vmem>>, vector<1x384x128xf32>
    %155 = vector.shape_cast %154 : vector<1x384x128xf32> to vector<384x128xf32>
    %156 = arith.addf %153, %155 : vector<384x128xf32>
    %c0_169 = arith.constant 0 : index
    %c0_170 = arith.constant 0 : index
    %c0_171 = arith.constant 0 : index
    %157 = vector.load %arg5[%c0_169, %c0_170, %c0_171] : memref<1x384x128xf32, #tpu.memory_space<vmem>>, vector<1x384x128xf32>
    %158 = vector.shape_cast %157 : vector<1x384x128xf32> to vector<384x128xf32>
    %159 = vector.shape_cast %156 : vector<384x128xf32> to vector<1x384x128xf32>
    tpu.vector_store %arg5[%c0_169, %c0_170, %c0_171], %159 {strides = array<i32>} : memref<1x384x128xf32, #tpu.memory_space<vmem>>, vector<1x384x128xf32>,
    return
  }
  func.func @transform_0(%arg0: i32) -> (i32, i32, i32) {
    %c0_i32 = arith.constant 0 : i32
    %c0_i32_0 = arith.constant 0 : i32
    %c0_i32_1 = arith.constant 0 : i32
    return %arg0, %c0_i32, %c0_i32_0 : i32, i32, i32
  }
  func.func @transform_1(%arg0: i32) -> (i32, i32, i32) {
    %c0_i32 = arith.constant 0 : i32
    %c0_i32_0 = arith.constant 0 : i32
    %c0_i32_1 = arith.constant 0 : i32
    %c0_i32_2 = arith.constant 0 : i32
    return %c0_i32, %c0_i32_0, %c0_i32_1 : i32, i32, i32
  }
  func.func @transform_2(%arg0: i32) -> (i32, i32, i32) {
    %c0_i32 = arith.constant 0 : i32
    %c0_i32_0 = arith.constant 0 : i32
    %c0_i32_1 = arith.constant 0 : i32
    %c0_i32_2 = arith.constant 0 : i32
    return %c0_i32, %c0_i32_0, %c0_i32_1 : i32, i32, i32
  }
  func.func @transform_3(%arg0: i32) -> (i32, i32) {
    %c0_i32 = arith.constant 0 : i32
    %c0_i32_0 = arith.constant 0 : i32
    %c0_i32_1 = arith.constant 0 : i32
    return %c0_i32, %c0_i32_0 : i32, i32
  }
  func.func @transform_4(%arg0: i32) -> (i32, i32, i32) {
    %c0_i32 = arith.constant 0 : i32
    %c0_i32_0 = arith.constant 0 : i32
    %c0_i32_1 = arith.constant 0 : i32
    return %arg0, %c0_i32, %c0_i32_0 : i32, i32, i32
  }
}

</mosaic_0001>

<llo_original>
// kernel: residual_block_forward.1
$region0: #{residual_block_forward.1}
  #allocation0 [shape = 'u32[]', space=smem, size = 0x4, offset = 0x4, fixed_abs, tag = 'smem constant byte address 0x4 - core index']
  #allocation1 [shape = 'u32[144,128]{1,0:T(1,128)}', space=vmem, size = 0x12000, scoped, tag = 'internal scratch']
  #allocation2 [shape = 'f32[432,128]{1,0:T(8,128)}', space=vmem, size = 0x36000, scoped, tag = 'scratch operand']
  #allocation3 [shape = 'f32[384,128]{1,0:T(8,128)}', space=vmem, size = 0x30000, scoped, tag = 'scratch operand']
  %s0 = inlined_call_operand.vmem [shape: f32[2,432,128], index: 0, kind: input, shape index: {}]
  %s1 = inlined_call_operand.vmem [shape: bf16[9,128,128], index: 1, kind: input, shape index: {}]
  %s2 = inlined_call_operand.vmem [shape: bf16[9,128,128], index: 2, kind: input, shape index: {}]
  %s3 = inlined_call_operand.vmem [shape: f32[384,1], index: 3, kind: input, shape index: {}]
  %s4 = inlined_call_operand.vmem [shape: f32[2,384,128], index: 4, kind: output, shape index: {}]
  %s5 = sld [smem:[#allocation0]]
  $region49: #{residual_block_forward.1} parent=0
    _
  %s7 = ssub.s32 1, %s5
  %s8 = scalar_select 0, %s7, %s5
  loop: start=0, step=1, limit=4
  $region2: #{residual_block_forward.1} parent=0 // loop_pre_header
    _
  $region3: #{residual_block_forward.1} parent=0 // loop_header
    %s10 = sphi 0, %s14
    %p11 = scmp.ge.s32.totalorder %s10, 4
    %s20 = sphi 0, %s22
    %s23 = sphi 0, %s20
    %s24 = sphi 0, %s23
    %s40 = sphi 0, %s24
    %s44 = sphi 0, %s44
    %s46 = sphi 0, %s44
    %s47 = sphi 0, %s46
    %s61 = sphi 0, %s47
    %s65 = sphi 0, %s65
    %s67 = sphi 0, %s65
    %s68 = sphi 0, %s67
    %s82 = sphi 0, %s68
    %s86 = sphi 0, %s86
    %s88 = sphi 0, %s86
    %s89 = sphi 0, %s88
    %s103 = sphi 0, %s89
    %s109 = sphi 0, %s111
    %s112 = sphi 0, %s109
    %s113 = sphi 0, %s112
    %s129 = sphi 0, %s113
  $region4: #{residual_block_forward.1} parent=0 // loop_header_branch
    %13 = sbr.rel (%p11) target = $region8
  $region5: #{residual_block_forward.1} parent=0 // loop_body
    %s15 = ssub.s32 %s10, 1
    %s16 = ssub.s32 %s10, 2
    %s17 = sadd.s32 %s10, 1
    %s18 = ssub.s32 %s10, %s17
    %p19 = scmp.eq.s32.totalorder %s18, 0
    %s21 = sadd.s32 %s20, 1
    %s22 = scalar_select %p19, %s20, %s21
    %p25 = pneg %p19
    %p26 = scmp.eq.s32.totalorder %s10, 1
    %p27 = por %p25, %p26
    %p28 = scmp.ne.s32.totalorder %s20, %s23
    %p29 = scmp.eq.s32.totalorder %s10, 0
    %p30 = por %p28, %p29
    %p31 = scmp.ne.s32.totalorder %s20, %s23
    %p32 = scmp.eq.s32.totalorder %s15, 1
    %p33 = por %p31, %p32
    %p34 = scmp.ne.s32.totalorder %s23, %s24
    %p35 = scmp.eq.s32.totalorder %s15, 0
    %p36 = por %p34, %p35
    %p37 = scmp.ne.s32.totalorder %s23, %s24
    %p38 = scmp.eq.s32.totalorder %s16, 1
    %p39 = por %p37, %p38
    %p41 = scmp.ne.s32.totalorder %s24, %s40
    %p42 = scmp.eq.s32.totalorder %s16, 0
    %p43 = por %p41, %p42
    %s45 = sadd.s32 %s44, 1
    %p48 = scmp.eq.s32.totalorder %s10, 1
    %p49 = scmp.ne.s32.totalorder %s44, %s46
    %p50 = scmp.eq.s32.totalorder %s10, 0
    %p51 = por %p49, %p50
    %p52 = scmp.ne.s32.totalorder %s44, %s46
    %p53 = scmp.eq.s32.totalorder %s15, 1
    %p54 = por %p52, %p53
    %p55 = scmp.ne.s32.totalorder %s46, %s47
    %p56 = scmp.eq.s32.totalorder %s15, 0
    %p57 = por %p55, %p56
    %p58 = scmp.ne.s32.totalorder %s46, %s47
    %p59 = scmp.eq.s32.totalorder %s16, 1
    %p60 = por %p58, %p59
    %p62 = scmp.ne.s32.totalorder %s47, %s61
    %p63 = scmp.eq.s32.totalorder %s16, 0
    %p64 = por %p62, %p63
    %s66 = sadd.s32 %s65, 1
    %p69 = scmp.eq.s32.totalorder %s10, 1
    %p70 = scmp.ne.s32.totalorder %s65, %s67
    %p71 = scmp.eq.s32.totalorder %s10, 0
    %p72 = por %p70, %p71
    %p73 = scmp.ne.s32.totalorder %s65, %s67
    %p74 = scmp.eq.s32.totalorder %s15, 1
    %p75 = por %p73, %p74
    %p76 = scmp.ne.s32.totalorder %s67, %s68
    %p77 = scmp.eq.s32.totalorder %s15, 0
    %p78 = por %p76, %p77
    %p79 = scmp.ne.s32.totalorder %s67, %s68
    %p80 = scmp.eq.s32.totalorder %s16, 1
    %p81 = por %p79, %p80
    %p83 = scmp.ne.s32.totalorder %s68, %s82
    %p84 = scmp.eq.s32.totalorder %s16, 0
    %p85 = por %p83, %p84
    %s87 = sadd.s32 %s86, 1
    %p90 = scmp.eq.s32.totalorder %s10, 1
    %p91 = scmp.ne.s32.totalorder %s86, %s88
    %p92 = scmp.eq.s32.totalorder %s10, 0
    %p93 = por %p91, %p92
    %p94 = scmp.ne.s32.totalorder %s86, %s88
    %p95 = scmp.eq.s32.totalorder %s15, 1
    %p96 = por %p94, %p95
    %p97 = scmp.ne.s32.totalorder %s88, %s89
    %p98 = scmp.eq.s32.totalorder %s15, 0
    %p99 = por %p97, %p98
    %p100 = scmp.ne.s32.totalorder %s88, %s89
    %p101 = scmp.eq.s32.totalorder %s16, 1
    %p102 = por %p100, %p101
    %p104 = scmp.ne.s32.totalorder %s89, %s103
    %p105 = scmp.eq.s32.totalorder %s16, 0
    %p106 = por %p104, %p105
    %s107 = ssub.s32 %s10, %s17
    %p108 = scmp.eq.s32.totalorder %s107, 0
    %s110 = sadd.s32 %s109, 1
    %s111 = scalar_select %p108, %s109, %s110
    %p114 = pneg %p108
    %p115 = scmp.eq.s32.totalorder %s10, 1
    %p116 = por %p114, %p115
    %p117 = scmp.ne.s32.totalorder %s109, %s112
    %p118 = scmp.eq.s32.totalorder %s10, 0
    %p119 = por %p117, %p118
    %p120 = scmp.ne.s32.totalorder %s109, %s112
    %p121 = scmp.eq.s32.totalorder %s15, 1
    %p122 = por %p120, %p121
    %p123 = scmp.ne.s32.totalorder %s112, %s113
    %p124 = scmp.eq.s32.totalorder %s15, 0
    %p125 = por %p123, %p124
    %p126 = scmp.ne.s32.totalorder %s112, %s113
    %p127 = scmp.eq.s32.totalorder %s16, 1
    %p128 = por %p126, %p127
    %p130 = scmp.ne.s32.totalorder %s113, %s129
    %p131 = scmp.eq.s32.totalorder %s16, 0
    %p132 = por %p130, %p131
    %p133 = scmp.le.s32.totalorder 1, %s10
    %p134 = scmp.lt.s32.totalorder %s10, 3
    %p135 = pnand %p133, %p134
    %p136 = pneg %p135
    // Predicated region
    $region9: #{residual_block_forward.1} parent=5 // pred_check
      _
    $region10: #{residual_block_forward.1} parent=5 // pred_check_branch
      %138 = sbr.rel (%p135) target = $region12
    $region11: #{residual_block_forward.1} parent=5 // pred_region
      %s139 = ssub.s32 %s10, 1
      // Predicated region
      $region13: #{residual_block_forward.1} parent=11 // pred_check
        %p140 = pneg %p57
      $region14: #{residual_block_forward.1} parent=11 // pred_check_branch
        %142 = sbr.rel (%p140) target = $region16
      $region15: #{residual_block_forward.1} parent=11 // pred_region
        _
      $region16: #{residual_block_forward.1} parent=11 // pred_fallthru
        _
      // Predicated region
      $region17: #{residual_block_forward.1} parent=11 // pred_check
        %p143 = pneg %p78
      $region18: #{residual_block_forward.1} parent=11 // pred_check_branch
        %145 = sbr.rel (%p143) target = $region20
      $region19: #{residual_block_forward.1} parent=11 // pred_region
        _
      $region20: #{residual_block_forward.1} parent=11 // pred_fallthru
        _
      // Predicated region
      $region21: #{residual_block_forward.1} parent=11 // pred_check
        %p146 = pneg %p99
      $region22: #{residual_block_forward.1} parent=11 // pred_check_branch
        %148 = sbr.rel (%p146) target = $region24
      $region23: #{residual_block_forward.1} parent=11 // pred_region
        _
      $region24: #{residual_block_forward.1} parent=11 // pred_fallthru
        _
    $region12: #{residual_block_forward.1} parent=5 // pred_fallthru
      _
    %p149 = scmp.lt.s32.totalorder %s10, 2
    // Predicated region
    $region25: #{residual_block_forward.1} parent=5 // pred_check
      %p150 = pneg %p149
    $region26: #{residual_block_forward.1} parent=5 // pred_check_branch
      %152 = sbr.rel (%p150) target = $region28
    $region27: #{residual_block_forward.1} parent=5 // pred_region
      // Predicated region
      $region29: #{residual_block_forward.1} parent=27 // pred_check
        %p153 = pneg %p30
      $region30: #{residual_block_forward.1} parent=27 // pred_check_branch
        %155 = sbr.rel (%p153) target = $region32
      $region31: #{residual_block_forward.1} parent=27 // pred_region
        %p156 = scmp.lt.s32.totalorder %s10, 1
        %s157 = scalar_select %p156, %s10, 1
        %s158 = smul.addr %s157, 54
        %s159 = smul.addr %s158, 8
        %s160 = scalar_lea.vmem %s0, %s159
      $region32: #{residual_block_forward.1} parent=27 // pred_fallthru
        _
    $region28: #{residual_block_forward.1} parent=5 // pred_fallthru
      _
    %p161 = scmp.le.s32.totalorder 1, %s10
    %p162 = scmp.lt.s32.totalorder %s10, 3
    %p163 = pnand %p161, %p162
    %p164 = pneg %p163
    // Predicated region
    $region33: #{residual_block_forward.1} parent=5 // pred_check
      _
    $region34: #{residual_block_forward.1} parent=5 // pred_check_branch
      %166 = sbr.rel (%p163) target = $region36
    $region35: #{residual_block_forward.1} parent=5 // pred_region
      %s167 = ssub.s32 %s10, 1
      %p168 = scmp.lt.s32.totalorder %s15, 1
      %s169 = scalar_select %p168, %s15, 1
      %s170 = smul.addr %s169, 54
      %s171 = smul.addr %s170, 8
      %s172 = scalar_lea.vmem %s0, %s171
      %p173 = pneg %p36
      %p174 = pneg %p33
      %p175 = pneg %p57
      %p176 = pneg %p54
      %p177 = pneg %p78
      %p178 = pneg %p75
      %p179 = pneg %p99
      %p180 = pneg %p96
      %p181 = pneg %p125
      %p182 = pneg %p122
      %p183 = scmp.lt.s32.totalorder %s15, 1
      %s184 = scalar_select %p183, %s15, 1
      %s185 = smul.addr %s184, 48
      %s186 = smul.addr %s185, 8
      %s187 = scalar_lea.vmem %s4, %s186
      %p188 = scmp.lt.s32.totalorder %s15, 1
      %s189 = scalar_select %p188, %s15, 1
      %s190 = smul.addr %s189, 54
      %s191 = smul.addr %s190, 8
      %s192 = scalar_lea.vmem %s0, %s191
      %p193 = scmp.lt.s32.totalorder %s15, 1
      %s194 = scalar_select %p193, %s15, 1
      %s195 = smul.addr %s194, 48
      %s196 = smul.addr %s195, 8
      %s197 = scalar_lea.vmem %s4, %s196
      %199 = vst [vmem:[#allocation2] sm:$0xff] 0.0
      %200 = vst [vmem:[#allocation2 + $0x8] sm:$0xff] 0.0
      %201 = vst [vmem:[#allocation2 + $0x10] sm:$0xff] 0.0
      %202 = vst [vmem:[#allocation2 + $0x198] sm:$0xff] 0.0
      %203 = vst [vmem:[#allocation2 + $0x1a0] sm:$0xff] 0.0
      %204 = vst [vmem:[#allocation2 + $0x1a8] sm:$0xff] 0.0
      %v205 = vld [vmem:[%s192] sm:$0xff]
      %v206 = vld [vmem:[%s192 + $0x8] sm:$0xff]
      %v207 = vld [vmem:[%s192 + $0x10] sm:$0xff]
      %v208 = vld [vmem:[%s192 + $0x18] sm:$0xff]
      %v209 = vld [vmem:[%s192 + $0x20] sm:$0xff]
      %v210 = vld [vmem:[%s192 + $0x28] sm:$0xff]
      %v211 = vld [vmem:[%s192 + $0x30] sm:$0xff]
      %v212 = vld [vmem:[%s192 + $0x38] sm:$0xff]
      %v213 = vld [vmem:[%s192 + $0x40] sm:$0xff]
      %v214 = vld [vmem:[%s192 + $0x48] sm:$0xff]
      %v215 = vld [vmem:[%s192 + $0x50] sm:$0xff]
      %v216 = vld [vmem:[%s192 + $0x58] sm:$0xff]
      %v217 = vld [vmem:[%s192 + $0x60] sm:$0xff]
      %v218 = vld [vmem:[%s192 + $0x68] sm:$0xff]
      %v219 = vld [vmem:[%s192 + $0x70] sm:$0xff]
      %v220 = vld [vmem:[%s192 + $0x78] sm:$0xff]
      %v221 = vld [vmem:[%s192 + $0x80] sm:$0xff]
      %v222 = vld [vmem:[%s192 + $0x88] sm:$0xff]
      %v223 = vld [vmem:[%s192 + $0x90] sm:$0xff]
      %v224 = vld [vmem:[%s192 + $0x98] sm:$0xff]
      %v225 = vld [vmem:[%s192 + $0xa0] sm:$0xff]
      %v226 = vld [vmem:[%s192 + $0xa8] sm:$0xff]
      %v227 = vld [vmem:[%s192 + $0xb0] sm:$0xff]
      %v228 = vld [vmem:[%s192 + $0xb8] sm:$0xff]
      %v229 = vld [vmem:[%s192 + $0xc0] sm:$0xff]
      %v230 = vld [vmem:[%s192 + $0xc8] sm:$0xff]
      %v231 = vld [vmem:[%s192 + $0xd0] sm:$0xff]
      %v232 = vld [vmem:[%s192 + $0xd8] sm:$0xff]
      %v233 = vld [vmem:[%s192 + $0xe0] sm:$0xff]
      %v234 = vld [vmem:[%s192 + $0xe8] sm:$0xff]
      %v235 = vld [vmem:[%s192 + $0xf0] sm:$0xff]
      %v236 = vld [vmem:[%s192 + $0xf8] sm:$0xff]
      %v237 = vld [vmem:[%s192 + $0x100] sm:$0xff]
      %v238 = vld [vmem:[%s192 + $0x108] sm:$0xff]
      %v239 = vld [vmem:[%s192 + $0x110] sm:$0xff]
      %v240 = vld [vmem:[%s192 + $0x118] sm:$0xff]
      %v241 = vld [vmem:[%s192 + $0x120] sm:$0xff]
      %v242 = vld [vmem:[%s192 + $0x128] sm:$0xff]
      %v243 = vld [vmem:[%s192 + $0x130] sm:$0xff]
      %v244 = vld [vmem:[%s192 + $0x138] sm:$0xff]
      %v245 = vld [vmem:[%s192 + $0x140] sm:$0xff]
      %v246 = vld [vmem:[%s192 + $0x148] sm:$0xff]
      %v247 = vld [vmem:[%s192 + $0x150] sm:$0xff]
      %v248 = vld [vmem:[%s192 + $0x158] sm:$0xff]
      %v249 = vld [vmem:[%s192 + $0x160] sm:$0xff]
      %v250 = vld [vmem:[%s192 + $0x168] sm:$0xff]
      %v251 = vld [vmem:[%s192 + $0x170] sm:$0xff]
      %v252 = vld [vmem:[%s192 + $0x178] sm:$0xff]
      %v253 = vrot.slane %v205, 7
      %v254 = vrot.slane %v206, 7
      %v255 = vrot.slane %v207, 7
      %v256 = vrot.slane %v208, 7
      %v257 = vrot.slane %v209, 7
      %v258 = vrot.slane %v210, 7
      %v259 = vrot.slane %v211, 7
      %v260 = vrot.slane %v212, 7
      %v261 = vrot.slane %v213, 7
      %v262 = vrot.slane %v214, 7
      %v263 = vrot.slane %v215, 7
      %v264 = vrot.slane %v216, 7
      %v265 = vrot.slane %v217, 7
      %v266 = vrot.slane %v218, 7
      %v267 = vrot.slane %v219, 7
      %v268 = vrot.slane %v220, 7
      %v269 = vrot.slane %v221, 7
      %v270 = vrot.slane %v222, 7
      %v271 = vrot.slane %v223, 7
      %v272 = vrot.slane %v224, 7
      %v273 = vrot.slane %v225, 7
      %v274 = vrot.slane %v226, 7
      %v275 = vrot.slane %v227, 7
      %v276 = vrot.slane %v228, 7
      %v277 = vrot.slane %v229, 7
      %v278 = vrot.slane %v230, 7
      %v279 = vrot.slane %v231, 7
      %v280 = vrot.slane %v232, 7
      %v281 = vrot.slane %v233, 7
      %v282 = vrot.slane %v234, 7
      %v283 = vrot.slane %v235, 7
      %v284 = vrot.slane %v236, 7
      %v285 = vrot.slane %v237, 7
      %v286 = vrot.slane %v238, 7
      %v287 = vrot.slane %v239, 7
      %v288 = vrot.slane %v240, 7
      %v289 = vrot.slane %v241, 7
      %v290 = vrot.slane %v242, 7
      %v291 = vrot.slane %v243, 7
      %v292 = vrot.slane %v244, 7
      %v293 = vrot.slane %v245, 7
      %v294 = vrot.slane %v246, 7
      %v295 = vrot.slane %v247, 7
      %v296 = vrot.slane %v248, 7
      %v297 = vrot.slane %v249, 7
      %v298 = vrot.slane %v250, 7
      %v299 = vrot.slane %v251, 7
      %v300 = vrot.slane %v252, 7
      %v301 = vlaneseq
      %v302 = vshrl.u32 %v301, 7
      %vm303 = vcmp.lt.s32.totalorder %v302, 1
      %v304 = vsel %vm303, %v299, %v300
      %v305 = vsel %vm303, %v298, %v299
      %v306 = vsel %vm303, %v297, %v298
      %v307 = vsel %vm303, %v296, %v297
      %v308 = vsel %vm303, %v295, %v296
      %v309 = vsel %vm303, %v294, %v295
      %v310 = vsel %vm303, %v293, %v294
      %v311 = vsel %vm303, %v292, %v293
      %v312 = vsel %vm303, %v291, %v292
      %v313 = vsel %vm303, %v290, %v291
      %v314 = vsel %vm303, %v289, %v290
      %v315 = vsel %vm303, %v288, %v289
      %v316 = vsel %vm303, %v287, %v288
      %v317 = vsel %vm303, %v286, %v287
      %v318 = vsel %vm303, %v285, %v286
      %v319 = vsel %vm303, %v284, %v285
      %v320 = vsel %vm303, %v283, %v284
      %v321 = vsel %vm303, %v282, %v283
      %v322 = vsel %vm303, %v281, %v282
      %v323 = vsel %vm303, %v280, %v281
      %v324 = vsel %vm303, %v279, %v280
      %v325 = vsel %vm303, %v278, %v279
      %v326 = vsel %vm303, %v277, %v278
      %v327 = vsel %vm303, %v276, %v277
      %v328 = vsel %vm303, %v275, %v276
      %v329 = vsel %vm303, %v274, %v275
      %v330 = vsel %vm303, %v273, %v274
      %v331 = vsel %vm303, %v272, %v273
      %v332 = vsel %vm303, %v271, %v272
      %v333 = vsel %vm303, %v270, %v271
      %v334 = vsel %vm303, %v269, %v270
      %v335 = vsel %vm303, %v268, %v269
      %v336 = vsel %vm303, %v267, %v268
      %v337 = vsel %vm303, %v266, %v267
      %v338 = vsel %vm303, %v265, %v266
      %v339 = vsel %vm303, %v264, %v265
      %v340 = vsel %vm303, %v263, %v264
      %v341 = vsel %vm303, %v262, %v263
      %v342 = vsel %vm303, %v261, %v262
      %v343 = vsel %vm303, %v260, %v261
      %v344 = vsel %vm303, %v259, %v260
      %v345 = vsel %vm303, %v258, %v259
      %v346 = vsel %vm303, %v257, %v258
      %v347 = vsel %vm303, %v256, %v257
      %v348 = vsel %vm303, %v255, %v256
      %v349 = vsel %vm303, %v254, %v255
      %v350 = vsel %vm303, %v253, %v254
      %v351 = vsel %vm303, %v300, %v253
      %v352 = vrot.slane %v205, 1
      %v353 = vrot.slane %v206, 1
      %v354 = vrot.slane %v207, 1
      %v355 = vrot.slane %v208, 1
      %v356 = vrot.slane %v209, 1
      %v357 = vrot.slane %v210, 1
      %v358 = vrot.slane %v211, 1
      %v359 = vrot.slane %v212, 1
      %v360 = vrot.slane %v213, 1
      %v361 = vrot.slane %v214, 1
      %v362 = vrot.slane %v215, 1
      %v363 = vrot.slane %v216, 1
      %v364 = vrot.slane %v217, 1
      %v365 = vrot.slane %v218, 1
      %v366 = vrot.slane %v219, 1
      %v367 = vrot.slane %v220, 1
      %v368 = vrot.slane %v221, 1
      %v369 = vrot.slane %v222, 1
      %v370 = vrot.slane %v223, 1
      %v371 = vrot.slane %v224, 1
      %v372 = vrot.slane %v225, 1
      %v373 = vrot.slane %v226, 1
      %v374 = vrot.slane %v227, 1
      %v375 = vrot.slane %v228, 1
      %v376 = vrot.slane %v229, 1
      %v377 = vrot.slane %v230, 1
      %v378 = vrot.slane %v231, 1
      %v379 = vrot.slane %v232, 1
      %v380 = vrot.slane %v233, 1
      %v381 = vrot.slane %v234, 1
      %v382 = vrot.slane %v235, 1
      %v383 = vrot.slane %v236, 1
      %v384 = vrot.slane %v237, 1
      %v385 = vrot.slane %v238, 1
      %v386 = vrot.slane %v239, 1
      %v387 = vrot.slane %v240, 1
      %v388 = vrot.slane %v241, 1
      %v389 = vrot.slane %v242, 1
      %v390 = vrot.slane %v243, 1
      %v391 = vrot.slane %v244, 1
      %v392 = vrot.slane %v245, 1
      %v393 = vrot.slane %v246, 1
      %v394 = vrot.slane %v247, 1
      %v395 = vrot.slane %v248, 1
      %v396 = vrot.slane %v249, 1
      %v397 = vrot.slane %v250, 1
      %v398 = vrot.slane %v251, 1
      %v399 = vrot.slane %v252, 1
      %vm400 = vcmp.lt.s32.totalorder %v302, 7
      %v401 = vsel %vm400, %v398, %v399
      %v402 = vsel %vm400, %v397, %v398
      %v403 = vsel %vm400, %v396, %v397
      %v404 = vsel %vm400, %v395, %v396
      %v405 = vsel %vm400, %v394, %v395
      %v406 = vsel %vm400, %v393, %v394
      %v407 = vsel %vm400, %v392, %v393
      %v408 = vsel %vm400, %v391, %v392
      %v409 = vsel %vm400, %v390, %v391
      %v410 = vsel %vm400, %v389, %v390
      %v411 = vsel %vm400, %v388, %v389
      %v412 = vsel %vm400, %v387, %v388
      %v413 = vsel %vm400, %v386, %v387
      %v414 = vsel %vm400, %v385, %v386
      %v415 = vsel %vm400, %v384, %v385
      %v416 = vsel %vm400, %v383, %v384
      %v417 = vsel %vm400, %v382, %v383
      %v418 = vsel %vm400, %v381, %v382
      %v419 = vsel %vm400, %v380, %v381
      %v420 = vsel %vm400, %v379, %v380
      %v421 = vsel %vm400, %v378, %v379
      %v422 = vsel %vm400, %v377, %v378
      %v423 = vsel %vm400, %v376, %v377
      %v424 = vsel %vm400, %v375, %v376
      %v425 = vsel %vm400, %v374, %v375
      %v426 = vsel %vm400, %v373, %v374
      %v427 = vsel %vm400, %v372, %v373
      %v428 = vsel %vm400, %v371, %v372
      %v429 = vsel %vm400, %v370, %v371
      %v430 = vsel %vm400, %v369, %v370
      %v431 = vsel %vm400, %v368, %v369
      %v432 = vsel %vm400, %v367, %v368
      %v433 = vsel %vm400, %v366, %v367
      %v434 = vsel %vm400, %v365, %v366
      %v435 = vsel %vm400, %v364, %v365
      %v436 = vsel %vm400, %v363, %v364
      %v437 = vsel %vm400, %v362, %v363
      %v438 = vsel %vm400, %v361, %v362
      %v439 = vsel %vm400, %v360, %v361
      %v440 = vsel %vm400, %v359, %v360
      %v441 = vsel %vm400, %v358, %v359
      %v442 = vsel %vm400, %v357, %v358
      %v443 = vsel %vm400, %v356, %v357
      %v444 = vsel %vm400, %v355, %v356
      %v445 = vsel %vm400, %v354, %v355
      %v446 = vsel %vm400, %v353, %v354
      %v447 = vsel %vm400, %v352, %v353
      %v448 = vsel %vm400, %v399, %v352
      %v449 = vpack.c.bf16 %v350, %v351
      %v450 = vpack.c.bf16 %v348, %v349
      %v451 = vpack.c.bf16 %v346, %v347
      %v452 = vpack.c.bf16 %v344, %v345
      %v453 = vpack.c.bf16 %v342, %v343
      %v454 = vpack.c.bf16 %v340, %v341
      %v455 = vpack.c.bf16 %v338, %v339
      %v456 = vpack.c.bf16 %v336, %v337
      %v457 = vpack.c.bf16 %v334, %v335
      %v458 = vpack.c.bf16 %v332, %v333
      %v459 = vpack.c.bf16 %v330, %v331
      %v460 = vpack.c.bf16 %v328, %v329
      %v461 = vpack.c.bf16 %v326, %v327
      %v462 = vpack.c.bf16 %v324, %v325
      %v463 = vpack.c.bf16 %v322, %v323
      %v464 = vpack.c.bf16 %v320, %v321
      %v465 = vpack.c.bf16 %v318, %v319
      %v466 = vpack.c.bf16 %v316, %v317
      %v467 = vpack.c.bf16 %v314, %v315
      %v468 = vpack.c.bf16 %v312, %v313
      %v469 = vpack.c.bf16 %v310, %v311
      %v470 = vpack.c.bf16 %v308, %v309
      %v471 = vpack.c.bf16 %v306, %v307
      %v472 = vpack.c.bf16 %v304, %v305
      %v473 = vld [vmem:[%s1] sm:$0xf]
      %v474 = vld [vmem:[%s1 + $0x4] sm:$0xf]
      %v475 = vld [vmem:[%s1 + $0x8] sm:$0xf]
      %v476 = vld [vmem:[%s1 + $0xc] sm:$0xf]
      %v477 = vld [vmem:[%s1 + $0x10] sm:$0xf]
      %v478 = vld [vmem:[%s1 + $0x14] sm:$0xf]
      %v479 = vld [vmem:[%s1 + $0x18] sm:$0xf]
      %v480 = vld [vmem:[%s1 + $0x1c] sm:$0xf]
      %v481 = vld [vmem:[%s1 + $0x20] sm:$0xf]
      %v482 = vld [vmem:[%s1 + $0x24] sm:$0xf]
      %v483 = vld [vmem:[%s1 + $0x28] sm:$0xf]
      %v484 = vld [vmem:[%s1 + $0x2c] sm:$0xf]
      %v485 = vld [vmem:[%s1 + $0x30] sm:$0xf]
      %v486 = vld [vmem:[%s1 + $0x34] sm:$0xf]
      %v487 = vld [vmem:[%s1 + $0x38] sm:$0xf]
      %v488 = vld [vmem:[%s1 + $0x3c] sm:$0xf]
      %v505 = vunpack.c.l.b16 %v473
      %v506 = vunpack.c.l.b16 %v474
      %v507 = vunpack.c.l.b16 %v475
      %v508 = vunpack.c.l.b16 %v476
      %v509 = vunpack.c.l.b16 %v477
      %v510 = vunpack.c.l.b16 %v478
      %v511 = vunpack.c.l.b16 %v479
      %v512 = vunpack.c.l.b16 %v480
      %v513 = vunpack.c.l.b16 %v481
      %v514 = vunpack.c.l.b16 %v482
      %v515 = vunpack.c.l.b16 %v483
      %v516 = vunpack.c.l.b16 %v484
      %v517 = vunpack.c.l.b16 %v485
      %v518 = vunpack.c.l.b16 %v486
      %v519 = vunpack.c.l.b16 %v487
      %v520 = vunpack.c.l.b16 %v488
      %v521 = vpack.c.b16 %v506, %v505
      %v522 = vpack.c.b16 %v508, %v507
      %v523 = vpack.c.b16 %v510, %v509
      %v524 = vpack.c.b16 %v512, %v511
      %v525 = vpack.c.b16 %v514, %v513
      %v526 = vpack.c.b16 %v516, %v515
      %v527 = vpack.c.b16 %v518, %v517
      %v528 = vpack.c.b16 %v520, %v519
      %537 = vmatprep.subr.bf16.mxu0 0
      %538 = vmatpush1.bf16.msra.mxu0 %v528
      %539 = vmatprep.subr.bf16.mxu0 0
      %540 = vmatpush1.bf16.msra.mxu0 %v527
      %541 = vmatprep.subr.bf16.mxu0 0
      %542 = vmatpush1.bf16.msra.mxu0 %v526
      %543 = vmatprep.subr.bf16.mxu0 0
      %544 = vmatpush1.bf16.msra.mxu0 %v525
      %545 = vmatprep.subr.bf16.mxu0 0
      %546 = vmatpush1.bf16.msra.mxu0 %v524
      %547 = vmatprep.subr.bf16.mxu0 0
      %548 = vmatpush1.bf16.msra.mxu0 %v523
      %549 = vmatprep.subr.bf16.mxu0 0
      %550 = vmatpush1.bf16.msra.mxu0 %v522
      %551 = vmatprep.subr.bf16.mxu0 0
      %552 = vmatpush1.bf16.msra.mxu0 %v521
      %553 = vmatprep.subr.bf16.mxu0 0
      %554 = vmatpush2.bf16.msra.mxu0 0
      %555 = vmatprep.subr.bf16.mxu0 0
      %556 = vmatpush2.bf16.msra.mxu0 0
      %557 = vmatprep.subr.bf16.mxu0 0
      %558 = vmatpush2.bf16.msra.mxu0 0
      %559 = vmatprep.subr.bf16.mxu0 0
      %560 = vmatpush2.bf16.msra.mxu0 0
      %561 = vmatprep.subr.bf16.mxu0 0
      %562 = vmatpush2.bf16.msra.mxu0 0
      %563 = vmatprep.subr.bf16.mxu0 0
      %564 = vmatpush2.bf16.msra.mxu0 0
      %565 = vmatprep.subr.bf16.mxu0 0
      %566 = vmatpush2.bf16.msra.mxu0 0
      %567 = vmatprep.subr.bf16.mxu0 0
      %568 = vmatpush2.bf16.msra.mxu0 0
      %569 = vmatprep.mubr.bf16.mxu0 0
      %570 = vmatmul.mubr.bf16.gmra.mxu0 %v449
      %v571 = vpop.f32.mrf.mxu0
      %v572 = vadd.f32 0.0, %v571
      %v573 = vpop.f32.mrf.mxu0
      %v574 = vpop.f32.mrf.mxu0
      %v575 = vadd.f32 0.0, %v574
      %v576 = vpop.f32.mrf.mxu0
      %577 = vmatprep.mubr.bf16.mxu0 0
      %578 = vmatmul.mubr.bf16.gmra.mxu0 %v450
      %v579 = vpop.f32.mrf.mxu0
      %v580 = vadd.f32 0.0, %v579
      %v581 = vpop.f32.mrf.mxu0
      %v582 = vpop.f32.mrf.mxu0
      %v583 = vadd.f32 0.0, %v582
      %v584 = vpop.f32.mrf.mxu0
      %585 = vmatprep.mubr.bf16.mxu0 0
      %586 = vmatmul.mubr.bf16.gmra.mxu0 %v451
      %v587 = vpop.f32.mrf.mxu0
      %v588 = vadd.f32 0.0, %v587
      %v589 = vpop.f32.mrf.mxu0
      %v590 = vpop.f32.mrf.mxu0
      %v591 = vadd.f32 0.0, %v590
      %v592 = vpop.f32.mrf.mxu0
      %593 = vmatprep.mubr.bf16.mxu0 0
      %594 = vmatmul.mubr.bf16.gmra.mxu0 %v452
      %v595 = vpop.f32.mrf.mxu0
      %v596 = vadd.f32 0.0, %v595
      %v597 = vpop.f32.mrf.mxu0
      %v598 = vpop.f32.mrf.mxu0
      %v599 = vadd.f32 0.0, %v598
      %v600 = vpop.f32.mrf.mxu0
      %601 = vmatprep.mubr.bf16.mxu0 0
      %602 = vmatmul.mubr.bf16.gmra.mxu0 %v453
      %v603 = vpop.f32.mrf.mxu0
      %v604 = vadd.f32 0.0, %v603
      %v605 = vpop.f32.mrf.mxu0
      %v606 = vpop.f32.mrf.mxu0
      %v607 = vadd.f32 0.0, %v606
      %v608 = vpop.f32.mrf.mxu0
      %609 = vmatprep.mubr.bf16.mxu0 0
      %610 = vmatmul.mubr.bf16.gmra.mxu0 %v454
      %v611 = vpop.f32.mrf.mxu0
      %v612 = vadd.f32 0.0, %v611
      %v613 = vpop.f32.mrf.mxu0
      %v614 = vpop.f32.mrf.mxu0
      %v615 = vadd.f32 0.0, %v614
      %v616 = vpop.f32.mrf.mxu0
      %617 = vmatprep.mubr.bf16.mxu0 0
      %618 = vmatmul.mubr.bf16.gmra.mxu0 %v455
      %v619 = vpop.f32.mrf.mxu0
      %v620 = vadd.f32 0.0, %v619
      %v621 = vpop.f32.mrf.mxu0
      %v622 = vpop.f32.mrf.mxu0
      %v623 = vadd.f32 0.0, %v622
      %v624 = vpop.f32.mrf.mxu0
      %625 = vmatprep.mubr.bf16.mxu0 0
      %626 = vmatmul.mubr.bf16.gmra.mxu0 %v456
      %v627 = vpop.f32.mrf.mxu0
      %v628 = vadd.f32 0.0, %v627
      %v629 = vpop.f32.mrf.mxu0
      %v630 = vpop.f32.mrf.mxu0
      %v631 = vadd.f32 0.0, %v630
      %v632 = vpop.f32.mrf.mxu0
      %633 = vmatprep.mubr.bf16.mxu0 0
      %634 = vmatmul.mubr.bf16.gmra.mxu0 %v457
      %v635 = vpop.f32.mrf.mxu0
      %v636 = vadd.f32 0.0, %v635
      %v637 = vpop.f32.mrf.mxu0
      %v638 = vpop.f32.mrf.mxu0
      %v639 = vadd.f32 0.0, %v638
      %v640 = vpop.f32.mrf.mxu0
      %641 = vmatprep.mubr.bf16.mxu0 0
      %642 = vmatmul.mubr.bf16.gmra.mxu0 %v458
      %v643 = vpop.f32.mrf.mxu0
      %v644 = vadd.f32 0.0, %v643
      %v645 = vpop.f32.mrf.mxu0
      %v646 = vpop.f32.mrf.mxu0
      %v647 = vadd.f32 0.0, %v646
      %v648 = vpop.f32.mrf.mxu0
      %649 = vmatprep.mubr.bf16.mxu0 0
      %650 = vmatmul.mubr.bf16.gmra.mxu0 %v459
      %v651 = vpop.f32.mrf.mxu0
      %v652 = vadd.f32 0.0, %v651
      %v653 = vpop.f32.mrf.mxu0
      %v654 = vpop.f32.mrf.mxu0
      %v655 = vadd.f32 0.0, %v654
      %v656 = vpop.f32.mrf.mxu0
      %657 = vmatprep.mubr.bf16.mxu0 0
      %658 = vmatmul.mubr.bf16.gmra.mxu0 %v460
      %v659 = vpop.f32.mrf.mxu0
      %v660 = vadd.f32 0.0, %v659
      %v661 = vpop.f32.mrf.mxu0
      %v662 = vpop.f32.mrf.mxu0
      %v663 = vadd.f32 0.0, %v662
      %v664 = vpop.f32.mrf.mxu0
      %665 = vmatprep.mubr.bf16.mxu0 0
      %666 = vmatmul.mubr.bf16.gmra.mxu0 %v461
      %v667 = vpop.f32.mrf.mxu0
      %v668 = vadd.f32 0.0, %v667
      %v669 = vpop.f32.mrf.mxu0
      %v670 = vpop.f32.mrf.mxu0
      %v671 = vadd.f32 0.0, %v670
      %v672 = vpop.f32.mrf.mxu0
      %673 = vmatprep.mubr.bf16.mxu0 0
      %674 = vmatmul.mubr.bf16.gmra.mxu0 %v462
      %v675 = vpop.f32.mrf.mxu0
      %v676 = vadd.f32 0.0, %v675
      %v677 = vpop.f32.mrf.mxu0
      %v678 = vpop.f32.mrf.mxu0
      %v679 = vadd.f32 0.0, %v678
      %v680 = vpop.f32.mrf.mxu0
      %681 = vmatprep.mubr.bf16.mxu0 0
      %682 = vmatmul.mubr.bf16.gmra.mxu0 %v463
      %v683 = vpop.f32.mrf.mxu0
      %v684 = vadd.f32 0.0, %v683
      %v685 = vpop.f32.mrf.mxu0
      %v686 = vpop.f32.mrf.mxu0
      %v687 = vadd.f32 0.0, %v686
      %v688 = vpop.f32.mrf.mxu0
      %689 = vmatprep.mubr.bf16.mxu0 0
      %690 = vmatmul.mubr.bf16.gmra.mxu0 %v464
      %v691 = vpop.f32.mrf.mxu0
      %v692 = vadd.f32 0.0, %v691
      %v693 = vpop.f32.mrf.mxu0
      %v694 = vpop.f32.mrf.mxu0
      %v695 = vadd.f32 0.0, %v694
      %v696 = vpop.f32.mrf.mxu0
      %697 = vmatprep.mubr.bf16.mxu0 0
      %698 = vmatmul.mubr.bf16.gmra.mxu0 %v465
      %v699 = vpop.f32.mrf.mxu0
      %v700 = vadd.f32 0.0, %v699
      %v701 = vpop.f32.mrf.mxu0
      %v702 = vpop.f32.mrf.mxu0
      %v703 = vadd.f32 0.0, %v702
      %v704 = vpop.f32.mrf.mxu0
      %705 = vmatprep.mubr.bf16.mxu0 0
      %706 = vmatmul.mubr.bf16.gmra.mxu0 %v466
      %v707 = vpop.f32.mrf.mxu0
      %v708 = vadd.f32 0.0, %v707
      %v709 = vpop.f32.mrf.mxu0
      %v710 = vpop.f32.mrf.mxu0
      %v711 = vadd.f32 0.0, %v710
      %v712 = vpop.f32.mrf.mxu0
      %713 = vmatprep.mubr.bf16.mxu0 0
      %714 = vmatmul.mubr.bf16.gmra.mxu0 %v467
      %v715 = vpop.f32.mrf.mxu0
      %v716 = vadd.f32 0.0, %v715
      %v717 = vpop.f32.mrf.mxu0
      %v718 = vpop.f32.mrf.mxu0
      %v719 = vadd.f32 0.0, %v718
      %v720 = vpop.f32.mrf.mxu0
      %721 = vmatprep.mubr.bf16.mxu0 0
      %722 = vmatmul.mubr.bf16.gmra.mxu0 %v468
      %v723 = vpop.f32.mrf.mxu0
      %v724 = vadd.f32 0.0, %v723
      %v725 = vpop.f32.mrf.mxu0
      %v726 = vpop.f32.mrf.mxu0
      %v727 = vadd.f32 0.0, %v726
      %v728 = vpop.f32.mrf.mxu0
      %729 = vmatprep.mubr.bf16.mxu0 0
      %730 = vmatmul.mubr.bf16.gmra.mxu0 %v469
      %v731 = vpop.f32.mrf.mxu0
      %v732 = vadd.f32 0.0, %v731
      %v733 = vpop.f32.mrf.mxu0
      %v734 = vpop.f32.mrf.mxu0
      %v735 = vadd.f32 0.0, %v734
      %v736 = vpop.f32.mrf.mxu0
      %737 = vmatprep.mubr.bf16.mxu0 0
      %738 = vmatmul.mubr.bf16.gmra.mxu0 %v470
      %v739 = vpop.f32.mrf.mxu0
      %v740 = vadd.f32 0.0, %v739
      %v741 = vpop.f32.mrf.mxu0
      %v742 = vpop.f32.mrf.mxu0
      %v743 = vadd.f32 0.0, %v742
      %v744 = vpop.f32.mrf.mxu0
      %745 = vmatprep.mubr.bf16.mxu0 0
      %746 = vmatmul.mubr.bf16.gmra.mxu0 %v471
      %v747 = vpop.f32.mrf.mxu0
      %v748 = vadd.f32 0.0, %v747
      %v749 = vpop.f32.mrf.mxu0
      %v750 = vpop.f32.mrf.mxu0
      %v751 = vadd.f32 0.0, %v750
      %v752 = vpop.f32.mrf.mxu0
      %753 = vmatprep.mubr.bf16.mxu0 0
      %754 = vmatmul.mubr.bf16.gmra.mxu0 %v472
      %v755 = vpop.f32.mrf.mxu0
      %v756 = vadd.f32 0.0, %v755
      %v757 = vpop.f32.mrf.mxu0
      %v758 = vpop.f32.mrf.mxu0
      %v759 = vadd.f32 0.0, %v758
      %v760 = vpop.f32.mrf.mxu0
      %761 = vdwg.mxu0
      %762 = vst [vmem:[#allocation3] sm:$0xff] %v572
      %763 = vst [vmem:[#allocation3 + $0x8] sm:$0xff] %v575
      %764 = vst [vmem:[#allocation3 + $0x10] sm:$0xff] %v580
      %765 = vst [vmem:[#allocation3 + $0x18] sm:$0xff] %v583
      %766 = vst [vmem:[#allocation3 + $0x20] sm:$0xff] %v588
      %767 = vst [vmem:[#allocation3 + $0x28] sm:$0xff] %v591
      %768 = vst [vmem:[#allocation3 + $0x30] sm:$0xff] %v596
      %769 = vst [vmem:[#allocation3 + $0x38] sm:$0xff] %v599
      %770 = vst [vmem:[#allocation3 + $0x40] sm:$0xff] %v604
      %771 = vst [vmem:[#allocation3 + $0x48] sm:$0xff] %v607
      %772 = vst [vmem:[#allocation3 + $0x50] sm:$0xff] %v612
      %773 = vst [vmem:[#allocation3 + $0x58] sm:$0xff] %v615
      %774 = vst [vmem:[#allocation3 + $0x60] sm:$0xff] %v620
      %775 = vst [vmem:[#allocation3 + $0x68] sm:$0xff] %v623
      %776 = vst [vmem:[#allocation3 + $0x70] sm:$0xff] %v628
      %777 = vst [vmem:[#allocation3 + $0x78] sm:$0xff] %v631
      %778 = vst [vmem:[#allocation3 + $0x80] sm:$0xff] %v636
      %779 = vst [vmem:[#allocation3 + $0x88] sm:$0xff] %v639
      %780 = vst [vmem:[#allocation3 + $0x90] sm:$0xff] %v644
      %781 = vst [vmem:[#allocation3 + $0x98] sm:$0xff] %v647
      %782 = vst [vmem:[#allocation3 + $0xa0] sm:$0xff] %v652
      %783 = vst [vmem:[#allocation3 + $0xa8] sm:$0xff] %v655
      %784 = vst [vmem:[#allocation3 + $0xb0] sm:$0xff] %v660
      %785 = vst [vmem:[#allocation3 + $0xb8] sm:$0xff] %v663
      %786 = vst [vmem:[#allocation3 + $0xc0] sm:$0xff] %v668
      %787 = vst [vmem:[#allocation3 + $0xc8] sm:$0xff] %v671
      %788 = vst [vmem:[#allocation3 + $0xd0] sm:$0xff] %v676
      %789 = vst [vmem:[#allocation3 + $0xd8] sm:$0xff] %v679
      %790 = vst [vmem:[#allocation3 + $0xe0] sm:$0xff] %v684
      %791 = vst [vmem:[#allocation3 + $0xe8] sm:$0xff] %v687
      %792 = vst [vmem:[#allocation3 + $0xf0] sm:$0xff] %v692
      %793 = vst [vmem:[#allocation3 + $0xf8] sm:$0xff] %v695
      %794 = vst [vmem:[#allocation3 + $0x100] sm:$0xff] %v700
      %795 = vst [vmem:[#allocation3 + $0x108] sm:$0xff] %v703
      %796 = vst [vmem:[#allocation3 + $0x110] sm:$0xff] %v708
      %797 = vst [vmem:[#allocation3 + $0x118] sm:$0xff] %v711
      %798 = vst [vmem:[#allocation3 + $0x120] sm:$0xff] %v716
      %799 = vst [vmem:[#allocation3 + $0x128] sm:$0xff] %v719
      %800 = vst [vmem:[#allocation3 + $0x130] sm:$0xff] %v724
      %801 = vst [vmem:[#allocation3 + $0x138] sm:$0xff] %v727
      %802 = vst [vmem:[#allocation3 + $0x140] sm:$0xff] %v732
      %803 = vst [vmem:[#allocation3 + $0x148] sm:$0xff] %v735
      %804 = vst [vmem:[#allocation3 + $0x150] sm:$0xff] %v740
      %805 = vst [vmem:[#allocation3 + $0x158] sm:$0xff] %v743
      %806 = vst [vmem:[#allocation3 + $0x160] sm:$0xff] %v748
      %807 = vst [vmem:[#allocation3 + $0x168] sm:$0xff] %v751
      %808 = vst [vmem:[#allocation3 + $0x170] sm:$0xff] %v756
      %809 = vst [vmem:[#allocation3 + $0x178] sm:$0xff] %v759
      %v810 = vpack.c.bf16 %v206, %v205
      %v811 = vpack.c.bf16 %v208, %v207
      %v812 = vpack.c.bf16 %v210, %v209
      %v813 = vpack.c.bf16 %v212, %v211
      %v814 = vpack.c.bf16 %v214, %v213
      %v815 = vpack.c.bf16 %v216, %v215
      %v816 = vpack.c.bf16 %v218, %v217
      %v817 = vpack.c.bf16 %v220, %v219
      %v818 = vpack.c.bf16 %v222, %v221
      %v819 = vpack.c.bf16 %v224, %v223
      %v820 = vpack.c.bf16 %v226, %v225
      %v821 = vpack.c.bf16 %v228, %v227
      %v822 = vpack.c.bf16 %v230, %v229
      %v823 = vpack.c.bf16 %v232, %v231
      %v824 = vpack.c.bf16 %v234, %v233
      %v825 = vpack.c.bf16 %v236, %v235
      %v826 = vpack.c.bf16 %v238, %v237
      %v827 = vpack.c.bf16 %v240, %v239
      %v828 = vpack.c.bf16 %v242, %v241
      %v829 = vpack.c.bf16 %v244, %v243
      %v830 = vpack.c.bf16 %v246, %v245
      %v831 = vpack.c.bf16 %v248, %v247
      %v832 = vpack.c.bf16 %v250, %v249
      %v833 = vpack.c.bf16 %v252, %v251
      %s834 = scalar_lea.vmem %s1, 64
      %v835 = vld [vmem:[%s834] sm:$0xf]
      %v836 = vld [vmem:[%s834 + $0x4] sm:$0xf]
      %v837 = vld [vmem:[%s834 + $0x8] sm:$0xf]
      %v838 = vld [vmem:[%s834 + $0xc] sm:$0xf]
      %v839 = vld [vmem:[%s834 + $0x10] sm:$0xf]
      %v840 = vld [vmem:[%s834 + $0x14] sm:$0xf]
      %v841 = vld [vmem:[%s834 + $0x18] sm:$0xf]
      %v842 = vld [vmem:[%s834 + $0x1c] sm:$0xf]
      %v843 = vld [vmem:[%s834 + $0x20] sm:$0xf]
      %v844 = vld [vmem:[%s834 + $0x24] sm:$0xf]
      %v845 = vld [vmem:[%s834 + $0x28] sm:$0xf]
      %v846 = vld [vmem:[%s834 + $0x2c] sm:$0xf]
      %v847 = vld [vmem:[%s834 + $0x30] sm:$0xf]
      %v848 = vld [vmem:[%s834 + $0x34] sm:$0xf]
      %v849 = vld [vmem:[%s834 + $0x38] sm:$0xf]
      %v850 = vld [vmem:[%s834 + $0x3c] sm:$0xf]
      %v867 = vunpack.c.l.b16 %v835
      %v868 = vunpack.c.l.b16 %v836
      %v869 = vunpack.c.l.b16 %v837
      %v870 = vunpack.c.l.b16 %v838
      %v871 = vunpack.c.l.b16 %v839
      %v872 = vunpack.c.l.b16 %v840
      %v873 = vunpack.c.l.b16 %v841
      %v874 = vunpack.c.l.b16 %v842
      %v875 = vunpack.c.l.b16 %v843
      %v876 = vunpack.c.l.b16 %v844
      %v877 = vunpack.c.l.b16 %v845
      %v878 = vunpack.c.l.b16 %v846
      %v879 = vunpack.c.l.b16 %v847
      %v880 = vunpack.c.l.b16 %v848
      %v881 = vunpack.c.l.b16 %v849
      %v882 = vunpack.c.l.b16 %v850
      %v883 = vpack.c.b16 %v868, %v867
      %v884 = vpack.c.b16 %v870, %v869
      %v885 = vpack.c.b16 %v872, %v871
      %v886 = vpack.c.b16 %v874, %v873
      %v887 = vpack.c.b16 %v876, %v875
      %v888 = vpack.c.b16 %v878, %v877
      %v889 = vpack.c.b16 %v880, %v879
      %v890 = vpack.c.b16 %v882, %v881
      %899 = vmatprep.subr.bf16.mxu0 0
      %900 = vmatpush1.bf16.msra.mxu0 %v890
      %901 = vmatprep.subr.bf16.mxu0 0
      %902 = vmatpush1.bf16.msra.mxu0 %v889
      %903 = vmatprep.subr.bf16.mxu0 0
      %904 = vmatpush1.bf16.msra.mxu0 %v888
      %905 = vmatprep.subr.bf16.mxu0 0
      %906 = vmatpush1.bf16.msra.mxu0 %v887
      %907 = vmatprep.subr.bf16.mxu0 0
      %908 = vmatpush1.bf16.msra.mxu0 %v886
      %909 = vmatprep.subr.bf16.mxu0 0
      %910 = vmatpush1.bf16.msra.mxu0 %v885
      %911 = vmatprep.subr.bf16.mxu0 0
      %912 = vmatpush1.bf16.msra.mxu0 %v884
      %913 = vmatprep.subr.bf16.mxu0 0
      %914 = vmatpush1.bf16.msra.mxu0 %v883
      %915 = vmatprep.subr.bf16.mxu0 0
      %916 = vmatpush2.bf16.msra.mxu0 0
      %917 = vmatprep.subr.bf16.mxu0 0
      %918 = vmatpush2.bf16.msra.mxu0 0
      %919 = vmatprep.subr.bf16.mxu0 0
      %920 = vmatpush2.bf16.msra.mxu0 0
      %921 = vmatprep.subr.bf16.mxu0 0
      %922 = vmatpush2.bf16.msra.mxu0 0
      %923 = vmatprep.subr.bf16.mxu0 0
      %924 = vmatpush2.bf16.msra.mxu0 0
      %925 = vmatprep.subr.bf16.mxu0 0
      %926 = vmatpush2.bf16.msra.mxu0 0
      %927 = vmatprep.subr.bf16.mxu0 0
      %928 = vmatpush2.bf16.msra.mxu0 0
      %929 = vmatprep.subr.bf16.mxu0 0
      %930 = vmatpush2.bf16.msra.mxu0 0
      %931 = vmatprep.mubr.bf16.mxu0 0
      %932 = vmatmul.mubr.bf16.gmra.mxu0 %v810
      %v933 = vpop.f32.mrf.mxu0
      %v934 = vadd.f32 0.0, %v933
      %v935 = vpop.f32.mrf.mxu0
      %v936 = vpop.f32.mrf.mxu0
      %v937 = vadd.f32 0.0, %v936
      %v938 = vpop.f32.mrf.mxu0
      %939 = vmatprep.mubr.bf16.mxu0 0
      %940 = vmatmul.mubr.bf16.gmra.mxu0 %v811
      %v941 = vpop.f32.mrf.mxu0
      %v942 = vadd.f32 0.0, %v941
      %v943 = vpop.f32.mrf.mxu0
      %v944 = vpop.f32.mrf.mxu0
      %v945 = vadd.f32 0.0, %v944
      %v946 = vpop.f32.mrf.mxu0
      %947 = vmatprep.mubr.bf16.mxu0 0
      %948 = vmatmul.mubr.bf16.gmra.mxu0 %v812
      %v949 = vpop.f32.mrf.mxu0
      %v950 = vadd.f32 0.0, %v949
      %v951 = vpop.f32.mrf.mxu0
      %v952 = vpop.f32.mrf.mxu0
      %v953 = vadd.f32 0.0, %v952
      %v954 = vpop.f32.mrf.mxu0
      %955 = vmatprep.mubr.bf16.mxu0 0
      %956 = vmatmul.mubr.bf16.gmra.mxu0 %v813
      %v957 = vpop.f32.mrf.mxu0
      %v958 = vadd.f32 0.0, %v957
      %v959 = vpop.f32.mrf.mxu0
      %v960 = vpop.f32.mrf.mxu0
      %v961 = vadd.f32 0.0, %v960
      %v962 = vpop.f32.mrf.mxu0
      %963 = vmatprep.mubr.bf16.mxu0 0
      %964 = vmatmul.mubr.bf16.gmra.mxu0 %v814
      %v965 = vpop.f32.mrf.mxu0
      %v966 = vadd.f32 0.0, %v965
      %v967 = vpop.f32.mrf.mxu0
      %v968 = vpop.f32.mrf.mxu0
      %v969 = vadd.f32 0.0, %v968
      %v970 = vpop.f32.mrf.mxu0
      %971 = vmatprep.mubr.bf16.mxu0 0
      %972 = vmatmul.mubr.bf16.gmra.mxu0 %v815
      %v973 = vpop.f32.mrf.mxu0
      %v974 = vadd.f32 0.0, %v973
      %v975 = vpop.f32.mrf.mxu0
      %v976 = vpop.f32.mrf.mxu0
      %v977 = vadd.f32 0.0, %v976
      %v978 = vpop.f32.mrf.mxu0
      %979 = vmatprep.mubr.bf16.mxu0 0
      %980 = vmatmul.mubr.bf16.gmra.mxu0 %v816
      %v981 = vpop.f32.mrf.mxu0
      %v982 = vadd.f32 0.0, %v981
      %v983 = vpop.f32.mrf.mxu0
      %v984 = vpop.f32.mrf.mxu0
      %v985 = vadd.f32 0.0, %v984
      %v986 = vpop.f32.mrf.mxu0
      %987 = vmatprep.mubr.bf16.mxu0 0
      %988 = vmatmul.mubr.bf16.gmra.mxu0 %v817
      %v989 = vpop.f32.mrf.mxu0
      %v990 = vadd.f32 0.0, %v989
      %v991 = vpop.f32.mrf.mxu0
      %v992 = vpop.f32.mrf.mxu0
      %v993 = vadd.f32 0.0, %v992
      %v994 = vpop.f32.mrf.mxu0
      %995 = vmatprep.mubr.bf16.mxu0 0
      %996 = vmatmul.mubr.bf16.gmra.mxu0 %v818
      %v997 = vpop.f32.mrf.mxu0
      %v998 = vadd.f32 0.0, %v997
      %v999 = vpop.f32.mrf.mxu0
      %v1000 = vpop.f32.mrf.mxu0
      %v1001 = vadd.f32 0.0, %v1000
      %v1002 = vpop.f32.mrf.mxu0
      %1003 = vmatprep.mubr.bf16.mxu0 0
      %1004 = vmatmul.mubr.bf16.gmra.mxu0 %v819
      %v1005 = vpop.f32.mrf.mxu0
      %v1006 = vadd.f32 0.0, %v1005
      %v1007 = vpop.f32.mrf.mxu0
      %v1008 = vpop.f32.mrf.mxu0
      %v1009 = vadd.f32 0.0, %v1008
      %v1010 = vpop.f32.mrf.mxu0
      %1011 = vmatprep.mubr.bf16.mxu0 0
      %1012 = vmatmul.mubr.bf16.gmra.mxu0 %v820
      %v1013 = vpop.f32.mrf.mxu0
      %v1014 = vadd.f32 0.0, %v1013
      %v1015 = vpop.f32.mrf.mxu0
      %v1016 = vpop.f32.mrf.mxu0
      %v1017 = vadd.f32 0.0, %v1016
      %v1018 = vpop.f32.mrf.mxu0
      %1019 = vmatprep.mubr.bf16.mxu0 0
      %1020 = vmatmul.mubr.bf16.gmra.mxu0 %v821
      %v1021 = vpop.f32.mrf.mxu0
      %v1022 = vadd.f32 0.0, %v1021
      %v1023 = vpop.f32.mrf.mxu0
      %v1024 = vpop.f32.mrf.mxu0
      %v1025 = vadd.f32 0.0, %v1024
      %v1026 = vpop.f32.mrf.mxu0
      %1027 = vmatprep.mubr.bf16.mxu0 0
      %1028 = vmatmul.mubr.bf16.gmra.mxu0 %v822
      %v1029 = vpop.f32.mrf.mxu0
      %v1030 = vadd.f32 0.0, %v1029
      %v1031 = vpop.f32.mrf.mxu0
      %v1032 = vpop.f32.mrf.mxu0
      %v1033 = vadd.f32 0.0, %v1032
      %v1034 = vpop.f32.mrf.mxu0
      %1035 = vmatprep.mubr.bf16.mxu0 0
      %1036 = vmatmul.mubr.bf16.gmra.mxu0 %v823
      %v1037 = vpop.f32.mrf.mxu0
      %v1038 = vadd.f32 0.0, %v1037
      %v1039 = vpop.f32.mrf.mxu0
      %v1040 = vpop.f32.mrf.mxu0
      %v1041 = vadd.f32 0.0, %v1040
      %v1042 = vpop.f32.mrf.mxu0
      %1043 = vmatprep.mubr.bf16.mxu0 0
      %1044 = vmatmul.mubr.bf16.gmra.mxu0 %v824
      %v1045 = vpop.f32.mrf.mxu0
      %v1046 = vadd.f32 0.0, %v1045
      %v1047 = vpop.f32.mrf.mxu0
      %v1048 = vpop.f32.mrf.mxu0
      %v1049 = vadd.f32 0.0, %v1048
      %v1050 = vpop.f32.mrf.mxu0
      %1051 = vmatprep.mubr.bf16.mxu0 0
      %1052 = vmatmul.mubr.bf16.gmra.mxu0 %v825
      %v1053 = vpop.f32.mrf.mxu0
      %v1054 = vadd.f32 0.0, %v1053
      %v1055 = vpop.f32.mrf.mxu0
      %v1056 = vpop.f32.mrf.mxu0
      %v1057 = vadd.f32 0.0, %v1056
      %v1058 = vpop.f32.mrf.mxu0
      %1059 = vmatprep.mubr.bf16.mxu0 0
      %1060 = vmatmul.mubr.bf16.gmra.mxu0 %v826
      %v1061 = vpop.f32.mrf.mxu0
      %v1062 = vadd.f32 0.0, %v1061
      %v1063 = vpop.f32.mrf.mxu0
      %v1064 = vpop.f32.mrf.mxu0
      %v1065 = vadd.f32 0.0, %v1064
      %v1066 = vpop.f32.mrf.mxu0
      %1067 = vmatprep.mubr.bf16.mxu0 0
      %1068 = vmatmul.mubr.bf16.gmra.mxu0 %v827
      %v1069 = vpop.f32.mrf.mxu0
      %v1070 = vadd.f32 0.0, %v1069
      %v1071 = vpop.f32.mrf.mxu0
      %v1072 = vpop.f32.mrf.mxu0
      %v1073 = vadd.f32 0.0, %v1072
      %v1074 = vpop.f32.mrf.mxu0
      %1075 = vmatprep.mubr.bf16.mxu0 0
      %1076 = vmatmul.mubr.bf16.gmra.mxu0 %v828
      %v1077 = vpop.f32.mrf.mxu0
      %v1078 = vadd.f32 0.0, %v1077
      %v1079 = vpop.f32.mrf.mxu0
      %v1080 = vpop.f32.mrf.mxu0
      %v1081 = vadd.f32 0.0, %v1080
      %v1082 = vpop.f32.mrf.mxu0
      %1083 = vmatprep.mubr.bf16.mxu0 0
      %1084 = vmatmul.mubr.bf16.gmra.mxu0 %v829
      %v1085 = vpop.f32.mrf.mxu0
      %v1086 = vadd.f32 0.0, %v1085
      %v1087 = vpop.f32.mrf.mxu0
      %v1088 = vpop.f32.mrf.mxu0
      %v1089 = vadd.f32 0.0, %v1088
      %v1090 = vpop.f32.mrf.mxu0
      %1091 = vmatprep.mubr.bf16.mxu0 0
      %1092 = vmatmul.mubr.bf16.gmra.mxu0 %v830
      %v1093 = vpop.f32.mrf.mxu0
      %v1094 = vadd.f32 0.0, %v1093
      %v1095 = vpop.f32.mrf.mxu0
      %v1096 = vpop.f32.mrf.mxu0
      %v1097 = vadd.f32 0.0, %v1096
      %v1098 = vpop.f32.mrf.mxu0
      %1099 = vmatprep.mubr.bf16.mxu0 0
      %1100 = vmatmul.mubr.bf16.gmra.mxu0 %v831
      %v1101 = vpop.f32.mrf.mxu0
      %v1102 = vadd.f32 0.0, %v1101
      %v1103 = vpop.f32.mrf.mxu0
      %v1104 = vpop.f32.mrf.mxu0
      %v1105 = vadd.f32 0.0, %v1104
      %v1106 = vpop.f32.mrf.mxu0
      %1107 = vmatprep.mubr.bf16.mxu0 0
      %1108 = vmatmul.mubr.bf16.gmra.mxu0 %v832
      %v1109 = vpop.f32.mrf.mxu0
      %v1110 = vadd.f32 0.0, %v1109
      %v1111 = vpop.f32.mrf.mxu0
      %v1112 = vpop.f32.mrf.mxu0
      %v1113 = vadd.f32 0.0, %v1112
      %v1114 = vpop.f32.mrf.mxu0
      %1115 = vmatprep.mubr.bf16.mxu0 0
      %1116 = vmatmul.mubr.bf16.gmra.mxu0 %v833
      %v1117 = vpop.f32.mrf.mxu0
      %v1118 = vadd.f32 0.0, %v1117
      %v1119 = vpop.f32.mrf.mxu0
      %v1120 = vpop.f32.mrf.mxu0
      %v1121 = vadd.f32 0.0, %v1120
      %v1122 = vpop.f32.mrf.mxu0
      %1123 = vdwg.mxu0
      %v1124 = vld [vmem:[#allocation3] sm:$0xff]
      %v1125 = vld [vmem:[#allocation3 + $0x8] sm:$0xff]
      %v1126 = vld [vmem:[#allocation3 + $0x10] sm:$0xff]
      %v1127 = vld [vmem:[#allocation3 + $0x18] sm:$0xff]
      %v1128 = vld [vmem:[#allocation3 + $0x20] sm:$0xff]
      %v1129 = vld [vmem:[#allocation3 + $0x28] sm:$0xff]
      %v1130 = vld [vmem:[#allocation3 + $0x30] sm:$0xff]
      %v1131 = vld [vmem:[#allocation3 + $0x38] sm:$0xff]
      %v1132 = vld [vmem:[#allocation3 + $0x40] sm:$0xff]
      %v1133 = vld [vmem:[#allocation3 + $0x48] sm:$0xff]
      %v1134 = vld [vmem:[#allocation3 + $0x50] sm:$0xff]
      %v1135 = vld [vmem:[#allocation3 + $0x58] sm:$0xff]
      %v1136 = vld [vmem:[#allocation3 + $0x60] sm:$0xff]
      %v1137 = vld [vmem:[#allocation3 + $0x68] sm:$0xff]
      %v1138 = vld [vmem:[#allocation3 + $0x70] sm:$0xff]
      %v1139 = vld [vmem:[#allocation3 + $0x78] sm:$0xff]
      %v1140 = vld [vmem:[#allocation3 + $0x80] sm:$0xff]
      %v1141 = vld [vmem:[#allocation3 + $0x88] sm:$0xff]
      %v1142 = vld [vmem:[#allocation3 + $0x90] sm:$0xff]
      %v1143 = vld [vmem:[#allocation3 + $0x98] sm:$0xff]
      %v1144 = vld [vmem:[#allocation3 + $0xa0] sm:$0xff]
      %v1145 = vld [vmem:[#allocation3 + $0xa8] sm:$0xff]
      %v1146 = vld [vmem:[#allocation3 + $0xb0] sm:$0xff]
      %v1147 = vld [vmem:[#allocation3 + $0xb8] sm:$0xff]
      %v1148 = vld [vmem:[#allocation3 + $0xc0] sm:$0xff]
      %v1149 = vld [vmem:[#allocation3 + $0xc8] sm:$0xff]
      %v1150 = vld [vmem:[#allocation3 + $0xd0] sm:$0xff]
      %v1151 = vld [vmem:[#allocation3 + $0xd8] sm:$0xff]
      %v1152 = vld [vmem:[#allocation3 + $0xe0] sm:$0xff]
      %v1153 = vld [vmem:[#allocation3 + $0xe8] sm:$0xff]
      %v1154 = vld [vmem:[#allocation3 + $0xf0] sm:$0xff]
      %v1155 = vld [vmem:[#allocation3 + $0xf8] sm:$0xff]
      %v1156 = vld [vmem:[#allocation3 + $0x100] sm:$0xff]
      %v1157 = vld [vmem:[#allocation3 + $0x108] sm:$0xff]
      %v1158 = vld [vmem:[#allocation3 + $0x110] sm:$0xff]
      %v1159 = vld [vmem:[#allocation3 + $0x118] sm:$0xff]
      %v1160 = vld [vmem:[#allocation3 + $0x120] sm:$0xff]
      %v1161 = vld [vmem:[#allocation3 + $0x128] sm:$0xff]
      %v1162 = vld [vmem:[#allocation3 + $0x130] sm:$0xff]
      %v1163 = vld [vmem:[#allocation3 + $0x138] sm:$0xff]
      %v1164 = vld [vmem:[#allocation3 + $0x140] sm:$0xff]
      %v1165 = vld [vmem:[#allocation3 + $0x148] sm:$0xff]
      %v1166 = vld [vmem:[#allocation3 + $0x150] sm:$0xff]
      %v1167 = vld [vmem:[#allocation3 + $0x158] sm:$0xff]
      %v1168 = vld [vmem:[#allocation3 + $0x160] sm:$0xff]
      %v1169 = vld [vmem:[#allocation3 + $0x168] sm:$0xff]
      %v1170 = vld [vmem:[#allocation3 + $0x170] sm:$0xff]
      %v1171 = vld [vmem:[#allocation3 + $0x178] sm:$0xff]
      %v1172 = vadd.f32 %v1124, %v934
      %v1173 = vadd.f32 %v1125, %v937
      %v1174 = vadd.f32 %v1126, %v942
      %v1175 = vadd.f32 %v1127, %v945
      %v1176 = vadd.f32 %v1128, %v950
      %v1177 = vadd.f32 %v1129, %v953
      %v1178 = vadd.f32 %v1130, %v958
      %v1179 = vadd.f32 %v1131, %v961
      %v1180 = vadd.f32 %v1132, %v966
      %v1181 = vadd.f32 %v1133, %v969
      %v1182 = vadd.f32 %v1134, %v974
      %v1183 = vadd.f32 %v1135, %v977
      %v1184 = vadd.f32 %v1136, %v982
      %v1185 = vadd.f32 %v1137, %v985
      %v1186 = vadd.f32 %v1138, %v990
      %v1187 = vadd.f32 %v1139, %v993
      %v1188 = vadd.f32 %v1140, %v998
      %v1189 = vadd.f32 %v1141, %v1001
      %v1190 = vadd.f32 %v1142, %v1006
      %v1191 = vadd.f32 %v1143, %v1009
      %v1192 = vadd.f32 %v1144, %v1014
      %v1193 = vadd.f32 %v1145, %v1017
      %v1194 = vadd.f32 %v1146, %v1022
      %v1195 = vadd.f32 %v1147, %v1025
      %v1196 = vadd.f32 %v1148, %v1030
      %v1197 = vadd.f32 %v1149, %v1033
      %v1198 = vadd.f32 %v1150, %v1038
      %v1199 = vadd.f32 %v1151, %v1041
      %v1200 = vadd.f32 %v1152, %v1046
      %v1201 = vadd.f32 %v1153, %v1049
      %v1202 = vadd.f32 %v1154, %v1054
      %v1203 = vadd.f32 %v1155, %v1057
      %v1204 = vadd.f32 %v1156, %v1062
      %v1205 = vadd.f32 %v1157, %v1065
      %v1206 = vadd.f32 %v1158, %v1070
      %v1207 = vadd.f32 %v1159, %v1073
      %v1208 = vadd.f32 %v1160, %v1078
      %v1209 = vadd.f32 %v1161, %v1081
      %v1210 = vadd.f32 %v1162, %v1086
      %v1211 = vadd.f32 %v1163, %v1089
      %v1212 = vadd.f32 %v1164, %v1094
      %v1213 = vadd.f32 %v1165, %v1097
      %v1214 = vadd.f32 %v1166, %v1102
      %v1215 = vadd.f32 %v1167, %v1105
      %v1216 = vadd.f32 %v1168, %v1110
      %v1217 = vadd.f32 %v1169, %v1113
      %v1218 = vadd.f32 %v1170, %v1118
      %v1219 = vadd.f32 %v1171, %v1121
      %1220 = vst [vmem:[#allocation3] sm:$0xff] %v1172
      %1221 = vst [vmem:[#allocation3 + $0x8] sm:$0xff] %v1173
      %1222 = vst [vmem:[#allocation3 + $0x10] sm:$0xff] %v1174
      %1223 = vst [vmem:[#allocation3 + $0x18] sm:$0xff] %v1175
      %1224 = vst [vmem:[#allocation3 + $0x20] sm:$0xff] %v1176
      %1225 = vst [vmem:[#allocation3 + $0x28] sm:$0xff] %v1177
      %1226 = vst [vmem:[#allocation3 + $0x30] sm:$0xff] %v1178
      %1227 = vst [vmem:[#allocation3 + $0x38] sm:$0xff] %v1179
      %1228 = vst [vmem:[#allocation3 + $0x40] sm:$0xff] %v1180
      %1229 = vst [vmem:[#allocation3 + $0x48] sm:$0xff] %v1181
      %1230 = vst [vmem:[#allocation3 + $0x50] sm:$0xff] %v1182
      %1231 = vst [vmem:[#allocation3 + $0x58] sm:$0xff] %v1183
      %1232 = vst [vmem:[#allocation3 + $0x60] sm:$0xff] %v1184
      %1233 = vst [vmem:[#allocation3 + $0x68] sm:$0xff] %v1185
      %1234 = vst [vmem:[#allocation3 + $0x70] sm:$0xff] %v1186
      %1235 = vst [vmem:[#allocation3 + $0x78] sm:$0xff] %v1187
      %1236 = vst [vmem:[#allocation3 + $0x80] sm:$0xff] %v1188
      %1237 = vst [vmem:[#allocation3 + $0x88] sm:$0xff] %v1189
      %1238 = vst [vmem:[#allocation3 + $0x90] sm:$0xff] %v1190
      %1239 = vst [vmem:[#allocation3 + $0x98] sm:$0xff] %v1191
      %1240 = vst [vmem:[#allocation3 + $0xa0] sm:$0xff] %v1192
      %1241 = vst [vmem:[#allocation3 + $0xa8] sm:$0xff] %v1193
      %1242 = vst [vmem:[#allocation3 + $0xb0] sm:$0xff] %v1194
      %1243 = vst [vmem:[#allocation3 + $0xb8] sm:$0xff] %v1195
      %1244 = vst [vmem:[#allocation3 + $0xc0] sm:$0xff] %v1196
      %1245 = vst [vmem:[#allocation3 + $0xc8] sm:$0xff] %v1197
      %1246 = vst [vmem:[#allocation3 + $0xd0] sm:$0xff] %v1198
      %1247 = vst [vmem:[#allocation3 + $0xd8] sm:$0xff] %v1199
      %1248 = vst [vmem:[#allocation3 + $0xe0] sm:$0xff] %v1200
      %1249 = vst [vmem:[#allocation3 + $0xe8] sm:$0xff] %v1201
      %1250 = vst [vmem:[#allocation3 + $0xf0] sm:$0xff] %v1202
      %1251 = vst [vmem:[#allocation3 + $0xf8] sm:$0xff] %v1203
      %1252 = vst [vmem:[#allocation3 + $0x100] sm:$0xff] %v1204
      %1253 = vst [vmem:[#allocation3 + $0x108] sm:$0xff] %v1205
      %1254 = vst [vmem:[#allocation3 + $0x110] sm:$0xff] %v1206
      %1255 = vst [vmem:[#allocation3 + $0x118] sm:$0xff] %v1207
      %1256 = vst [vmem:[#allocation3 + $0x120] sm:$0xff] %v1208
      %1257 = vst [vmem:[#allocation3 + $0x128] sm:$0xff] %v1209
      %1258 = vst [vmem:[#allocation3 + $0x130] sm:$0xff] %v1210
      %1259 = vst [vmem:[#allocation3 + $0x138] sm:$0xff] %v1211
      %1260 = vst [vmem:[#allocation3 + $0x140] sm:$0xff] %v1212
      %1261 = vst [vmem:[#allocation3 + $0x148] sm:$0xff] %v1213
      %1262 = vst [vmem:[#allocation3 + $0x150] sm:$0xff] %v1214
      %1263 = vst [vmem:[#allocation3 + $0x158] sm:$0xff] %v1215
      %1264 = vst [vmem:[#allocation3 + $0x160] sm:$0xff] %v1216
      %1265 = vst [vmem:[#allocation3 + $0x168] sm:$0xff] %v1217
      %1266 = vst [vmem:[#allocation3 + $0x170] sm:$0xff] %v1218
      %1267 = vst [vmem:[#allocation3 + $0x178] sm:$0xff] %v1219
      %v1268 = vpack.c.bf16 %v446, %v447
      %v1269 = vpack.c.bf16 %v444, %v445
      %v1270 = vpack.c.bf16 %v442, %v443
      %v1271 = vpack.c.bf16 %v440, %v441
      %v1272 = vpack.c.bf16 %v438, %v439
      %v1273 = vpack.c.bf16 %v436, %v437
      %v1274 = vpack.c.bf16 %v434, %v435
      %v1275 = vpack.c.bf16 %v432, %v433
      %v1276 = vpack.c.bf16 %v430, %v431
      %v1277 = vpack.c.bf16 %v428, %v429
      %v1278 = vpack.c.bf16 %v426, %v427
      %v1279 = vpack.c.bf16 %v424, %v425
      %v1280 = vpack.c.bf16 %v422, %v423
      %v1281 = vpack.c.bf16 %v420, %v421
      %v1282 = vpack.c.bf16 %v418, %v419
      %v1283 = vpack.c.bf16 %v416, %v417
      %v1284 = vpack.c.bf16 %v414, %v415
      %v1285 = vpack.c.bf16 %v412, %v413
      %v1286 = vpack.c.bf16 %v410, %v411
      %v1287 = vpack.c.bf16 %v408, %v409
      %v1288 = vpack.c.bf16 %v406, %v407
      %v1289 = vpack.c.bf16 %v404, %v405
      %v1290 = vpack.c.bf16 %v402, %v403
      %v1291 = vpack.c.bf16 %v448, %v401
      %s1292 = scalar_lea.vmem %s1, 128
      %v1293 = vld [vmem:[%s1292] sm:$0xf]
      %v1294 = vld [vmem:[%s1292 + $0x4] sm:$0xf]
      %v1295 = vld [vmem:[%s1292 + $0x8] sm:$0xf]
      %v1296 = vld [vmem:[%s1292 + $0xc] sm:$0xf]
      %v1297 = vld [vmem:[%s1292 + $0x10] sm:$0xf]
      %v1298 = vld [vmem:[%s1292 + $0x14] sm:$0xf]
      %v1299 = vld [vmem:[%s1292 + $0x18] sm:$0xf]
      %v1300 = vld [vmem:[%s1292 + $0x1c] sm:$0xf]
      %v1301 = vld [vmem:[%s1292 + $0x20] sm:$0xf]
      %v1302 = vld [vmem:[%s1292 + $0x24] sm:$0xf]
      %v1303 = vld [vmem:[%s1292 + $0x28] sm:$0xf]
      %v1304 = vld [vmem:[%s1292 + $0x2c] sm:$0xf]
      %v1305 = vld [vmem:[%s1292 + $0x30] sm:$0xf]
      %v1306 = vld [vmem:[%s1292 + $0x34] sm:$0xf]
      %v1307 = vld [vmem:[%s1292 + $0x38] sm:$0xf]
      %v1308 = vld [vmem:[%s1292 + $0x3c] sm:$0xf]
      %v1325 = vunpack.c.l.b16 %v1293
      %v1326 = vunpack.c.l.b16 %v1294
      %v1327 = vunpack.c.l.b16 %v1295
      %v1328 = vunpack.c.l.b16 %v1296
      %v1329 = vunpack.c.l.b16 %v1297
      %v1330 = vunpack.c.l.b16 %v1298
      %v1331 = vunpack.c.l.b16 %v1299
      %v1332 = vunpack.c.l.b16 %v1300
      %v1333 = vunpack.c.l.b16 %v1301
      %v1334 = vunpack.c.l.b16 %v1302
      %v1335 = vunpack.c.l.b16 %v1303
      %v1336 = vunpack.c.l.b16 %v1304
      %v1337 = vunpack.c.l.b16 %v1305
      %v1338 = vunpack.c.l.b16 %v1306
      %v1339 = vunpack.c.l.b16 %v1307
      %v1340 = vunpack.c.l.b16 %v1308
      %v1341 = vpack.c.b16 %v1326, %v1325
      %v1342 = vpack.c.b16 %v1328, %v1327
      %v1343 = vpack.c.b16 %v1330, %v1329
      %v1344 = vpack.c.b16 %v1332, %v1331
      %v1345 = vpack.c.b16 %v1334, %v1333
      %v1346 = vpack.c.b16 %v1336, %v1335
      %v1347 = vpack.c.b16 %v1338, %v1337
      %v1348 = vpack.c.b16 %v1340, %v1339
      %1357 = vmatprep.subr.bf16.mxu0 0
      %1358 = vmatpush1.bf16.msra.mxu0 %v1348
      %1359 = vmatprep.subr.bf16.mxu0 0
      %1360 = vmatpush1.bf16.msra.mxu0 %v1347
      %1361 = vmatprep.subr.bf16.mxu0 0
      %1362 = vmatpush1.bf16.msra.mxu0 %v1346
      %1363 = vmatprep.subr.bf16.mxu0 0
      %1364 = vmatpush1.bf16.msra.mxu0 %v1345
      %1365 = vmatprep.subr.bf16.mxu0 0
      %1366 = vmatpush1.bf16.msra.mxu0 %v1344
      %1367 = vmatprep.subr.bf16.mxu0 0
      %1368 = vmatpush1.bf16.msra.mxu0 %v1343
      %1369 = vmatprep.subr.bf16.mxu0 0
      %1370 = vmatpush1.bf16.msra.mxu0 %v1342
      %1371 = vmatprep.subr.bf16.mxu0 0
      %1372 = vmatpush1.bf16.msra.mxu0 %v1341
      %1373 = vmatprep.subr.bf16.mxu0 0
      %1374 = vmatpush2.bf16.msra.mxu0 0
      %1375 = vmatprep.subr.bf16.mxu0 0
      %1376 = vmatpush2.bf16.msra.mxu0 0
      %1377 = vmatprep.subr.bf16.mxu0 0
      %1378 = vmatpush2.bf16.msra.mxu0 0
      %1379 = vmatprep.subr.bf16.mxu0 0
      %1380 = vmatpush2.bf16.msra.mxu0 0
      %1381 = vmatprep.subr.bf16.mxu0 0
      %1382 = vmatpush2.bf16.msra.mxu0 0
      %1383 = vmatprep.subr.bf16.mxu0 0
      %1384 = vmatpush2.bf16.msra.mxu0 0
      %1385 = vmatprep.subr.bf16.mxu0 0
      %1386 = vmatpush2.bf16.msra.mxu0 0
      %1387 = vmatprep.subr.bf16.mxu0 0
      %1388 = vmatpush2.bf16.msra.mxu0 0
      %1389 = vmatprep.mubr.bf16.mxu0 0
      %1390 = vmatmul.mubr.bf16.gmra.mxu0 %v1268
      %v1391 = vpop.f32.mrf.mxu0
      %v1392 = vadd.f32 0.0, %v1391
      %v1393 = vpop.f32.mrf.mxu0
      %v1394 = vpop.f32.mrf.mxu0
      %v1395 = vadd.f32 0.0, %v1394
      %v1396 = vpop.f32.mrf.mxu0
      %1397 = vmatprep.mubr.bf16.mxu0 0
      %1398 = vmatmul.mubr.bf16.gmra.mxu0 %v1269
      %v1399 = vpop.f32.mrf.mxu0
      %v1400 = vadd.f32 0.0, %v1399
      %v1401 = vpop.f32.mrf.mxu0
      %v1402 = vpop.f32.mrf.mxu0
      %v1403 = vadd.f32 0.0, %v1402
      %v1404 = vpop.f32.mrf.mxu0
      %1405 = vmatprep.mubr.bf16.mxu0 0
      %1406 = vmatmul.mubr.bf16.gmra.mxu0 %v1270
      %v1407 = vpop.f32.mrf.mxu0
      %v1408 = vadd.f32 0.0, %v1407
      %v1409 = vpop.f32.mrf.mxu0
      %v1410 = vpop.f32.mrf.mxu0
      %v1411 = vadd.f32 0.0, %v1410
      %v1412 = vpop.f32.mrf.mxu0
      %1413 = vmatprep.mubr.bf16.mxu0 0
      %1414 = vmatmul.mubr.bf16.gmra.mxu0 %v1271
      %v1415 = vpop.f32.mrf.mxu0
      %v1416 = vadd.f32 0.0, %v1415
      %v1417 = vpop.f32.mrf.mxu0
      %v1418 = vpop.f32.mrf.mxu0
      %v1419 = vadd.f32 0.0, %v1418
      %v1420 = vpop.f32.mrf.mxu0
      %1421 = vmatprep.mubr.bf16.mxu0 0
      %1422 = vmatmul.mubr.bf16.gmra.mxu0 %v1272
      %v1423 = vpop.f32.mrf.mxu0
      %v1424 = vadd.f32 0.0, %v1423
      %v1425 = vpop.f32.mrf.mxu0
      %v1426 = vpop.f32.mrf.mxu0
      %v1427 = vadd.f32 0.0, %v1426
      %v1428 = vpop.f32.mrf.mxu0
      %1429 = vmatprep.mubr.bf16.mxu0 0
      %1430 = vmatmul.mubr.bf16.gmra.mxu0 %v1273
      %v1431 = vpop.f32.mrf.mxu0
      %v1432 = vadd.f32 0.0, %v1431
      %v1433 = vpop.f32.mrf.mxu0
      %v1434 = vpop.f32.mrf.mxu0
      %v1435 = vadd.f32 0.0, %v1434
      %v1436 = vpop.f32.mrf.mxu0
      %1437 = vmatprep.mubr.bf16.mxu0 0
      %1438 = vmatmul.mubr.bf16.gmra.mxu0 %v1274
      %v1439 = vpop.f32.mrf.mxu0
      %v1440 = vadd.f32 0.0, %v1439
      %v1441 = vpop.f32.mrf.mxu0
      %v1442 = vpop.f32.mrf.mxu0
      %v1443 = vadd.f32 0.0, %v1442
      %v1444 = vpop.f32.mrf.mxu0
      %1445 = vmatprep.mubr.bf16.mxu0 0
      %1446 = vmatmul.mubr.bf16.gmra.mxu0 %v1275
      %v1447 = vpop.f32.mrf.mxu0
      %v1448 = vadd.f32 0.0, %v1447
      %v1449 = vpop.f32.mrf.mxu0
      %v1450 = vpop.f32.mrf.mxu0
      %v1451 = vadd.f32 0.0, %v1450
      %v1452 = vpop.f32.mrf.mxu0
      %1453 = vmatprep.mubr.bf16.mxu0 0
      %1454 = vmatmul.mubr.bf16.gmra.mxu0 %v1276
      %v1455 = vpop.f32.mrf.mxu0
      %v1456 = vadd.f32 0.0, %v1455
      %v1457 = vpop.f32.mrf.mxu0
      %v1458 = vpop.f32.mrf.mxu0
      %v1459 = vadd.f32 0.0, %v1458
      %v1460 = vpop.f32.mrf.mxu0
      %1461 = vmatprep.mubr.bf16.mxu0 0
      %1462 = vmatmul.mubr.bf16.gmra.mxu0 %v1277
      %v1463 = vpop.f32.mrf.mxu0
      %v1464 = vadd.f32 0.0, %v1463
      %v1465 = vpop.f32.mrf.mxu0
      %v1466 = vpop.f32.mrf.mxu0
      %v1467 = vadd.f32 0.0, %v1466
      %v1468 = vpop.f32.mrf.mxu0
      %1469 = vmatprep.mubr.bf16.mxu0 0
      %1470 = vmatmul.mubr.bf16.gmra.mxu0 %v1278
      %v1471 = vpop.f32.mrf.mxu0
      %v1472 = vadd.f32 0.0, %v1471
      %v1473 = vpop.f32.mrf.mxu0
      %v1474 = vpop.f32.mrf.mxu0
      %v1475 = vadd.f32 0.0, %v1474
      %v1476 = vpop.f32.mrf.mxu0
      %1477 = vmatprep.mubr.bf16.mxu0 0
      %1478 = vmatmul.mubr.bf16.gmra.mxu0 %v1279
      %v1479 = vpop.f32.mrf.mxu0
      %v1480 = vadd.f32 0.0, %v1479
      %v1481 = vpop.f32.mrf.mxu0
      %v1482 = vpop.f32.mrf.mxu0
      %v1483 = vadd.f32 0.0, %v1482
      %v1484 = vpop.f32.mrf.mxu0
      %1485 = vmatprep.mubr.bf16.mxu0 0
      %1486 = vmatmul.mubr.bf16.gmra.mxu0 %v1280
      %v1487 = vpop.f32.mrf.mxu0
      %v1488 = vadd.f32 0.0, %v1487
      %v1489 = vpop.f32.mrf.mxu0
      %v1490 = vpop.f32.mrf.mxu0
      %v1491 = vadd.f32 0.0, %v1490
      %v1492 = vpop.f32.mrf.mxu0
      %1493 = vmatprep.mubr.bf16.mxu0 0
      %1494 = vmatmul.mubr.bf16.gmra.mxu0 %v1281
      %v1495 = vpop.f32.mrf.mxu0
      %v1496 = vadd.f32 0.0, %v1495
      %v1497 = vpop.f32.mrf.mxu0
      %v1498 = vpop.f32.mrf.mxu0
      %v1499 = vadd.f32 0.0, %v1498
      %v1500 = vpop.f32.mrf.mxu0
      %1501 = vmatprep.mubr.bf16.mxu0 0
      %1502 = vmatmul.mubr.bf16.gmra.mxu0 %v1282
      %v1503 = vpop.f32.mrf.mxu0
      %v1504 = vadd.f32 0.0, %v1503
      %v1505 = vpop.f32.mrf.mxu0
      %v1506 = vpop.f32.mrf.mxu0
      %v1507 = vadd.f32 0.0, %v1506
      %v1508 = vpop.f32.mrf.mxu0
      %1509 = vmatprep.mubr.bf16.mxu0 0
      %1510 = vmatmul.mubr.bf16.gmra.mxu0 %v1283
      %v1511 = vpop.f32.mrf.mxu0
      %v1512 = vadd.f32 0.0, %v1511
      %v1513 = vpop.f32.mrf.mxu0
      %v1514 = vpop.f32.mrf.mxu0
      %v1515 = vadd.f32 0.0, %v1514
      %v1516 = vpop.f32.mrf.mxu0
      %1517 = vmatprep.mubr.bf16.mxu0 0
      %1518 = vmatmul.mubr.bf16.gmra.mxu0 %v1284
      %v1519 = vpop.f32.mrf.mxu0
      %v1520 = vadd.f32 0.0, %v1519
      %v1521 = vpop.f32.mrf.mxu0
      %v1522 = vpop.f32.mrf.mxu0
      %v1523 = vadd.f32 0.0, %v1522
      %v1524 = vpop.f32.mrf.mxu0
      %1525 = vmatprep.mubr.bf16.mxu0 0
      %1526 = vmatmul.mubr.bf16.gmra.mxu0 %v1285
      %v1527 = vpop.f32.mrf.mxu0
      %v1528 = vadd.f32 0.0, %v1527
      %v1529 = vpop.f32.mrf.mxu0
      %v1530 = vpop.f32.mrf.mxu0
      %v1531 = vadd.f32 0.0, %v1530
      %v1532 = vpop.f32.mrf.mxu0
      %1533 = vmatprep.mubr.bf16.mxu0 0
      %1534 = vmatmul.mubr.bf16.gmra.mxu0 %v1286
      %v1535 = vpop.f32.mrf.mxu0
      %v1536 = vadd.f32 0.0, %v1535
      %v1537 = vpop.f32.mrf.mxu0
      %v1538 = vpop.f32.mrf.mxu0
      %v1539 = vadd.f32 0.0, %v1538
      %v1540 = vpop.f32.mrf.mxu0
      %1541 = vmatprep.mubr.bf16.mxu0 0
      %1542 = vmatmul.mubr.bf16.gmra.mxu0 %v1287
      %v1543 = vpop.f32.mrf.mxu0
      %v1544 = vadd.f32 0.0, %v1543
      %v1545 = vpop.f32.mrf.mxu0
      %v1546 = vpop.f32.mrf.mxu0
      %v1547 = vadd.f32 0.0, %v1546
      %v1548 = vpop.f32.mrf.mxu0
      %1549 = vmatprep.mubr.bf16.mxu0 0
      %1550 = vmatmul.mubr.bf16.gmra.mxu0 %v1288
      %v1551 = vpop.f32.mrf.mxu0
      %v1552 = vadd.f32 0.0, %v1551
      %v1553 = vpop.f32.mrf.mxu0
      %v1554 = vpop.f32.mrf.mxu0
      %v1555 = vadd.f32 0.0, %v1554
      %v1556 = vpop.f32.mrf.mxu0
      %1557 = vmatprep.mubr.bf16.mxu0 0
      %1558 = vmatmul.mubr.bf16.gmra.mxu0 %v1289
      %v1559 = vpop.f32.mrf.mxu0
      %v1560 = vadd.f32 0.0, %v1559
      %v1561 = vpop.f32.mrf.mxu0
      %v1562 = vpop.f32.mrf.mxu0
      %v1563 = vadd.f32 0.0, %v1562
      %v1564 = vpop.f32.mrf.mxu0
      %1565 = vmatprep.mubr.bf16.mxu0 0
      %1566 = vmatmul.mubr.bf16.gmra.mxu0 %v1290
      %v1567 = vpop.f32.mrf.mxu0
      %v1568 = vadd.f32 0.0, %v1567
      %v1569 = vpop.f32.mrf.mxu0
      %v1570 = vpop.f32.mrf.mxu0
      %v1571 = vadd.f32 0.0, %v1570
      %v1572 = vpop.f32.mrf.mxu0
      %1573 = vmatprep.mubr.bf16.mxu0 0
      %1574 = vmatmul.mubr.bf16.gmra.mxu0 %v1291
      %v1575 = vpop.f32.mrf.mxu0
      %v1576 = vadd.f32 0.0, %v1575
      %v1577 = vpop.f32.mrf.mxu0
      %v1578 = vpop.f32.mrf.mxu0
      %v1579 = vadd.f32 0.0, %v1578
      %v1580 = vpop.f32.mrf.mxu0
      %1581 = vdwg.mxu0
      %v1582 = vld [vmem:[#allocation3] sm:$0xff]
      %v1583 = vld [vmem:[#allocation3 + $0x8] sm:$0xff]
      %v1584 = vld [vmem:[#allocation3 + $0x10] sm:$0xff]
      %v1585 = vld [vmem:[#allocation3 + $0x18] sm:$0xff]
      %v1586 = vld [vmem:[#allocation3 + $0x20] sm:$0xff]
      %v1587 = vld [vmem:[#allocation3 + $0x28] sm:$0xff]
      %v1588 = vld [vmem:[#allocation3 + $0x30] sm:$0xff]
      %v1589 = vld [vmem:[#allocation3 + $0x38] sm:$0xff]
      %v1590 = vld [vmem:[#allocation3 + $0x40] sm:$0xff]
      %v1591 = vld [vmem:[#allocation3 + $0x48] sm:$0xff]
      %v1592 = vld [vmem:[#allocation3 + $0x50] sm:$0xff]
      %v1593 = vld [vmem:[#allocation3 + $0x58] sm:$0xff]
      %v1594 = vld [vmem:[#allocation3 + $0x60] sm:$0xff]
      %v1595 = vld [vmem:[#allocation3 + $0x68] sm:$0xff]
      %v1596 = vld [vmem:[#allocation3 + $0x70] sm:$0xff]
      %v1597 = vld [vmem:[#allocation3 + $0x78] sm:$0xff]
      %v1598 = vld [vmem:[#allocation3 + $0x80] sm:$0xff]
      %v1599 = vld [vmem:[#allocation3 + $0x88] sm:$0xff]
      %v1600 = vld [vmem:[#allocation3 + $0x90] sm:$0xff]
      %v1601 = vld [vmem:[#allocation3 + $0x98] sm:$0xff]
      %v1602 = vld [vmem:[#allocation3 + $0xa0] sm:$0xff]
      %v1603 = vld [vmem:[#allocation3 + $0xa8] sm:$0xff]
      %v1604 = vld [vmem:[#allocation3 + $0xb0] sm:$0xff]
      %v1605 = vld [vmem:[#allocation3 + $0xb8] sm:$0xff]
      %v1606 = vld [vmem:[#allocation3 + $0xc0] sm:$0xff]
      %v1607 = vld [vmem:[#allocation3 + $0xc8] sm:$0xff]
      %v1608 = vld [vmem:[#allocation3 + $0xd0] sm:$0xff]
      %v1609 = vld [vmem:[#allocation3 + $0xd8] sm:$0xff]
      %v1610 = vld [vmem:[#allocation3 + $0xe0] sm:$0xff]
      %v1611 = vld [vmem:[#allocation3 + $0xe8] sm:$0xff]
      %v1612 = vld [vmem:[#allocation3 + $0xf0] sm:$0xff]
      %v1613 = vld [vmem:[#allocation3 + $0xf8] sm:$0xff]
      %v1614 = vld [vmem:[#allocation3 + $0x100] sm:$0xff]
      %v1615 = vld [vmem:[#allocation3 + $0x108] sm:$0xff]
      %v1616 = vld [vmem:[#allocation3 + $0x110] sm:$0xff]
      %v1617 = vld [vmem:[#allocation3 + $0x118] sm:$0xff]
      %v1618 = vld [vmem:[#allocation3 + $0x120] sm:$0xff]
      %v1619 = vld [vmem:[#allocation3 + $0x128] sm:$0xff]
      %v1620 = vld [vmem:[#allocation3 + $0x130] sm:$0xff]
      %v1621 = vld [vmem:[#allocation3 + $0x138] sm:$0xff]
      %v1622 = vld [vmem:[#allocation3 + $0x140] sm:$0xff]
      %v1623 = vld [vmem:[#allocation3 + $0x148] sm:$0xff]
      %v1624 = vld [vmem:[#allocation3 + $0x150] sm:$0xff]
      %v1625 = vld [vmem:[#allocation3 + $0x158] sm:$0xff]
      %v1626 = vld [vmem:[#allocation3 + $0x160] sm:$0xff]
      %v1627 = vld [vmem:[#allocation3 + $0x168] sm:$0xff]
      %v1628 = vld [vmem:[#allocation3 + $0x170] sm:$0xff]
      %v1629 = vld [vmem:[#allocation3 + $0x178] sm:$0xff]
      %v1630 = vadd.f32 %v1582, %v1392
      %v1631 = vadd.f32 %v1583, %v1395
      %v1632 = vadd.f32 %v1584, %v1400
      %v1633 = vadd.f32 %v1585, %v1403
      %v1634 = vadd.f32 %v1586, %v1408
      %v1635 = vadd.f32 %v1587, %v1411
      %v1636 = vadd.f32 %v1588, %v1416
      %v1637 = vadd.f32 %v1589, %v1419
      %v1638 = vadd.f32 %v1590, %v1424
      %v1639 = vadd.f32 %v1591, %v1427
      %v1640 = vadd.f32 %v1592, %v1432
      %v1641 = vadd.f32 %v1593, %v1435
      %v1642 = vadd.f32 %v1594, %v1440
      %v1643 = vadd.f32 %v1595, %v1443
      %v1644 = vadd.f32 %v1596, %v1448
      %v1645 = vadd.f32 %v1597, %v1451
      %v1646 = vadd.f32 %v1598, %v1456
      %v1647 = vadd.f32 %v1599, %v1459
      %v1648 = vadd.f32 %v1600, %v1464
      %v1649 = vadd.f32 %v1601, %v1467
      %v1650 = vadd.f32 %v1602, %v1472
      %v1651 = vadd.f32 %v1603, %v1475
      %v1652 = vadd.f32 %v1604, %v1480
      %v1653 = vadd.f32 %v1605, %v1483
      %v1654 = vadd.f32 %v1606, %v1488
      %v1655 = vadd.f32 %v1607, %v1491
      %v1656 = vadd.f32 %v1608, %v1496
      %v1657 = vadd.f32 %v1609, %v1499
      %v1658 = vadd.f32 %v1610, %v1504
      %v1659 = vadd.f32 %v1611, %v1507
      %v1660 = vadd.f32 %v1612, %v1512
      %v1661 = vadd.f32 %v1613, %v1515
      %v1662 = vadd.f32 %v1614, %v1520
      %v1663 = vadd.f32 %v1615, %v1523
      %v1664 = vadd.f32 %v1616, %v1528
      %v1665 = vadd.f32 %v1617, %v1531
      %v1666 = vadd.f32 %v1618, %v1536
      %v1667 = vadd.f32 %v1619, %v1539
      %v1668 = vadd.f32 %v1620, %v1544
      %v1669 = vadd.f32 %v1621, %v1547
      %v1670 = vadd.f32 %v1622, %v1552
      %v1671 = vadd.f32 %v1623, %v1555
      %v1672 = vadd.f32 %v1624, %v1560
      %v1673 = vadd.f32 %v1625, %v1563
      %v1674 = vadd.f32 %v1626, %v1568
      %v1675 = vadd.f32 %v1627, %v1571
      %v1676 = vadd.f32 %v1628, %v1576
      %v1677 = vadd.f32 %v1629, %v1579
      %1678 = vst [vmem:[#allocation3] sm:$0xff] %v1630
      %1679 = vst [vmem:[#allocation3 + $0x8] sm:$0xff] %v1631
      %1680 = vst [vmem:[#allocation3 + $0x10] sm:$0xff] %v1632
      %1681 = vst [vmem:[#allocation3 + $0x18] sm:$0xff] %v1633
      %1682 = vst [vmem:[#allocation3 + $0x20] sm:$0xff] %v1634
      %1683 = vst [vmem:[#allocation3 + $0x28] sm:$0xff] %v1635
      %1684 = vst [vmem:[#allocation3 + $0x30] sm:$0xff] %v1636
      %1685 = vst [vmem:[#allocation3 + $0x38] sm:$0xff] %v1637
      %1686 = vst [vmem:[#allocation3 + $0x40] sm:$0xff] %v1638
      %1687 = vst [vmem:[#allocation3 + $0x48] sm:$0xff] %v1639
      %1688 = vst [vmem:[#allocation3 + $0x50] sm:$0xff] %v1640
      %1689 = vst [vmem:[#allocation3 + $0x58] sm:$0xff] %v1641
      %1690 = vst [vmem:[#allocation3 + $0x60] sm:$0xff] %v1642
      %1691 = vst [vmem:[#allocation3 + $0x68] sm:$0xff] %v1643
      %1692 = vst [vmem:[#allocation3 + $0x70] sm:$0xff] %v1644
      %1693 = vst [vmem:[#allocation3 + $0x78] sm:$0xff] %v1645
      %1694 = vst [vmem:[#allocation3 + $0x80] sm:$0xff] %v1646
      %1695 = vst [vmem:[#allocation3 + $0x88] sm:$0xff] %v1647
      %1696 = vst [vmem:[#allocation3 + $0x90] sm:$0xff] %v1648
      %1697 = vst [vmem:[#allocation3 + $0x98] sm:$0xff] %v1649
      %1698 = vst [vmem:[#allocation3 + $0xa0] sm:$0xff] %v1650
      %1699 = vst [vmem:[#allocation3 + $0xa8] sm:$0xff] %v1651
      %1700 = vst [vmem:[#allocation3 + $0xb0] sm:$0xff] %v1652
      %1701 = vst [vmem:[#allocation3 + $0xb8] sm:$0xff] %v1653
      %1702 = vst [vmem:[#allocation3 + $0xc0] sm:$0xff] %v1654
      %1703 = vst [vmem:[#allocation3 + $0xc8] sm:$0xff] %v1655
      %1704 = vst [vmem:[#allocation3 + $0xd0] sm:$0xff] %v1656
      %1705 = vst [vmem:[#allocation3 + $0xd8] sm:$0xff] %v1657
      %1706 = vst [vmem:[#allocation3 + $0xe0] sm:$0xff] %v1658
      %1707 = vst [vmem:[#allocation3 + $0xe8] sm:$0xff] %v1659
      %1708 = vst [vmem:[#allocation3 + $0xf0] sm:$0xff] %v1660
      %1709 = vst [vmem:[#allocation3 + $0xf8] sm:$0xff] %v1661
      %1710 = vst [vmem:[#allocation3 + $0x100] sm:$0xff] %v1662
      %1711 = vst [vmem:[#allocation3 + $0x108] sm:$0xff] %v1663
      %1712 = vst [vmem:[#allocation3 + $0x110] sm:$0xff] %v1664
      %1713 = vst [vmem:[#allocation3 + $0x118] sm:$0xff] %v1665
      %1714 = vst [vmem:[#allocation3 + $0x120] sm:$0xff] %v1666
      %1715 = vst [vmem:[#allocation3 + $0x128] sm:$0xff] %v1667
      %1716 = vst [vmem:[#allocation3 + $0x130] sm:$0xff] %v1668
      %1717 = vst [vmem:[#allocation3 + $0x138] sm:$0xff] %v1669
      %1718 = vst [vmem:[#allocation3 + $0x140] sm:$0xff] %v1670
      %1719 = vst [vmem:[#allocation3 + $0x148] sm:$0xff] %v1671
      %1720 = vst [vmem:[#allocation3 + $0x150] sm:$0xff] %v1672
      %1721 = vst [vmem:[#allocation3 + $0x158] sm:$0xff] %v1673
      %1722 = vst [vmem:[#allocation3 + $0x160] sm:$0xff] %v1674
      %1723 = vst [vmem:[#allocation3 + $0x168] sm:$0xff] %v1675
      %1724 = vst [vmem:[#allocation3 + $0x170] sm:$0xff] %v1676
      %1725 = vst [vmem:[#allocation3 + $0x178] sm:$0xff] %v1677
      %v1726 = vld [vmem:[%s192 + $0x18] sm:$0xff]
      %v1727 = vld [vmem:[%s192 + $0x20] sm:$0xff]
      %v1728 = vld [vmem:[%s192 + $0x28] sm:$0xff]
      %v1729 = vld [vmem:[%s192 + $0x30] sm:$0xff]
      %v1730 = vld [vmem:[%s192 + $0x38] sm:$0xff]
      %v1731 = vld [vmem:[%s192 + $0x40] sm:$0xff]
      %v1732 = vld [vmem:[%s192 + $0x48] sm:$0xff]
      %v1733 = vld [vmem:[%s192 + $0x50] sm:$0xff]
      %v1734 = vld [vmem:[%s192 + $0x58] sm:$0xff]
      %v1735 = vld [vmem:[%s192 + $0x60] sm:$0xff]
      %v1736 = vld [vmem:[%s192 + $0x68] sm:$0xff]
      %v1737 = vld [vmem:[%s192 + $0x70] sm:$0xff]
      %v1738 = vld [vmem:[%s192 + $0x78] sm:$0xff]
      %v1739 = vld [vmem:[%s192 + $0x80] sm:$0xff]
      %v1740 = vld [vmem:[%s192 + $0x88] sm:$0xff]
      %v1741 = vld [vmem:[%s192 + $0x90] sm:$0xff]
      %v1742 = vld [vmem:[%s192 + $0x98] sm:$0xff]
      %v1743 = vld [vmem:[%s192 + $0xa0] sm:$0xff]
      %v1744 = vld [vmem:[%s192 + $0xa8] sm:$0xff]
      %v1745 = vld [vmem:[%s192 + $0xb0] sm:$0xff]
      %v1746 = vld [vmem:[%s192 + $0xb8] sm:$0xff]
      %v1747 = vld [vmem:[%s192 + $0xc0] sm:$0xff]
      %v1748 = vld [vmem:[%s192 + $0xc8] sm:$0xff]
      %v1749 = vld [vmem:[%s192 + $0xd0] sm:$0xff]
      %v1750 = vld [vmem:[%s192 + $0xd8] sm:$0xff]
      %v1751 = vld [vmem:[%s192 + $0xe0] sm:$0xff]
      %v1752 = vld [vmem:[%s192 + $0xe8] sm:$0xff]
      %v1753 = vld [vmem:[%s192 + $0xf0] sm:$0xff]
      %v1754 = vld [vmem:[%s192 + $0xf8] sm:$0xff]
      %v1755 = vld [vmem:[%s192 + $0x100] sm:$0xff]
      %v1756 = vld [vmem:[%s192 + $0x108] sm:$0xff]
      %v1757 = vld [vmem:[%s192 + $0x110] sm:$0xff]
      %v1758 = vld [vmem:[%s192 + $0x118] sm:$0xff]
      %v1759 = vld [vmem:[%s192 + $0x120] sm:$0xff]
      %v1760 = vld [vmem:[%s192 + $0x128] sm:$0xff]
      %v1761 = vld [vmem:[%s192 + $0x130] sm:$0xff]
      %v1762 = vld [vmem:[%s192 + $0x138] sm:$0xff]
      %v1763 = vld [vmem:[%s192 + $0x140] sm:$0xff]
      %v1764 = vld [vmem:[%s192 + $0x148] sm:$0xff]
      %v1765 = vld [vmem:[%s192 + $0x150] sm:$0xff]
      %v1766 = vld [vmem:[%s192 + $0x158] sm:$0xff]
      %v1767 = vld [vmem:[%s192 + $0x160] sm:$0xff]
      %v1768 = vld [vmem:[%s192 + $0x168] sm:$0xff]
      %v1769 = vld [vmem:[%s192 + $0x170] sm:$0xff]
      %v1770 = vld [vmem:[%s192 + $0x178] sm:$0xff]
      %v1771 = vld [vmem:[%s192 + $0x180] sm:$0xff]
      %v1772 = vld [vmem:[%s192 + $0x188] sm:$0xff]
      %v1773 = vld [vmem:[%s192 + $0x190] sm:$0xff]
      %v1774 = vrot.slane %v1726, 7
      %v1775 = vrot.slane %v1727, 7
      %v1776 = vrot.slane %v1728, 7
      %v1777 = vrot.slane %v1729, 7
      %v1778 = vrot.slane %v1730, 7
      %v1779 = vrot.slane %v1731, 7
      %v1780 = vrot.slane %v1732, 7
      %v1781 = vrot.slane %v1733, 7
      %v1782 = vrot.slane %v1734, 7
      %v1783 = vrot.slane %v1735, 7
      %v1784 = vrot.slane %v1736, 7
      %v1785 = vrot.slane %v1737, 7
      %v1786 = vrot.slane %v1738, 7
      %v1787 = vrot.slane %v1739, 7
      %v1788 = vrot.slane %v1740, 7
      %v1789 = vrot.slane %v1741, 7
      %v1790 = vrot.slane %v1742, 7
      %v1791 = vrot.slane %v1743, 7
      %v1792 = vrot.slane %v1744, 7
      %v1793 = vrot.slane %v1745, 7
      %v1794 = vrot.slane %v1746, 7
      %v1795 = vrot.slane %v1747, 7
      %v1796 = vrot.slane %v1748, 7
      %v1797 = vrot.slane %v1749, 7
      %v1798 = vrot.slane %v1750, 7
      %v1799 = vrot.slane %v1751, 7
      %v1800 = vrot.slane %v1752, 7
      %v1801 = vrot.slane %v1753, 7
      %v1802 = vrot.slane %v1754, 7
      %v1803 = vrot.slane %v1755, 7
      %v1804 = vrot.slane %v1756, 7
      %v1805 = vrot.slane %v1757, 7
      %v1806 = vrot.slane %v1758, 7
      %v1807 = vrot.slane %v1759, 7
      %v1808 = vrot.slane %v1760, 7
      %v1809 = vrot.slane %v1761, 7
      %v1810 = vrot.slane %v1762, 7
      %v1811 = vrot.slane %v1763, 7
      %v1812 = vrot.slane %v1764, 7
      %v1813 = vrot.slane %v1765, 7
      %v1814 = vrot.slane %v1766, 7
      %v1815 = vrot.slane %v1767, 7
      %v1816 = vrot.slane %v1768, 7
      %v1817 = vrot.slane %v1769, 7
      %v1818 = vrot.slane %v1770, 7
      %v1819 = vrot.slane %v1771, 7
      %v1820 = vrot.slane %v1772, 7
      %v1821 = vrot.slane %v1773, 7
      %v1822 = vsel %vm303, %v1820, %v1821
      %v1823 = vsel %vm303, %v1819, %v1820
      %v1824 = vsel %vm303, %v1818, %v1819
      %v1825 = vsel %vm303, %v1817, %v1818
      %v1826 = vsel %vm303, %v1816, %v1817
      %v1827 = vsel %vm303, %v1815, %v1816
      %v1828 = vsel %vm303, %v1814, %v1815
      %v1829 = vsel %vm303, %v1813, %v1814
      %v1830 = vsel %vm303, %v1812, %v1813
      %v1831 = vsel %vm303, %v1811, %v1812
      %v1832 = vsel %vm303, %v1810, %v1811
      %v1833 = vsel %vm303, %v1809, %v1810
      %v1834 = vsel %vm303, %v1808, %v1809
      %v1835 = vsel %vm303, %v1807, %v1808
      %v1836 = vsel %vm303, %v1806, %v1807
      %v1837 = vsel %vm303, %v1805, %v1806
      %v1838 = vsel %vm303, %v1804, %v1805
      %v1839 = vsel %vm303, %v1803, %v1804
      %v1840 = vsel %vm303, %v1802, %v1803
      %v1841 = vsel %vm303, %v1801, %v1802
      %v1842 = vsel %vm303, %v1800, %v1801
      %v1843 = vsel %vm303, %v1799, %v1800
      %v1844 = vsel %vm303, %v1798, %v1799
      %v1845 = vsel %vm303, %v1797, %v1798
      %v1846 = vsel %vm303, %v1796, %v1797
      %v1847 = vsel %vm303, %v1795, %v1796
      %v1848 = vsel %vm303, %v1794, %v1795
      %v1849 = vsel %vm303, %v1793, %v1794
      %v1850 = vsel %vm303, %v1792, %v1793
      %v1851 = vsel %vm303, %v1791, %v1792
      %v1852 = vsel %vm303, %v1790, %v1791
      %v1853 = vsel %vm303, %v1789, %v1790
      %v1854 = vsel %vm303, %v1788, %v1789
      %v1855 = vsel %vm303, %v1787, %v1788
      %v1856 = vsel %vm303, %v1786, %v1787
      %v1857 = vsel %vm303, %v1785, %v1786
      %v1858 = vsel %vm303, %v1784, %v1785
      %v1859 = vsel %vm303, %v1783, %v1784
      %v1860 = vsel %vm303, %v1782, %v1783
      %v1861 = vsel %vm303, %v1781, %v1782
      %v1862 = vsel %vm303, %v1780, %v1781
      %v1863 = vsel %vm303, %v1779, %v1780
      %v1864 = vsel %vm303, %v1778, %v1779
      %v1865 = vsel %vm303, %v1777, %v1778
      %v1866 = vsel %vm303, %v1776, %v1777
      %v1867 = vsel %vm303, %v1775, %v1776
      %v1868 = vsel %vm303, %v1774, %v1775
      %v1869 = vsel %vm303, %v1821, %v1774
      %v1870 = vrot.slane %v1726, 1
      %v1871 = vrot.slane %v1727, 1
      %v1872 = vrot.slane %v1728, 1
      %v1873 = vrot.slane %v1729, 1
      %v1874 = vrot.slane %v1730, 1
      %v1875 = vrot.slane %v1731, 1
      %v1876 = vrot.slane %v1732, 1
      %v1877 = vrot.slane %v1733, 1
      %v1878 = vrot.slane %v1734, 1
      %v1879 = vrot.slane %v1735, 1
      %v1880 = vrot.slane %v1736, 1
      %v1881 = vrot.slane %v1737, 1
      %v1882 = vrot.slane %v1738, 1
      %v1883 = vrot.slane %v1739, 1
      %v1884 = vrot.slane %v1740, 1
      %v1885 = vrot.slane %v1741, 1
      %v1886 = vrot.slane %v1742, 1
      %v1887 = vrot.slane %v1743, 1
      %v1888 = vrot.slane %v1744, 1
      %v1889 = vrot.slane %v1745, 1
      %v1890 = vrot.slane %v1746, 1
      %v1891 = vrot.slane %v1747, 1
      %v1892 = vrot.slane %v1748, 1
      %v1893 = vrot.slane %v1749, 1
      %v1894 = vrot.slane %v1750, 1
      %v1895 = vrot.slane %v1751, 1
      %v1896 = vrot.slane %v1752, 1
      %v1897 = vrot.slane %v1753, 1
      %v1898 = vrot.slane %v1754, 1
      %v1899 = vrot.slane %v1755, 1
      %v1900 = vrot.slane %v1756, 1
      %v1901 = vrot.slane %v1757, 1
      %v1902 = vrot.slane %v1758, 1
      %v1903 = vrot.slane %v1759, 1
      %v1904 = vrot.slane %v1760, 1
      %v1905 = vrot.slane %v1761, 1
      %v1906 = vrot.slane %v1762, 1
      %v1907 = vrot.slane %v1763, 1
      %v1908 = vrot.slane %v1764, 1
      %v1909 = vrot.slane %v1765, 1
      %v1910 = vrot.slane %v1766, 1
      %v1911 = vrot.slane %v1767, 1
      %v1912 = vrot.slane %v1768, 1
      %v1913 = vrot.slane %v1769, 1
      %v1914 = vrot.slane %v1770, 1
      %v1915 = vrot.slane %v1771, 1
      %v1916 = vrot.slane %v1772, 1
      %v1917 = vrot.slane %v1773, 1
      %v1918 = vsel %vm400, %v1916, %v1917
      %v1919 = vsel %vm400, %v1915, %v1916
      %v1920 = vsel %vm400, %v1914, %v1915
      %v1921 = vsel %vm400, %v1913, %v1914
      %v1922 = vsel %vm400, %v1912, %v1913
      %v1923 = vsel %vm400, %v1911, %v1912
      %v1924 = vsel %vm400, %v1910, %v1911
      %v1925 = vsel %vm400, %v1909, %v1910
      %v1926 = vsel %vm400, %v1908, %v1909
      %v1927 = vsel %vm400, %v1907, %v1908
      %v1928 = vsel %vm400, %v1906, %v1907
      %v1929 = vsel %vm400, %v1905, %v1906
      %v1930 = vsel %vm400, %v1904, %v1905
      %v1931 = vsel %vm400, %v1903, %v1904
      %v1932 = vsel %vm400, %v1902, %v1903
      %v1933 = vsel %vm400, %v1901, %v1902
      %v1934 = vsel %vm400, %v1900, %v1901
      %v1935 = vsel %vm400, %v1899, %v1900
      %v1936 = vsel %vm400, %v1898, %v1899
      %v1937 = vsel %vm400, %v1897, %v1898
      %v1938 = vsel %vm400, %v1896, %v1897
      %v1939 = vsel %vm400, %v1895, %v1896
      %v1940 = vsel %vm400, %v1894, %v1895
      %v1941 = vsel %vm400, %v1893, %v1894
      %v1942 = vsel %vm400, %v1892, %v1893
      %v1943 = vsel %vm400, %v1891, %v1892
      %v1944 = vsel %vm400, %v1890, %v1891
      %v1945 = vsel %vm400, %v1889, %v1890
      %v1946 = vsel %vm400, %v1888, %v1889
      %v1947 = vsel %vm400, %v1887, %v1888
      %v1948 = vsel %vm400, %v1886, %v1887
      %v1949 = vsel %vm400, %v1885, %v1886
      %v1950 = vsel %vm400, %v1884, %v1885
      %v1951 = vsel %vm400, %v1883, %v1884
      %v1952 = vsel %vm400, %v1882, %v1883
      %v1953 = vsel %vm400, %v1881, %v1882
      %v1954 = vsel %vm400, %v1880, %v1881
      %v1955 = vsel %vm400, %v1879, %v1880
      %v1956 = vsel %vm400, %v1878, %v1879
      %v1957 = vsel %vm400, %v1877, %v1878
      %v1958 = vsel %vm400, %v1876, %v1877
      %v1959 = vsel %vm400, %v1875, %v1876
      %v1960 = vsel %vm400, %v1874, %v1875
      %v1961 = vsel %vm400, %v1873, %v1874
      %v1962 = vsel %vm400, %v1872, %v1873
      %v1963 = vsel %vm400, %v1871, %v1872
      %v1964 = vsel %vm400, %v1870, %v1871
      %v1965 = vsel %vm400, %v1917, %v1870
      %v1966 = vpack.c.bf16 %v1868, %v1869
      %v1967 = vpack.c.bf16 %v1866, %v1867
      %v1968 = vpack.c.bf16 %v1864, %v1865
      %v1969 = vpack.c.bf16 %v1862, %v1863
      %v1970 = vpack.c.bf16 %v1860, %v1861
      %v1971 = vpack.c.bf16 %v1858, %v1859
      %v1972 = vpack.c.bf16 %v1856, %v1857
      %v1973 = vpack.c.bf16 %v1854, %v1855
      %v1974 = vpack.c.bf16 %v1852, %v1853
      %v1975 = vpack.c.bf16 %v1850, %v1851
      %v1976 = vpack.c.bf16 %v1848, %v1849
      %v1977 = vpack.c.bf16 %v1846, %v1847
      %v1978 = vpack.c.bf16 %v1844, %v1845
      %v1979 = vpack.c.bf16 %v1842, %v1843
      %v1980 = vpack.c.bf16 %v1840, %v1841
      %v1981 = vpack.c.bf16 %v1838, %v1839
      %v1982 = vpack.c.bf16 %v1836, %v1837
      %v1983 = vpack.c.bf16 %v1834, %v1835
      %v1984 = vpack.c.bf16 %v1832, %v1833
      %v1985 = vpack.c.bf16 %v1830, %v1831
      %v1986 = vpack.c.bf16 %v1828, %v1829
      %v1987 = vpack.c.bf16 %v1826, %v1827
      %v1988 = vpack.c.bf16 %v1824, %v1825
      %v1989 = vpack.c.bf16 %v1822, %v1823
      %s1990 = scalar_lea.vmem %s1, 192
      %v1991 = vld [vmem:[%s1990] sm:$0xf]
      %v1992 = vld [vmem:[%s1990 + $0x4] sm:$0xf]
      %v1993 = vld [vmem:[%s1990 + $0x8] sm:$0xf]
      %v1994 = vld [vmem:[%s1990 + $0xc] sm:$0xf]
      %v1995 = vld [vmem:[%s1990 + $0x10] sm:$0xf]
      %v1996 = vld [vmem:[%s1990 + $0x14] sm:$0xf]
      %v1997 = vld [vmem:[%s1990 + $0x18] sm:$0xf]
      %v1998 = vld [vmem:[%s1990 + $0x1c] sm:$0xf]
      %v1999 = vld [vmem:[%s1990 + $0x20] sm:$0xf]
      %v2000 = vld [vmem:[%s1990 + $0x24] sm:$0xf]
      %v2001 = vld [vmem:[%s1990 + $0x28] sm:$0xf]
      %v2002 = vld [vmem:[%s1990 + $0x2c] sm:$0xf]
      %v2003 = vld [vmem:[%s1990 + $0x30] sm:$0xf]
      %v2004 = vld [vmem:[%s1990 + $0x34] sm:$0xf]
      %v2005 = vld [vmem:[%s1990 + $0x38] sm:$0xf]
      %v2006 = vld [vmem:[%s1990 + $0x3c] sm:$0xf]
      %v2023 = vunpack.c.l.b16 %v1991
      %v2024 = vunpack.c.l.b16 %v1992
      %v2025 = vunpack.c.l.b16 %v1993
      %v2026 = vunpack.c.l.b16 %v1994
      %v2027 = vunpack.c.l.b16 %v1995
      %v2028 = vunpack.c.l.b16 %v1996
      %v2029 = vunpack.c.l.b16 %v1997
      %v2030 = vunpack.c.l.b16 %v1998
      %v2031 = vunpack.c.l.b16 %v1999
      %v2032 = vunpack.c.l.b16 %v2000
      %v2033 = vunpack.c.l.b16 %v2001
      %v2034 = vunpack.c.l.b16 %v2002
      %v2035 = vunpack.c.l.b16 %v2003
      %v2036 = vunpack.c.l.b16 %v2004
      %v2037 = vunpack.c.l.b16 %v2005
      %v2038 = vunpack.c.l.b16 %v2006
      %v2039 = vpack.c.b16 %v2024, %v2023
      %v2040 = vpack.c.b16 %v2026, %v2025
      %v2041 = vpack.c.b16 %v2028, %v2027
      %v2042 = vpack.c.b16 %v2030, %v2029
      %v2043 = vpack.c.b16 %v2032, %v2031
      %v2044 = vpack.c.b16 %v2034, %v2033
      %v2045 = vpack.c.b16 %v2036, %v2035
      %v2046 = vpack.c.b16 %v2038, %v2037
      %2055 = vmatprep.subr.bf16.mxu0 0
      %2056 = vmatpush1.bf16.msra.mxu0 %v2046
      %2057 = vmatprep.subr.bf16.mxu0 0
      %2058 = vmatpush1.bf16.msra.mxu0 %v2045
      %2059 = vmatprep.subr.bf16.mxu0 0
      %2060 = vmatpush1.bf16.msra.mxu0 %v2044
      %2061 = vmatprep.subr.bf16.mxu0 0
      %2062 = vmatpush1.bf16.msra.mxu0 %v2043
      %2063 = vmatprep.subr.bf16.mxu0 0
      %2064 = vmatpush1.bf16.msra.mxu0 %v2042
      %2065 = vmatprep.subr.bf16.mxu0 0
      %2066 = vmatpush1.bf16.msra.mxu0 %v2041
      %2067 = vmatprep.subr.bf16.mxu0 0
      %2068 = vmatpush1.bf16.msra.mxu0 %v2040
      %2069 = vmatprep.subr.bf16.mxu0 0
      %2070 = vmatpush1.bf16.msra.mxu0 %v2039
      %2071 = vmatprep.subr.bf16.mxu0 0
      %2072 = vmatpush2.bf16.msra.mxu0 0
      %2073 = vmatprep.subr.bf16.mxu0 0
      %2074 = vmatpush2.bf16.msra.mxu0 0
      %2075 = vmatprep.subr.bf16.mxu0 0
      %2076 = vmatpush2.bf16.msra.mxu0 0
      %2077 = vmatprep.subr.bf16.mxu0 0
      %2078 = vmatpush2.bf16.msra.mxu0 0
      %2079 = vmatprep.subr.bf16.mxu0 0
      %2080 = vmatpush2.bf16.msra.mxu0 0
      %2081 = vmatprep.subr.bf16.mxu0 0
      %2082 = vmatpush2.bf16.msra.mxu0 0
      %2083 = vmatprep.subr.bf16.mxu0 0
      %2084 = vmatpush2.bf16.msra.mxu0 0
      %2085 = vmatprep.subr.bf16.mxu0 0
      %2086 = vmatpush2.bf16.msra.mxu0 0
      %2087 = vmatprep.mubr.bf16.mxu0 0
      %2088 = vmatmul.mubr.bf16.gmra.mxu0 %v1966
      %v2089 = vpop.f32.mrf.mxu0
      %v2090 = vadd.f32 0.0, %v2089
      %v2091 = vpop.f32.mrf.mxu0
      %v2092 = vpop.f32.mrf.mxu0
      %v2093 = vadd.f32 0.0, %v2092
      %v2094 = vpop.f32.mrf.mxu0
      %2095 = vmatprep.mubr.bf16.mxu0 0
      %2096 = vmatmul.mubr.bf16.gmra.mxu0 %v1967
      %v2097 = vpop.f32.mrf.mxu0
      %v2098 = vadd.f32 0.0, %v2097
      %v2099 = vpop.f32.mrf.mxu0
      %v2100 = vpop.f32.mrf.mxu0
      %v2101 = vadd.f32 0.0, %v2100
      %v2102 = vpop.f32.mrf.mxu0
      %2103 = vmatprep.mubr.bf16.mxu0 0
      %2104 = vmatmul.mubr.bf16.gmra.mxu0 %v1968
      %v2105 = vpop.f32.mrf.mxu0
      %v2106 = vadd.f32 0.0, %v2105
      %v2107 = vpop.f32.mrf.mxu0
      %v2108 = vpop.f32.mrf.mxu0
      %v2109 = vadd.f32 0.0, %v2108
      %v2110 = vpop.f32.mrf.mxu0
      %2111 = vmatprep.mubr.bf16.mxu0 0
      %2112 = vmatmul.mubr.bf16.gmra.mxu0 %v1969
      %v2113 = vpop.f32.mrf.mxu0
      %v2114 = vadd.f32 0.0, %v2113
      %v2115 = vpop.f32.mrf.mxu0
      %v2116 = vpop.f32.mrf.mxu0
      %v2117 = vadd.f32 0.0, %v2116
      %v2118 = vpop.f32.mrf.mxu0
      %2119 = vmatprep.mubr.bf16.mxu0 0
      %2120 = vmatmul.mubr.bf16.gmra.mxu0 %v1970
      %v2121 = vpop.f32.mrf.mxu0
      %v2122 = vadd.f32 0.0, %v2121
      %v2123 = vpop.f32.mrf.mxu0
      %v2124 = vpop.f32.mrf.mxu0
      %v2125 = vadd.f32 0.0, %v2124
      %v2126 = vpop.f32.mrf.mxu0
      %2127 = vmatprep.mubr.bf16.mxu0 0
      %2128 = vmatmul.mubr.bf16.gmra.mxu0 %v1971
      %v2129 = vpop.f32.mrf.mxu0
      %v2130 = vadd.f32 0.0, %v2129
      %v2131 = vpop.f32.mrf.mxu0
      %v2132 = vpop.f32.mrf.mxu0
      %v2133 = vadd.f32 0.0, %v2132
      %v2134 = vpop.f32.mrf.mxu0
      %2135 = vmatprep.mubr.bf16.mxu0 0
      %2136 = vmatmul.mubr.bf16.gmra.mxu0 %v1972
      %v2137 = vpop.f32.mrf.mxu0
      %v2138 = vadd.f32 0.0, %v2137
      %v2139 = vpop.f32.mrf.mxu0
      %v2140 = vpop.f32.mrf.mxu0
      %v2141 = vadd.f32 0.0, %v2140
      %v2142 = vpop.f32.mrf.mxu0
      %2143 = vmatprep.mubr.bf16.mxu0 0
      %2144 = vmatmul.mubr.bf16.gmra.mxu0 %v1973
      %v2145 = vpop.f32.mrf.mxu0
      %v2146 = vadd.f32 0.0, %v2145
      %v2147 = vpop.f32.mrf.mxu0
      %v2148 = vpop.f32.mrf.mxu0
      %v2149 = vadd.f32 0.0, %v2148
      %v2150 = vpop.f32.mrf.mxu0
      %2151 = vmatprep.mubr.bf16.mxu0 0
      %2152 = vmatmul.mubr.bf16.gmra.mxu0 %v1974
      %v2153 = vpop.f32.mrf.mxu0
      %v2154 = vadd.f32 0.0, %v2153
      %v2155 = vpop.f32.mrf.mxu0
      %v2156 = vpop.f32.mrf.mxu0
      %v2157 = vadd.f32 0.0, %v2156
      %v2158 = vpop.f32.mrf.mxu0
      %2159 = vmatprep.mubr.bf16.mxu0 0
      %2160 = vmatmul.mubr.bf16.gmra.mxu0 %v1975
      %v2161 = vpop.f32.mrf.mxu0
      %v2162 = vadd.f32 0.0, %v2161
      %v2163 = vpop.f32.mrf.mxu0
      %v2164 = vpop.f32.mrf.mxu0
      %v2165 = vadd.f32 0.0, %v2164
      %v2166 = vpop.f32.mrf.mxu0
      %2167 = vmatprep.mubr.bf16.mxu0 0
      %2168 = vmatmul.mubr.bf16.gmra.mxu0 %v1976
      %v2169 = vpop.f32.mrf.mxu0
      %v2170 = vadd.f32 0.0, %v2169
      %v2171 = vpop.f32.mrf.mxu0
      %v2172 = vpop.f32.mrf.mxu0
      %v2173 = vadd.f32 0.0, %v2172
      %v2174 = vpop.f32.mrf.mxu0
      %2175 = vmatprep.mubr.bf16.mxu0 0
      %2176 = vmatmul.mubr.bf16.gmra.mxu0 %v1977
      %v2177 = vpop.f32.mrf.mxu0
      %v2178 = vadd.f32 0.0, %v2177
      %v2179 = vpop.f32.mrf.mxu0
      %v2180 = vpop.f32.mrf.mxu0
      %v2181 = vadd.f32 0.0, %v2180
      %v2182 = vpop.f32.mrf.mxu0
      %2183 = vmatprep.mubr.bf16.mxu0 0
      %2184 = vmatmul.mubr.bf16.gmra.mxu0 %v1978
      %v2185 = vpop.f32.mrf.mxu0
      %v2186 = vadd.f32 0.0, %v2185
      %v2187 = vpop.f32.mrf.mxu0
      %v2188 = vpop.f32.mrf.mxu0
      %v2189 = vadd.f32 0.0, %v2188
      %v2190 = vpop.f32.mrf.mxu0
      %2191 = vmatprep.mubr.bf16.mxu0 0
      %2192 = vmatmul.mubr.bf16.gmra.mxu0 %v1979
      %v2193 = vpop.f32.mrf.mxu0
      %v2194 = vadd.f32 0.0, %v2193
      %v2195 = vpop.f32.mrf.mxu0
      %v2196 = vpop.f32.mrf.mxu0
      %v2197 = vadd.f32 0.0, %v2196
      %v2198 = vpop.f32.mrf.mxu0
      %2199 = vmatprep.mubr.bf16.mxu0 0
      %2200 = vmatmul.mubr.bf16.gmra.mxu0 %v1980
      %v2201 = vpop.f32.mrf.mxu0
      %v2202 = vadd.f32 0.0, %v2201
      %v2203 = vpop.f32.mrf.mxu0
      %v2204 = vpop.f32.mrf.mxu0
      %v2205 = vadd.f32 0.0, %v2204
      %v2206 = vpop.f32.mrf.mxu0
      %2207 = vmatprep.mubr.bf16.mxu0 0
      %2208 = vmatmul.mubr.bf16.gmra.mxu0 %v1981
      %v2209 = vpop.f32.mrf.mxu0
      %v2210 = vadd.f32 0.0, %v2209
      %v2211 = vpop.f32.mrf.mxu0
      %v2212 = vpop.f32.mrf.mxu0
      %v2213 = vadd.f32 0.0, %v2212
      %v2214 = vpop.f32.mrf.mxu0
      %2215 = vmatprep.mubr.bf16.mxu0 0
      %2216 = vmatmul.mubr.bf16.gmra.mxu0 %v1982
      %v2217 = vpop.f32.mrf.mxu0
      %v2218 = vadd.f32 0.0, %v2217
      %v2219 = vpop.f32.mrf.mxu0
      %v2220 = vpop.f32.mrf.mxu0
      %v2221 = vadd.f32 0.0, %v2220
      %v2222 = vpop.f32.mrf.mxu0
      %2223 = vmatprep.mubr.bf16.mxu0 0
      %2224 = vmatmul.mubr.bf16.gmra.mxu0 %v1983
      %v2225 = vpop.f32.mrf.mxu0
      %v2226 = vadd.f32 0.0, %v2225
      %v2227 = vpop.f32.mrf.mxu0
      %v2228 = vpop.f32.mrf.mxu0
      %v2229 = vadd.f32 0.0, %v2228
      %v2230 = vpop.f32.mrf.mxu0
      %2231 = vmatprep.mubr.bf16.mxu0 0
      %2232 = vmatmul.mubr.bf16.gmra.mxu0 %v1984
      %v2233 = vpop.f32.mrf.mxu0
      %v2234 = vadd.f32 0.0, %v2233
      %v2235 = vpop.f32.mrf.mxu0
      %v2236 = vpop.f32.mrf.mxu0
      %v2237 = vadd.f32 0.0, %v2236
      %v2238 = vpop.f32.mrf.mxu0
      %2239 = vmatprep.mubr.bf16.mxu0 0
      %2240 = vmatmul.mubr.bf16.gmra.mxu0 %v1985
      %v2241 = vpop.f32.mrf.mxu0
      %v2242 = vadd.f32 0.0, %v2241
      %v2243 = vpop.f32.mrf.mxu0
      %v2244 = vpop.f32.mrf.mxu0
      %v2245 = vadd.f32 0.0, %v2244
      %v2246 = vpop.f32.mrf.mxu0
      %2247 = vmatprep.mubr.bf16.mxu0 0
      %2248 = vmatmul.mubr.bf16.gmra.mxu0 %v1986
      %v2249 = vpop.f32.mrf.mxu0
      %v2250 = vadd.f32 0.0, %v2249
      %v2251 = vpop.f32.mrf.mxu0
      %v2252 = vpop.f32.mrf.mxu0
      %v2253 = vadd.f32 0.0, %v2252
      %v2254 = vpop.f32.mrf.mxu0
      %2255 = vmatprep.mubr.bf16.mxu0 0
      %2256 = vmatmul.mubr.bf16.gmra.mxu0 %v1987
      %v2257 = vpop.f32.mrf.mxu0
      %v2258 = vadd.f32 0.0, %v2257
      %v2259 = vpop.f32.mrf.mxu0
      %v2260 = vpop.f32.mrf.mxu0
      %v2261 = vadd.f32 0.0, %v2260
      %v2262 = vpop.f32.mrf.mxu0
      %2263 = vmatprep.mubr.bf16.mxu0 0
      %2264 = vmatmul.mubr.bf16.gmra.mxu0 %v1988
      %v2265 = vpop.f32.mrf.mxu0
      %v2266 = vadd.f32 0.0, %v2265
      %v2267 = vpop.f32.mrf.mxu0
      %v2268 = vpop.f32.mrf.mxu0
      %v2269 = vadd.f32 0.0, %v2268
      %v2270 = vpop.f32.mrf.mxu0
      %2271 = vmatprep.mubr.bf16.mxu0 0
      %2272 = vmatmul.mubr.bf16.gmra.mxu0 %v1989
      %v2273 = vpop.f32.mrf.mxu0
      %v2274 = vadd.f32 0.0, %v2273
      %v2275 = vpop.f32.mrf.mxu0
      %v2276 = vpop.f32.mrf.mxu0
      %v2277 = vadd.f32 0.0, %v2276
      %v2278 = vpop.f32.mrf.mxu0
      %2279 = vdwg.mxu0
      %v2280 = vld [vmem:[#allocation3] sm:$0xff]
      %v2281 = vld [vmem:[#allocation3 + $0x8] sm:$0xff]
      %v2282 = vld [vmem:[#allocation3 + $0x10] sm:$0xff]
      %v2283 = vld [vmem:[#allocation3 + $0x18] sm:$0xff]
      %v2284 = vld [vmem:[#allocation3 + $0x20] sm:$0xff]
      %v2285 = vld [vmem:[#allocation3 + $0x28] sm:$0xff]
      %v2286 = vld [vmem:[#allocation3 + $0x30] sm:$0xff]
      %v2287 = vld [vmem:[#allocation3 + $0x38] sm:$0xff]
      %v2288 = vld [vmem:[#allocation3 + $0x40] sm:$0xff]
      %v2289 = vld [vmem:[#allocation3 + $0x48] sm:$0xff]
      %v2290 = vld [vmem:[#allocation3 + $0x50] sm:$0xff]
      %v2291 = vld [vmem:[#allocation3 + $0x58] sm:$0xff]
      %v2292 = vld [vmem:[#allocation3 + $0x60] sm:$0xff]
      %v2293 = vld [vmem:[#allocation3 + $0x68] sm:$0xff]
      %v2294 = vld [vmem:[#allocation3 + $0x70] sm:$0xff]
      %v2295 = vld [vmem:[#allocation3 + $0x78] sm:$0xff]
      %v2296 = vld [vmem:[#allocation3 + $0x80] sm:$0xff]
      %v2297 = vld [vmem:[#allocation3 + $0x88] sm:$0xff]
      %v2298 = vld [vmem:[#allocation3 + $0x90] sm:$0xff]
      %v2299 = vld [vmem:[#allocation3 + $0x98] sm:$0xff]
      %v2300 = vld [vmem:[#allocation3 + $0xa0] sm:$0xff]
      %v2301 = vld [vmem:[#allocation3 + $0xa8] sm:$0xff]
      %v2302 = vld [vmem:[#allocation3 + $0xb0] sm:$0xff]
      %v2303 = vld [vmem:[#allocation3 + $0xb8] sm:$0xff]
      %v2304 = vld [vmem:[#allocation3 + $0xc0] sm:$0xff]
      %v2305 = vld [vmem:[#allocation3 + $0xc8] sm:$0xff]
      %v2306 = vld [vmem:[#allocation3 + $0xd0] sm:$0xff]
      %v2307 = vld [vmem:[#allocation3 + $0xd8] sm:$0xff]
      %v2308 = vld [vmem:[#allocation3 + $0xe0] sm:$0xff]
      %v2309 = vld [vmem:[#allocation3 + $0xe8] sm:$0xff]
      %v2310 = vld [vmem:[#allocation3 + $0xf0] sm:$0xff]
      %v2311 = vld [vmem:[#allocation3 + $0xf8] sm:$0xff]
      %v2312 = vld [vmem:[#allocation3 + $0x100] sm:$0xff]
      %v2313 = vld [vmem:[#allocation3 + $0x108] sm:$0xff]
      %v2314 = vld [vmem:[#allocation3 + $0x110] sm:$0xff]
      %v2315 = vld [vmem:[#allocation3 + $0x118] sm:$0xff]
      %v2316 = vld [vmem:[#allocation3 + $0x120] sm:$0xff]
      %v2317 = vld [vmem:[#allocation3 + $0x128] sm:$0xff]
      %v2318 = vld [vmem:[#allocation3 + $0x130] sm:$0xff]
      %v2319 = vld [vmem:[#allocation3 + $0x138] sm:$0xff]
      %v2320 = vld [vmem:[#allocation3 + $0x140] sm:$0xff]
      %v2321 = vld [vmem:[#allocation3 + $0x148] sm:$0xff]
      %v2322 = vld [vmem:[#allocation3 + $0x150] sm:$0xff]
      %v2323 = vld [vmem:[#allocation3 + $0x158] sm:$0xff]
      %v2324 = vld [vmem:[#allocation3 + $0x160] sm:$0xff]
      %v2325 = vld [vmem:[#allocation3 + $0x168] sm:$0xff]
      %v2326 = vld [vmem:[#allocation3 + $0x170] sm:$0xff]
      %v2327 = vld [vmem:[#allocation3 + $0x178] sm:$0xff]
      %v2328 = vadd.f32 %v2280, %v2090
      %v2329 = vadd.f32 %v2281, %v2093
      %v2330 = vadd.f32 %v2282, %v2098
      %v2331 = vadd.f32 %v2283, %v2101
      %v2332 = vadd.f32 %v2284, %v2106
      %v2333 = vadd.f32 %v2285, %v2109
      %v2334 = vadd.f32 %v2286, %v2114
      %v2335 = vadd.f32 %v2287, %v2117
      %v2336 = vadd.f32 %v2288, %v2122
      %v2337 = vadd.f32 %v2289, %v2125
      %v2338 = vadd.f32 %v2290, %v2130
      %v2339 = vadd.f32 %v2291, %v2133
      %v2340 = vadd.f32 %v2292, %v2138
      %v2341 = vadd.f32 %v2293, %v2141
      %v2342 = vadd.f32 %v2294, %v2146
      %v2343 = vadd.f32 %v2295, %v2149
      %v2344 = vadd.f32 %v2296, %v2154
      %v2345 = vadd.f32 %v2297, %v2157
      %v2346 = vadd.f32 %v2298, %v2162
      %v2347 = vadd.f32 %v2299, %v2165
      %v2348 = vadd.f32 %v2300, %v2170
      %v2349 = vadd.f32 %v2301, %v2173
      %v2350 = vadd.f32 %v2302, %v2178
      %v2351 = vadd.f32 %v2303, %v2181
      %v2352 = vadd.f32 %v2304, %v2186
      %v2353 = vadd.f32 %v2305, %v2189
      %v2354 = vadd.f32 %v2306, %v2194
      %v2355 = vadd.f32 %v2307, %v2197
      %v2356 = vadd.f32 %v2308, %v2202
      %v2357 = vadd.f32 %v2309, %v2205
      %v2358 = vadd.f32 %v2310, %v2210
      %v2359 = vadd.f32 %v2311, %v2213
      %v2360 = vadd.f32 %v2312, %v2218
      %v2361 = vadd.f32 %v2313, %v2221
      %v2362 = vadd.f32 %v2314, %v2226
      %v2363 = vadd.f32 %v2315, %v2229
      %v2364 = vadd.f32 %v2316, %v2234
      %v2365 = vadd.f32 %v2317, %v2237
      %v2366 = vadd.f32 %v2318, %v2242
      %v2367 = vadd.f32 %v2319, %v2245
      %v2368 = vadd.f32 %v2320, %v2250
      %v2369 = vadd.f32 %v2321, %v2253
      %v2370 = vadd.f32 %v2322, %v2258
      %v2371 = vadd.f32 %v2323, %v2261
      %v2372 = vadd.f32 %v2324, %v2266
      %v2373 = vadd.f32 %v2325, %v2269
      %v2374 = vadd.f32 %v2326, %v2274
      %v2375 = vadd.f32 %v2327, %v2277
      %2376 = vst [vmem:[#allocation3] sm:$0xff] %v2328
      %2377 = vst [vmem:[#allocation3 + $0x8] sm:$0xff] %v2329
      %2378 = vst [vmem:[#allocation3 + $0x10] sm:$0xff] %v2330
      %2379 = vst [vmem:[#allocation3 + $0x18] sm:$0xff] %v2331
      %2380 = vst [vmem:[#allocation3 + $0x20] sm:$0xff] %v2332
      %2381 = vst [vmem:[#allocation3 + $0x28] sm:$0xff] %v2333
      %2382 = vst [vmem:[#allocation3 + $0x30] sm:$0xff] %v2334
      %2383 = vst [vmem:[#allocation3 + $0x38] sm:$0xff] %v2335
      %2384 = vst [vmem:[#allocation3 + $0x40] sm:$0xff] %v2336
      %2385 = vst [vmem:[#allocation3 + $0x48] sm:$0xff] %v2337
      %2386 = vst [vmem:[#allocation3 + $0x50] sm:$0xff] %v2338
      %2387 = vst [vmem:[#allocation3 + $0x58] sm:$0xff] %v2339
      %2388 = vst [vmem:[#allocation3 + $0x60] sm:$0xff] %v2340
      %2389 = vst [vmem:[#allocation3 + $0x68] sm:$0xff] %v2341
      %2390 = vst [vmem:[#allocation3 + $0x70] sm:$0xff] %v2342
      %2391 = vst [vmem:[#allocation3 + $0x78] sm:$0xff] %v2343
      %2392 = vst [vmem:[#allocation3 + $0x80] sm:$0xff] %v2344
      %2393 = vst [vmem:[#allocation3 + $0x88] sm:$0xff] %v2345
      %2394 = vst [vmem:[#allocation3 + $0x90] sm:$0xff] %v2346
      %2395 = vst [vmem:[#allocation3 + $0x98] sm:$0xff] %v2347
      %2396 = vst [vmem:[#allocation3 + $0xa0] sm:$0xff] %v2348
      %2397 = vst [vmem:[#allocation3 + $0xa8] sm:$0xff] %v2349
      %2398 = vst [vmem:[#allocation3 + $0xb0] sm:$0xff] %v2350
      %2399 = vst [vmem:[#allocation3 + $0xb8] sm:$0xff] %v2351
      %2400 = vst [vmem:[#allocation3 + $0xc0] sm:$0xff] %v2352
      %2401 = vst [vmem:[#allocation3 + $0xc8] sm:$0xff] %v2353
      %2402 = vst [vmem:[#allocation3 + $0xd0] sm:$0xff] %v2354
      %2403 = vst [vmem:[#allocation3 + $0xd8] sm:$0xff] %v2355
      %2404 = vst [vmem:[#allocation3 + $0xe0] sm:$0xff] %v2356
      %2405 = vst [vmem:[#allocation3 + $0xe8] sm:$0xff] %v2357
      %2406 = vst [vmem:[#allocation3 + $0xf0] sm:$0xff] %v2358
      %2407 = vst [vmem:[#allocation3 + $0xf8] sm:$0xff] %v2359
      %2408 = vst [vmem:[#allocation3 + $0x100] sm:$0xff] %v2360
      %2409 = vst [vmem:[#allocation3 + $0x108] sm:$0xff] %v2361
      %2410 = vst [vmem:[#allocation3 + $0x110] sm:$0xff] %v2362
      %2411 = vst [vmem:[#allocation3 + $0x118] sm:$0xff] %v2363
      %2412 = vst [vmem:[#allocation3 + $0x120] sm:$0xff] %v2364
      %2413 = vst [vmem:[#allocation3 + $0x128] sm:$0xff] %v2365
      %2414 = vst [vmem:[#allocation3 + $0x130] sm:$0xff] %v2366
      %2415 = vst [vmem:[#allocation3 + $0x138] sm:$0xff] %v2367
      %2416 = vst [vmem:[#allocation3 + $0x140] sm:$0xff] %v2368
      %2417 = vst [vmem:[#allocation3 + $0x148] sm:$0xff] %v2369
      %2418 = vst [vmem:[#allocation3 + $0x150] sm:$0xff] %v2370
      %2419 = vst [vmem:[#allocation3 + $0x158] sm:$0xff] %v2371
      %2420 = vst [vmem:[#allocation3 + $0x160] sm:$0xff] %v2372
      %2421 = vst [vmem:[#allocation3 + $0x168] sm:$0xff] %v2373
      %2422 = vst [vmem:[#allocation3 + $0x170] sm:$0xff] %v2374
      %2423 = vst [vmem:[#allocation3 + $0x178] sm:$0xff] %v2375
      %v2424 = vpack.c.bf16 %v1727, %v1726
      %v2425 = vpack.c.bf16 %v1729, %v1728
      %v2426 = vpack.c.bf16 %v1731, %v1730
      %v2427 = vpack.c.bf16 %v1733, %v1732
      %v2428 = vpack.c.bf16 %v1735, %v1734
      %v2429 = vpack.c.bf16 %v1737, %v1736
      %v2430 = vpack.c.bf16 %v1739, %v1738
      %v2431 = vpack.c.bf16 %v1741, %v1740
      %v2432 = vpack.c.bf16 %v1743, %v1742
      %v2433 = vpack.c.bf16 %v1745, %v1744
      %v2434 = vpack.c.bf16 %v1747, %v1746
      %v2435 = vpack.c.bf16 %v1749, %v1748
      %v2436 = vpack.c.bf16 %v1751, %v1750
      %v2437 = vpack.c.bf16 %v1753, %v1752
      %v2438 = vpack.c.bf16 %v1755, %v1754
      %v2439 = vpack.c.bf16 %v1757, %v1756
      %v2440 = vpack.c.bf16 %v1759, %v1758
      %v2441 = vpack.c.bf16 %v1761, %v1760
      %v2442 = vpack.c.bf16 %v1763, %v1762
      %v2443 = vpack.c.bf16 %v1765, %v1764
      %v2444 = vpack.c.bf16 %v1767, %v1766
      %v2445 = vpack.c.bf16 %v1769, %v1768
      %v2446 = vpack.c.bf16 %v1771, %v1770
      %v2447 = vpack.c.bf16 %v1773, %v1772
      %s2448 = scalar_lea.vmem %s1, 256
      %v2449 = vld [vmem:[%s2448] sm:$0xf]
      %v2450 = vld [vmem:[%s2448 + $0x4] sm:$0xf]
      %v2451 = vld [vmem:[%s2448 + $0x8] sm:$0xf]
      %v2452 = vld [vmem:[%s2448 + $0xc] sm:$0xf]
      %v2453 = vld [vmem:[%s2448 + $0x10] sm:$0xf]
      %v2454 = vld [vmem:[%s2448 + $0x14] sm:$0xf]
      %v2455 = vld [vmem:[%s2448 + $0x18] sm:$0xf]
      %v2456 = vld [vmem:[%s2448 + $0x1c] sm:$0xf]
      %v2457 = vld [vmem:[%s2448 + $0x20] sm:$0xf]
      %v2458 = vld [vmem:[%s2448 + $0x24] sm:$0xf]
      %v2459 = vld [vmem:[%s2448 + $0x28] sm:$0xf]
      %v2460 = vld [vmem:[%s2448 + $0x2c] sm:$0xf]
      %v2461 = vld [vmem:[%s2448 + $0x30] sm:$0xf]
      %v2462 = vld [vmem:[%s2448 + $0x34] sm:$0xf]
      %v2463 = vld [vmem:[%s2448 + $0x38] sm:$0xf]
      %v2464 = vld [vmem:[%s2448 + $0x3c] sm:$0xf]
      %v2481 = vunpack.c.l.b16 %v2449
      %v2482 = vunpack.c.l.b16 %v2450
      %v2483 = vunpack.c.l.b16 %v2451
      %v2484 = vunpack.c.l.b16 %v2452
      %v2485 = vunpack.c.l.b16 %v2453
      %v2486 = vunpack.c.l.b16 %v2454
      %v2487 = vunpack.c.l.b16 %v2455
      %v2488 = vunpack.c.l.b16 %v2456
      %v2489 = vunpack.c.l.b16 %v2457
      %v2490 = vunpack.c.l.b16 %v2458
      %v2491 = vunpack.c.l.b16 %v2459
      %v2492 = vunpack.c.l.b16 %v2460
      %v2493 = vunpack.c.l.b16 %v2461
      %v2494 = vunpack.c.l.b16 %v2462
      %v2495 = vunpack.c.l.b16 %v2463
      %v2496 = vunpack.c.l.b16 %v2464
      %v2497 = vpack.c.b16 %v2482, %v2481
      %v2498 = vpack.c.b16 %v2484, %v2483
      %v2499 = vpack.c.b16 %v2486, %v2485
      %v2500 = vpack.c.b16 %v2488, %v2487
      %v2501 = vpack.c.b16 %v2490, %v2489
      %v2502 = vpack.c.b16 %v2492, %v2491
      %v2503 = vpack.c.b16 %v2494, %v2493
      %v2504 = vpack.c.b16 %v2496, %v2495
      %2513 = vmatprep.subr.bf16.mxu0 0
      %2514 = vmatpush1.bf16.msra.mxu0 %v2504
      %2515 = vmatprep.subr.bf16.mxu0 0
      %2516 = vmatpush1.bf16.msra.mxu0 %v2503
      %2517 = vmatprep.subr.bf16.mxu0 0
      %2518 = vmatpush1.bf16.msra.mxu0 %v2502
      %2519 = vmatprep.subr.bf16.mxu0 0
      %2520 = vmatpush1.bf16.msra.mxu0 %v2501
      %2521 = vmatprep.subr.bf16.mxu0 0
      %2522 = vmatpush1.bf16.msra.mxu0 %v2500
      %2523 = vmatprep.subr.bf16.mxu0 0
      %2524 = vmatpush1.bf16.msra.mxu0 %v2499
      %2525 = vmatprep.subr.bf16.mxu0 0
      %2526 = vmatpush1.bf16.msra.mxu0 %v2498
      %2527 = vmatprep.subr.bf16.mxu0 0
      %2528 = vmatpush1.bf16.msra.mxu0 %v2497
      %2529 = vmatprep.subr.bf16.mxu0 0
      %2530 = vmatpush2.bf16.msra.mxu0 0
      %2531 = vmatprep.subr.bf16.mxu0 0
      %2532 = vmatpush2.bf16.msra.mxu0 0
      %2533 = vmatprep.subr.bf16.mxu0 0
      %2534 = vmatpush2.bf16.msra.mxu0 0
      %2535 = vmatprep.subr.bf16.mxu0 0
      %2536 = vmatpush2.bf16.msra.mxu0 0
      %2537 = vmatprep.subr.bf16.mxu0 0
      %2538 = vmatpush2.bf16.msra.mxu0 0
      %2539 = vmatprep.subr.bf16.mxu0 0
      %2540 = vmatpush2.bf16.msra.mxu0 0
      %2541 = vmatprep.subr.bf16.mxu0 0
      %2542 = vmatpush2.bf16.msra.mxu0 0
      %2543 = vmatprep.subr.bf16.mxu0 0
      %2544 = vmatpush2.bf16.msra.mxu0 0
      %2545 = vmatprep.mubr.bf16.mxu0 0
      %2546 = vmatmul.mubr.bf16.gmra.mxu0 %v2424
      %v2547 = vpop.f32.mrf.mxu0
      %v2548 = vadd.f32 0.0, %v2547
      %v2549 = vpop.f32.mrf.mxu0
      %v2550 = vpop.f32.mrf.mxu0
      %v2551 = vadd.f32 0.0, %v2550
      %v2552 = vpop.f32.mrf.mxu0
      %2553 = vmatprep.mubr.bf16.mxu0 0
      %2554 = vmatmul.mubr.bf16.gmra.mxu0 %v2425
      %v2555 = vpop.f32.mrf.mxu0
      %v2556 = vadd.f32 0.0, %v2555
      %v2557 = vpop.f32.mrf.mxu0
      %v2558 = vpop.f32.mrf.mxu0
      %v2559 = vadd.f32 0.0, %v2558
      %v2560 = vpop.f32.mrf.mxu0
      %2561 = vmatprep.mubr.bf16.mxu0 0
      %2562 = vmatmul.mubr.bf16.gmra.mxu0 %v2426
      %v2563 = vpop.f32.mrf.mxu0
      %v2564 = vadd.f32 0.0, %v2563
      %v2565 = vpop.f32.mrf.mxu0
      %v2566 = vpop.f32.mrf.mxu0
      %v2567 = vadd.f32 0.0, %v2566
      %v2568 = vpop.f32.mrf.mxu0
      %2569 = vmatprep.mubr.bf16.mxu0 0
      %2570 = vmatmul.mubr.bf16.gmra.mxu0 %v2427
      %v2571 = vpop.f32.mrf.mxu0
      %v2572 = vadd.f32 0.0, %v2571
      %v2573 = vpop.f32.mrf.mxu0
      %v2574 = vpop.f32.mrf.mxu0
      %v2575 = vadd.f32 0.0, %v2574
      %v2576 = vpop.f32.mrf.mxu0
      %2577 = vmatprep.mubr.bf16.mxu0 0
      %2578 = vmatmul.mubr.bf16.gmra.mxu0 %v2428
      %v2579 = vpop.f32.mrf.mxu0
      %v2580 = vadd.f32 0.0, %v2579
      %v2581 = vpop.f32.mrf.mxu0
      %v2582 = vpop.f32.mrf.mxu0
      %v2583 = vadd.f32 0.0, %v2582
      %v2584 = vpop.f32.mrf.mxu0
      %2585 = vmatprep.mubr.bf16.mxu0 0
      %2586 = vmatmul.mubr.bf16.gmra.mxu0 %v2429
      %v2587 = vpop.f32.mrf.mxu0
      %v2588 = vadd.f32 0.0, %v2587
      %v2589 = vpop.f32.mrf.mxu0
      %v2590 = vpop.f32.mrf.mxu0
      %v2591 = vadd.f32 0.0, %v2590
      %v2592 = vpop.f32.mrf.mxu0
      %2593 = vmatprep.mubr.bf16.mxu0 0
      %2594 = vmatmul.mubr.bf16.gmra.mxu0 %v2430
      %v2595 = vpop.f32.mrf.mxu0
      %v2596 = vadd.f32 0.0, %v2595
      %v2597 = vpop.f32.mrf.mxu0
      %v2598 = vpop.f32.mrf.mxu0
      %v2599 = vadd.f32 0.0, %v2598
      %v2600 = vpop.f32.mrf.mxu0
      %2601 = vmatprep.mubr.bf16.mxu0 0
      %2602 = vmatmul.mubr.bf16.gmra.mxu0 %v2431
      %v2603 = vpop.f32.mrf.mxu0
      %v2604 = vadd.f32 0.0, %v2603
      %v2605 = vpop.f32.mrf.mxu0
      %v2606 = vpop.f32.mrf.mxu0
      %v2607 = vadd.f32 0.0, %v2606
      %v2608 = vpop.f32.mrf.mxu0
      %2609 = vmatprep.mubr.bf16.mxu0 0
      %2610 = vmatmul.mubr.bf16.gmra.mxu0 %v2432
      %v2611 = vpop.f32.mrf.mxu0
      %v2612 = vadd.f32 0.0, %v2611
      %v2613 = vpop.f32.mrf.mxu0
      %v2614 = vpop.f32.mrf.mxu0
      %v2615 = vadd.f32 0.0, %v2614
      %v2616 = vpop.f32.mrf.mxu0
      %2617 = vmatprep.mubr.bf16.mxu0 0
      %2618 = vmatmul.mubr.bf16.gmra.mxu0 %v2433
      %v2619 = vpop.f32.mrf.mxu0
      %v2620 = vadd.f32 0.0, %v2619
      %v2621 = vpop.f32.mrf.mxu0
      %v2622 = vpop.f32.mrf.mxu0
      %v2623 = vadd.f32 0.0, %v2622
      %v2624 = vpop.f32.mrf.mxu0
      %2625 = vmatprep.mubr.bf16.mxu0 0
      %2626 = vmatmul.mubr.bf16.gmra.mxu0 %v2434
      %v2627 = vpop.f32.mrf.mxu0
      %v2628 = vadd.f32 0.0, %v2627
      %v2629 = vpop.f32.mrf.mxu0
      %v2630 = vpop.f32.mrf.mxu0
      %v2631 = vadd.f32 0.0, %v2630
      %v2632 = vpop.f32.mrf.mxu0
      %2633 = vmatprep.mubr.bf16.mxu0 0
      %2634 = vmatmul.mubr.bf16.gmra.mxu0 %v2435
      %v2635 = vpop.f32.mrf.mxu0
      %v2636 = vadd.f32 0.0, %v2635
      %v2637 = vpop.f32.mrf.mxu0
      %v2638 = vpop.f32.mrf.mxu0
      %v2639 = vadd.f32 0.0, %v2638
      %v2640 = vpop.f32.mrf.mxu0
      %2641 = vmatprep.mubr.bf16.mxu0 0
      %2642 = vmatmul.mubr.bf16.gmra.mxu0 %v2436
      %v2643 = vpop.f32.mrf.mxu0
      %v2644 = vadd.f32 0.0, %v2643
      %v2645 = vpop.f32.mrf.mxu0
      %v2646 = vpop.f32.mrf.mxu0
      %v2647 = vadd.f32 0.0, %v2646
      %v2648 = vpop.f32.mrf.mxu0
      %2649 = vmatprep.mubr.bf16.mxu0 0
      %2650 = vmatmul.mubr.bf16.gmra.mxu0 %v2437
      %v2651 = vpop.f32.mrf.mxu0
      %v2652 = vadd.f32 0.0, %v2651
      %v2653 = vpop.f32.mrf.mxu0
      %v2654 = vpop.f32.mrf.mxu0
      %v2655 = vadd.f32 0.0, %v2654
      %v2656 = vpop.f32.mrf.mxu0
      %2657 = vmatprep.mubr.bf16.mxu0 0
      %2658 = vmatmul.mubr.bf16.gmra.mxu0 %v2438
      %v2659 = vpop.f32.mrf.mxu0
      %v2660 = vadd.f32 0.0, %v2659
      %v2661 = vpop.f32.mrf.mxu0
      %v2662 = vpop.f32.mrf.mxu0
      %v2663 = vadd.f32 0.0, %v2662
      %v2664 = vpop.f32.mrf.mxu0
      %2665 = vmatprep.mubr.bf16.mxu0 0
      %2666 = vmatmul.mubr.bf16.gmra.mxu0 %v2439
      %v2667 = vpop.f32.mrf.mxu0
      %v2668 = vadd.f32 0.0, %v2667
      %v2669 = vpop.f32.mrf.mxu0
      %v2670 = vpop.f32.mrf.mxu0
      %v2671 = vadd.f32 0.0, %v2670
      %v2672 = vpop.f32.mrf.mxu0
      %2673 = vmatprep.mubr.bf16.mxu0 0
      %2674 = vmatmul.mubr.bf16.gmra.mxu0 %v2440
      %v2675 = vpop.f32.mrf.mxu0
      %v2676 = vadd.f32 0.0, %v2675
      %v2677 = vpop.f32.mrf.mxu0
      %v2678 = vpop.f32.mrf.mxu0
      %v2679 = vadd.f32 0.0, %v2678
      %v2680 = vpop.f32.mrf.mxu0
      %2681 = vmatprep.mubr.bf16.mxu0 0
      %2682 = vmatmul.mubr.bf16.gmra.mxu0 %v2441
      %v2683 = vpop.f32.mrf.mxu0
      %v2684 = vadd.f32 0.0, %v2683
      %v2685 = vpop.f32.mrf.mxu0
      %v2686 = vpop.f32.mrf.mxu0
      %v2687 = vadd.f32 0.0, %v2686
      %v2688 = vpop.f32.mrf.mxu0
      %2689 = vmatprep.mubr.bf16.mxu0 0
      %2690 = vmatmul.mubr.bf16.gmra.mxu0 %v2442
      %v2691 = vpop.f32.mrf.mxu0
      %v2692 = vadd.f32 0.0, %v2691
      %v2693 = vpop.f32.mrf.mxu0
      %v2694 = vpop.f32.mrf.mxu0
      %v2695 = vadd.f32 0.0, %v2694
      %v2696 = vpop.f32.mrf.mxu0
      %2697 = vmatprep.mubr.bf16.mxu0 0
      %2698 = vmatmul.mubr.bf16.gmra.mxu0 %v2443
      %v2699 = vpop.f32.mrf.mxu0
      %v2700 = vadd.f32 0.0, %v2699
      %v2701 = vpop.f32.mrf.mxu0
      %v2702 = vpop.f32.mrf.mxu0
      %v2703 = vadd.f32 0.0, %v2702
      %v2704 = vpop.f32.mrf.mxu0
      %2705 = vmatprep.mubr.bf16.mxu0 0
      %2706 = vmatmul.mubr.bf16.gmra.mxu0 %v2444
      %v2707 = vpop.f32.mrf.mxu0
      %v2708 = vadd.f32 0.0, %v2707
      %v2709 = vpop.f32.mrf.mxu0
      %v2710 = vpop.f32.mrf.mxu0
      %v2711 = vadd.f32 0.0, %v2710
      %v2712 = vpop.f32.mrf.mxu0
      %2713 = vmatprep.mubr.bf16.mxu0 0
      %2714 = vmatmul.mubr.bf16.gmra.mxu0 %v2445
      %v2715 = vpop.f32.mrf.mxu0
      %v2716 = vadd.f32 0.0, %v2715
      %v2717 = vpop.f32.mrf.mxu0
      %v2718 = vpop.f32.mrf.mxu0
      %v2719 = vadd.f32 0.0, %v2718
      %v2720 = vpop.f32.mrf.mxu0
      %2721 = vmatprep.mubr.bf16.mxu0 0
      %2722 = vmatmul.mubr.bf16.gmra.mxu0 %v2446
      %v2723 = vpop.f32.mrf.mxu0
      %v2724 = vadd.f32 0.0, %v2723
      %v2725 = vpop.f32.mrf.mxu0
      %v2726 = vpop.f32.mrf.mxu0
      %v2727 = vadd.f32 0.0, %v2726
      %v2728 = vpop.f32.mrf.mxu0
      %2729 = vmatprep.mubr.bf16.mxu0 0
      %2730 = vmatmul.mubr.bf16.gmra.mxu0 %v2447
      %v2731 = vpop.f32.mrf.mxu0
      %v2732 = vadd.f32 0.0, %v2731
      %v2733 = vpop.f32.mrf.mxu0
      %v2734 = vpop.f32.mrf.mxu0
      %v2735 = vadd.f32 0.0, %v2734
      %v2736 = vpop.f32.mrf.mxu0
      %2737 = vdwg.mxu0
      %v2738 = vld [vmem:[#allocation3] sm:$0xff]
      %v2739 = vld [vmem:[#allocation3 + $0x8] sm:$0xff]
      %v2740 = vld [vmem:[#allocation3 + $0x10] sm:$0xff]
      %v2741 = vld [vmem:[#allocation3 + $0x18] sm:$0xff]
      %v2742 = vld [vmem:[#allocation3 + $0x20] sm:$0xff]
      %v2743 = vld [vmem:[#allocation3 + $0x28] sm:$0xff]
      %v2744 = vld [vmem:[#allocation3 + $0x30] sm:$0xff]
      %v2745 = vld [vmem:[#allocation3 + $0x38] sm:$0xff]
      %v2746 = vld [vmem:[#allocation3 + $0x40] sm:$0xff]
      %v2747 = vld [vmem:[#allocation3 + $0x48] sm:$0xff]
      %v2748 = vld [vmem:[#allocation3 + $0x50] sm:$0xff]
      %v2749 = vld [vmem:[#allocation3 + $0x58] sm:$0xff]
      %v2750 = vld [vmem:[#allocation3 + $0x60] sm:$0xff]
      %v2751 = vld [vmem:[#allocation3 + $0x68] sm:$0xff]
      %v2752 = vld [vmem:[#allocation3 + $0x70] sm:$0xff]
      %v2753 = vld [vmem:[#allocation3 + $0x78] sm:$0xff]
      %v2754 = vld [vmem:[#allocation3 + $0x80] sm:$0xff]
      %v2755 = vld [vmem:[#allocation3 + $0x88] sm:$0xff]
      %v2756 = vld [vmem:[#allocation3 + $0x90] sm:$0xff]
      %v2757 = vld [vmem:[#allocation3 + $0x98] sm:$0xff]
      %v2758 = vld [vmem:[#allocation3 + $0xa0] sm:$0xff]
      %v2759 = vld [vmem:[#allocation3 + $0xa8] sm:$0xff]
      %v2760 = vld [vmem:[#allocation3 + $0xb0] sm:$0xff]
      %v2761 = vld [vmem:[#allocation3 + $0xb8] sm:$0xff]
      %v2762 = vld [vmem:[#allocation3 + $0xc0] sm:$0xff]
      %v2763 = vld [vmem:[#allocation3 + $0xc8] sm:$0xff]
      %v2764 = vld [vmem:[#allocation3 + $0xd0] sm:$0xff]
      %v2765 = vld [vmem:[#allocation3 + $0xd8] sm:$0xff]
      %v2766 = vld [vmem:[#allocation3 + $0xe0] sm:$0xff]
      %v2767 = vld [vmem:[#allocation3 + $0xe8] sm:$0xff]
      %v2768 = vld [vmem:[#allocation3 + $0xf0] sm:$0xff]
      %v2769 = vld [vmem:[#allocation3 + $0xf8] sm:$0xff]
      %v2770 = vld [vmem:[#allocation3 + $0x100] sm:$0xff]
      %v2771 = vld [vmem:[#allocation3 + $0x108] sm:$0xff]
      %v2772 = vld [vmem:[#allocation3 + $0x110] sm:$0xff]
      %v2773 = vld [vmem:[#allocation3 + $0x118] sm:$0xff]
      %v2774 = vld [vmem:[#allocation3 + $0x120] sm:$0xff]
      %v2775 = vld [vmem:[#allocation3 + $0x128] sm:$0xff]
      %v2776 = vld [vmem:[#allocation3 + $0x130] sm:$0xff]
      %v2777 = vld [vmem:[#allocation3 + $0x138] sm:$0xff]
      %v2778 = vld [vmem:[#allocation3 + $0x140] sm:$0xff]
      %v2779 = vld [vmem:[#allocation3 + $0x148] sm:$0xff]
      %v2780 = vld [vmem:[#allocation3 + $0x150] sm:$0xff]
      %v2781 = vld [vmem:[#allocation3 + $0x158] sm:$0xff]
      %v2782 = vld [vmem:[#allocation3 + $0x160] sm:$0xff]
      %v2783 = vld [vmem:[#allocation3 + $0x168] sm:$0xff]
      %v2784 = vld [vmem:[#allocation3 + $0x170] sm:$0xff]
      %v2785 = vld [vmem:[#allocation3 + $0x178] sm:$0xff]
      %v2786 = vadd.f32 %v2738, %v2548
      %v2787 = vadd.f32 %v2739, %v2551
      %v2788 = vadd.f32 %v2740, %v2556
      %v2789 = vadd.f32 %v2741, %v2559
      %v2790 = vadd.f32 %v2742, %v2564
      %v2791 = vadd.f32 %v2743, %v2567
      %v2792 = vadd.f32 %v2744, %v2572
      %v2793 = vadd.f32 %v2745, %v2575
      %v2794 = vadd.f32 %v2746, %v2580
      %v2795 = vadd.f32 %v2747, %v2583
      %v2796 = vadd.f32 %v2748, %v2588
      %v2797 = vadd.f32 %v2749, %v2591
      %v2798 = vadd.f32 %v2750, %v2596
      %v2799 = vadd.f32 %v2751, %v2599
      %v2800 = vadd.f32 %v2752, %v2604
      %v2801 = vadd.f32 %v2753, %v2607
      %v2802 = vadd.f32 %v2754, %v2612
      %v2803 = vadd.f32 %v2755, %v2615
      %v2804 = vadd.f32 %v2756, %v2620
      %v2805 = vadd.f32 %v2757, %v2623
      %v2806 = vadd.f32 %v2758, %v2628
      %v2807 = vadd.f32 %v2759, %v2631
      %v2808 = vadd.f32 %v2760, %v2636
      %v2809 = vadd.f32 %v2761, %v2639
      %v2810 = vadd.f32 %v2762, %v2644
      %v2811 = vadd.f32 %v2763, %v2647
      %v2812 = vadd.f32 %v2764, %v2652
      %v2813 = vadd.f32 %v2765, %v2655
      %v2814 = vadd.f32 %v2766, %v2660
      %v2815 = vadd.f32 %v2767, %v2663
      %v2816 = vadd.f32 %v2768, %v2668
      %v2817 = vadd.f32 %v2769, %v2671
      %v2818 = vadd.f32 %v2770, %v2676
      %v2819 = vadd.f32 %v2771, %v2679
      %v2820 = vadd.f32 %v2772, %v2684
      %v2821 = vadd.f32 %v2773, %v2687
      %v2822 = vadd.f32 %v2774, %v2692
      %v2823 = vadd.f32 %v2775, %v2695
      %v2824 = vadd.f32 %v2776, %v2700
      %v2825 = vadd.f32 %v2777, %v2703
      %v2826 = vadd.f32 %v2778, %v2708
      %v2827 = vadd.f32 %v2779, %v2711
      %v2828 = vadd.f32 %v2780, %v2716
      %v2829 = vadd.f32 %v2781, %v2719
      %v2830 = vadd.f32 %v2782, %v2724
      %v2831 = vadd.f32 %v2783, %v2727
      %v2832 = vadd.f32 %v2784, %v2732
      %v2833 = vadd.f32 %v2785, %v2735
      %2834 = vst [vmem:[#allocation3] sm:$0xff] %v2786
      %2835 = vst [vmem:[#allocation3 + $0x8] sm:$0xff] %v2787
      %2836 = vst [vmem:[#allocation3 + $0x10] sm:$0xff] %v2788
      %2837 = vst [vmem:[#allocation3 + $0x18] sm:$0xff] %v2789
      %2838 = vst [vmem:[#allocation3 + $0x20] sm:$0xff] %v2790
      %2839 = vst [vmem:[#allocation3 + $0x28] sm:$0xff] %v2791
      %2840 = vst [vmem:[#allocation3 + $0x30] sm:$0xff] %v2792
      %2841 = vst [vmem:[#allocation3 + $0x38] sm:$0xff] %v2793
      %2842 = vst [vmem:[#allocation3 + $0x40] sm:$0xff] %v2794
      %2843 = vst [vmem:[#allocation3 + $0x48] sm:$0xff] %v2795
      %2844 = vst [vmem:[#allocation3 + $0x50] sm:$0xff] %v2796
      %2845 = vst [vmem:[#allocation3 + $0x58] sm:$0xff] %v2797
      %2846 = vst [vmem:[#allocation3 + $0x60] sm:$0xff] %v2798
      %2847 = vst [vmem:[#allocation3 + $0x68] sm:$0xff] %v2799
      %2848 = vst [vmem:[#allocation3 + $0x70] sm:$0xff] %v2800
      %2849 = vst [vmem:[#allocation3 + $0x78] sm:$0xff] %v2801
      %2850 = vst [vmem:[#allocation3 + $0x80] sm:$0xff] %v2802
      %2851 = vst [vmem:[#allocation3 + $0x88] sm:$0xff] %v2803
      %2852 = vst [vmem:[#allocation3 + $0x90] sm:$0xff] %v2804
      %2853 = vst [vmem:[#allocation3 + $0x98] sm:$0xff] %v2805
      %2854 = vst [vmem:[#allocation3 + $0xa0] sm:$0xff] %v2806
      %2855 = vst [vmem:[#allocation3 + $0xa8] sm:$0xff] %v2807
      %2856 = vst [vmem:[#allocation3 + $0xb0] sm:$0xff] %v2808
      %2857 = vst [vmem:[#allocation3 + $0xb8] sm:$0xff] %v2809
      %2858 = vst [vmem:[#allocation3 + $0xc0] sm:$0xff] %v2810
      %2859 = vst [vmem:[#allocation3 + $0xc8] sm:$0xff] %v2811
      %2860 = vst [vmem:[#allocation3 + $0xd0] sm:$0xff] %v2812
      %2861 = vst [vmem:[#allocation3 + $0xd8] sm:$0xff] %v2813
      %2862 = vst [vmem:[#allocation3 + $0xe0] sm:$0xff] %v2814
      %2863 = vst [vmem:[#allocation3 + $0xe8] sm:$0xff] %v2815
      %2864 = vst [vmem:[#allocation3 + $0xf0] sm:$0xff] %v2816
      %2865 = vst [vmem:[#allocation3 + $0xf8] sm:$0xff] %v2817
      %2866 = vst [vmem:[#allocation3 + $0x100] sm:$0xff] %v2818
      %2867 = vst [vmem:[#allocation3 + $0x108] sm:$0xff] %v2819
      %2868 = vst [vmem:[#allocation3 + $0x110] sm:$0xff] %v2820
      %2869 = vst [vmem:[#allocation3 + $0x118] sm:$0xff] %v2821
      %2870 = vst [vmem:[#allocation3 + $0x120] sm:$0xff] %v2822
      %2871 = vst [vmem:[#allocation3 + $0x128] sm:$0xff] %v2823
      %2872 = vst [vmem:[#allocation3 + $0x130] sm:$0xff] %v2824
      %2873 = vst [vmem:[#allocation3 + $0x138] sm:$0xff] %v2825
      %2874 = vst [vmem:[#allocation3 + $0x140] sm:$0xff] %v2826
      %2875 = vst [vmem:[#allocation3 + $0x148] sm:$0xff] %v2827
      %2876 = vst [vmem:[#allocation3 + $0x150] sm:$0xff] %v2828
      %2877 = vst [vmem:[#allocation3 + $0x158] sm:$0xff] %v2829
      %2878 = vst [vmem:[#allocation3 + $0x160] sm:$0xff] %v2830
      %2879 = vst [vmem:[#allocation3 + $0x168] sm:$0xff] %v2831
      %2880 = vst [vmem:[#allocation3 + $0x170] sm:$0xff] %v2832
      %2881 = vst [vmem:[#allocation3 + $0x178] sm:$0xff] %v2833
      %v2882 = vpack.c.bf16 %v1963, %v1964
      %v2883 = vpack.c.bf16 %v1961, %v1962
      %v2884 = vpack.c.bf16 %v1959, %v1960
      %v2885 = vpack.c.bf16 %v1957, %v1958
      %v2886 = vpack.c.bf16 %v1955, %v1956
      %v2887 = vpack.c.bf16 %v1953, %v1954
      %v2888 = vpack.c.bf16 %v1951, %v1952
      %v2889 = vpack.c.bf16 %v1949, %v1950
      %v2890 = vpack.c.bf16 %v1947, %v1948
      %v2891 = vpack.c.bf16 %v1945, %v1946
      %v2892 = vpack.c.bf16 %v1943, %v1944
      %v2893 = vpack.c.bf16 %v1941, %v1942
      %v2894 = vpack.c.bf16 %v1939, %v1940
      %v2895 = vpack.c.bf16 %v1937, %v1938
      %v2896 = vpack.c.bf16 %v1935, %v1936
      %v2897 = vpack.c.bf16 %v1933, %v1934
      %v2898 = vpack.c.bf16 %v1931, %v1932
      %v2899 = vpack.c.bf16 %v1929, %v1930
      %v2900 = vpack.c.bf16 %v1927, %v1928
      %v2901 = vpack.c.bf16 %v1925, %v1926
      %v2902 = vpack.c.bf16 %v1923, %v1924
      %v2903 = vpack.c.bf16 %v1921, %v1922
      %v2904 = vpack.c.bf16 %v1919, %v1920
      %v2905 = vpack.c.bf16 %v1965, %v1918
      %s2906 = scalar_lea.vmem %s1, 320
      %v2907 = vld [vmem:[%s2906] sm:$0xf]
      %v2908 = vld [vmem:[%s2906 + $0x4] sm:$0xf]
      %v2909 = vld [vmem:[%s2906 + $0x8] sm:$0xf]
      %v2910 = vld [vmem:[%s2906 + $0xc] sm:$0xf]
      %v2911 = vld [vmem:[%s2906 + $0x10] sm:$0xf]
      %v2912 = vld [vmem:[%s2906 + $0x14] sm:$0xf]
      %v2913 = vld [vmem:[%s2906 + $0x18] sm:$0xf]
      %v2914 = vld [vmem:[%s2906 + $0x1c] sm:$0xf]
      %v2915 = vld [vmem:[%s2906 + $0x20] sm:$0xf]
      %v2916 = vld [vmem:[%s2906 + $0x24] sm:$0xf]
      %v2917 = vld [vmem:[%s2906 + $0x28] sm:$0xf]
      %v2918 = vld [vmem:[%s2906 + $0x2c] sm:$0xf]
      %v2919 = vld [vmem:[%s2906 + $0x30] sm:$0xf]
      %v2920 = vld [vmem:[%s2906 + $0x34] sm:$0xf]
      %v2921 = vld [vmem:[%s2906 + $0x38] sm:$0xf]
      %v2922 = vld [vmem:[%s2906 + $0x3c] sm:$0xf]
      %v2939 = vunpack.c.l.b16 %v2907
      %v2940 = vunpack.c.l.b16 %v2908
      %v2941 = vunpack.c.l.b16 %v2909
      %v2942 = vunpack.c.l.b16 %v2910
      %v2943 = vunpack.c.l.b16 %v2911
      %v2944 = vunpack.c.l.b16 %v2912
      %v2945 = vunpack.c.l.b16 %v2913
      %v2946 = vunpack.c.l.b16 %v2914
      %v2947 = vunpack.c.l.b16 %v2915
      %v2948 = vunpack.c.l.b16 %v2916
      %v2949 = vunpack.c.l.b16 %v2917
      %v2950 = vunpack.c.l.b16 %v2918
      %v2951 = vunpack.c.l.b16 %v2919
      %v2952 = vunpack.c.l.b16 %v2920
      %v2953 = vunpack.c.l.b16 %v2921
      %v2954 = vunpack.c.l.b16 %v2922
      %v2955 = vpack.c.b16 %v2940, %v2939
      %v2956 = vpack.c.b16 %v2942, %v2941
      %v2957 = vpack.c.b16 %v2944, %v2943
      %v2958 = vpack.c.b16 %v2946, %v2945
      %v2959 = vpack.c.b16 %v2948, %v2947
      %v2960 = vpack.c.b16 %v2950, %v2949
      %v2961 = vpack.c.b16 %v2952, %v2951
      %v2962 = vpack.c.b16 %v2954, %v2953
      %2971 = vmatprep.subr.bf16.mxu0 0
      %2972 = vmatpush1.bf16.msra.mxu0 %v2962
      %2973 = vmatprep.subr.bf16.mxu0 0
      %2974 = vmatpush1.bf16.msra.mxu0 %v2961
      %2975 = vmatprep.subr.bf16.mxu0 0
      %2976 = vmatpush1.bf16.msra.mxu0 %v2960
      %2977 = vmatprep.subr.bf16.mxu0 0
      %2978 = vmatpush1.bf16.msra.mxu0 %v2959
      %2979 = vmatprep.subr.bf16.mxu0 0
      %2980 = vmatpush1.bf16.msra.mxu0 %v2958
      %2981 = vmatprep.subr.bf16.mxu0 0
      %2982 = vmatpush1.bf16.msra.mxu0 %v2957
      %2983 = vmatprep.subr.bf16.mxu0 0
      %2984 = vmatpush1.bf16.msra.mxu0 %v2956
      %2985 = vmatprep.subr.bf16.mxu0 0
      %2986 = vmatpush1.bf16.msra.mxu0 %v2955
      %2987 = vmatprep.subr.bf16.mxu0 0
      %2988 = vmatpush2.bf16.msra.mxu0 0
      %2989 = vmatprep.subr.bf16.mxu0 0
      %2990 = vmatpush2.bf16.msra.mxu0 0
      %2991 = vmatprep.subr.bf16.mxu0 0
      %2992 = vmatpush2.bf16.msra.mxu0 0
      %2993 = vmatprep.subr.bf16.mxu0 0
      %2994 = vmatpush2.bf16.msra.mxu0 0
      %2995 = vmatprep.subr.bf16.mxu0 0
      %2996 = vmatpush2.bf16.msra.mxu0 0
      %2997 = vmatprep.subr.bf16.mxu0 0
      %2998 = vmatpush2.bf16.msra.mxu0 0
      %2999 = vmatprep.subr.bf16.mxu0 0
      %3000 = vmatpush2.bf16.msra.mxu0 0
      %3001 = vmatprep.subr.bf16.mxu0 0
      %3002 = vmatpush2.bf16.msra.mxu0 0
      %3003 = vmatprep.mubr.bf16.mxu0 0
      %3004 = vmatmul.mubr.bf16.gmra.mxu0 %v2882
      %v3005 = vpop.f32.mrf.mxu0
      %v3006 = vadd.f32 0.0, %v3005
      %v3007 = vpop.f32.mrf.mxu0
      %v3008 = vpop.f32.mrf.mxu0
      %v3009 = vadd.f32 0.0, %v3008
      %v3010 = vpop.f32.mrf.mxu0
      %3011 = vmatprep.mubr.bf16.mxu0 0
      %3012 = vmatmul.mubr.bf16.gmra.mxu0 %v2883
      %v3013 = vpop.f32.mrf.mxu0
      %v3014 = vadd.f32 0.0, %v3013
      %v3015 = vpop.f32.mrf.mxu0
      %v3016 = vpop.f32.mrf.mxu0
      %v3017 = vadd.f32 0.0, %v3016
      %v3018 = vpop.f32.mrf.mxu0
      %3019 = vmatprep.mubr.bf16.mxu0 0
      %3020 = vmatmul.mubr.bf16.gmra.mxu0 %v2884
      %v3021 = vpop.f32.mrf.mxu0
      %v3022 = vadd.f32 0.0, %v3021
      %v3023 = vpop.f32.mrf.mxu0
      %v3024 = vpop.f32.mrf.mxu0
      %v3025 = vadd.f32 0.0, %v3024
      %v3026 = vpop.f32.mrf.mxu0
      %3027 = vmatprep.mubr.bf16.mxu0 0
      %3028 = vmatmul.mubr.bf16.gmra.mxu0 %v2885
      %v3029 = vpop.f32.mrf.mxu0
      %v3030 = vadd.f32 0.0, %v3029
      %v3031 = vpop.f32.mrf.mxu0
      %v3032 = vpop.f32.mrf.mxu0
      %v3033 = vadd.f32 0.0, %v3032
      %v3034 = vpop.f32.mrf.mxu0
      %3035 = vmatprep.mubr.bf16.mxu0 0
      %3036 = vmatmul.mubr.bf16.gmra.mxu0 %v2886
      %v3037 = vpop.f32.mrf.mxu0
      %v3038 = vadd.f32 0.0, %v3037
      %v3039 = vpop.f32.mrf.mxu0
      %v3040 = vpop.f32.mrf.mxu0
      %v3041 = vadd.f32 0.0, %v3040
      %v3042 = vpop.f32.mrf.mxu0
      %3043 = vmatprep.mubr.bf16.mxu0 0
      %3044 = vmatmul.mubr.bf16.gmra.mxu0 %v2887
      %v3045 = vpop.f32.mrf.mxu0
      %v3046 = vadd.f32 0.0, %v3045
      %v3047 = vpop.f32.mrf.mxu0
      %v3048 = vpop.f32.mrf.mxu0
      %v3049 = vadd.f32 0.0, %v3048
      %v3050 = vpop.f32.mrf.mxu0
      %3051 = vmatprep.mubr.bf16.mxu0 0
      %3052 = vmatmul.mubr.bf16.gmra.mxu0 %v2888
      %v3053 = vpop.f32.mrf.mxu0
      %v3054 = vadd.f32 0.0, %v3053
      %v3055 = vpop.f32.mrf.mxu0
      %v3056 = vpop.f32.mrf.mxu0
      %v3057 = vadd.f32 0.0, %v3056
      %v3058 = vpop.f32.mrf.mxu0
      %3059 = vmatprep.mubr.bf16.mxu0 0
      %3060 = vmatmul.mubr.bf16.gmra.mxu0 %v2889
      %v3061 = vpop.f32.mrf.mxu0
      %v3062 = vadd.f32 0.0, %v3061
      %v3063 = vpop.f32.mrf.mxu0
      %v3064 = vpop.f32.mrf.mxu0
      %v3065 = vadd.f32 0.0, %v3064
      %v3066 = vpop.f32.mrf.mxu0
      %3067 = vmatprep.mubr.bf16.mxu0 0
      %3068 = vmatmul.mubr.bf16.gmra.mxu0 %v2890
      %v3069 = vpop.f32.mrf.mxu0
      %v3070 = vadd.f32 0.0, %v3069
      %v3071 = vpop.f32.mrf.mxu0
      %v3072 = vpop.f32.mrf.mxu0
      %v3073 = vadd.f32 0.0, %v3072
      %v3074 = vpop.f32.mrf.mxu0
      %3075 = vmatprep.mubr.bf16.mxu0 0
      %3076 = vmatmul.mubr.bf16.gmra.mxu0 %v2891
      %v3077 = vpop.f32.mrf.mxu0
      %v3078 = vadd.f32 0.0, %v3077
      %v3079 = vpop.f32.mrf.mxu0
      %v3080 = vpop.f32.mrf.mxu0
      %v3081 = vadd.f32 0.0, %v3080
      %v3082 = vpop.f32.mrf.mxu0
      %3083 = vmatprep.mubr.bf16.mxu0 0
      %3084 = vmatmul.mubr.bf16.gmra.mxu0 %v2892
      %v3085 = vpop.f32.mrf.mxu0
      %v3086 = vadd.f32 0.0, %v3085
      %v3087 = vpop.f32.mrf.mxu0
      %v3088 = vpop.f32.mrf.mxu0
      %v3089 = vadd.f32 0.0, %v3088
      %v3090 = vpop.f32.mrf.mxu0
      %3091 = vmatprep.mubr.bf16.mxu0 0
      %3092 = vmatmul.mubr.bf16.gmra.mxu0 %v2893
      %v3093 = vpop.f32.mrf.mxu0
      %v3094 = vadd.f32 0.0, %v3093
      %v3095 = vpop.f32.mrf.mxu0
      %v3096 = vpop.f32.mrf.mxu0
      %v3097 = vadd.f32 0.0, %v3096
      %v3098 = vpop.f32.mrf.mxu0
      %3099 = vmatprep.mubr.bf16.mxu0 0
      %3100 = vmatmul.mubr.bf16.gmra.mxu0 %v2894
      %v3101 = vpop.f32.mrf.mxu0
      %v3102 = vadd.f32 0.0, %v3101
      %v3103 = vpop.f32.mrf.mxu0
      %v3104 = vpop.f32.mrf.mxu0
      %v3105 = vadd.f32 0.0, %v3104
      %v3106 = vpop.f32.mrf.mxu0
      %3107 = vmatprep.mubr.bf16.mxu0 0
      %3108 = vmatmul.mubr.bf16.gmra.mxu0 %v2895
      %v3109 = vpop.f32.mrf.mxu0
      %v3110 = vadd.f32 0.0, %v3109
      %v3111 = vpop.f32.mrf.mxu0
      %v3112 = vpop.f32.mrf.mxu0
      %v3113 = vadd.f32 0.0, %v3112
      %v3114 = vpop.f32.mrf.mxu0
      %3115 = vmatprep.mubr.bf16.mxu0 0
      %3116 = vmatmul.mubr.bf16.gmra.mxu0 %v2896
      %v3117 = vpop.f32.mrf.mxu0
      %v3118 = vadd.f32 0.0, %v3117
      %v3119 = vpop.f32.mrf.mxu0
      %v3120 = vpop.f32.mrf.mxu0
      %v3121 = vadd.f32 0.0, %v3120
      %v3122 = vpop.f32.mrf.mxu0
      %3123 = vmatprep.mubr.bf16.mxu0 0
      %3124 = vmatmul.mubr.bf16.gmra.mxu0 %v2897
      %v3125 = vpop.f32.mrf.mxu0
      %v3126 = vadd.f32 0.0, %v3125
      %v3127 = vpop.f32.mrf.mxu0
      %v3128 = vpop.f32.mrf.mxu0
      %v3129 = vadd.f32 0.0, %v3128
      %v3130 = vpop.f32.mrf.mxu0
      %3131 = vmatprep.mubr.bf16.mxu0 0
      %3132 = vmatmul.mubr.bf16.gmra.mxu0 %v2898
      %v3133 = vpop.f32.mrf.mxu0
      %v3134 = vadd.f32 0.0, %v3133
      %v3135 = vpop.f32.mrf.mxu0
      %v3136 = vpop.f32.mrf.mxu0
      %v3137 = vadd.f32 0.0, %v3136
      %v3138 = vpop.f32.mrf.mxu0
      %3139 = vmatprep.mubr.bf16.mxu0 0
      %3140 = vmatmul.mubr.bf16.gmra.mxu0 %v2899
      %v3141 = vpop.f32.mrf.mxu0
      %v3142 = vadd.f32 0.0, %v3141
      %v3143 = vpop.f32.mrf.mxu0
      %v3144 = vpop.f32.mrf.mxu0
      %v3145 = vadd.f32 0.0, %v3144
      %v3146 = vpop.f32.mrf.mxu0
      %3147 = vmatprep.mubr.bf16.mxu0 0
      %3148 = vmatmul.mubr.bf16.gmra.mxu0 %v2900
      %v3149 = vpop.f32.mrf.mxu0
      %v3150 = vadd.f32 0.0, %v3149
      %v3151 = vpop.f32.mrf.mxu0
      %v3152 = vpop.f32.mrf.mxu0
      %v3153 = vadd.f32 0.0, %v3152
      %v3154 = vpop.f32.mrf.mxu0
      %3155 = vmatprep.mubr.bf16.mxu0 0
      %3156 = vmatmul.mubr.bf16.gmra.mxu0 %v2901
      %v3157 = vpop.f32.mrf.mxu0
      %v3158 = vadd.f32 0.0, %v3157
      %v3159 = vpop.f32.mrf.mxu0
      %v3160 = vpop.f32.mrf.mxu0
      %v3161 = vadd.f32 0.0, %v3160
      %v3162 = vpop.f32.mrf.mxu0
      %3163 = vmatprep.mubr.bf16.mxu0 0
      %3164 = vmatmul.mubr.bf16.gmra.mxu0 %v2902
      %v3165 = vpop.f32.mrf.mxu0
      %v3166 = vadd.f32 0.0, %v3165
      %v3167 = vpop.f32.mrf.mxu0
      %v3168 = vpop.f32.mrf.mxu0
      %v3169 = vadd.f32 0.0, %v3168
      %v3170 = vpop.f32.mrf.mxu0
      %3171 = vmatprep.mubr.bf16.mxu0 0
      %3172 = vmatmul.mubr.bf16.gmra.mxu0 %v2903
      %v3173 = vpop.f32.mrf.mxu0
      %v3174 = vadd.f32 0.0, %v3173
      %v3175 = vpop.f32.mrf.mxu0
      %v3176 = vpop.f32.mrf.mxu0
      %v3177 = vadd.f32 0.0, %v3176
      %v3178 = vpop.f32.mrf.mxu0
      %3179 = vmatprep.mubr.bf16.mxu0 0
      %3180 = vmatmul.mubr.bf16.gmra.mxu0 %v2904
      %v3181 = vpop.f32.mrf.mxu0
      %v3182 = vadd.f32 0.0, %v3181
      %v3183 = vpop.f32.mrf.mxu0
      %v3184 = vpop.f32.mrf.mxu0
      %v3185 = vadd.f32 0.0, %v3184
      %v3186 = vpop.f32.mrf.mxu0
      %3187 = vmatprep.mubr.bf16.mxu0 0
      %3188 = vmatmul.mubr.bf16.gmra.mxu0 %v2905
      %v3189 = vpop.f32.mrf.mxu0
      %v3190 = vadd.f32 0.0, %v3189
      %v3191 = vpop.f32.mrf.mxu0
      %v3192 = vpop.f32.mrf.mxu0
      %v3193 = vadd.f32 0.0, %v3192
      %v3194 = vpop.f32.mrf.mxu0
      %3195 = vdwg.mxu0
      %v3196 = vld [vmem:[#allocation3] sm:$0xff]
      %v3197 = vld [vmem:[#allocation3 + $0x8] sm:$0xff]
      %v3198 = vld [vmem:[#allocation3 + $0x10] sm:$0xff]
      %v3199 = vld [vmem:[#allocation3 + $0x18] sm:$0xff]
      %v3200 = vld [vmem:[#allocation3 + $0x20] sm:$0xff]
      %v3201 = vld [vmem:[#allocation3 + $0x28] sm:$0xff]
      %v3202 = vld [vmem:[#allocation3 + $0x30] sm:$0xff]
      %v3203 = vld [vmem:[#allocation3 + $0x38] sm:$0xff]
      %v3204 = vld [vmem:[#allocation3 + $0x40] sm:$0xff]
      %v3205 = vld [vmem:[#allocation3 + $0x48] sm:$0xff]
      %v3206 = vld [vmem:[#allocation3 + $0x50] sm:$0xff]
      %v3207 = vld [vmem:[#allocation3 + $0x58] sm:$0xff]
      %v3208 = vld [vmem:[#allocation3 + $0x60] sm:$0xff]
      %v3209 = vld [vmem:[#allocation3 + $0x68] sm:$0xff]
      %v3210 = vld [vmem:[#allocation3 + $0x70] sm:$0xff]
      %v3211 = vld [vmem:[#allocation3 + $0x78] sm:$0xff]
      %v3212 = vld [vmem:[#allocation3 + $0x80] sm:$0xff]
      %v3213 = vld [vmem:[#allocation3 + $0x88] sm:$0xff]
      %v3214 = vld [vmem:[#allocation3 + $0x90] sm:$0xff]
      %v3215 = vld [vmem:[#allocation3 + $0x98] sm:$0xff]
      %v3216 = vld [vmem:[#allocation3 + $0xa0] sm:$0xff]
      %v3217 = vld [vmem:[#allocation3 + $0xa8] sm:$0xff]
      %v3218 = vld [vmem:[#allocation3 + $0xb0] sm:$0xff]
      %v3219 = vld [vmem:[#allocation3 + $0xb8] sm:$0xff]
      %v3220 = vld [vmem:[#allocation3 + $0xc0] sm:$0xff]
      %v3221 = vld [vmem:[#allocation3 + $0xc8] sm:$0xff]
      %v3222 = vld [vmem:[#allocation3 + $0xd0] sm:$0xff]
      %v3223 = vld [vmem:[#allocation3 + $0xd8] sm:$0xff]
      %v3224 = vld [vmem:[#allocation3 + $0xe0] sm:$0xff]
      %v3225 = vld [vmem:[#allocation3 + $0xe8] sm:$0xff]
      %v3226 = vld [vmem:[#allocation3 + $0xf0] sm:$0xff]
      %v3227 = vld [vmem:[#allocation3 + $0xf8] sm:$0xff]
      %v3228 = vld [vmem:[#allocation3 + $0x100] sm:$0xff]
      %v3229 = vld [vmem:[#allocation3 + $0x108] sm:$0xff]
      %v3230 = vld [vmem:[#allocation3 + $0x110] sm:$0xff]
      %v3231 = vld [vmem:[#allocation3 + $0x118] sm:$0xff]
      %v3232 = vld [vmem:[#allocation3 + $0x120] sm:$0xff]
      %v3233 = vld [vmem:[#allocation3 + $0x128] sm:$0xff]
      %v3234 = vld [vmem:[#allocation3 + $0x130] sm:$0xff]
      %v3235 = vld [vmem:[#allocation3 + $0x138] sm:$0xff]
      %v3236 = vld [vmem:[#allocation3 + $0x140] sm:$0xff]
      %v3237 = vld [vmem:[#allocation3 + $0x148] sm:$0xff]
      %v3238 = vld [vmem:[#allocation3 + $0x150] sm:$0xff]
      %v3239 = vld [vmem:[#allocation3 + $0x158] sm:$0xff]
      %v3240 = vld [vmem:[#allocation3 + $0x160] sm:$0xff]
      %v3241 = vld [vmem:[#allocation3 + $0x168] sm:$0xff]
      %v3242 = vld [vmem:[#allocation3 + $0x170] sm:$0xff]
      %v3243 = vld [vmem:[#allocation3 + $0x178] sm:$0xff]
      %v3244 = vadd.f32 %v3196, %v3006
      %v3245 = vadd.f32 %v3197, %v3009
      %v3246 = vadd.f32 %v3198, %v3014
      %v3247 = vadd.f32 %v3199, %v3017
      %v3248 = vadd.f32 %v3200, %v3022
      %v3249 = vadd.f32 %v3201, %v3025
      %v3250 = vadd.f32 %v3202, %v3030
      %v3251 = vadd.f32 %v3203, %v3033
      %v3252 = vadd.f32 %v3204, %v3038
      %v3253 = vadd.f32 %v3205, %v3041
      %v3254 = vadd.f32 %v3206, %v3046
      %v3255 = vadd.f32 %v3207, %v3049
      %v3256 = vadd.f32 %v3208, %v3054
      %v3257 = vadd.f32 %v3209, %v3057
      %v3258 = vadd.f32 %v3210, %v3062
      %v3259 = vadd.f32 %v3211, %v3065
      %v3260 = vadd.f32 %v3212, %v3070
      %v3261 = vadd.f32 %v3213, %v3073
      %v3262 = vadd.f32 %v3214, %v3078
      %v3263 = vadd.f32 %v3215, %v3081
      %v3264 = vadd.f32 %v3216, %v3086
      %v3265 = vadd.f32 %v3217, %v3089
      %v3266 = vadd.f32 %v3218, %v3094
      %v3267 = vadd.f32 %v3219, %v3097
      %v3268 = vadd.f32 %v3220, %v3102
      %v3269 = vadd.f32 %v3221, %v3105
      %v3270 = vadd.f32 %v3222, %v3110
      %v3271 = vadd.f32 %v3223, %v3113
      %v3272 = vadd.f32 %v3224, %v3118
      %v3273 = vadd.f32 %v3225, %v3121
      %v3274 = vadd.f32 %v3226, %v3126
      %v3275 = vadd.f32 %v3227, %v3129
      %v3276 = vadd.f32 %v3228, %v3134
      %v3277 = vadd.f32 %v3229, %v3137
      %v3278 = vadd.f32 %v3230, %v3142
      %v3279 = vadd.f32 %v3231, %v3145
      %v3280 = vadd.f32 %v3232, %v3150
      %v3281 = vadd.f32 %v3233, %v3153
      %v3282 = vadd.f32 %v3234, %v3158
      %v3283 = vadd.f32 %v3235, %v3161
      %v3284 = vadd.f32 %v3236, %v3166
      %v3285 = vadd.f32 %v3237, %v3169
      %v3286 = vadd.f32 %v3238, %v3174
      %v3287 = vadd.f32 %v3239, %v3177
      %v3288 = vadd.f32 %v3240, %v3182
      %v3289 = vadd.f32 %v3241, %v3185
      %v3290 = vadd.f32 %v3242, %v3190
      %v3291 = vadd.f32 %v3243, %v3193
      %3292 = vst [vmem:[#allocation3] sm:$0xff] %v3244
      %3293 = vst [vmem:[#allocation3 + $0x8] sm:$0xff] %v3245
      %3294 = vst [vmem:[#allocation3 + $0x10] sm:$0xff] %v3246
      %3295 = vst [vmem:[#allocation3 + $0x18] sm:$0xff] %v3247
      %3296 = vst [vmem:[#allocation3 + $0x20] sm:$0xff] %v3248
      %3297 = vst [vmem:[#allocation3 + $0x28] sm:$0xff] %v3249
      %3298 = vst [vmem:[#allocation3 + $0x30] sm:$0xff] %v3250
      %3299 = vst [vmem:[#allocation3 + $0x38] sm:$0xff] %v3251
      %3300 = vst [vmem:[#allocation3 + $0x40] sm:$0xff] %v3252
      %3301 = vst [vmem:[#allocation3 + $0x48] sm:$0xff] %v3253
      %3302 = vst [vmem:[#allocation3 + $0x50] sm:$0xff] %v3254
      %3303 = vst [vmem:[#allocation3 + $0x58] sm:$0xff] %v3255
      %3304 = vst [vmem:[#allocation3 + $0x60] sm:$0xff] %v3256
      %3305 = vst [vmem:[#allocation3 + $0x68] sm:$0xff] %v3257
      %3306 = vst [vmem:[#allocation3 + $0x70] sm:$0xff] %v3258
      %3307 = vst [vmem:[#allocation3 + $0x78] sm:$0xff] %v3259
      %3308 = vst [vmem:[#allocation3 + $0x80] sm:$0xff] %v3260
      %3309 = vst [vmem:[#allocation3 + $0x88] sm:$0xff] %v3261
      %3310 = vst [vmem:[#allocation3 + $0x90] sm:$0xff] %v3262
      %3311 = vst [vmem:[#allocation3 + $0x98] sm:$0xff] %v3263
      %3312 = vst [vmem:[#allocation3 + $0xa0] sm:$0xff] %v3264
      %3313 = vst [vmem:[#allocation3 + $0xa8] sm:$0xff] %v3265
      %3314 = vst [vmem:[#allocation3 + $0xb0] sm:$0xff] %v3266
      %3315 = vst [vmem:[#allocation3 + $0xb8] sm:$0xff] %v3267
      %3316 = vst [vmem:[#allocation3 + $0xc0] sm:$0xff] %v3268
      %3317 = vst [vmem:[#allocation3 + $0xc8] sm:$0xff] %v3269
      %3318 = vst [vmem:[#allocation3 + $0xd0] sm:$0xff] %v3270
      %3319 = vst [vmem:[#allocation3 + $0xd8] sm:$0xff] %v3271
      %3320 = vst [vmem:[#allocation3 + $0xe0] sm:$0xff] %v3272
      %3321 = vst [vmem:[#allocation3 + $0xe8] sm:$0xff] %v3273
      %3322 = vst [vmem:[#allocation3 + $0xf0] sm:$0xff] %v3274
      %3323 = vst [vmem:[#allocation3 + $0xf8] sm:$0xff] %v3275
      %3324 = vst [vmem:[#allocation3 + $0x100] sm:$0xff] %v3276
      %3325 = vst [vmem:[#allocation3 + $0x108] sm:$0xff] %v3277
      %3326 = vst [vmem:[#allocation3 + $0x110] sm:$0xff] %v3278
      %3327 = vst [vmem:[#allocation3 + $0x118] sm:$0xff] %v3279
      %3328 = vst [vmem:[#allocation3 + $0x120] sm:$0xff] %v3280
      %3329 = vst [vmem:[#allocation3 + $0x128] sm:$0xff] %v3281
      %3330 = vst [vmem:[#allocation3 + $0x130] sm:$0xff] %v3282
      %3331 = vst [vmem:[#allocation3 + $0x138] sm:$0xff] %v3283
      %3332 = vst [vmem:[#allocation3 + $0x140] sm:$0xff] %v3284
      %3333 = vst [vmem:[#allocation3 + $0x148] sm:$0xff] %v3285
      %3334 = vst [vmem:[#allocation3 + $0x150] sm:$0xff] %v3286
      %3335 = vst [vmem:[#allocation3 + $0x158] sm:$0xff] %v3287
      %3336 = vst [vmem:[#allocation3 + $0x160] sm:$0xff] %v3288
      %3337 = vst [vmem:[#allocation3 + $0x168] sm:$0xff] %v3289
      %3338 = vst [vmem:[#allocation3 + $0x170] sm:$0xff] %v3290
      %3339 = vst [vmem:[#allocation3 + $0x178] sm:$0xff] %v3291
      %v3340 = vld [vmem:[%s192 + $0x30] sm:$0xff]
      %v3341 = vld [vmem:[%s192 + $0x38] sm:$0xff]
      %v3342 = vld [vmem:[%s192 + $0x40] sm:$0xff]
      %v3343 = vld [vmem:[%s192 + $0x48] sm:$0xff]
      %v3344 = vld [vmem:[%s192 + $0x50] sm:$0xff]
      %v3345 = vld [vmem:[%s192 + $0x58] sm:$0xff]
      %v3346 = vld [vmem:[%s192 + $0x60] sm:$0xff]
      %v3347 = vld [vmem:[%s192 + $0x68] sm:$0xff]
      %v3348 = vld [vmem:[%s192 + $0x70] sm:$0xff]
      %v3349 = vld [vmem:[%s192 + $0x78] sm:$0xff]
      %v3350 = vld [vmem:[%s192 + $0x80] sm:$0xff]
      %v3351 = vld [vmem:[%s192 + $0x88] sm:$0xff]
      %v3352 = vld [vmem:[%s192 + $0x90] sm:$0xff]
      %v3353 = vld [vmem:[%s192 + $0x98] sm:$0xff]
      %v3354 = vld [vmem:[%s192 + $0xa0] sm:$0xff]
      %v3355 = vld [vmem:[%s192 + $0xa8] sm:$0xff]
      %v3356 = vld [vmem:[%s192 + $0xb0] sm:$0xff]
      %v3357 = vld [vmem:[%s192 + $0xb8] sm:$0xff]
      %v3358 = vld [vmem:[%s192 + $0xc0] sm:$0xff]
      %v3359 = vld [vmem:[%s192 + $0xc8] sm:$0xff]
      %v3360 = vld [vmem:[%s192 + $0xd0] sm:$0xff]
      %v3361 = vld [vmem:[%s192 + $0xd8] sm:$0xff]
      %v3362 = vld [vmem:[%s192 + $0xe0] sm:$0xff]
      %v3363 = vld [vmem:[%s192 + $0xe8] sm:$0xff]
      %v3364 = vld [vmem:[%s192 + $0xf0] sm:$0xff]
      %v3365 = vld [vmem:[%s192 + $0xf8] sm:$0xff]
      %v3366 = vld [vmem:[%s192 + $0x100] sm:$0xff]
      %v3367 = vld [vmem:[%s192 + $0x108] sm:$0xff]
      %v3368 = vld [vmem:[%s192 + $0x110] sm:$0xff]
      %v3369 = vld [vmem:[%s192 + $0x118] sm:$0xff]
      %v3370 = vld [vmem:[%s192 + $0x120] sm:$0xff]
      %v3371 = vld [vmem:[%s192 + $0x128] sm:$0xff]
      %v3372 = vld [vmem:[%s192 + $0x130] sm:$0xff]
      %v3373 = vld [vmem:[%s192 + $0x138] sm:$0xff]
      %v3374 = vld [vmem:[%s192 + $0x140] sm:$0xff]
      %v3375 = vld [vmem:[%s192 + $0x148] sm:$0xff]
      %v3376 = vld [vmem:[%s192 + $0x150] sm:$0xff]
      %v3377 = vld [vmem:[%s192 + $0x158] sm:$0xff]
      %v3378 = vld [vmem:[%s192 + $0x160] sm:$0xff]
      %v3379 = vld [vmem:[%s192 + $0x168] sm:$0xff]
      %v3380 = vld [vmem:[%s192 + $0x170] sm:$0xff]
      %v3381 = vld [vmem:[%s192 + $0x178] sm:$0xff]
      %v3382 = vld [vmem:[%s192 + $0x180] sm:$0xff]
      %v3383 = vld [vmem:[%s192 + $0x188] sm:$0xff]
      %v3384 = vld [vmem:[%s192 + $0x190] sm:$0xff]
      %v3385 = vld [vmem:[%s192 + $0x198] sm:$0xff]
      %v3386 = vld [vmem:[%s192 + $0x1a0] sm:$0xff]
      %v3387 = vld [vmem:[%s192 + $0x1a8] sm:$0xff]
      %v3388 = vrot.slane %v3340, 7
      %v3389 = vrot.slane %v3341, 7
      %v3390 = vrot.slane %v3342, 7
      %v3391 = vrot.slane %v3343, 7
      %v3392 = vrot.slane %v3344, 7
      %v3393 = vrot.slane %v3345, 7
      %v3394 = vrot.slane %v3346, 7
      %v3395 = vrot.slane %v3347, 7
      %v3396 = vrot.slane %v3348, 7
      %v3397 = vrot.slane %v3349, 7
      %v3398 = vrot.slane %v3350, 7
      %v3399 = vrot.slane %v3351, 7
      %v3400 = vrot.slane %v3352, 7
      %v3401 = vrot.slane %v3353, 7
      %v3402 = vrot.slane %v3354, 7
      %v3403 = vrot.slane %v3355, 7
      %v3404 = vrot.slane %v3356, 7
      %v3405 = vrot.slane %v3357, 7
      %v3406 = vrot.slane %v3358, 7
      %v3407 = vrot.slane %v3359, 7
      %v3408 = vrot.slane %v3360, 7
      %v3409 = vrot.slane %v3361, 7
      %v3410 = vrot.slane %v3362, 7
      %v3411 = vrot.slane %v3363, 7
      %v3412 = vrot.slane %v3364, 7
      %v3413 = vrot.slane %v3365, 7
      %v3414 = vrot.slane %v3366, 7
      %v3415 = vrot.slane %v3367, 7
      %v3416 = vrot.slane %v3368, 7
      %v3417 = vrot.slane %v3369, 7
      %v3418 = vrot.slane %v3370, 7
      %v3419 = vrot.slane %v3371, 7
      %v3420 = vrot.slane %v3372, 7
      %v3421 = vrot.slane %v3373, 7
      %v3422 = vrot.slane %v3374, 7
      %v3423 = vrot.slane %v3375, 7
      %v3424 = vrot.slane %v3376, 7
      %v3425 = vrot.slane %v3377, 7
      %v3426 = vrot.slane %v3378, 7
      %v3427 = vrot.slane %v3379, 7
      %v3428 = vrot.slane %v3380, 7
      %v3429 = vrot.slane %v3381, 7
      %v3430 = vrot.slane %v3382, 7
      %v3431 = vrot.slane %v3383, 7
      %v3432 = vrot.slane %v3384, 7
      %v3433 = vrot.slane %v3385, 7
      %v3434 = vrot.slane %v3386, 7
      %v3435 = vrot.slane %v3387, 7
      %v3436 = vsel %vm303, %v3434, %v3435
      %v3437 = vsel %vm303, %v3433, %v3434
      %v3438 = vsel %vm303, %v3432, %v3433
      %v3439 = vsel %vm303, %v3431, %v3432
      %v3440 = vsel %vm303, %v3430, %v3431
      %v3441 = vsel %vm303, %v3429, %v3430
      %v3442 = vsel %vm303, %v3428, %v3429
      %v3443 = vsel %vm303, %v3427, %v3428
      %v3444 = vsel %vm303, %v3426, %v3427
      %v3445 = vsel %vm303, %v3425, %v3426
      %v3446 = vsel %vm303, %v3424, %v3425
      %v3447 = vsel %vm303, %v3423, %v3424
      %v3448 = vsel %vm303, %v3422, %v3423
      %v3449 = vsel %vm303, %v3421, %v3422
      %v3450 = vsel %vm303, %v3420, %v3421
      %v3451 = vsel %vm303, %v3419, %v3420
      %v3452 = vsel %vm303, %v3418, %v3419
      %v3453 = vsel %vm303, %v3417, %v3418
      %v3454 = vsel %vm303, %v3416, %v3417
      %v3455 = vsel %vm303, %v3415, %v3416
      %v3456 = vsel %vm303, %v3414, %v3415
      %v3457 = vsel %vm303, %v3413, %v3414
      %v3458 = vsel %vm303, %v3412, %v3413
      %v3459 = vsel %vm303, %v3411, %v3412
      %v3460 = vsel %vm303, %v3410, %v3411
      %v3461 = vsel %vm303, %v3409, %v3410
      %v3462 = vsel %vm303, %v3408, %v3409
      %v3463 = vsel %vm303, %v3407, %v3408
      %v3464 = vsel %vm303, %v3406, %v3407
      %v3465 = vsel %vm303, %v3405, %v3406
      %v3466 = vsel %vm303, %v3404, %v3405
      %v3467 = vsel %vm303, %v3403, %v3404
      %v3468 = vsel %vm303, %v3402, %v3403
      %v3469 = vsel %vm303, %v3401, %v3402
      %v3470 = vsel %vm303, %v3400, %v3401
      %v3471 = vsel %vm303, %v3399, %v3400
      %v3472 = vsel %vm303, %v3398, %v3399
      %v3473 = vsel %vm303, %v3397, %v3398
      %v3474 = vsel %vm303, %v3396, %v3397
      %v3475 = vsel %vm303, %v3395, %v3396
      %v3476 = vsel %vm303, %v3394, %v3395
      %v3477 = vsel %vm303, %v3393, %v3394
      %v3478 = vsel %vm303, %v3392, %v3393
      %v3479 = vsel %vm303, %v3391, %v3392
      %v3480 = vsel %vm303, %v3390, %v3391
      %v3481 = vsel %vm303, %v3389, %v3390
      %v3482 = vsel %vm303, %v3388, %v3389
      %v3483 = vsel %vm303, %v3435, %v3388
      %v3484 = vrot.slane %v3340, 1
      %v3485 = vrot.slane %v3341, 1
      %v3486 = vrot.slane %v3342, 1
      %v3487 = vrot.slane %v3343, 1
      %v3488 = vrot.slane %v3344, 1
      %v3489 = vrot.slane %v3345, 1
      %v3490 = vrot.slane %v3346, 1
      %v3491 = vrot.slane %v3347, 1
      %v3492 = vrot.slane %v3348, 1
      %v3493 = vrot.slane %v3349, 1
      %v3494 = vrot.slane %v3350, 1
      %v3495 = vrot.slane %v3351, 1
      %v3496 = vrot.slane %v3352, 1
      %v3497 = vrot.slane %v3353, 1
      %v3498 = vrot.slane %v3354, 1
      %v3499 = vrot.slane %v3355, 1
      %v3500 = vrot.slane %v3356, 1
      %v3501 = vrot.slane %v3357, 1
      %v3502 = vrot.slane %v3358, 1
      %v3503 = vrot.slane %v3359, 1
      %v3504 = vrot.slane %v3360, 1
      %v3505 = vrot.slane %v3361, 1
      %v3506 = vrot.slane %v3362, 1
      %v3507 = vrot.slane %v3363, 1
      %v3508 = vrot.slane %v3364, 1
      %v3509 = vrot.slane %v3365, 1
      %v3510 = vrot.slane %v3366, 1
      %v3511 = vrot.slane %v3367, 1
      %v3512 = vrot.slane %v3368, 1
      %v3513 = vrot.slane %v3369, 1
      %v3514 = vrot.slane %v3370, 1
      %v3515 = vrot.slane %v3371, 1
      %v3516 = vrot.slane %v3372, 1
      %v3517 = vrot.slane %v3373, 1
      %v3518 = vrot.slane %v3374, 1
      %v3519 = vrot.slane %v3375, 1
      %v3520 = vrot.slane %v3376, 1
      %v3521 = vrot.slane %v3377, 1
      %v3522 = vrot.slane %v3378, 1
      %v3523 = vrot.slane %v3379, 1
      %v3524 = vrot.slane %v3380, 1
      %v3525 = vrot.slane %v3381, 1
      %v3526 = vrot.slane %v3382, 1
      %v3527 = vrot.slane %v3383, 1
      %v3528 = vrot.slane %v3384, 1
      %v3529 = vrot.slane %v3385, 1
      %v3530 = vrot.slane %v3386, 1
      %v3531 = vrot.slane %v3387, 1
      %v3532 = vsel %vm400, %v3530, %v3531
      %v3533 = vsel %vm400, %v3529, %v3530
      %v3534 = vsel %vm400, %v3528, %v3529
      %v3535 = vsel %vm400, %v3527, %v3528
      %v3536 = vsel %vm400, %v3526, %v3527
      %v3537 = vsel %vm400, %v3525, %v3526
      %v3538 = vsel %vm400, %v3524, %v3525
      %v3539 = vsel %vm400, %v3523, %v3524
      %v3540 = vsel %vm400, %v3522, %v3523
      %v3541 = vsel %vm400, %v3521, %v3522
      %v3542 = vsel %vm400, %v3520, %v3521
      %v3543 = vsel %vm400, %v3519, %v3520
      %v3544 = vsel %vm400, %v3518, %v3519
      %v3545 = vsel %vm400, %v3517, %v3518
      %v3546 = vsel %vm400, %v3516, %v3517
      %v3547 = vsel %vm400, %v3515, %v3516
      %v3548 = vsel %vm400, %v3514, %v3515
      %v3549 = vsel %vm400, %v3513, %v3514
      %v3550 = vsel %vm400, %v3512, %v3513
      %v3551 = vsel %vm400, %v3511, %v3512
      %v3552 = vsel %vm400, %v3510, %v3511
      %v3553 = vsel %vm400, %v3509, %v3510
      %v3554 = vsel %vm400, %v3508, %v3509
      %v3555 = vsel %vm400, %v3507, %v3508
      %v3556 = vsel %vm400, %v3506, %v3507
      %v3557 = vsel %vm400, %v3505, %v3506
      %v3558 = vsel %vm400, %v3504, %v3505
      %v3559 = vsel %vm400, %v3503, %v3504
      %v3560 = vsel %vm400, %v3502, %v3503
      %v3561 = vsel %vm400, %v3501, %v3502
      %v3562 = vsel %vm400, %v3500, %v3501
      %v3563 = vsel %vm400, %v3499, %v3500
      %v3564 = vsel %vm400, %v3498, %v3499
      %v3565 = vsel %vm400, %v3497, %v3498
      %v3566 = vsel %vm400, %v3496, %v3497
      %v3567 = vsel %vm400, %v3495, %v3496
      %v3568 = vsel %vm400, %v3494, %v3495
      %v3569 = vsel %vm400, %v3493, %v3494
      %v3570 = vsel %vm400, %v3492, %v3493
      %v3571 = vsel %vm400, %v3491, %v3492
      %v3572 = vsel %vm400, %v3490, %v3491
      %v3573 = vsel %vm400, %v3489, %v3490
      %v3574 = vsel %vm400, %v3488, %v3489
      %v3575 = vsel %vm400, %v3487, %v3488
      %v3576 = vsel %vm400, %v3486, %v3487
      %v3577 = vsel %vm400, %v3485, %v3486
      %v3578 = vsel %vm400, %v3484, %v3485
      %v3579 = vsel %vm400, %v3531, %v3484
      %v3580 = vpack.c.bf16 %v3482, %v3483
      %v3581 = vpack.c.bf16 %v3480, %v3481
      %v3582 = vpack.c.bf16 %v3478, %v3479
      %v3583 = vpack.c.bf16 %v3476, %v3477
      %v3584 = vpack.c.bf16 %v3474, %v3475
      %v3585 = vpack.c.bf16 %v3472, %v3473
      %v3586 = vpack.c.bf16 %v3470, %v3471
      %v3587 = vpack.c.bf16 %v3468, %v3469
      %v3588 = vpack.c.bf16 %v3466, %v3467
      %v3589 = vpack.c.bf16 %v3464, %v3465
      %v3590 = vpack.c.bf16 %v3462, %v3463
      %v3591 = vpack.c.bf16 %v3460, %v3461
      %v3592 = vpack.c.bf16 %v3458, %v3459
      %v3593 = vpack.c.bf16 %v3456, %v3457
      %v3594 = vpack.c.bf16 %v3454, %v3455
      %v3595 = vpack.c.bf16 %v3452, %v3453
      %v3596 = vpack.c.bf16 %v3450, %v3451
      %v3597 = vpack.c.bf16 %v3448, %v3449
      %v3598 = vpack.c.bf16 %v3446, %v3447
      %v3599 = vpack.c.bf16 %v3444, %v3445
      %v3600 = vpack.c.bf16 %v3442, %v3443
      %v3601 = vpack.c.bf16 %v3440, %v3441
      %v3602 = vpack.c.bf16 %v3438, %v3439
      %v3603 = vpack.c.bf16 %v3436, %v3437
      %s3604 = scalar_lea.vmem %s1, 384
      %v3605 = vld [vmem:[%s3604] sm:$0xf]
      %v3606 = vld [vmem:[%s3604 + $0x4] sm:$0xf]
      %v3607 = vld [vmem:[%s3604 + $0x8] sm:$0xf]
      %v3608 = vld [vmem:[%s3604 + $0xc] sm:$0xf]
      %v3609 = vld [vmem:[%s3604 + $0x10] sm:$0xf]
      %v3610 = vld [vmem:[%s3604 + $0x14] sm:$0xf]
      %v3611 = vld [vmem:[%s3604 + $0x18] sm:$0xf]
      %v3612 = vld [vmem:[%s3604 + $0x1c] sm:$0xf]
      %v3613 = vld [vmem:[%s3604 + $0x20] sm:$0xf]
      %v3614 = vld [vmem:[%s3604 + $0x24] sm:$0xf]
      %v3615 = vld [vmem:[%s3604 + $0x28] sm:$0xf]
      %v3616 = vld [vmem:[%s3604 + $0x2c] sm:$0xf]
      %v3617 = vld [vmem:[%s3604 + $0x30] sm:$0xf]
      %v3618 = vld [vmem:[%s3604 + $0x34] sm:$0xf]
      %v3619 = vld [vmem:[%s3604 + $0x38] sm:$0xf]
      %v3620 = vld [vmem:[%s3604 + $0x3c] sm:$0xf]
      %v3637 = vunpack.c.l.b16 %v3605
      %v3638 = vunpack.c.l.b16 %v3606
      %v3639 = vunpack.c.l.b16 %v3607
      %v3640 = vunpack.c.l.b16 %v3608
      %v3641 = vunpack.c.l.b16 %v3609
      %v3642 = vunpack.c.l.b16 %v3610
      %v3643 = vunpack.c.l.b16 %v3611
      %v3644 = vunpack.c.l.b16 %v3612
      %v3645 = vunpack.c.l.b16 %v3613
      %v3646 = vunpack.c.l.b16 %v3614
      %v3647 = vunpack.c.l.b16 %v3615
      %v3648 = vunpack.c.l.b16 %v3616
      %v3649 = vunpack.c.l.b16 %v3617
      %v3650 = vunpack.c.l.b16 %v3618
      %v3651 = vunpack.c.l.b16 %v3619
      %v3652 = vunpack.c.l.b16 %v3620
      %v3653 = vpack.c.b16 %v3638, %v3637
      %v3654 = vpack.c.b16 %v3640, %v3639
      %v3655 = vpack.c.b16 %v3642, %v3641
      %v3656 = vpack.c.b16 %v3644, %v3643
      %v3657 = vpack.c.b16 %v3646, %v3645
      %v3658 = vpack.c.b16 %v3648, %v3647
      %v3659 = vpack.c.b16 %v3650, %v3649
      %v3660 = vpack.c.b16 %v3652, %v3651
      %3669 = vmatprep.subr.bf16.mxu0 0
      %3670 = vmatpush1.bf16.msra.mxu0 %v3660
      %3671 = vmatprep.subr.bf16.mxu0 0
      %3672 = vmatpush1.bf16.msra.mxu0 %v3659
      %3673 = vmatprep.subr.bf16.mxu0 0
      %3674 = vmatpush1.bf16.msra.mxu0 %v3658
      %3675 = vmatprep.subr.bf16.mxu0 0
      %3676 = vmatpush1.bf16.msra.mxu0 %v3657
      %3677 = vmatprep.subr.bf16.mxu0 0
      %3678 = vmatpush1.bf16.msra.mxu0 %v3656
      %3679 = vmatprep.subr.bf16.mxu0 0
      %3680 = vmatpush1.bf16.msra.mxu0 %v3655
      %3681 = vmatprep.subr.bf16.mxu0 0
      %3682 = vmatpush1.bf16.msra.mxu0 %v3654
      %3683 = vmatprep.subr.bf16.mxu0 0
      %3684 = vmatpush1.bf16.msra.mxu0 %v3653
      %3685 = vmatprep.subr.bf16.mxu0 0
      %3686 = vmatpush2.bf16.msra.mxu0 0
      %3687 = vmatprep.subr.bf16.mxu0 0
      %3688 = vmatpush2.bf16.msra.mxu0 0
      %3689 = vmatprep.subr.bf16.mxu0 0
      %3690 = vmatpush2.bf16.msra.mxu0 0
      %3691 = vmatprep.subr.bf16.mxu0 0
      %3692 = vmatpush2.bf16.msra.mxu0 0
      %3693 = vmatprep.subr.bf16.mxu0 0
      %3694 = vmatpush2.bf16.msra.mxu0 0
      %3695 = vmatprep.subr.bf16.mxu0 0
      %3696 = vmatpush2.bf16.msra.mxu0 0
      %3697 = vmatprep.subr.bf16.mxu0 0
      %3698 = vmatpush2.bf16.msra.mxu0 0
      %3699 = vmatprep.subr.bf16.mxu0 0
      %3700 = vmatpush2.bf16.msra.mxu0 0
      %3701 = vmatprep.mubr.bf16.mxu0 0
      %3702 = vmatmul.mubr.bf16.gmra.mxu0 %v3580
      %v3703 = vpop.f32.mrf.mxu0
      %v3704 = vadd.f32 0.0, %v3703
      %v3705 = vpop.f32.mrf.mxu0
      %v3706 = vpop.f32.mrf.mxu0
      %v3707 = vadd.f32 0.0, %v3706
      %v3708 = vpop.f32.mrf.mxu0
      %3709 = vmatprep.mubr.bf16.mxu0 0
      %3710 = vmatmul.mubr.bf16.gmra.mxu0 %v3581
      %v3711 = vpop.f32.mrf.mxu0
      %v3712 = vadd.f32 0.0, %v3711
      %v3713 = vpop.f32.mrf.mxu0
      %v3714 = vpop.f32.mrf.mxu0
      %v3715 = vadd.f32 0.0, %v3714
      %v3716 = vpop.f32.mrf.mxu0
      %3717 = vmatprep.mubr.bf16.mxu0 0
      %3718 = vmatmul.mubr.bf16.gmra.mxu0 %v3582
      %v3719 = vpop.f32.mrf.mxu0
      %v3720 = vadd.f32 0.0, %v3719
      %v3721 = vpop.f32.mrf.mxu0
      %v3722 = vpop.f32.mrf.mxu0
      %v3723 = vadd.f32 0.0, %v3722
      %v3724 = vpop.f32.mrf.mxu0
      %3725 = vmatprep.mubr.bf16.mxu0 0
      %3726 = vmatmul.mubr.bf16.gmra.mxu0 %v3583
      %v3727 = vpop.f32.mrf.mxu0
      %v3728 = vadd.f32 0.0, %v3727
      %v3729 = vpop.f32.mrf.mxu0
      %v3730 = vpop.f32.mrf.mxu0
      %v3731 = vadd.f32 0.0, %v3730
      %v3732 = vpop.f32.mrf.mxu0
      %3733 = vmatprep.mubr.bf16.mxu0 0
      %3734 = vmatmul.mubr.bf16.gmra.mxu0 %v3584
      %v3735 = vpop.f32.mrf.mxu0
      %v3736 = vadd.f32 0.0, %v3735
      %v3737 = vpop.f32.mrf.mxu0
      %v3738 = vpop.f32.mrf.mxu0
      %v3739 = vadd.f32 0.0, %v3738
      %v3740 = vpop.f32.mrf.mxu0
      %3741 = vmatprep.mubr.bf16.mxu0 0
      %3742 = vmatmul.mubr.bf16.gmra.mxu0 %v3585
      %v3743 = vpop.f32.mrf.mxu0
      %v3744 = vadd.f32 0.0, %v3743
      %v3745 = vpop.f32.mrf.mxu0
      %v3746 = vpop.f32.mrf.mxu0
      %v3747 = vadd.f32 0.0, %v3746
      %v3748 = vpop.f32.mrf.mxu0
      %3749 = vmatprep.mubr.bf16.mxu0 0
      %3750 = vmatmul.mubr.bf16.gmra.mxu0 %v3586
      %v3751 = vpop.f32.mrf.mxu0
      %v3752 = vadd.f32 0.0, %v3751
      %v3753 = vpop.f32.mrf.mxu0
      %v3754 = vpop.f32.mrf.mxu0
      %v3755 = vadd.f32 0.0, %v3754
      %v3756 = vpop.f32.mrf.mxu0
      %3757 = vmatprep.mubr.bf16.mxu0 0
      %3758 = vmatmul.mubr.bf16.gmra.mxu0 %v3587
      %v3759 = vpop.f32.mrf.mxu0
      %v3760 = vadd.f32 0.0, %v3759
      %v3761 = vpop.f32.mrf.mxu0
      %v3762 = vpop.f32.mrf.mxu0
      %v3763 = vadd.f32 0.0, %v3762
      %v3764 = vpop.f32.mrf.mxu0
      %3765 = vmatprep.mubr.bf16.mxu0 0
      %3766 = vmatmul.mubr.bf16.gmra.mxu0 %v3588
      %v3767 = vpop.f32.mrf.mxu0
      %v3768 = vadd.f32 0.0, %v3767
      %v3769 = vpop.f32.mrf.mxu0
      %v3770 = vpop.f32.mrf.mxu0
      %v3771 = vadd.f32 0.0, %v3770
      %v3772 = vpop.f32.mrf.mxu0
      %3773 = vmatprep.mubr.bf16.mxu0 0
      %3774 = vmatmul.mubr.bf16.gmra.mxu0 %v3589
      %v3775 = vpop.f32.mrf.mxu0
      %v3776 = vadd.f32 0.0, %v3775
      %v3777 = vpop.f32.mrf.mxu0
      %v3778 = vpop.f32.mrf.mxu0
      %v3779 = vadd.f32 0.0, %v3778
      %v3780 = vpop.f32.mrf.mxu0
      %3781 = vmatprep.mubr.bf16.mxu0 0
      %3782 = vmatmul.mubr.bf16.gmra.mxu0 %v3590
      %v3783 = vpop.f32.mrf.mxu0
      %v3784 = vadd.f32 0.0, %v3783
      %v3785 = vpop.f32.mrf.mxu0
      %v3786 = vpop.f32.mrf.mxu0
      %v3787 = vadd.f32 0.0, %v3786
      %v3788 = vpop.f32.mrf.mxu0
      %3789 = vmatprep.mubr.bf16.mxu0 0
      %3790 = vmatmul.mubr.bf16.gmra.mxu0 %v3591
      %v3791 = vpop.f32.mrf.mxu0
      %v3792 = vadd.f32 0.0, %v3791
      %v3793 = vpop.f32.mrf.mxu0
      %v3794 = vpop.f32.mrf.mxu0
      %v3795 = vadd.f32 0.0, %v3794
      %v3796 = vpop.f32.mrf.mxu0
      %3797 = vmatprep.mubr.bf16.mxu0 0
      %3798 = vmatmul.mubr.bf16.gmra.mxu0 %v3592
      %v3799 = vpop.f32.mrf.mxu0
      %v3800 = vadd.f32 0.0, %v3799
      %v3801 = vpop.f32.mrf.mxu0
      %v3802 = vpop.f32.mrf.mxu0
      %v3803 = vadd.f32 0.0, %v3802
      %v3804 = vpop.f32.mrf.mxu0
      %3805 = vmatprep.mubr.bf16.mxu0 0
      %3806 = vmatmul.mubr.bf16.gmra.mxu0 %v3593
      %v3807 = vpop.f32.mrf.mxu0
      %v3808 = vadd.f32 0.0, %v3807
      %v3809 = vpop.f32.mrf.mxu0
      %v3810 = vpop.f32.mrf.mxu0
      %v3811 = vadd.f32 0.0, %v3810
      %v3812 = vpop.f32.mrf.mxu0
      %3813 = vmatprep.mubr.bf16.mxu0 0
      %3814 = vmatmul.mubr.bf16.gmra.mxu0 %v3594
      %v3815 = vpop.f32.mrf.mxu0
      %v3816 = vadd.f32 0.0, %v3815
      %v3817 = vpop.f32.mrf.mxu0
      %v3818 = vpop.f32.mrf.mxu0
      %v3819 = vadd.f32 0.0, %v3818
      %v3820 = vpop.f32.mrf.mxu0
      %3821 = vmatprep.mubr.bf16.mxu0 0
      %3822 = vmatmul.mubr.bf16.gmra.mxu0 %v3595
      %v3823 = vpop.f32.mrf.mxu0
      %v3824 = vadd.f32 0.0, %v3823
      %v3825 = vpop.f32.mrf.mxu0
      %v3826 = vpop.f32.mrf.mxu0
      %v3827 = vadd.f32 0.0, %v3826
      %v3828 = vpop.f32.mrf.mxu0
      %3829 = vmatprep.mubr.bf16.mxu0 0
      %3830 = vmatmul.mubr.bf16.gmra.mxu0 %v3596
      %v3831 = vpop.f32.mrf.mxu0
      %v3832 = vadd.f32 0.0, %v3831
      %v3833 = vpop.f32.mrf.mxu0
      %v3834 = vpop.f32.mrf.mxu0
      %v3835 = vadd.f32 0.0, %v3834
      %v3836 = vpop.f32.mrf.mxu0
      %3837 = vmatprep.mubr.bf16.mxu0 0
      %3838 = vmatmul.mubr.bf16.gmra.mxu0 %v3597
      %v3839 = vpop.f32.mrf.mxu0
      %v3840 = vadd.f32 0.0, %v3839
      %v3841 = vpop.f32.mrf.mxu0
      %v3842 = vpop.f32.mrf.mxu0
      %v3843 = vadd.f32 0.0, %v3842
      %v3844 = vpop.f32.mrf.mxu0
      %3845 = vmatprep.mubr.bf16.mxu0 0
      %3846 = vmatmul.mubr.bf16.gmra.mxu0 %v3598
      %v3847 = vpop.f32.mrf.mxu0
      %v3848 = vadd.f32 0.0, %v3847
      %v3849 = vpop.f32.mrf.mxu0
      %v3850 = vpop.f32.mrf.mxu0
      %v3851 = vadd.f32 0.0, %v3850
      %v3852 = vpop.f32.mrf.mxu0
      %3853 = vmatprep.mubr.bf16.mxu0 0
      %3854 = vmatmul.mubr.bf16.gmra.mxu0 %v3599
      %v3855 = vpop.f32.mrf.mxu0
      %v3856 = vadd.f32 0.0, %v3855
      %v3857 = vpop.f32.mrf.mxu0
      %v3858 = vpop.f32.mrf.mxu0
      %v3859 = vadd.f32 0.0, %v3858
      %v3860 = vpop.f32.mrf.mxu0
      %3861 = vmatprep.mubr.bf16.mxu0 0
      %3862 = vmatmul.mubr.bf16.gmra.mxu0 %v3600
      %v3863 = vpop.f32.mrf.mxu0
      %v3864 = vadd.f32 0.0, %v3863
      %v3865 = vpop.f32.mrf.mxu0
      %v3866 = vpop.f32.mrf.mxu0
      %v3867 = vadd.f32 0.0, %v3866
      %v3868 = vpop.f32.mrf.mxu0
      %3869 = vmatprep.mubr.bf16.mxu0 0
      %3870 = vmatmul.mubr.bf16.gmra.mxu0 %v3601
      %v3871 = vpop.f32.mrf.mxu0
      %v3872 = vadd.f32 0.0, %v3871
      %v3873 = vpop.f32.mrf.mxu0
      %v3874 = vpop.f32.mrf.mxu0
      %v3875 = vadd.f32 0.0, %v3874
      %v3876 = vpop.f32.mrf.mxu0
      %3877 = vmatprep.mubr.bf16.mxu0 0
      %3878 = vmatmul.mubr.bf16.gmra.mxu0 %v3602
      %v3879 = vpop.f32.mrf.mxu0
      %v3880 = vadd.f32 0.0, %v3879
      %v3881 = vpop.f32.mrf.mxu0
      %v3882 = vpop.f32.mrf.mxu0
      %v3883 = vadd.f32 0.0, %v3882
      %v3884 = vpop.f32.mrf.mxu0
      %3885 = vmatprep.mubr.bf16.mxu0 0
      %3886 = vmatmul.mubr.bf16.gmra.mxu0 %v3603
      %v3887 = vpop.f32.mrf.mxu0
      %v3888 = vadd.f32 0.0, %v3887
      %v3889 = vpop.f32.mrf.mxu0
      %v3890 = vpop.f32.mrf.mxu0
      %v3891 = vadd.f32 0.0, %v3890
      %v3892 = vpop.f32.mrf.mxu0
      %3893 = vdwg.mxu0
      %v3894 = vld [vmem:[#allocation3] sm:$0xff]
      %v3895 = vld [vmem:[#allocation3 + $0x8] sm:$0xff]
      %v3896 = vld [vmem:[#allocation3 + $0x10] sm:$0xff]
      %v3897 = vld [vmem:[#allocation3 + $0x18] sm:$0xff]
      %v3898 = vld [vmem:[#allocation3 + $0x20] sm:$0xff]
      %v3899 = vld [vmem:[#allocation3 + $0x28] sm:$0xff]
      %v3900 = vld [vmem:[#allocation3 + $0x30] sm:$0xff]
      %v3901 = vld [vmem:[#allocation3 + $0x38] sm:$0xff]
      %v3902 = vld [vmem:[#allocation3 + $0x40] sm:$0xff]
      %v3903 = vld [vmem:[#allocation3 + $0x48] sm:$0xff]
      %v3904 = vld [vmem:[#allocation3 + $0x50] sm:$0xff]
      %v3905 = vld [vmem:[#allocation3 + $0x58] sm:$0xff]
      %v3906 = vld [vmem:[#allocation3 + $0x60] sm:$0xff]
      %v3907 = vld [vmem:[#allocation3 + $0x68] sm:$0xff]
      %v3908 = vld [vmem:[#allocation3 + $0x70] sm:$0xff]
      %v3909 = vld [vmem:[#allocation3 + $0x78] sm:$0xff]
      %v3910 = vld [vmem:[#allocation3 + $0x80] sm:$0xff]
      %v3911 = vld [vmem:[#allocation3 + $0x88] sm:$0xff]
      %v3912 = vld [vmem:[#allocation3 + $0x90] sm:$0xff]
      %v3913 = vld [vmem:[#allocation3 + $0x98] sm:$0xff]
      %v3914 = vld [vmem:[#allocation3 + $0xa0] sm:$0xff]
      %v3915 = vld [vmem:[#allocation3 + $0xa8] sm:$0xff]
      %v3916 = vld [vmem:[#allocation3 + $0xb0] sm:$0xff]
      %v3917 = vld [vmem:[#allocation3 + $0xb8] sm:$0xff]
      %v3918 = vld [vmem:[#allocation3 + $0xc0] sm:$0xff]
      %v3919 = vld [vmem:[#allocation3 + $0xc8] sm:$0xff]
      %v3920 = vld [vmem:[#allocation3 + $0xd0] sm:$0xff]
      %v3921 = vld [vmem:[#allocation3 + $0xd8] sm:$0xff]
      %v3922 = vld [vmem:[#allocation3 + $0xe0] sm:$0xff]
      %v3923 = vld [vmem:[#allocation3 + $0xe8] sm:$0xff]
      %v3924 = vld [vmem:[#allocation3 + $0xf0] sm:$0xff]
      %v3925 = vld [vmem:[#allocation3 + $0xf8] sm:$0xff]
      %v3926 = vld [vmem:[#allocation3 + $0x100] sm:$0xff]
      %v3927 = vld [vmem:[#allocation3 + $0x108] sm:$0xff]
      %v3928 = vld [vmem:[#allocation3 + $0x110] sm:$0xff]
      %v3929 = vld [vmem:[#allocation3 + $0x118] sm:$0xff]
      %v3930 = vld [vmem:[#allocation3 + $0x120] sm:$0xff]
      %v3931 = vld [vmem:[#allocation3 + $0x128] sm:$0xff]
      %v3932 = vld [vmem:[#allocation3 + $0x130] sm:$0xff]
      %v3933 = vld [vmem:[#allocation3 + $0x138] sm:$0xff]
      %v3934 = vld [vmem:[#allocation3 + $0x140] sm:$0xff]
      %v3935 = vld [vmem:[#allocation3 + $0x148] sm:$0xff]
      %v3936 = vld [vmem:[#allocation3 + $0x150] sm:$0xff]
      %v3937 = vld [vmem:[#allocation3 + $0x158] sm:$0xff]
      %v3938 = vld [vmem:[#allocation3 + $0x160] sm:$0xff]
      %v3939 = vld [vmem:[#allocation3 + $0x168] sm:$0xff]
      %v3940 = vld [vmem:[#allocation3 + $0x170] sm:$0xff]
      %v3941 = vld [vmem:[#allocation3 + $0x178] sm:$0xff]
      %v3942 = vadd.f32 %v3894, %v3704
      %v3943 = vadd.f32 %v3895, %v3707
      %v3944 = vadd.f32 %v3896, %v3712
      %v3945 = vadd.f32 %v3897, %v3715
      %v3946 = vadd.f32 %v3898, %v3720
      %v3947 = vadd.f32 %v3899, %v3723
      %v3948 = vadd.f32 %v3900, %v3728
      %v3949 = vadd.f32 %v3901, %v3731
      %v3950 = vadd.f32 %v3902, %v3736
      %v3951 = vadd.f32 %v3903, %v3739
      %v3952 = vadd.f32 %v3904, %v3744
      %v3953 = vadd.f32 %v3905, %v3747
      %v3954 = vadd.f32 %v3906, %v3752
      %v3955 = vadd.f32 %v3907, %v3755
      %v3956 = vadd.f32 %v3908, %v3760
      %v3957 = vadd.f32 %v3909, %v3763
      %v3958 = vadd.f32 %v3910, %v3768
      %v3959 = vadd.f32 %v3911, %v3771
      %v3960 = vadd.f32 %v3912, %v3776
      %v3961 = vadd.f32 %v3913, %v3779
      %v3962 = vadd.f32 %v3914, %v3784
      %v3963 = vadd.f32 %v3915, %v3787
      %v3964 = vadd.f32 %v3916, %v3792
      %v3965 = vadd.f32 %v3917, %v3795
      %v3966 = vadd.f32 %v3918, %v3800
      %v3967 = vadd.f32 %v3919, %v3803
      %v3968 = vadd.f32 %v3920, %v3808
      %v3969 = vadd.f32 %v3921, %v3811
      %v3970 = vadd.f32 %v3922, %v3816
      %v3971 = vadd.f32 %v3923, %v3819
      %v3972 = vadd.f32 %v3924, %v3824
      %v3973 = vadd.f32 %v3925, %v3827
      %v3974 = vadd.f32 %v3926, %v3832
      %v3975 = vadd.f32 %v3927, %v3835
      %v3976 = vadd.f32 %v3928, %v3840
      %v3977 = vadd.f32 %v3929, %v3843
      %v3978 = vadd.f32 %v3930, %v3848
      %v3979 = vadd.f32 %v3931, %v3851
      %v3980 = vadd.f32 %v3932, %v3856
      %v3981 = vadd.f32 %v3933, %v3859
      %v3982 = vadd.f32 %v3934, %v3864
      %v3983 = vadd.f32 %v3935, %v3867
      %v3984 = vadd.f32 %v3936, %v3872
      %v3985 = vadd.f32 %v3937, %v3875
      %v3986 = vadd.f32 %v3938, %v3880
      %v3987 = vadd.f32 %v3939, %v3883
      %v3988 = vadd.f32 %v3940, %v3888
      %v3989 = vadd.f32 %v3941, %v3891
      %3990 = vst [vmem:[#allocation3] sm:$0xff] %v3942
      %3991 = vst [vmem:[#allocation3 + $0x8] sm:$0xff] %v3943
      %3992 = vst [vmem:[#allocation3 + $0x10] sm:$0xff] %v3944
      %3993 = vst [vmem:[#allocation3 + $0x18] sm:$0xff] %v3945
      %3994 = vst [vmem:[#allocation3 + $0x20] sm:$0xff] %v3946
      %3995 = vst [vmem:[#allocation3 + $0x28] sm:$0xff] %v3947
      %3996 = vst [vmem:[#allocation3 + $0x30] sm:$0xff] %v3948
      %3997 = vst [vmem:[#allocation3 + $0x38] sm:$0xff] %v3949
      %3998 = vst [vmem:[#allocation3 + $0x40] sm:$0xff] %v3950
      %3999 = vst [vmem:[#allocation3 + $0x48] sm:$0xff] %v3951
      %4000 = vst [vmem:[#allocation3 + $0x50] sm:$0xff] %v3952
      %4001 = vst [vmem:[#allocation3 + $0x58] sm:$0xff] %v3953
      %4002 = vst [vmem:[#allocation3 + $0x60] sm:$0xff] %v3954
      %4003 = vst [vmem:[#allocation3 + $0x68] sm:$0xff] %v3955
      %4004 = vst [vmem:[#allocation3 + $0x70] sm:$0xff] %v3956
      %4005 = vst [vmem:[#allocation3 + $0x78] sm:$0xff] %v3957
      %4006 = vst [vmem:[#allocation3 + $0x80] sm:$0xff] %v3958
      %4007 = vst [vmem:[#allocation3 + $0x88] sm:$0xff] %v3959
      %4008 = vst [vmem:[#allocation3 + $0x90] sm:$0xff] %v3960
      %4009 = vst [vmem:[#allocation3 + $0x98] sm:$0xff] %v3961
      %4010 = vst [vmem:[#allocation3 + $0xa0] sm:$0xff] %v3962
      %4011 = vst [vmem:[#allocation3 + $0xa8] sm:$0xff] %v3963
      %4012 = vst [vmem:[#allocation3 + $0xb0] sm:$0xff] %v3964
      %4013 = vst [vmem:[#allocation3 + $0xb8] sm:$0xff] %v3965
      %4014 = vst [vmem:[#allocation3 + $0xc0] sm:$0xff] %v3966
      %4015 = vst [vmem:[#allocation3 + $0xc8] sm:$0xff] %v3967
      %4016 = vst [vmem:[#allocation3 + $0xd0] sm:$0xff] %v3968
      %4017 = vst [vmem:[#allocation3 + $0xd8] sm:$0xff] %v3969
      %4018 = vst [vmem:[#allocation3 + $0xe0] sm:$0xff] %v3970
      %4019 = vst [vmem:[#allocation3 + $0xe8] sm:$0xff] %v3971
      %4020 = vst [vmem:[#allocation3 + $0xf0] sm:$0xff] %v3972
      %4021 = vst [vmem:[#allocation3 + $0xf8] sm:$0xff] %v3973
      %4022 = vst [vmem:[#allocation3 + $0x100] sm:$0xff] %v3974
      %4023 = vst [vmem:[#allocation3 + $0x108] sm:$0xff] %v3975
      %4024 = vst [vmem:[#allocation3 + $0x110] sm:$0xff] %v3976
      %4025 = vst [vmem:[#allocation3 + $0x118] sm:$0xff] %v3977
      %4026 = vst [vmem:[#allocation3 + $0x120] sm:$0xff] %v3978
      %4027 = vst [vmem:[#allocation3 + $0x128] sm:$0xff] %v3979
      %4028 = vst [vmem:[#allocation3 + $0x130] sm:$0xff] %v3980
      %4029 = vst [vmem:[#allocation3 + $0x138] sm:$0xff] %v3981
      %4030 = vst [vmem:[#allocation3 + $0x140] sm:$0xff] %v3982
      %4031 = vst [vmem:[#allocation3 + $0x148] sm:$0xff] %v3983
      %4032 = vst [vmem:[#allocation3 + $0x150] sm:$0xff] %v3984
      %4033 = vst [vmem:[#allocation3 + $0x158] sm:$0xff] %v3985
      %4034 = vst [vmem:[#allocation3 + $0x160] sm:$0xff] %v3986
      %4035 = vst [vmem:[#allocation3 + $0x168] sm:$0xff] %v3987
      %4036 = vst [vmem:[#allocation3 + $0x170] sm:$0xff] %v3988
      %4037 = vst [vmem:[#allocation3 + $0x178] sm:$0xff] %v3989
      %v4038 = vpack.c.bf16 %v3341, %v3340
      %v4039 = vpack.c.bf16 %v3343, %v3342
      %v4040 = vpack.c.bf16 %v3345, %v3344
      %v4041 = vpack.c.bf16 %v3347, %v3346
      %v4042 = vpack.c.bf16 %v3349, %v3348
      %v4043 = vpack.c.bf16 %v3351, %v3350
      %v4044 = vpack.c.bf16 %v3353, %v3352
      %v4045 = vpack.c.bf16 %v3355, %v3354
      %v4046 = vpack.c.bf16 %v3357, %v3356
      %v4047 = vpack.c.bf16 %v3359, %v3358
      %v4048 = vpack.c.bf16 %v3361, %v3360
      %v4049 = vpack.c.bf16 %v3363, %v3362
      %v4050 = vpack.c.bf16 %v3365, %v3364
      %v4051 = vpack.c.bf16 %v3367, %v3366
      %v4052 = vpack.c.bf16 %v3369, %v3368
      %v4053 = vpack.c.bf16 %v3371, %v3370
      %v4054 = vpack.c.bf16 %v3373, %v3372
      %v4055 = vpack.c.bf16 %v3375, %v3374
      %v4056 = vpack.c.bf16 %v3377, %v3376
      %v4057 = vpack.c.bf16 %v3379, %v3378
      %v4058 = vpack.c.bf16 %v3381, %v3380
      %v4059 = vpack.c.bf16 %v3383, %v3382
      %v4060 = vpack.c.bf16 %v3385, %v3384
      %v4061 = vpack.c.bf16 %v3387, %v3386
      %s4062 = scalar_lea.vmem %s1, 448
      %v4063 = vld [vmem:[%s4062] sm:$0xf]
      %v4064 = vld [vmem:[%s4062 + $0x4] sm:$0xf]
      %v4065 = vld [vmem:[%s4062 + $0x8] sm:$0xf]
      %v4066 = vld [vmem:[%s4062 + $0xc] sm:$0xf]
      %v4067 = vld [vmem:[%s4062 + $0x10] sm:$0xf]
      %v4068 = vld [vmem:[%s4062 + $0x14] sm:$0xf]
      %v4069 = vld [vmem:[%s4062 + $0x18] sm:$0xf]
      %v4070 = vld [vmem:[%s4062 + $0x1c] sm:$0xf]
      %v4071 = vld [vmem:[%s4062 + $0x20] sm:$0xf]
      %v4072 = vld [vmem:[%s4062 + $0x24] sm:$0xf]
      %v4073 = vld [vmem:[%s4062 + $0x28] sm:$0xf]
      %v4074 = vld [vmem:[%s4062 + $0x2c] sm:$0xf]
      %v4075 = vld [vmem:[%s4062 + $0x30] sm:$0xf]
      %v4076 = vld [vmem:[%s4062 + $0x34] sm:$0xf]
      %v4077 = vld [vmem:[%s4062 + $0x38] sm:$0xf]
      %v4078 = vld [vmem:[%s4062 + $0x3c] sm:$0xf]
      %v4095 = vunpack.c.l.b16 %v4063
      %v4096 = vunpack.c.l.b16 %v4064
      %v4097 = vunpack.c.l.b16 %v4065
      %v4098 = vunpack.c.l.b16 %v4066
      %v4099 = vunpack.c.l.b16 %v4067
      %v4100 = vunpack.c.l.b16 %v4068
      %v4101 = vunpack.c.l.b16 %v4069
      %v4102 = vunpack.c.l.b16 %v4070
      %v4103 = vunpack.c.l.b16 %v4071
      %v4104 = vunpack.c.l.b16 %v4072
      %v4105 = vunpack.c.l.b16 %v4073
      %v4106 = vunpack.c.l.b16 %v4074
      %v4107 = vunpack.c.l.b16 %v4075
      %v4108 = vunpack.c.l.b16 %v4076
      %v4109 = vunpack.c.l.b16 %v4077
      %v4110 = vunpack.c.l.b16 %v4078
      %v4111 = vpack.c.b16 %v4096, %v4095
      %v4112 = vpack.c.b16 %v4098, %v4097
      %v4113 = vpack.c.b16 %v4100, %v4099
      %v4114 = vpack.c.b16 %v4102, %v4101
      %v4115 = vpack.c.b16 %v4104, %v4103
      %v4116 = vpack.c.b16 %v4106, %v4105
      %v4117 = vpack.c.b16 %v4108, %v4107
      %v4118 = vpack.c.b16 %v4110, %v4109
      %4127 = vmatprep.subr.bf16.mxu0 0
      %4128 = vmatpush1.bf16.msra.mxu0 %v4118
      %4129 = vmatprep.subr.bf16.mxu0 0
      %4130 = vmatpush1.bf16.msra.mxu0 %v4117
      %4131 = vmatprep.subr.bf16.mxu0 0
      %4132 = vmatpush1.bf16.msra.mxu0 %v4116
      %4133 = vmatprep.subr.bf16.mxu0 0
      %4134 = vmatpush1.bf16.msra.mxu0 %v4115
      %4135 = vmatprep.subr.bf16.mxu0 0
      %4136 = vmatpush1.bf16.msra.mxu0 %v4114
      %4137 = vmatprep.subr.bf16.mxu0 0
      %4138 = vmatpush1.bf16.msra.mxu0 %v4113
      %4139 = vmatprep.subr.bf16.mxu0 0
      %4140 = vmatpush1.bf16.msra.mxu0 %v4112
      %4141 = vmatprep.subr.bf16.mxu0 0
      %4142 = vmatpush1.bf16.msra.mxu0 %v4111
      %4143 = vmatprep.subr.bf16.mxu0 0
      %4144 = vmatpush2.bf16.msra.mxu0 0
      %4145 = vmatprep.subr.bf16.mxu0 0
      %4146 = vmatpush2.bf16.msra.mxu0 0
      %4147 = vmatprep.subr.bf16.mxu0 0
      %4148 = vmatpush2.bf16.msra.mxu0 0
      %4149 = vmatprep.subr.bf16.mxu0 0
      %4150 = vmatpush2.bf16.msra.mxu0 0
      %4151 = vmatprep.subr.bf16.mxu0 0
      %4152 = vmatpush2.bf16.msra.mxu0 0
      %4153 = vmatprep.subr.bf16.mxu0 0
      %4154 = vmatpush2.bf16.msra.mxu0 0
      %4155 = vmatprep.subr.bf16.mxu0 0
      %4156 = vmatpush2.bf16.msra.mxu0 0
      %4157 = vmatprep.subr.bf16.mxu0 0
      %4158 = vmatpush2.bf16.msra.mxu0 0
      %4159 = vmatprep.mubr.bf16.mxu0 0
      %4160 = vmatmul.mubr.bf16.gmra.mxu0 %v4038
      %v4161 = vpop.f32.mrf.mxu0
      %v4162 = vadd.f32 0.0, %v4161
      %v4163 = vpop.f32.mrf.mxu0
      %v4164 = vpop.f32.mrf.mxu0
      %v4165 = vadd.f32 0.0, %v4164
      %v4166 = vpop.f32.mrf.mxu0
      %4167 = vmatprep.mubr.bf16.mxu0 0
      %4168 = vmatmul.mubr.bf16.gmra.mxu0 %v4039
      %v4169 = vpop.f32.mrf.mxu0
      %v4170 = vadd.f32 0.0, %v4169
      %v4171 = vpop.f32.mrf.mxu0
      %v4172 = vpop.f32.mrf.mxu0
      %v4173 = vadd.f32 0.0, %v4172
      %v4174 = vpop.f32.mrf.mxu0
      %4175 = vmatprep.mubr.bf16.mxu0 0
      %4176 = vmatmul.mubr.bf16.gmra.mxu0 %v4040
      %v4177 = vpop.f32.mrf.mxu0
      %v4178 = vadd.f32 0.0, %v4177
      %v4179 = vpop.f32.mrf.mxu0
      %v4180 = vpop.f32.mrf.mxu0
      %v4181 = vadd.f32 0.0, %v4180
      %v4182 = vpop.f32.mrf.mxu0
      %4183 = vmatprep.mubr.bf16.mxu0 0
      %4184 = vmatmul.mubr.bf16.gmra.mxu0 %v4041
      %v4185 = vpop.f32.mrf.mxu0
      %v4186 = vadd.f32 0.0, %v4185
      %v4187 = vpop.f32.mrf.mxu0
      %v4188 = vpop.f32.mrf.mxu0
      %v4189 = vadd.f32 0.0, %v4188
      %v4190 = vpop.f32.mrf.mxu0
      %4191 = vmatprep.mubr.bf16.mxu0 0
      %4192 = vmatmul.mubr.bf16.gmra.mxu0 %v4042
      %v4193 = vpop.f32.mrf.mxu0
      %v4194 = vadd.f32 0.0, %v4193
      %v4195 = vpop.f32.mrf.mxu0
      %v4196 = vpop.f32.mrf.mxu0
      %v4197 = vadd.f32 0.0, %v4196
      %v4198 = vpop.f32.mrf.mxu0
      %4199 = vmatprep.mubr.bf16.mxu0 0
      %4200 = vmatmul.mubr.bf16.gmra.mxu0 %v4043
      %v4201 = vpop.f32.mrf.mxu0
      %v4202 = vadd.f32 0.0, %v4201
      %v4203 = vpop.f32.mrf.mxu0
      %v4204 = vpop.f32.mrf.mxu0
      %v4205 = vadd.f32 0.0, %v4204
      %v4206 = vpop.f32.mrf.mxu0
      %4207 = vmatprep.mubr.bf16.mxu0 0
      %4208 = vmatmul.mubr.bf16.gmra.mxu0 %v4044
      %v4209 = vpop.f32.mrf.mxu0
      %v4210 = vadd.f32 0.0, %v4209
      %v4211 = vpop.f32.mrf.mxu0
      %v4212 = vpop.f32.mrf.mxu0
      %v4213 = vadd.f32 0.0, %v4212
      %v4214 = vpop.f32.mrf.mxu0
      %4215 = vmatprep.mubr.bf16.mxu0 0
      %4216 = vmatmul.mubr.bf16.gmra.mxu0 %v4045
      %v4217 = vpop.f32.mrf.mxu0
      %v4218 = vadd.f32 0.0, %v4217
      %v4219 = vpop.f32.mrf.mxu0
      %v4220 = vpop.f32.mrf.mxu0
      %v4221 = vadd.f32 0.0, %v4220
      %v4222 = vpop.f32.mrf.mxu0
      %4223 = vmatprep.mubr.bf16.mxu0 0
      %4224 = vmatmul.mubr.bf16.gmra.mxu0 %v4046
      %v4225 = vpop.f32.mrf.mxu0
      %v4226 = vadd.f32 0.0, %v4225
      %v4227 = vpop.f32.mrf.mxu0
      %v4228 = vpop.f32.mrf.mxu0
      %v4229 = vadd.f32 0.0, %v4228
      %v4230 = vpop.f32.mrf.mxu0
      %4231 = vmatprep.mubr.bf16.mxu0 0
      %4232 = vmatmul.mubr.bf16.gmra.mxu0 %v4047
      %v4233 = vpop.f32.mrf.mxu0
      %v4234 = vadd.f32 0.0, %v4233
      %v4235 = vpop.f32.mrf.mxu0
      %v4236 = vpop.f32.mrf.mxu0
      %v4237 = vadd.f32 0.0, %v4236
      %v4238 = vpop.f32.mrf.mxu0
      %4239 = vmatprep.mubr.bf16.mxu0 0
      %4240 = vmatmul.mubr.bf16.gmra.mxu0 %v4048
      %v4241 = vpop.f32.mrf.mxu0
      %v4242 = vadd.f32 0.0, %v4241
      %v4243 = vpop.f32.mrf.mxu0
      %v4244 = vpop.f32.mrf.mxu0
      %v4245 = vadd.f32 0.0, %v4244
      %v4246 = vpop.f32.mrf.mxu0
      %4247 = vmatprep.mubr.bf16.mxu0 0
      %4248 = vmatmul.mubr.bf16.gmra.mxu0 %v4049
      %v4249 = vpop.f32.mrf.mxu0
      %v4250 = vadd.f32 0.0, %v4249
      %v4251 = vpop.f32.mrf.mxu0
      %v4252 = vpop.f32.mrf.mxu0
      %v4253 = vadd.f32 0.0, %v4252
      %v4254 = vpop.f32.mrf.mxu0
      %4255 = vmatprep.mubr.bf16.mxu0 0
      %4256 = vmatmul.mubr.bf16.gmra.mxu0 %v4050
      %v4257 = vpop.f32.mrf.mxu0
      %v4258 = vadd.f32 0.0, %v4257
      %v4259 = vpop.f32.mrf.mxu0
      %v4260 = vpop.f32.mrf.mxu0
      %v4261 = vadd.f32 0.0, %v4260
      %v4262 = vpop.f32.mrf.mxu0
      %4263 = vmatprep.mubr.bf16.mxu0 0
      %4264 = vmatmul.mubr.bf16.gmra.mxu0 %v4051
      %v4265 = vpop.f32.mrf.mxu0
      %v4266 = vadd.f32 0.0, %v4265
      %v4267 = vpop.f32.mrf.mxu0
      %v4268 = vpop.f32.mrf.mxu0
      %v4269 = vadd.f32 0.0, %v4268
      %v4270 = vpop.f32.mrf.mxu0
      %4271 = vmatprep.mubr.bf16.mxu0 0
      %4272 = vmatmul.mubr.bf16.gmra.mxu0 %v4052
      %v4273 = vpop.f32.mrf.mxu0
      %v4274 = vadd.f32 0.0, %v4273
      %v4275 = vpop.f32.mrf.mxu0
      %v4276 = vpop.f32.mrf.mxu0
      %v4277 = vadd.f32 0.0, %v4276
      %v4278 = vpop.f32.mrf.mxu0
      %4279 = vmatprep.mubr.bf16.mxu0 0
      %4280 = vmatmul.mubr.bf16.gmra.mxu0 %v4053
      %v4281 = vpop.f32.mrf.mxu0
      %v4282 = vadd.f32 0.0, %v4281
      %v4283 = vpop.f32.mrf.mxu0
      %v4284 = vpop.f32.mrf.mxu0
      %v4285 = vadd.f32 0.0, %v4284
      %v4286 = vpop.f32.mrf.mxu0
      %4287 = vmatprep.mubr.bf16.mxu0 0
      %4288 = vmatmul.mubr.bf16.gmra.mxu0 %v4054
      %v4289 = vpop.f32.mrf.mxu0
      %v4290 = vadd.f32 0.0, %v4289
      %v4291 = vpop.f32.mrf.mxu0
      %v4292 = vpop.f32.mrf.mxu0
      %v4293 = vadd.f32 0.0, %v4292
      %v4294 = vpop.f32.mrf.mxu0
      %4295 = vmatprep.mubr.bf16.mxu0 0
      %4296 = vmatmul.mubr.bf16.gmra.mxu0 %v4055
      %v4297 = vpop.f32.mrf.mxu0
      %v4298 = vadd.f32 0.0, %v4297
      %v4299 = vpop.f32.mrf.mxu0
      %v4300 = vpop.f32.mrf.mxu0
      %v4301 = vadd.f32 0.0, %v4300
      %v4302 = vpop.f32.mrf.mxu0
      %4303 = vmatprep.mubr.bf16.mxu0 0
      %4304 = vmatmul.mubr.bf16.gmra.mxu0 %v4056
      %v4305 = vpop.f32.mrf.mxu0
      %v4306 = vadd.f32 0.0, %v4305
      %v4307 = vpop.f32.mrf.mxu0
      %v4308 = vpop.f32.mrf.mxu0
      %v4309 = vadd.f32 0.0, %v4308
      %v4310 = vpop.f32.mrf.mxu0
      %4311 = vmatprep.mubr.bf16.mxu0 0
      %4312 = vmatmul.mubr.bf16.gmra.mxu0 %v4057
      %v4313 = vpop.f32.mrf.mxu0
      %v4314 = vadd.f32 0.0, %v4313
      %v4315 = vpop.f32.mrf.mxu0
      %v4316 = vpop.f32.mrf.mxu0
      %v4317 = vadd.f32 0.0, %v4316
      %v4318 = vpop.f32.mrf.mxu0
      %4319 = vmatprep.mubr.bf16.mxu0 0
      %4320 = vmatmul.mubr.bf16.gmra.mxu0 %v4058
      %v4321 = vpop.f32.mrf.mxu0
      %v4322 = vadd.f32 0.0, %v4321
      %v4323 = vpop.f32.mrf.mxu0
      %v4324 = vpop.f32.mrf.mxu0
      %v4325 = vadd.f32 0.0, %v4324
      %v4326 = vpop.f32.mrf.mxu0
      %4327 = vmatprep.mubr.bf16.mxu0 0
      %4328 = vmatmul.mubr.bf16.gmra.mxu0 %v4059
      %v4329 = vpop.f32.mrf.mxu0
      %v4330 = vadd.f32 0.0, %v4329
      %v4331 = vpop.f32.mrf.mxu0
      %v4332 = vpop.f32.mrf.mxu0
      %v4333 = vadd.f32 0.0, %v4332
      %v4334 = vpop.f32.mrf.mxu0
      %4335 = vmatprep.mubr.bf16.mxu0 0
      %4336 = vmatmul.mubr.bf16.gmra.mxu0 %v4060
      %v4337 = vpop.f32.mrf.mxu0
      %v4338 = vadd.f32 0.0, %v4337
      %v4339 = vpop.f32.mrf.mxu0
      %v4340 = vpop.f32.mrf.mxu0
      %v4341 = vadd.f32 0.0, %v4340
      %v4342 = vpop.f32.mrf.mxu0
      %4343 = vmatprep.mubr.bf16.mxu0 0
      %4344 = vmatmul.mubr.bf16.gmra.mxu0 %v4061
      %v4345 = vpop.f32.mrf.mxu0
      %v4346 = vadd.f32 0.0, %v4345
      %v4347 = vpop.f32.mrf.mxu0
      %v4348 = vpop.f32.mrf.mxu0
      %v4349 = vadd.f32 0.0, %v4348
      %v4350 = vpop.f32.mrf.mxu0
      %4351 = vdwg.mxu0
      %v4352 = vld [vmem:[#allocation3] sm:$0xff]
      %v4353 = vld [vmem:[#allocation3 + $0x8] sm:$0xff]
      %v4354 = vld [vmem:[#allocation3 + $0x10] sm:$0xff]
      %v4355 = vld [vmem:[#allocation3 + $0x18] sm:$0xff]
      %v4356 = vld [vmem:[#allocation3 + $0x20] sm:$0xff]
      %v4357 = vld [vmem:[#allocation3 + $0x28] sm:$0xff]
      %v4358 = vld [vmem:[#allocation3 + $0x30] sm:$0xff]
      %v4359 = vld [vmem:[#allocation3 + $0x38] sm:$0xff]
      %v4360 = vld [vmem:[#allocation3 + $0x40] sm:$0xff]
      %v4361 = vld [vmem:[#allocation3 + $0x48] sm:$0xff]
      %v4362 = vld [vmem:[#allocation3 + $0x50] sm:$0xff]
      %v4363 = vld [vmem:[#allocation3 + $0x58] sm:$0xff]
      %v4364 = vld [vmem:[#allocation3 + $0x60] sm:$0xff]
      %v4365 = vld [vmem:[#allocation3 + $0x68] sm:$0xff]
      %v4366 = vld [vmem:[#allocation3 + $0x70] sm:$0xff]
      %v4367 = vld [vmem:[#allocation3 + $0x78] sm:$0xff]
      %v4368 = vld [vmem:[#allocation3 + $0x80] sm:$0xff]
      %v4369 = vld [vmem:[#allocation3 + $0x88] sm:$0xff]
      %v4370 = vld [vmem:[#allocation3 + $0x90] sm:$0xff]
      %v4371 = vld [vmem:[#allocation3 + $0x98] sm:$0xff]
      %v4372 = vld [vmem:[#allocation3 + $0xa0] sm:$0xff]
      %v4373 = vld [vmem:[#allocation3 + $0xa8] sm:$0xff]
      %v4374 = vld [vmem:[#allocation3 + $0xb0] sm:$0xff]
      %v4375 = vld [vmem:[#allocation3 + $0xb8] sm:$0xff]
      %v4376 = vld [vmem:[#allocation3 + $0xc0] sm:$0xff]
      %v4377 = vld [vmem:[#allocation3 + $0xc8] sm:$0xff]
      %v4378 = vld [vmem:[#allocation3 + $0xd0] sm:$0xff]
      %v4379 = vld [vmem:[#allocation3 + $0xd8] sm:$0xff]
      %v4380 = vld [vmem:[#allocation3 + $0xe0] sm:$0xff]
      %v4381 = vld [vmem:[#allocation3 + $0xe8] sm:$0xff]
      %v4382 = vld [vmem:[#allocation3 + $0xf0] sm:$0xff]
      %v4383 = vld [vmem:[#allocation3 + $0xf8] sm:$0xff]
      %v4384 = vld [vmem:[#allocation3 + $0x100] sm:$0xff]
      %v4385 = vld [vmem:[#allocation3 + $0x108] sm:$0xff]
      %v4386 = vld [vmem:[#allocation3 + $0x110] sm:$0xff]
      %v4387 = vld [vmem:[#allocation3 + $0x118] sm:$0xff]
      %v4388 = vld [vmem:[#allocation3 + $0x120] sm:$0xff]
      %v4389 = vld [vmem:[#allocation3 + $0x128] sm:$0xff]
      %v4390 = vld [vmem:[#allocation3 + $0x130] sm:$0xff]
      %v4391 = vld [vmem:[#allocation3 + $0x138] sm:$0xff]
      %v4392 = vld [vmem:[#allocation3 + $0x140] sm:$0xff]
      %v4393 = vld [vmem:[#allocation3 + $0x148] sm:$0xff]
      %v4394 = vld [vmem:[#allocation3 + $0x150] sm:$0xff]
      %v4395 = vld [vmem:[#allocation3 + $0x158] sm:$0xff]
      %v4396 = vld [vmem:[#allocation3 + $0x160] sm:$0xff]
      %v4397 = vld [vmem:[#allocation3 + $0x168] sm:$0xff]
      %v4398 = vld [vmem:[#allocation3 + $0x170] sm:$0xff]
      %v4399 = vld [vmem:[#allocation3 + $0x178] sm:$0xff]
      %v4400 = vadd.f32 %v4352, %v4162
      %v4401 = vadd.f32 %v4353, %v4165
      %v4402 = vadd.f32 %v4354, %v4170
      %v4403 = vadd.f32 %v4355, %v4173
      %v4404 = vadd.f32 %v4356, %v4178
      %v4405 = vadd.f32 %v4357, %v4181
      %v4406 = vadd.f32 %v4358, %v4186
      %v4407 = vadd.f32 %v4359, %v4189
      %v4408 = vadd.f32 %v4360, %v4194
      %v4409 = vadd.f32 %v4361, %v4197
      %v4410 = vadd.f32 %v4362, %v4202
      %v4411 = vadd.f32 %v4363, %v4205
      %v4412 = vadd.f32 %v4364, %v4210
      %v4413 = vadd.f32 %v4365, %v4213
      %v4414 = vadd.f32 %v4366, %v4218
      %v4415 = vadd.f32 %v4367, %v4221
      %v4416 = vadd.f32 %v4368, %v4226
      %v4417 = vadd.f32 %v4369, %v4229
      %v4418 = vadd.f32 %v4370, %v4234
      %v4419 = vadd.f32 %v4371, %v4237
      %v4420 = vadd.f32 %v4372, %v4242
      %v4421 = vadd.f32 %v4373, %v4245
      %v4422 = vadd.f32 %v4374, %v4250
      %v4423 = vadd.f32 %v4375, %v4253
      %v4424 = vadd.f32 %v4376, %v4258
      %v4425 = vadd.f32 %v4377, %v4261
      %v4426 = vadd.f32 %v4378, %v4266
      %v4427 = vadd.f32 %v4379, %v4269
      %v4428 = vadd.f32 %v4380, %v4274
      %v4429 = vadd.f32 %v4381, %v4277
      %v4430 = vadd.f32 %v4382, %v4282
      %v4431 = vadd.f32 %v4383, %v4285
      %v4432 = vadd.f32 %v4384, %v4290
      %v4433 = vadd.f32 %v4385, %v4293
      %v4434 = vadd.f32 %v4386, %v4298
      %v4435 = vadd.f32 %v4387, %v4301
      %v4436 = vadd.f32 %v4388, %v4306
      %v4437 = vadd.f32 %v4389, %v4309
      %v4438 = vadd.f32 %v4390, %v4314
      %v4439 = vadd.f32 %v4391, %v4317
      %v4440 = vadd.f32 %v4392, %v4322
      %v4441 = vadd.f32 %v4393, %v4325
      %v4442 = vadd.f32 %v4394, %v4330
      %v4443 = vadd.f32 %v4395, %v4333
      %v4444 = vadd.f32 %v4396, %v4338
      %v4445 = vadd.f32 %v4397, %v4341
      %v4446 = vadd.f32 %v4398, %v4346
      %v4447 = vadd.f32 %v4399, %v4349
      %4448 = vst [vmem:[#allocation3] sm:$0xff] %v4400
      %4449 = vst [vmem:[#allocation3 + $0x8] sm:$0xff] %v4401
      %4450 = vst [vmem:[#allocation3 + $0x10] sm:$0xff] %v4402
      %4451 = vst [vmem:[#allocation3 + $0x18] sm:$0xff] %v4403
      %4452 = vst [vmem:[#allocation3 + $0x20] sm:$0xff] %v4404
      %4453 = vst [vmem:[#allocation3 + $0x28] sm:$0xff] %v4405
      %4454 = vst [vmem:[#allocation3 + $0x30] sm:$0xff] %v4406
      %4455 = vst [vmem:[#allocation3 + $0x38] sm:$0xff] %v4407
      %4456 = vst [vmem:[#allocation3 + $0x40] sm:$0xff] %v4408
      %4457 = vst [vmem:[#allocation3 + $0x48] sm:$0xff] %v4409
      %4458 = vst [vmem:[#allocation3 + $0x50] sm:$0xff] %v4410
      %4459 = vst [vmem:[#allocation3 + $0x58] sm:$0xff] %v4411
      %4460 = vst [vmem:[#allocation3 + $0x60] sm:$0xff] %v4412
      %4461 = vst [vmem:[#allocation3 + $0x68] sm:$0xff] %v4413
      %4462 = vst [vmem:[#allocation3 + $0x70] sm:$0xff] %v4414
      %4463 = vst [vmem:[#allocation3 + $0x78] sm:$0xff] %v4415
      %4464 = vst [vmem:[#allocation3 + $0x80] sm:$0xff] %v4416
      %4465 = vst [vmem:[#allocation3 + $0x88] sm:$0xff] %v4417
      %4466 = vst [vmem:[#allocation3 + $0x90] sm:$0xff] %v4418
      %4467 = vst [vmem:[#allocation3 + $0x98] sm:$0xff] %v4419
      %4468 = vst [vmem:[#allocation3 + $0xa0] sm:$0xff] %v4420
      %4469 = vst [vmem:[#allocation3 + $0xa8] sm:$0xff] %v4421
      %4470 = vst [vmem:[#allocation3 + $0xb0] sm:$0xff] %v4422
      %4471 = vst [vmem:[#allocation3 + $0xb8] sm:$0xff] %v4423
      %4472 = vst [vmem:[#allocation3 + $0xc0] sm:$0xff] %v4424
      %4473 = vst [vmem:[#allocation3 + $0xc8] sm:$0xff] %v4425
      %4474 = vst [vmem:[#allocation3 + $0xd0] sm:$0xff] %v4426
      %4475 = vst [vmem:[#allocation3 + $0xd8] sm:$0xff] %v4427
      %4476 = vst [vmem:[#allocation3 + $0xe0] sm:$0xff] %v4428
      %4477 = vst [vmem:[#allocation3 + $0xe8] sm:$0xff] %v4429
      %4478 = vst [vmem:[#allocation3 + $0xf0] sm:$0xff] %v4430
      %4479 = vst [vmem:[#allocation3 + $0xf8] sm:$0xff] %v4431
      %4480 = vst [vmem:[#allocation3 + $0x100] sm:$0xff] %v4432
      %4481 = vst [vmem:[#allocation3 + $0x108] sm:$0xff] %v4433
      %4482 = vst [vmem:[#allocation3 + $0x110] sm:$0xff] %v4434
      %4483 = vst [vmem:[#allocation3 + $0x118] sm:$0xff] %v4435
      %4484 = vst [vmem:[#allocation3 + $0x120] sm:$0xff] %v4436
      %4485 = vst [vmem:[#allocation3 + $0x128] sm:$0xff] %v4437
      %4486 = vst [vmem:[#allocation3 + $0x130] sm:$0xff] %v4438
      %4487 = vst [vmem:[#allocation3 + $0x138] sm:$0xff] %v4439
      %4488 = vst [vmem:[#allocation3 + $0x140] sm:$0xff] %v4440
      %4489 = vst [vmem:[#allocation3 + $0x148] sm:$0xff] %v4441
      %4490 = vst [vmem:[#allocation3 + $0x150] sm:$0xff] %v4442
      %4491 = vst [vmem:[#allocation3 + $0x158] sm:$0xff] %v4443
      %4492 = vst [vmem:[#allocation3 + $0x160] sm:$0xff] %v4444
      %4493 = vst [vmem:[#allocation3 + $0x168] sm:$0xff] %v4445
      %4494 = vst [vmem:[#allocation3 + $0x170] sm:$0xff] %v4446
      %4495 = vst [vmem:[#allocation3 + $0x178] sm:$0xff] %v4447
      %v4496 = vpack.c.bf16 %v3577, %v3578
      %v4497 = vpack.c.bf16 %v3575, %v3576
      %v4498 = vpack.c.bf16 %v3573, %v3574
      %v4499 = vpack.c.bf16 %v3571, %v3572
      %v4500 = vpack.c.bf16 %v3569, %v3570
      %v4501 = vpack.c.bf16 %v3567, %v3568
      %v4502 = vpack.c.bf16 %v3565, %v3566
      %v4503 = vpack.c.bf16 %v3563, %v3564
      %v4504 = vpack.c.bf16 %v3561, %v3562
      %v4505 = vpack.c.bf16 %v3559, %v3560
      %v4506 = vpack.c.bf16 %v3557, %v3558
      %v4507 = vpack.c.bf16 %v3555, %v3556
      %v4508 = vpack.c.bf16 %v3553, %v3554
      %v4509 = vpack.c.bf16 %v3551, %v3552
      %v4510 = vpack.c.bf16 %v3549, %v3550
      %v4511 = vpack.c.bf16 %v3547, %v3548
      %v4512 = vpack.c.bf16 %v3545, %v3546
      %v4513 = vpack.c.bf16 %v3543, %v3544
      %v4514 = vpack.c.bf16 %v3541, %v3542
      %v4515 = vpack.c.bf16 %v3539, %v3540
      %v4516 = vpack.c.bf16 %v3537, %v3538
      %v4517 = vpack.c.bf16 %v3535, %v3536
      %v4518 = vpack.c.bf16 %v3533, %v3534
      %v4519 = vpack.c.bf16 %v3579, %v3532
      %s4520 = scalar_lea.vmem %s1, 512
      %v4521 = vld [vmem:[%s4520] sm:$0xf]
      %v4522 = vld [vmem:[%s4520 + $0x4] sm:$0xf]
      %v4523 = vld [vmem:[%s4520 + $0x8] sm:$0xf]
      %v4524 = vld [vmem:[%s4520 + $0xc] sm:$0xf]
      %v4525 = vld [vmem:[%s4520 + $0x10] sm:$0xf]
      %v4526 = vld [vmem:[%s4520 + $0x14] sm:$0xf]
      %v4527 = vld [vmem:[%s4520 + $0x18] sm:$0xf]
      %v4528 = vld [vmem:[%s4520 + $0x1c] sm:$0xf]
      %v4529 = vld [vmem:[%s4520 + $0x20] sm:$0xf]
      %v4530 = vld [vmem:[%s4520 + $0x24] sm:$0xf]
      %v4531 = vld [vmem:[%s4520 + $0x28] sm:$0xf]
      %v4532 = vld [vmem:[%s4520 + $0x2c] sm:$0xf]
      %v4533 = vld [vmem:[%s4520 + $0x30] sm:$0xf]
      %v4534 = vld [vmem:[%s4520 + $0x34] sm:$0xf]
      %v4535 = vld [vmem:[%s4520 + $0x38] sm:$0xf]
      %v4536 = vld [vmem:[%s4520 + $0x3c] sm:$0xf]
      %v4553 = vunpack.c.l.b16 %v4521
      %v4554 = vunpack.c.l.b16 %v4522
      %v4555 = vunpack.c.l.b16 %v4523
      %v4556 = vunpack.c.l.b16 %v4524
      %v4557 = vunpack.c.l.b16 %v4525
      %v4558 = vunpack.c.l.b16 %v4526
      %v4559 = vunpack.c.l.b16 %v4527
      %v4560 = vunpack.c.l.b16 %v4528
      %v4561 = vunpack.c.l.b16 %v4529
      %v4562 = vunpack.c.l.b16 %v4530
      %v4563 = vunpack.c.l.b16 %v4531
      %v4564 = vunpack.c.l.b16 %v4532
      %v4565 = vunpack.c.l.b16 %v4533
      %v4566 = vunpack.c.l.b16 %v4534
      %v4567 = vunpack.c.l.b16 %v4535
      %v4568 = vunpack.c.l.b16 %v4536
      %v4569 = vpack.c.b16 %v4554, %v4553
      %v4570 = vpack.c.b16 %v4556, %v4555
      %v4571 = vpack.c.b16 %v4558, %v4557
      %v4572 = vpack.c.b16 %v4560, %v4559
      %v4573 = vpack.c.b16 %v4562, %v4561
      %v4574 = vpack.c.b16 %v4564, %v4563
      %v4575 = vpack.c.b16 %v4566, %v4565
      %v4576 = vpack.c.b16 %v4568, %v4567
      %4585 = vmatprep.subr.bf16.mxu0 0
      %4586 = vmatpush1.bf16.msra.mxu0 %v4576
      %4587 = vmatprep.subr.bf16.mxu0 0
      %4588 = vmatpush1.bf16.msra.mxu0 %v4575
      %4589 = vmatprep.subr.bf16.mxu0 0
      %4590 = vmatpush1.bf16.msra.mxu0 %v4574
      %4591 = vmatprep.subr.bf16.mxu0 0
      %4592 = vmatpush1.bf16.msra.mxu0 %v4573
      %4593 = vmatprep.subr.bf16.mxu0 0
      %4594 = vmatpush1.bf16.msra.mxu0 %v4572
      %4595 = vmatprep.subr.bf16.mxu0 0
      %4596 = vmatpush1.bf16.msra.mxu0 %v4571
      %4597 = vmatprep.subr.bf16.mxu0 0
      %4598 = vmatpush1.bf16.msra.mxu0 %v4570
      %4599 = vmatprep.subr.bf16.mxu0 0
      %4600 = vmatpush1.bf16.msra.mxu0 %v4569
      %4601 = vmatprep.subr.bf16.mxu0 0
      %4602 = vmatpush2.bf16.msra.mxu0 0
      %4603 = vmatprep.subr.bf16.mxu0 0
      %4604 = vmatpush2.bf16.msra.mxu0 0
      %4605 = vmatprep.subr.bf16.mxu0 0
      %4606 = vmatpush2.bf16.msra.mxu0 0
      %4607 = vmatprep.subr.bf16.mxu0 0
      %4608 = vmatpush2.bf16.msra.mxu0 0
      %4609 = vmatprep.subr.bf16.mxu0 0
      %4610 = vmatpush2.bf16.msra.mxu0 0
      %4611 = vmatprep.subr.bf16.mxu0 0
      %4612 = vmatpush2.bf16.msra.mxu0 0
      %4613 = vmatprep.subr.bf16.mxu0 0
      %4614 = vmatpush2.bf16.msra.mxu0 0
      %4615 = vmatprep.subr.bf16.mxu0 0
      %4616 = vmatpush2.bf16.msra.mxu0 0
      %4617 = vmatprep.mubr.bf16.mxu0 0
      %4618 = vmatmul.mubr.bf16.gmra.mxu0 %v4496
      %v4619 = vpop.f32.mrf.mxu0
      %v4620 = vadd.f32 0.0, %v4619
      %v4621 = vpop.f32.mrf.mxu0
      %v4622 = vpop.f32.mrf.mxu0
      %v4623 = vadd.f32 0.0, %v4622
      %v4624 = vpop.f32.mrf.mxu0
      %4625 = vmatprep.mubr.bf16.mxu0 0
      %4626 = vmatmul.mubr.bf16.gmra.mxu0 %v4497
      %v4627 = vpop.f32.mrf.mxu0
      %v4628 = vadd.f32 0.0, %v4627
      %v4629 = vpop.f32.mrf.mxu0
      %v4630 = vpop.f32.mrf.mxu0
      %v4631 = vadd.f32 0.0, %v4630
      %v4632 = vpop.f32.mrf.mxu0
      %4633 = vmatprep.mubr.bf16.mxu0 0
      %4634 = vmatmul.mubr.bf16.gmra.mxu0 %v4498
      %v4635 = vpop.f32.mrf.mxu0
      %v4636 = vadd.f32 0.0, %v4635
      %v4637 = vpop.f32.mrf.mxu0
      %v4638 = vpop.f32.mrf.mxu0
      %v4639 = vadd.f32 0.0, %v4638
      %v4640 = vpop.f32.mrf.mxu0
      %4641 = vmatprep.mubr.bf16.mxu0 0
      %4642 = vmatmul.mubr.bf16.gmra.mxu0 %v4499
      %v4643 = vpop.f32.mrf.mxu0
      %v4644 = vadd.f32 0.0, %v4643
      %v4645 = vpop.f32.mrf.mxu0
      %v4646 = vpop.f32.mrf.mxu0
      %v4647 = vadd.f32 0.0, %v4646
      %v4648 = vpop.f32.mrf.mxu0
      %4649 = vmatprep.mubr.bf16.mxu0 0
      %4650 = vmatmul.mubr.bf16.gmra.mxu0 %v4500
      %v4651 = vpop.f32.mrf.mxu0
      %v4652 = vadd.f32 0.0, %v4651
      %v4653 = vpop.f32.mrf.mxu0
      %v4654 = vpop.f32.mrf.mxu0
      %v4655 = vadd.f32 0.0, %v4654
      %v4656 = vpop.f32.mrf.mxu0
      %4657 = vmatprep.mubr.bf16.mxu0 0
      %4658 = vmatmul.mubr.bf16.gmra.mxu0 %v4501
      %v4659 = vpop.f32.mrf.mxu0
      %v4660 = vadd.f32 0.0, %v4659
      %v4661 = vpop.f32.mrf.mxu0
      %v4662 = vpop.f32.mrf.mxu0
      %v4663 = vadd.f32 0.0, %v4662
      %v4664 = vpop.f32.mrf.mxu0
      %4665 = vmatprep.mubr.bf16.mxu0 0
      %4666 = vmatmul.mubr.bf16.gmra.mxu0 %v4502
      %v4667 = vpop.f32.mrf.mxu0
      %v4668 = vadd.f32 0.0, %v4667
      %v4669 = vpop.f32.mrf.mxu0
      %v4670 = vpop.f32.mrf.mxu0
      %v4671 = vadd.f32 0.0, %v4670
      %v4672 = vpop.f32.mrf.mxu0
      %4673 = vmatprep.mubr.bf16.mxu0 0
      %4674 = vmatmul.mubr.bf16.gmra.mxu0 %v4503
      %v4675 = vpop.f32.mrf.mxu0
      %v4676 = vadd.f32 0.0, %v4675
      %v4677 = vpop.f32.mrf.mxu0
      %v4678 = vpop.f32.mrf.mxu0
      %v4679 = vadd.f32 0.0, %v4678
      %v4680 = vpop.f32.mrf.mxu0
      %4681 = vmatprep.mubr.bf16.mxu0 0
      %4682 = vmatmul.mubr.bf16.gmra.mxu0 %v4504
      %v4683 = vpop.f32.mrf.mxu0
      %v4684 = vadd.f32 0.0, %v4683
      %v4685 = vpop.f32.mrf.mxu0
      %v4686 = vpop.f32.mrf.mxu0
      %v4687 = vadd.f32 0.0, %v4686
      %v4688 = vpop.f32.mrf.mxu0
      %4689 = vmatprep.mubr.bf16.mxu0 0
      %4690 = vmatmul.mubr.bf16.gmra.mxu0 %v4505
      %v4691 = vpop.f32.mrf.mxu0
      %v4692 = vadd.f32 0.0, %v4691
      %v4693 = vpop.f32.mrf.mxu0
      %v4694 = vpop.f32.mrf.mxu0
      %v4695 = vadd.f32 0.0, %v4694
      %v4696 = vpop.f32.mrf.mxu0
      %4697 = vmatprep.mubr.bf16.mxu0 0
      %4698 = vmatmul.mubr.bf16.gmra.mxu0 %v4506
      %v4699 = vpop.f32.mrf.mxu0
      %v4700 = vadd.f32 0.0, %v4699
      %v4701 = vpop.f32.mrf.mxu0
      %v4702 = vpop.f32.mrf.mxu0
      %v4703 = vadd.f32 0.0, %v4702
      %v4704 = vpop.f32.mrf.mxu0
      %4705 = vmatprep.mubr.bf16.mxu0 0
      %4706 = vmatmul.mubr.bf16.gmra.mxu0 %v4507
      %v4707 = vpop.f32.mrf.mxu0
      %v4708 = vadd.f32 0.0, %v4707
      %v4709 = vpop.f32.mrf.mxu0
      %v4710 = vpop.f32.mrf.mxu0
      %v4711 = vadd.f32 0.0, %v4710
      %v4712 = vpop.f32.mrf.mxu0
      %4713 = vmatprep.mubr.bf16.mxu0 0
      %4714 = vmatmul.mubr.bf16.gmra.mxu0 %v4508
      %v4715 = vpop.f32.mrf.mxu0
      %v4716 = vadd.f32 0.0, %v4715
      %v4717 = vpop.f32.mrf.mxu0
      %v4718 = vpop.f32.mrf.mxu0
      %v4719 = vadd.f32 0.0, %v4718
      %v4720 = vpop.f32.mrf.mxu0
      %4721 = vmatprep.mubr.bf16.mxu0 0
      %4722 = vmatmul.mubr.bf16.gmra.mxu0 %v4509
      %v4723 = vpop.f32.mrf.mxu0
      %v4724 = vadd.f32 0.0, %v4723
      %v4725 = vpop.f32.mrf.mxu0
      %v4726 = vpop.f32.mrf.mxu0
      %v4727 = vadd.f32 0.0, %v4726
      %v4728 = vpop.f32.mrf.mxu0
      %4729 = vmatprep.mubr.bf16.mxu0 0
      %4730 = vmatmul.mubr.bf16.gmra.mxu0 %v4510
      %v4731 = vpop.f32.mrf.mxu0
      %v4732 = vadd.f32 0.0, %v4731
      %v4733 = vpop.f32.mrf.mxu0
      %v4734 = vpop.f32.mrf.mxu0
      %v4735 = vadd.f32 0.0, %v4734
      %v4736 = vpop.f32.mrf.mxu0
      %4737 = vmatprep.mubr.bf16.mxu0 0
      %4738 = vmatmul.mubr.bf16.gmra.mxu0 %v4511
      %v4739 = vpop.f32.mrf.mxu0
      %v4740 = vadd.f32 0.0, %v4739
      %v4741 = vpop.f32.mrf.mxu0
      %v4742 = vpop.f32.mrf.mxu0
      %v4743 = vadd.f32 0.0, %v4742
      %v4744 = vpop.f32.mrf.mxu0
      %4745 = vmatprep.mubr.bf16.mxu0 0
      %4746 = vmatmul.mubr.bf16.gmra.mxu0 %v4512
      %v4747 = vpop.f32.mrf.mxu0
      %v4748 = vadd.f32 0.0, %v4747
      %v4749 = vpop.f32.mrf.mxu0
      %v4750 = vpop.f32.mrf.mxu0
      %v4751 = vadd.f32 0.0, %v4750
      %v4752 = vpop.f32.mrf.mxu0
      %4753 = vmatprep.mubr.bf16.mxu0 0
      %4754 = vmatmul.mubr.bf16.gmra.mxu0 %v4513
      %v4755 = vpop.f32.mrf.mxu0
      %v4756 = vadd.f32 0.0, %v4755
      %v4757 = vpop.f32.mrf.mxu0
      %v4758 = vpop.f32.mrf.mxu0
      %v4759 = vadd.f32 0.0, %v4758
      %v4760 = vpop.f32.mrf.mxu0
      %4761 = vmatprep.mubr.bf16.mxu0 0
      %4762 = vmatmul.mubr.bf16.gmra.mxu0 %v4514
      %v4763 = vpop.f32.mrf.mxu0
      %v4764 = vadd.f32 0.0, %v4763
      %v4765 = vpop.f32.mrf.mxu0
      %v4766 = vpop.f32.mrf.mxu0
      %v4767 = vadd.f32 0.0, %v4766
      %v4768 = vpop.f32.mrf.mxu0
      %4769 = vmatprep.mubr.bf16.mxu0 0
      %4770 = vmatmul.mubr.bf16.gmra.mxu0 %v4515
      %v4771 = vpop.f32.mrf.mxu0
      %v4772 = vadd.f32 0.0, %v4771
      %v4773 = vpop.f32.mrf.mxu0
      %v4774 = vpop.f32.mrf.mxu0
      %v4775 = vadd.f32 0.0, %v4774
      %v4776 = vpop.f32.mrf.mxu0
      %4777 = vmatprep.mubr.bf16.mxu0 0
      %4778 = vmatmul.mubr.bf16.gmra.mxu0 %v4516
      %v4779 = vpop.f32.mrf.mxu0
      %v4780 = vadd.f32 0.0, %v4779
      %v4781 = vpop.f32.mrf.mxu0
      %v4782 = vpop.f32.mrf.mxu0
      %v4783 = vadd.f32 0.0, %v4782
      %v4784 = vpop.f32.mrf.mxu0
      %4785 = vmatprep.mubr.bf16.mxu0 0
      %4786 = vmatmul.mubr.bf16.gmra.mxu0 %v4517
      %v4787 = vpop.f32.mrf.mxu0
      %v4788 = vadd.f32 0.0, %v4787
      %v4789 = vpop.f32.mrf.mxu0
      %v4790 = vpop.f32.mrf.mxu0
      %v4791 = vadd.f32 0.0, %v4790
      %v4792 = vpop.f32.mrf.mxu0
      %4793 = vmatprep.mubr.bf16.mxu0 0
      %4794 = vmatmul.mubr.bf16.gmra.mxu0 %v4518
      %v4795 = vpop.f32.mrf.mxu0
      %v4796 = vadd.f32 0.0, %v4795
      %v4797 = vpop.f32.mrf.mxu0
      %v4798 = vpop.f32.mrf.mxu0
      %v4799 = vadd.f32 0.0, %v4798
      %v4800 = vpop.f32.mrf.mxu0
      %4801 = vmatprep.mubr.bf16.mxu0 0
      %4802 = vmatmul.mubr.bf16.gmra.mxu0 %v4519
      %v4803 = vpop.f32.mrf.mxu0
      %v4804 = vadd.f32 0.0, %v4803
      %v4805 = vpop.f32.mrf.mxu0
      %v4806 = vpop.f32.mrf.mxu0
      %v4807 = vadd.f32 0.0, %v4806
      %v4808 = vpop.f32.mrf.mxu0
      %4809 = vdwg.mxu0
      %v4810 = vld [vmem:[#allocation3] sm:$0xff]
      %v4811 = vld [vmem:[#allocation3 + $0x8] sm:$0xff]
      %v4812 = vld [vmem:[#allocation3 + $0x10] sm:$0xff]
      %v4813 = vld [vmem:[#allocation3 + $0x18] sm:$0xff]
      %v4814 = vld [vmem:[#allocation3 + $0x20] sm:$0xff]
      %v4815 = vld [vmem:[#allocation3 + $0x28] sm:$0xff]
      %v4816 = vld [vmem:[#allocation3 + $0x30] sm:$0xff]
      %v4817 = vld [vmem:[#allocation3 + $0x38] sm:$0xff]
      %v4818 = vld [vmem:[#allocation3 + $0x40] sm:$0xff]
      %v4819 = vld [vmem:[#allocation3 + $0x48] sm:$0xff]
      %v4820 = vld [vmem:[#allocation3 + $0x50] sm:$0xff]
      %v4821 = vld [vmem:[#allocation3 + $0x58] sm:$0xff]
      %v4822 = vld [vmem:[#allocation3 + $0x60] sm:$0xff]
      %v4823 = vld [vmem:[#allocation3 + $0x68] sm:$0xff]
      %v4824 = vld [vmem:[#allocation3 + $0x70] sm:$0xff]
      %v4825 = vld [vmem:[#allocation3 + $0x78] sm:$0xff]
      %v4826 = vld [vmem:[#allocation3 + $0x80] sm:$0xff]
      %v4827 = vld [vmem:[#allocation3 + $0x88] sm:$0xff]
      %v4828 = vld [vmem:[#allocation3 + $0x90] sm:$0xff]
      %v4829 = vld [vmem:[#allocation3 + $0x98] sm:$0xff]
      %v4830 = vld [vmem:[#allocation3 + $0xa0] sm:$0xff]
      %v4831 = vld [vmem:[#allocation3 + $0xa8] sm:$0xff]
      %v4832 = vld [vmem:[#allocation3 + $0xb0] sm:$0xff]
      %v4833 = vld [vmem:[#allocation3 + $0xb8] sm:$0xff]
      %v4834 = vld [vmem:[#allocation3 + $0xc0] sm:$0xff]
      %v4835 = vld [vmem:[#allocation3 + $0xc8] sm:$0xff]
      %v4836 = vld [vmem:[#allocation3 + $0xd0] sm:$0xff]
      %v4837 = vld [vmem:[#allocation3 + $0xd8] sm:$0xff]
      %v4838 = vld [vmem:[#allocation3 + $0xe0] sm:$0xff]
      %v4839 = vld [vmem:[#allocation3 + $0xe8] sm:$0xff]
      %v4840 = vld [vmem:[#allocation3 + $0xf0] sm:$0xff]
      %v4841 = vld [vmem:[#allocation3 + $0xf8] sm:$0xff]
      %v4842 = vld [vmem:[#allocation3 + $0x100] sm:$0xff]
      %v4843 = vld [vmem:[#allocation3 + $0x108] sm:$0xff]
      %v4844 = vld [vmem:[#allocation3 + $0x110] sm:$0xff]
      %v4845 = vld [vmem:[#allocation3 + $0x118] sm:$0xff]
      %v4846 = vld [vmem:[#allocation3 + $0x120] sm:$0xff]
      %v4847 = vld [vmem:[#allocation3 + $0x128] sm:$0xff]
      %v4848 = vld [vmem:[#allocation3 + $0x130] sm:$0xff]
      %v4849 = vld [vmem:[#allocation3 + $0x138] sm:$0xff]
      %v4850 = vld [vmem:[#allocation3 + $0x140] sm:$0xff]
      %v4851 = vld [vmem:[#allocation3 + $0x148] sm:$0xff]
      %v4852 = vld [vmem:[#allocation3 + $0x150] sm:$0xff]
      %v4853 = vld [vmem:[#allocation3 + $0x158] sm:$0xff]
      %v4854 = vld [vmem:[#allocation3 + $0x160] sm:$0xff]
      %v4855 = vld [vmem:[#allocation3 + $0x168] sm:$0xff]
      %v4856 = vld [vmem:[#allocation3 + $0x170] sm:$0xff]
      %v4857 = vld [vmem:[#allocation3 + $0x178] sm:$0xff]
      %v4858 = vadd.f32 %v4810, %v4620
      %v4859 = vadd.f32 %v4811, %v4623
      %v4860 = vadd.f32 %v4812, %v4628
      %v4861 = vadd.f32 %v4813, %v4631
      %v4862 = vadd.f32 %v4814, %v4636
      %v4863 = vadd.f32 %v4815, %v4639
      %v4864 = vadd.f32 %v4816, %v4644
      %v4865 = vadd.f32 %v4817, %v4647
      %v4866 = vadd.f32 %v4818, %v4652
      %v4867 = vadd.f32 %v4819, %v4655
      %v4868 = vadd.f32 %v4820, %v4660
      %v4869 = vadd.f32 %v4821, %v4663
      %v4870 = vadd.f32 %v4822, %v4668
      %v4871 = vadd.f32 %v4823, %v4671
      %v4872 = vadd.f32 %v4824, %v4676
      %v4873 = vadd.f32 %v4825, %v4679
      %v4874 = vadd.f32 %v4826, %v4684
      %v4875 = vadd.f32 %v4827, %v4687
      %v4876 = vadd.f32 %v4828, %v4692
      %v4877 = vadd.f32 %v4829, %v4695
      %v4878 = vadd.f32 %v4830, %v4700
      %v4879 = vadd.f32 %v4831, %v4703
      %v4880 = vadd.f32 %v4832, %v4708
      %v4881 = vadd.f32 %v4833, %v4711
      %v4882 = vadd.f32 %v4834, %v4716
      %v4883 = vadd.f32 %v4835, %v4719
      %v4884 = vadd.f32 %v4836, %v4724
      %v4885 = vadd.f32 %v4837, %v4727
      %v4886 = vadd.f32 %v4838, %v4732
      %v4887 = vadd.f32 %v4839, %v4735
      %v4888 = vadd.f32 %v4840, %v4740
      %v4889 = vadd.f32 %v4841, %v4743
      %v4890 = vadd.f32 %v4842, %v4748
      %v4891 = vadd.f32 %v4843, %v4751
      %v4892 = vadd.f32 %v4844, %v4756
      %v4893 = vadd.f32 %v4845, %v4759
      %v4894 = vadd.f32 %v4846, %v4764
      %v4895 = vadd.f32 %v4847, %v4767
      %v4896 = vadd.f32 %v4848, %v4772
      %v4897 = vadd.f32 %v4849, %v4775
      %v4898 = vadd.f32 %v4850, %v4780
      %v4899 = vadd.f32 %v4851, %v4783
      %v4900 = vadd.f32 %v4852, %v4788
      %v4901 = vadd.f32 %v4853, %v4791
      %v4902 = vadd.f32 %v4854, %v4796
      %v4903 = vadd.f32 %v4855, %v4799
      %v4904 = vadd.f32 %v4856, %v4804
      %v4905 = vadd.f32 %v4857, %v4807
      %4906 = vst [vmem:[#allocation3] sm:$0xff] %v4858
      %4907 = vst [vmem:[#allocation3 + $0x8] sm:$0xff] %v4859
      %4908 = vst [vmem:[#allocation3 + $0x10] sm:$0xff] %v4860
      %4909 = vst [vmem:[#allocation3 + $0x18] sm:$0xff] %v4861
      %4910 = vst [vmem:[#allocation3 + $0x20] sm:$0xff] %v4862
      %4911 = vst [vmem:[#allocation3 + $0x28] sm:$0xff] %v4863
      %4912 = vst [vmem:[#allocation3 + $0x30] sm:$0xff] %v4864
      %4913 = vst [vmem:[#allocation3 + $0x38] sm:$0xff] %v4865
      %4914 = vst [vmem:[#allocation3 + $0x40] sm:$0xff] %v4866
      %4915 = vst [vmem:[#allocation3 + $0x48] sm:$0xff] %v4867
      %4916 = vst [vmem:[#allocation3 + $0x50] sm:$0xff] %v4868
      %4917 = vst [vmem:[#allocation3 + $0x58] sm:$0xff] %v4869
      %4918 = vst [vmem:[#allocation3 + $0x60] sm:$0xff] %v4870
      %4919 = vst [vmem:[#allocation3 + $0x68] sm:$0xff] %v4871
      %4920 = vst [vmem:[#allocation3 + $0x70] sm:$0xff] %v4872
      %4921 = vst [vmem:[#allocation3 + $0x78] sm:$0xff] %v4873
      %4922 = vst [vmem:[#allocation3 + $0x80] sm:$0xff] %v4874
      %4923 = vst [vmem:[#allocation3 + $0x88] sm:$0xff] %v4875
      %4924 = vst [vmem:[#allocation3 + $0x90] sm:$0xff] %v4876
      %4925 = vst [vmem:[#allocation3 + $0x98] sm:$0xff] %v4877
      %4926 = vst [vmem:[#allocation3 + $0xa0] sm:$0xff] %v4878
      %4927 = vst [vmem:[#allocation3 + $0xa8] sm:$0xff] %v4879
      %4928 = vst [vmem:[#allocation3 + $0xb0] sm:$0xff] %v4880
      %4929 = vst [vmem:[#allocation3 + $0xb8] sm:$0xff] %v4881
      %4930 = vst [vmem:[#allocation3 + $0xc0] sm:$0xff] %v4882
      %4931 = vst [vmem:[#allocation3 + $0xc8] sm:$0xff] %v4883
      %4932 = vst [vmem:[#allocation3 + $0xd0] sm:$0xff] %v4884
      %4933 = vst [vmem:[#allocation3 + $0xd8] sm:$0xff] %v4885
      %4934 = vst [vmem:[#allocation3 + $0xe0] sm:$0xff] %v4886
      %4935 = vst [vmem:[#allocation3 + $0xe8] sm:$0xff] %v4887
      %4936 = vst [vmem:[#allocation3 + $0xf0] sm:$0xff] %v4888
      %4937 = vst [vmem:[#allocation3 + $0xf8] sm:$0xff] %v4889
      %4938 = vst [vmem:[#allocation3 + $0x100] sm:$0xff] %v4890
      %4939 = vst [vmem:[#allocation3 + $0x108] sm:$0xff] %v4891
      %4940 = vst [vmem:[#allocation3 + $0x110] sm:$0xff] %v4892
      %4941 = vst [vmem:[#allocation3 + $0x118] sm:$0xff] %v4893
      %4942 = vst [vmem:[#allocation3 + $0x120] sm:$0xff] %v4894
      %4943 = vst [vmem:[#allocation3 + $0x128] sm:$0xff] %v4895
      %4944 = vst [vmem:[#allocation3 + $0x130] sm:$0xff] %v4896
      %4945 = vst [vmem:[#allocation3 + $0x138] sm:$0xff] %v4897
      %4946 = vst [vmem:[#allocation3 + $0x140] sm:$0xff] %v4898
      %4947 = vst [vmem:[#allocation3 + $0x148] sm:$0xff] %v4899
      %4948 = vst [vmem:[#allocation3 + $0x150] sm:$0xff] %v4900
      %4949 = vst [vmem:[#allocation3 + $0x158] sm:$0xff] %v4901
      %4950 = vst [vmem:[#allocation3 + $0x160] sm:$0xff] %v4902
      %4951 = vst [vmem:[#allocation3 + $0x168] sm:$0xff] %v4903
      %4952 = vst [vmem:[#allocation3 + $0x170] sm:$0xff] %v4904
      %4953 = vst [vmem:[#allocation3 + $0x178] sm:$0xff] %v4905
      %v4954 = vld [vmem:[#allocation3] sm:$0xff]
      %v4955 = vld [vmem:[#allocation3 + $0x8] sm:$0xff]
      %v4956 = vld [vmem:[#allocation3 + $0x10] sm:$0xff]
      %v4957 = vld [vmem:[#allocation3 + $0x18] sm:$0xff]
      %v4958 = vld [vmem:[#allocation3 + $0x20] sm:$0xff]
      %v4959 = vld [vmem:[#allocation3 + $0x28] sm:$0xff]
      %v4960 = vld [vmem:[#allocation3 + $0x30] sm:$0xff]
      %v4961 = vld [vmem:[#allocation3 + $0x38] sm:$0xff]
      %v4962 = vld [vmem:[#allocation3 + $0x40] sm:$0xff]
      %v4963 = vld [vmem:[#allocation3 + $0x48] sm:$0xff]
      %v4964 = vld [vmem:[#allocation3 + $0x50] sm:$0xff]
      %v4965 = vld [vmem:[#allocation3 + $0x58] sm:$0xff]
      %v4966 = vld [vmem:[#allocation3 + $0x60] sm:$0xff]
      %v4967 = vld [vmem:[#allocation3 + $0x68] sm:$0xff]
      %v4968 = vld [vmem:[#allocation3 + $0x70] sm:$0xff]
      %v4969 = vld [vmem:[#allocation3 + $0x78] sm:$0xff]
      %v4970 = vld [vmem:[#allocation3 + $0x80] sm:$0xff]
      %v4971 = vld [vmem:[#allocation3 + $0x88] sm:$0xff]
      %v4972 = vld [vmem:[#allocation3 + $0x90] sm:$0xff]
      %v4973 = vld [vmem:[#allocation3 + $0x98] sm:$0xff]
      %v4974 = vld [vmem:[#allocation3 + $0xa0] sm:$0xff]
      %v4975 = vld [vmem:[#allocation3 + $0xa8] sm:$0xff]
      %v4976 = vld [vmem:[#allocation3 + $0xb0] sm:$0xff]
      %v4977 = vld [vmem:[#allocation3 + $0xb8] sm:$0xff]
      %v4978 = vld [vmem:[#allocation3 + $0xc0] sm:$0xff]
      %v4979 = vld [vmem:[#allocation3 + $0xc8] sm:$0xff]
      %v4980 = vld [vmem:[#allocation3 + $0xd0] sm:$0xff]
      %v4981 = vld [vmem:[#allocation3 + $0xd8] sm:$0xff]
      %v4982 = vld [vmem:[#allocation3 + $0xe0] sm:$0xff]
      %v4983 = vld [vmem:[#allocation3 + $0xe8] sm:$0xff]
      %v4984 = vld [vmem:[#allocation3 + $0xf0] sm:$0xff]
      %v4985 = vld [vmem:[#allocation3 + $0xf8] sm:$0xff]
      %v4986 = vld [vmem:[#allocation3 + $0x100] sm:$0xff]
      %v4987 = vld [vmem:[#allocation3 + $0x108] sm:$0xff]
      %v4988 = vld [vmem:[#allocation3 + $0x110] sm:$0xff]
      %v4989 = vld [vmem:[#allocation3 + $0x118] sm:$0xff]
      %v4990 = vld [vmem:[#allocation3 + $0x120] sm:$0xff]
      %v4991 = vld [vmem:[#allocation3 + $0x128] sm:$0xff]
      %v4992 = vld [vmem:[#allocation3 + $0x130] sm:$0xff]
      %v4993 = vld [vmem:[#allocation3 + $0x138] sm:$0xff]
      %v4994 = vld [vmem:[#allocation3 + $0x140] sm:$0xff]
      %v4995 = vld [vmem:[#allocation3 + $0x148] sm:$0xff]
      %v4996 = vld [vmem:[#allocation3 + $0x150] sm:$0xff]
      %v4997 = vld [vmem:[#allocation3 + $0x158] sm:$0xff]
      %v4998 = vld [vmem:[#allocation3 + $0x160] sm:$0xff]
      %v4999 = vld [vmem:[#allocation3 + $0x168] sm:$0xff]
      %v5000 = vld [vmem:[#allocation3 + $0x170] sm:$0xff]
      %v5001 = vld [vmem:[#allocation3 + $0x178] sm:$0xff]
      %v5002 = vmax.f32 %v4954, 0.0
      %v5003 = vmax.f32 %v4955, 0.0
      %v5004 = vmax.f32 %v4956, 0.0
      %v5005 = vmax.f32 %v4957, 0.0
      %v5006 = vmax.f32 %v4958, 0.0
      %v5007 = vmax.f32 %v4959, 0.0
      %v5008 = vmax.f32 %v4960, 0.0
      %v5009 = vmax.f32 %v4961, 0.0
      %v5010 = vmax.f32 %v4962, 0.0
      %v5011 = vmax.f32 %v4963, 0.0
      %v5012 = vmax.f32 %v4964, 0.0
      %v5013 = vmax.f32 %v4965, 0.0
      %v5014 = vmax.f32 %v4966, 0.0
      %v5015 = vmax.f32 %v4967, 0.0
      %v5016 = vmax.f32 %v4968, 0.0
      %v5017 = vmax.f32 %v4969, 0.0
      %v5018 = vmax.f32 %v4970, 0.0
      %v5019 = vmax.f32 %v4971, 0.0
      %v5020 = vmax.f32 %v4972, 0.0
      %v5021 = vmax.f32 %v4973, 0.0
      %v5022 = vmax.f32 %v4974, 0.0
      %v5023 = vmax.f32 %v4975, 0.0
      %v5024 = vmax.f32 %v4976, 0.0
      %v5025 = vmax.f32 %v4977, 0.0
      %v5026 = vmax.f32 %v4978, 0.0
      %v5027 = vmax.f32 %v4979, 0.0
      %v5028 = vmax.f32 %v4980, 0.0
      %v5029 = vmax.f32 %v4981, 0.0
      %v5030 = vmax.f32 %v4982, 0.0
      %v5031 = vmax.f32 %v4983, 0.0
      %v5032 = vmax.f32 %v4984, 0.0
      %v5033 = vmax.f32 %v4985, 0.0
      %v5034 = vmax.f32 %v4986, 0.0
      %v5035 = vmax.f32 %v4987, 0.0
      %v5036 = vmax.f32 %v4988, 0.0
      %v5037 = vmax.f32 %v4989, 0.0
      %v5038 = vmax.f32 %v4990, 0.0
      %v5039 = vmax.f32 %v4991, 0.0
      %v5040 = vmax.f32 %v4992, 0.0
      %v5041 = vmax.f32 %v4993, 0.0
      %v5042 = vmax.f32 %v4994, 0.0
      %v5043 = vmax.f32 %v4995, 0.0
      %v5044 = vmax.f32 %v4996, 0.0
      %v5045 = vmax.f32 %v4997, 0.0
      %v5046 = vmax.f32 %v4998, 0.0
      %v5047 = vmax.f32 %v4999, 0.0
      %v5048 = vmax.f32 %v5000, 0.0
      %v5049 = vmax.f32 %v5001, 0.0
      %v5050 = vld [vmem:[%s3] sm:$0xff]
      %v5051 = vld [vmem:[%s3 + $0x8] sm:$0xff]
      %v5052 = vld [vmem:[%s3 + $0x10] sm:$0xff]
      %v5053 = vld [vmem:[%s3 + $0x18] sm:$0xff]
      %v5054 = vld [vmem:[%s3 + $0x20] sm:$0xff]
      %v5055 = vld [vmem:[%s3 + $0x28] sm:$0xff]
      %v5056 = vld [vmem:[%s3 + $0x30] sm:$0xff]
      %v5057 = vld [vmem:[%s3 + $0x38] sm:$0xff]
      %v5058 = vld [vmem:[%s3 + $0x40] sm:$0xff]
      %v5059 = vld [vmem:[%s3 + $0x48] sm:$0xff]
      %v5060 = vld [vmem:[%s3 + $0x50] sm:$0xff]
      %v5061 = vld [vmem:[%s3 + $0x58] sm:$0xff]
      %v5062 = vld [vmem:[%s3 + $0x60] sm:$0xff]
      %v5063 = vld [vmem:[%s3 + $0x68] sm:$0xff]
      %v5064 = vld [vmem:[%s3 + $0x70] sm:$0xff]
      %v5065 = vld [vmem:[%s3 + $0x78] sm:$0xff]
      %v5066 = vld [vmem:[%s3 + $0x80] sm:$0xff]
      %v5067 = vld [vmem:[%s3 + $0x88] sm:$0xff]
      %v5068 = vld [vmem:[%s3 + $0x90] sm:$0xff]
      %v5069 = vld [vmem:[%s3 + $0x98] sm:$0xff]
      %v5070 = vld [vmem:[%s3 + $0xa0] sm:$0xff]
      %v5071 = vld [vmem:[%s3 + $0xa8] sm:$0xff]
      %v5072 = vld [vmem:[%s3 + $0xb0] sm:$0xff]
      %v5073 = vld [vmem:[%s3 + $0xb8] sm:$0xff]
      %v5074 = vld [vmem:[%s3 + $0xc0] sm:$0xff]
      %v5075 = vld [vmem:[%s3 + $0xc8] sm:$0xff]
      %v5076 = vld [vmem:[%s3 + $0xd0] sm:$0xff]
      %v5077 = vld [vmem:[%s3 + $0xd8] sm:$0xff]
      %v5078 = vld [vmem:[%s3 + $0xe0] sm:$0xff]
      %v5079 = vld [vmem:[%s3 + $0xe8] sm:$0xff]
      %v5080 = vld [vmem:[%s3 + $0xf0] sm:$0xff]
      %v5081 = vld [vmem:[%s3 + $0xf8] sm:$0xff]
      %v5082 = vld [vmem:[%s3 + $0x100] sm:$0xff]
      %v5083 = vld [vmem:[%s3 + $0x108] sm:$0xff]
      %v5084 = vld [vmem:[%s3 + $0x110] sm:$0xff]
      %v5085 = vld [vmem:[%s3 + $0x118] sm:$0xff]
      %v5086 = vld [vmem:[%s3 + $0x120] sm:$0xff]
      %v5087 = vld [vmem:[%s3 + $0x128] sm:$0xff]
      %v5088 = vld [vmem:[%s3 + $0x130] sm:$0xff]
      %v5089 = vld [vmem:[%s3 + $0x138] sm:$0xff]
      %v5090 = vld [vmem:[%s3 + $0x140] sm:$0xff]
      %v5091 = vld [vmem:[%s3 + $0x148] sm:$0xff]
      %v5092 = vld [vmem:[%s3 + $0x150] sm:$0xff]
      %v5093 = vld [vmem:[%s3 + $0x158] sm:$0xff]
      %v5094 = vld [vmem:[%s3 + $0x160] sm:$0xff]
      %v5095 = vld [vmem:[%s3 + $0x168] sm:$0xff]
      %v5096 = vld [vmem:[%s3 + $0x170] sm:$0xff]
      %v5097 = vld [vmem:[%s3 + $0x178] sm:$0xff]
      %5099 = vset.pattern.permute.xlu0 0
      %5100 = vperm.xlu0 %5099, %v5050
      %v5101 = vpop.permute.xlu0 %5100
      %5104 = vset.pattern.permute.xlu0 0
      %5105 = vperm.xlu0 %5104, %v5051
      %v5106 = vpop.permute.xlu0 %5105
      %5109 = vset.pattern.permute.xlu0 0
      %5110 = vperm.xlu0 %5109, %v5052
      %v5111 = vpop.permute.xlu0 %5110
      %5114 = vset.pattern.permute.xlu0 0
      %5115 = vperm.xlu0 %5114, %v5053
      %v5116 = vpop.permute.xlu0 %5115
      %5119 = vset.pattern.permute.xlu0 0
      %5120 = vperm.xlu0 %5119, %v5054
      %v5121 = vpop.permute.xlu0 %5120
      %5124 = vset.pattern.permute.xlu0 0
      %5125 = vperm.xlu0 %5124, %v5055
      %v5126 = vpop.permute.xlu0 %5125
      %5129 = vset.pattern.permute.xlu0 0
      %5130 = vperm.xlu0 %5129, %v5056
      %v5131 = vpop.permute.xlu0 %5130
      %5134 = vset.pattern.permute.xlu0 0
      %5135 = vperm.xlu0 %5134, %v5057
      %v5136 = vpop.permute.xlu0 %5135
      %5139 = vset.pattern.permute.xlu0 0
      %5140 = vperm.xlu0 %5139, %v5058
      %v5141 = vpop.permute.xlu0 %5140
      %5144 = vset.pattern.permute.xlu0 0
      %5145 = vperm.xlu0 %5144, %v5059
      %v5146 = vpop.permute.xlu0 %5145
      %5149 = vset.pattern.permute.xlu0 0
      %5150 = vperm.xlu0 %5149, %v5060
      %v5151 = vpop.permute.xlu0 %5150
      %5154 = vset.pattern.permute.xlu0 0
      %5155 = vperm.xlu0 %5154, %v5061
      %v5156 = vpop.permute.xlu0 %5155
      %5159 = vset.pattern.permute.xlu0 0
      %5160 = vperm.xlu0 %5159, %v5062
      %v5161 = vpop.permute.xlu0 %5160
      %5164 = vset.pattern.permute.xlu0 0
      %5165 = vperm.xlu0 %5164, %v5063
      %v5166 = vpop.permute.xlu0 %5165
      %5169 = vset.pattern.permute.xlu0 0
      %5170 = vperm.xlu0 %5169, %v5064
      %v5171 = vpop.permute.xlu0 %5170
      %5174 = vset.pattern.permute.xlu0 0
      %5175 = vperm.xlu0 %5174, %v5065
      %v5176 = vpop.permute.xlu0 %5175
      %5179 = vset.pattern.permute.xlu0 0
      %5180 = vperm.xlu0 %5179, %v5066
      %v5181 = vpop.permute.xlu0 %5180
      %5184 = vset.pattern.permute.xlu0 0
      %5185 = vperm.xlu0 %5184, %v5067
      %v5186 = vpop.permute.xlu0 %5185
      %5189 = vset.pattern.permute.xlu0 0
      %5190 = vperm.xlu0 %5189, %v5068
      %v5191 = vpop.permute.xlu0 %5190
      %5194 = vset.pattern.permute.xlu0 0
      %5195 = vperm.xlu0 %5194, %v5069
      %v5196 = vpop.permute.xlu0 %5195
      %5199 = vset.pattern.permute.xlu0 0
      %5200 = vperm.xlu0 %5199, %v5070
      %v5201 = vpop.permute.xlu0 %5200
      %5204 = vset.pattern.permute.xlu0 0
      %5205 = vperm.xlu0 %5204, %v5071
      %v5206 = vpop.permute.xlu0 %5205
      %5209 = vset.pattern.permute.xlu0 0
      %5210 = vperm.xlu0 %5209, %v5072
      %v5211 = vpop.permute.xlu0 %5210
      %5214 = vset.pattern.permute.xlu0 0
      %5215 = vperm.xlu0 %5214, %v5073
      %v5216 = vpop.permute.xlu0 %5215
      %5219 = vset.pattern.permute.xlu0 0
      %5220 = vperm.xlu0 %5219, %v5074
      %v5221 = vpop.permute.xlu0 %5220
      %5224 = vset.pattern.permute.xlu0 0
      %5225 = vperm.xlu0 %5224, %v5075
      %v5226 = vpop.permute.xlu0 %5225
      %5229 = vset.pattern.permute.xlu0 0
      %5230 = vperm.xlu0 %5229, %v5076
      %v5231 = vpop.permute.xlu0 %5230
      %5234 = vset.pattern.permute.xlu0 0
      %5235 = vperm.xlu0 %5234, %v5077
      %v5236 = vpop.permute.xlu0 %5235
      %5239 = vset.pattern.permute.xlu0 0
      %5240 = vperm.xlu0 %5239, %v5078
      %v5241 = vpop.permute.xlu0 %5240
      %5244 = vset.pattern.permute.xlu0 0
      %5245 = vperm.xlu0 %5244, %v5079
      %v5246 = vpop.permute.xlu0 %5245
      %5249 = vset.pattern.permute.xlu0 0
      %5250 = vperm.xlu0 %5249, %v5080
      %v5251 = vpop.permute.xlu0 %5250
      %5254 = vset.pattern.permute.xlu0 0
      %5255 = vperm.xlu0 %5254, %v5081
      %v5256 = vpop.permute.xlu0 %5255
      %5259 = vset.pattern.permute.xlu0 0
      %5260 = vperm.xlu0 %5259, %v5082
      %v5261 = vpop.permute.xlu0 %5260
      %5264 = vset.pattern.permute.xlu0 0
      %5265 = vperm.xlu0 %5264, %v5083
      %v5266 = vpop.permute.xlu0 %5265
      %5269 = vset.pattern.permute.xlu0 0
      %5270 = vperm.xlu0 %5269, %v5084
      %v5271 = vpop.permute.xlu0 %5270
      %5274 = vset.pattern.permute.xlu0 0
      %5275 = vperm.xlu0 %5274, %v5085
      %v5276 = vpop.permute.xlu0 %5275
      %5279 = vset.pattern.permute.xlu0 0
      %5280 = vperm.xlu0 %5279, %v5086
      %v5281 = vpop.permute.xlu0 %5280
      %5284 = vset.pattern.permute.xlu0 0
      %5285 = vperm.xlu0 %5284, %v5087
      %v5286 = vpop.permute.xlu0 %5285
      %5289 = vset.pattern.permute.xlu0 0
      %5290 = vperm.xlu0 %5289, %v5088
      %v5291 = vpop.permute.xlu0 %5290
      %5294 = vset.pattern.permute.xlu0 0
      %5295 = vperm.xlu0 %5294, %v5089
      %v5296 = vpop.permute.xlu0 %5295
      %5299 = vset.pattern.permute.xlu0 0
      %5300 = vperm.xlu0 %5299, %v5090
      %v5301 = vpop.permute.xlu0 %5300
      %5304 = vset.pattern.permute.xlu0 0
      %5305 = vperm.xlu0 %5304, %v5091
      %v5306 = vpop.permute.xlu0 %5305
      %5309 = vset.pattern.permute.xlu0 0
      %5310 = vperm.xlu0 %5309, %v5092
      %v5311 = vpop.permute.xlu0 %5310
      %5314 = vset.pattern.permute.xlu0 0
      %5315 = vperm.xlu0 %5314, %v5093
      %v5316 = vpop.permute.xlu0 %5315
      %5319 = vset.pattern.permute.xlu0 0
      %5320 = vperm.xlu0 %5319, %v5094
      %v5321 = vpop.permute.xlu0 %5320
      %5324 = vset.pattern.permute.xlu0 0
      %5325 = vperm.xlu0 %5324, %v5095
      %v5326 = vpop.permute.xlu0 %5325
      %5329 = vset.pattern.permute.xlu0 0
      %5330 = vperm.xlu0 %5329, %v5096
      %v5331 = vpop.permute.xlu0 %5330
      %5334 = vset.pattern.permute.xlu0 0
      %5335 = vperm.xlu0 %5334, %v5097
      %v5336 = vpop.permute.xlu0 %5335
      %v5338 = vmul.f32 %v5002, %v5101
      %v5339 = vmul.f32 %v5003, %v5106
      %v5340 = vmul.f32 %v5004, %v5111
      %v5341 = vmul.f32 %v5005, %v5116
      %v5342 = vmul.f32 %v5006, %v5121
      %v5343 = vmul.f32 %v5007, %v5126
      %v5344 = vmul.f32 %v5008, %v5131
      %v5345 = vmul.f32 %v5009, %v5136
      %v5346 = vmul.f32 %v5010, %v5141
      %v5347 = vmul.f32 %v5011, %v5146
      %v5348 = vmul.f32 %v5012, %v5151
      %v5349 = vmul.f32 %v5013, %v5156
      %v5350 = vmul.f32 %v5014, %v5161
      %v5351 = vmul.f32 %v5015, %v5166
      %v5352 = vmul.f32 %v5016, %v5171
      %v5353 = vmul.f32 %v5017, %v5176
      %v5354 = vmul.f32 %v5018, %v5181
      %v5355 = vmul.f32 %v5019, %v5186
      %v5356 = vmul.f32 %v5020, %v5191
      %v5357 = vmul.f32 %v5021, %v5196
      %v5358 = vmul.f32 %v5022, %v5201
      %v5359 = vmul.f32 %v5023, %v5206
      %v5360 = vmul.f32 %v5024, %v5211
      %v5361 = vmul.f32 %v5025, %v5216
      %v5362 = vmul.f32 %v5026, %v5221
      %v5363 = vmul.f32 %v5027, %v5226
      %v5364 = vmul.f32 %v5028, %v5231
      %v5365 = vmul.f32 %v5029, %v5236
      %v5366 = vmul.f32 %v5030, %v5241
      %v5367 = vmul.f32 %v5031, %v5246
      %v5368 = vmul.f32 %v5032, %v5251
      %v5369 = vmul.f32 %v5033, %v5256
      %v5370 = vmul.f32 %v5034, %v5261
      %v5371 = vmul.f32 %v5035, %v5266
      %v5372 = vmul.f32 %v5036, %v5271
      %v5373 = vmul.f32 %v5037, %v5276
      %v5374 = vmul.f32 %v5038, %v5281
      %v5375 = vmul.f32 %v5039, %v5286
      %v5376 = vmul.f32 %v5040, %v5291
      %v5377 = vmul.f32 %v5041, %v5296
      %v5378 = vmul.f32 %v5042, %v5301
      %v5379 = vmul.f32 %v5043, %v5306
      %v5380 = vmul.f32 %v5044, %v5311
      %v5381 = vmul.f32 %v5045, %v5316
      %v5382 = vmul.f32 %v5046, %v5321
      %v5383 = vmul.f32 %v5047, %v5326
      %v5384 = vmul.f32 %v5048, %v5331
      %v5385 = vmul.f32 %v5049, %v5336
      %5386 = vst [vmem:[#allocation2 + $0x18] sm:$0xff] %v5338
      %5387 = vst [vmem:[#allocation2 + $0x20] sm:$0xff] %v5339
      %5388 = vst [vmem:[#allocation2 + $0x28] sm:$0xff] %v5340
      %5389 = vst [vmem:[#allocation2 + $0x30] sm:$0xff] %v5341
      %5390 = vst [vmem:[#allocation2 + $0x38] sm:$0xff] %v5342
      %5391 = vst [vmem:[#allocation2 + $0x40] sm:$0xff] %v5343
      %5392 = vst [vmem:[#allocation2 + $0x48] sm:$0xff] %v5344
      %5393 = vst [vmem:[#allocation2 + $0x50] sm:$0xff] %v5345
      %5394 = vst [vmem:[#allocation2 + $0x58] sm:$0xff] %v5346
      %5395 = vst [vmem:[#allocation2 + $0x60] sm:$0xff] %v5347
      %5396 = vst [vmem:[#allocation2 + $0x68] sm:$0xff] %v5348
      %5397 = vst [vmem:[#allocation2 + $0x70] sm:$0xff] %v5349
      %5398 = vst [vmem:[#allocation2 + $0x78] sm:$0xff] %v5350
      %5399 = vst [vmem:[#allocation2 + $0x80] sm:$0xff] %v5351
      %5400 = vst [vmem:[#allocation2 + $0x88] sm:$0xff] %v5352
      %5401 = vst [vmem:[#allocation2 + $0x90] sm:$0xff] %v5353
      %5402 = vst [vmem:[#allocation2 + $0x98] sm:$0xff] %v5354
      %5403 = vst [vmem:[#allocation2 + $0xa0] sm:$0xff] %v5355
      %5404 = vst [vmem:[#allocation2 + $0xa8] sm:$0xff] %v5356
      %5405 = vst [vmem:[#allocation2 + $0xb0] sm:$0xff] %v5357
      %5406 = vst [vmem:[#allocation2 + $0xb8] sm:$0xff] %v5358
      %5407 = vst [vmem:[#allocation2 + $0xc0] sm:$0xff] %v5359
      %5408 = vst [vmem:[#allocation2 + $0xc8] sm:$0xff] %v5360
      %5409 = vst [vmem:[#allocation2 + $0xd0] sm:$0xff] %v5361
      %5410 = vst [vmem:[#allocation2 + $0xd8] sm:$0xff] %v5362
      %5411 = vst [vmem:[#allocation2 + $0xe0] sm:$0xff] %v5363
      %5412 = vst [vmem:[#allocation2 + $0xe8] sm:$0xff] %v5364
      %5413 = vst [vmem:[#allocation2 + $0xf0] sm:$0xff] %v5365
      %5414 = vst [vmem:[#allocation2 + $0xf8] sm:$0xff] %v5366
      %5415 = vst [vmem:[#allocation2 + $0x100] sm:$0xff] %v5367
      %5416 = vst [vmem:[#allocation2 + $0x108] sm:$0xff] %v5368
      %5417 = vst [vmem:[#allocation2 + $0x110] sm:$0xff] %v5369
      %5418 = vst [vmem:[#allocation2 + $0x118] sm:$0xff] %v5370
      %5419 = vst [vmem:[#allocation2 + $0x120] sm:$0xff] %v5371
      %5420 = vst [vmem:[#allocation2 + $0x128] sm:$0xff] %v5372
      %5421 = vst [vmem:[#allocation2 + $0x130] sm:$0xff] %v5373
      %5422 = vst [vmem:[#allocation2 + $0x138] sm:$0xff] %v5374
      %5423 = vst [vmem:[#allocation2 + $0x140] sm:$0xff] %v5375
      %5424 = vst [vmem:[#allocation2 + $0x148] sm:$0xff] %v5376
      %5425 = vst [vmem:[#allocation2 + $0x150] sm:$0xff] %v5377
      %5426 = vst [vmem:[#allocation2 + $0x158] sm:$0xff] %v5378
      %5427 = vst [vmem:[#allocation2 + $0x160] sm:$0xff] %v5379
      %5428 = vst [vmem:[#allocation2 + $0x168] sm:$0xff] %v5380
      %5429 = vst [vmem:[#allocation2 + $0x170] sm:$0xff] %v5381
      %5430 = vst [vmem:[#allocation2 + $0x178] sm:$0xff] %v5382
      %5431 = vst [vmem:[#allocation2 + $0x180] sm:$0xff] %v5383
      %5432 = vst [vmem:[#allocation2 + $0x188] sm:$0xff] %v5384
      %5433 = vst [vmem:[#allocation2 + $0x190] sm:$0xff] %v5385
      %v5434 = vld [vmem:[#allocation2] sm:$0xff]
      %v5435 = vld [vmem:[#allocation2 + $0x8] sm:$0xff]
      %v5436 = vld [vmem:[#allocation2 + $0x10] sm:$0xff]
      %v5437 = vld [vmem:[#allocation2 + $0x18] sm:$0xff]
      %v5438 = vld [vmem:[#allocation2 + $0x20] sm:$0xff]
      %v5439 = vld [vmem:[#allocation2 + $0x28] sm:$0xff]
      %v5440 = vld [vmem:[#allocation2 + $0x30] sm:$0xff]
      %v5441 = vld [vmem:[#allocation2 + $0x38] sm:$0xff]
      %v5442 = vld [vmem:[#allocation2 + $0x40] sm:$0xff]
      %v5443 = vld [vmem:[#allocation2 + $0x48] sm:$0xff]
      %v5444 = vld [vmem:[#allocation2 + $0x50] sm:$0xff]
      %v5445 = vld [vmem:[#allocation2 + $0x58] sm:$0xff]
      %v5446 = vld [vmem:[#allocation2 + $0x60] sm:$0xff]
      %v5447 = vld [vmem:[#allocation2 + $0x68] sm:$0xff]
      %v5448 = vld [vmem:[#allocation2 + $0x70] sm:$0xff]
      %v5449 = vld [vmem:[#allocation2 + $0x78] sm:$0xff]
      %v5450 = vld [vmem:[#allocation2 + $0x80] sm:$0xff]
      %v5451 = vld [vmem:[#allocation2 + $0x88] sm:$0xff]
      %v5452 = vld [vmem:[#allocation2 + $0x90] sm:$0xff]
      %v5453 = vld [vmem:[#allocation2 + $0x98] sm:$0xff]
      %v5454 = vld [vmem:[#allocation2 + $0xa0] sm:$0xff]
      %v5455 = vld [vmem:[#allocation2 + $0xa8] sm:$0xff]
      %v5456 = vld [vmem:[#allocation2 + $0xb0] sm:$0xff]
      %v5457 = vld [vmem:[#allocation2 + $0xb8] sm:$0xff]
      %v5458 = vld [vmem:[#allocation2 + $0xc0] sm:$0xff]
      %v5459 = vld [vmem:[#allocation2 + $0xc8] sm:$0xff]
      %v5460 = vld [vmem:[#allocation2 + $0xd0] sm:$0xff]
      %v5461 = vld [vmem:[#allocation2 + $0xd8] sm:$0xff]
      %v5462 = vld [vmem:[#allocation2 + $0xe0] sm:$0xff]
      %v5463 = vld [vmem:[#allocation2 + $0xe8] sm:$0xff]
      %v5464 = vld [vmem:[#allocation2 + $0xf0] sm:$0xff]
      %v5465 = vld [vmem:[#allocation2 + $0xf8] sm:$0xff]
      %v5466 = vld [vmem:[#allocation2 + $0x100] sm:$0xff]
      %v5467 = vld [vmem:[#allocation2 + $0x108] sm:$0xff]
      %v5468 = vld [vmem:[#allocation2 + $0x110] sm:$0xff]
      %v5469 = vld [vmem:[#allocation2 + $0x118] sm:$0xff]
      %v5470 = vld [vmem:[#allocation2 + $0x120] sm:$0xff]
      %v5471 = vld [vmem:[#allocation2 + $0x128] sm:$0xff]
      %v5472 = vld [vmem:[#allocation2 + $0x130] sm:$0xff]
      %v5473 = vld [vmem:[#allocation2 + $0x138] sm:$0xff]
      %v5474 = vld [vmem:[#allocation2 + $0x140] sm:$0xff]
      %v5475 = vld [vmem:[#allocation2 + $0x148] sm:$0xff]
      %v5476 = vld [vmem:[#allocation2 + $0x150] sm:$0xff]
      %v5477 = vld [vmem:[#allocation2 + $0x158] sm:$0xff]
      %v5478 = vld [vmem:[#allocation2 + $0x160] sm:$0xff]
      %v5479 = vld [vmem:[#allocation2 + $0x168] sm:$0xff]
      %v5480 = vld [vmem:[#allocation2 + $0x170] sm:$0xff]
      %v5481 = vld [vmem:[#allocation2 + $0x178] sm:$0xff]
      %v5482 = vrot.slane %v5434, 7
      %v5483 = vrot.slane %v5435, 7
      %v5484 = vrot.slane %v5436, 7
      %v5485 = vrot.slane %v5437, 7
      %v5486 = vrot.slane %v5438, 7
      %v5487 = vrot.slane %v5439, 7
      %v5488 = vrot.slane %v5440, 7
      %v5489 = vrot.slane %v5441, 7
      %v5490 = vrot.slane %v5442, 7
      %v5491 = vrot.slane %v5443, 7
      %v5492 = vrot.slane %v5444, 7
      %v5493 = vrot.slane %v5445, 7
      %v5494 = vrot.slane %v5446, 7
      %v5495 = vrot.slane %v5447, 7
      %v5496 = vrot.slane %v5448, 7
      %v5497 = vrot.slane %v5449, 7
      %v5498 = vrot.slane %v5450, 7
      %v5499 = vrot.slane %v5451, 7
      %v5500 = vrot.slane %v5452, 7
      %v5501 = vrot.slane %v5453, 7
      %v5502 = vrot.slane %v5454, 7
      %v5503 = vrot.slane %v5455, 7
      %v5504 = vrot.slane %v5456, 7
      %v5505 = vrot.slane %v5457, 7
      %v5506 = vrot.slane %v5458, 7
      %v5507 = vrot.slane %v5459, 7
      %v5508 = vrot.slane %v5460, 7
      %v5509 = vrot.slane %v5461, 7
      %v5510 = vrot.slane %v5462, 7
      %v5511 = vrot.slane %v5463, 7
      %v5512 = vrot.slane %v5464, 7
      %v5513 = vrot.slane %v5465, 7
      %v5514 = vrot.slane %v5466, 7
      %v5515 = vrot.slane %v5467, 7
      %v5516 = vrot.slane %v5468, 7
      %v5517 = vrot.slane %v5469, 7
      %v5518 = vrot.slane %v5470, 7
      %v5519 = vrot.slane %v5471, 7
      %v5520 = vrot.slane %v5472, 7
      %v5521 = vrot.slane %v5473, 7
      %v5522 = vrot.slane %v5474, 7
      %v5523 = vrot.slane %v5475, 7
      %v5524 = vrot.slane %v5476, 7
      %v5525 = vrot.slane %v5477, 7
      %v5526 = vrot.slane %v5478, 7
      %v5527 = vrot.slane %v5479, 7
      %v5528 = vrot.slane %v5480, 7
      %v5529 = vrot.slane %v5481, 7
      %v5530 = vsel %vm303, %v5528, %v5529
      %v5531 = vsel %vm303, %v5527, %v5528
      %v5532 = vsel %vm303, %v5526, %v5527
      %v5533 = vsel %vm303, %v5525, %v5526
      %v5534 = vsel %vm303, %v5524, %v5525
      %v5535 = vsel %vm303, %v5523, %v5524
      %v5536 = vsel %vm303, %v5522, %v5523
      %v5537 = vsel %vm303, %v5521, %v5522
      %v5538 = vsel %vm303, %v5520, %v5521
      %v5539 = vsel %vm303, %v5519, %v5520
      %v5540 = vsel %vm303, %v5518, %v5519
      %v5541 = vsel %vm303, %v5517, %v5518
      %v5542 = vsel %vm303, %v5516, %v5517
      %v5543 = vsel %vm303, %v5515, %v5516
      %v5544 = vsel %vm303, %v5514, %v5515
      %v5545 = vsel %vm303, %v5513, %v5514
      %v5546 = vsel %vm303, %v5512, %v5513
      %v5547 = vsel %vm303, %v5511, %v5512
      %v5548 = vsel %vm303, %v5510, %v5511
      %v5549 = vsel %vm303, %v5509, %v5510
      %v5550 = vsel %vm303, %v5508, %v5509
      %v5551 = vsel %vm303, %v5507, %v5508
      %v5552 = vsel %vm303, %v5506, %v5507
      %v5553 = vsel %vm303, %v5505, %v5506
      %v5554 = vsel %vm303, %v5504, %v5505
      %v5555 = vsel %vm303, %v5503, %v5504
      %v5556 = vsel %vm303, %v5502, %v5503
      %v5557 = vsel %vm303, %v5501, %v5502
      %v5558 = vsel %vm303, %v5500, %v5501
      %v5559 = vsel %vm303, %v5499, %v5500
      %v5560 = vsel %vm303, %v5498, %v5499
      %v5561 = vsel %vm303, %v5497, %v5498
      %v5562 = vsel %vm303, %v5496, %v5497
      %v5563 = vsel %vm303, %v5495, %v5496
      %v5564 = vsel %vm303, %v5494, %v5495
      %v5565 = vsel %vm303, %v5493, %v5494
      %v5566 = vsel %vm303, %v5492, %v5493
      %v5567 = vsel %vm303, %v5491, %v5492
      %v5568 = vsel %vm303, %v5490, %v5491
      %v5569 = vsel %vm303, %v5489, %v5490
      %v5570 = vsel %vm303, %v5488, %v5489
      %v5571 = vsel %vm303, %v5487, %v5488
      %v5572 = vsel %vm303, %v5486, %v5487
      %v5573 = vsel %vm303, %v5485, %v5486
      %v5574 = vsel %vm303, %v5484, %v5485
      %v5575 = vsel %vm303, %v5483, %v5484
      %v5576 = vsel %vm303, %v5482, %v5483
      %v5577 = vsel %vm303, %v5529, %v5482
      %v5578 = vrot.slane %v5434, 1
      %v5579 = vrot.slane %v5435, 1
      %v5580 = vrot.slane %v5436, 1
      %v5581 = vrot.slane %v5437, 1
      %v5582 = vrot.slane %v5438, 1
      %v5583 = vrot.slane %v5439, 1
      %v5584 = vrot.slane %v5440, 1
      %v5585 = vrot.slane %v5441, 1
      %v5586 = vrot.slane %v5442, 1
      %v5587 = vrot.slane %v5443, 1
      %v5588 = vrot.slane %v5444, 1
      %v5589 = vrot.slane %v5445, 1
      %v5590 = vrot.slane %v5446, 1
      %v5591 = vrot.slane %v5447, 1
      %v5592 = vrot.slane %v5448, 1
      %v5593 = vrot.slane %v5449, 1
      %v5594 = vrot.slane %v5450, 1
      %v5595 = vrot.slane %v5451, 1
      %v5596 = vrot.slane %v5452, 1
      %v5597 = vrot.slane %v5453, 1
      %v5598 = vrot.slane %v5454, 1
      %v5599 = vrot.slane %v5455, 1
      %v5600 = vrot.slane %v5456, 1
      %v5601 = vrot.slane %v5457, 1
      %v5602 = vrot.slane %v5458, 1
      %v5603 = vrot.slane %v5459, 1
      %v5604 = vrot.slane %v5460, 1
      %v5605 = vrot.slane %v5461, 1
      %v5606 = vrot.slane %v5462, 1
      %v5607 = vrot.slane %v5463, 1
      %v5608 = vrot.slane %v5464, 1
      %v5609 = vrot.slane %v5465, 1
      %v5610 = vrot.slane %v5466, 1
      %v5611 = vrot.slane %v5467, 1
      %v5612 = vrot.slane %v5468, 1
      %v5613 = vrot.slane %v5469, 1
      %v5614 = vrot.slane %v5470, 1
      %v5615 = vrot.slane %v5471, 1
      %v5616 = vrot.slane %v5472, 1
      %v5617 = vrot.slane %v5473, 1
      %v5618 = vrot.slane %v5474, 1
      %v5619 = vrot.slane %v5475, 1
      %v5620 = vrot.slane %v5476, 1
      %v5621 = vrot.slane %v5477, 1
      %v5622 = vrot.slane %v5478, 1
      %v5623 = vrot.slane %v5479, 1
      %v5624 = vrot.slane %v5480, 1
      %v5625 = vrot.slane %v5481, 1
      %v5626 = vsel %vm400, %v5624, %v5625
      %v5627 = vsel %vm400, %v5623, %v5624
      %v5628 = vsel %vm400, %v5622, %v5623
      %v5629 = vsel %vm400, %v5621, %v5622
      %v5630 = vsel %vm400, %v5620, %v5621
      %v5631 = vsel %vm400, %v5619, %v5620
      %v5632 = vsel %vm400, %v5618, %v5619
      %v5633 = vsel %vm400, %v5617, %v5618
      %v5634 = vsel %vm400, %v5616, %v5617
      %v5635 = vsel %vm400, %v5615, %v5616
      %v5636 = vsel %vm400, %v5614, %v5615
      %v5637 = vsel %vm400, %v5613, %v5614
      %v5638 = vsel %vm400, %v5612, %v5613
      %v5639 = vsel %vm400, %v5611, %v5612
      %v5640 = vsel %vm400, %v5610, %v5611
      %v5641 = vsel %vm400, %v5609, %v5610
      %v5642 = vsel %vm400, %v5608, %v5609
      %v5643 = vsel %vm400, %v5607, %v5608
      %v5644 = vsel %vm400, %v5606, %v5607
      %v5645 = vsel %vm400, %v5605, %v5606
      %v5646 = vsel %vm400, %v5604, %v5605
      %v5647 = vsel %vm400, %v5603, %v5604
      %v5648 = vsel %vm400, %v5602, %v5603
      %v5649 = vsel %vm400, %v5601, %v5602
      %v5650 = vsel %vm400, %v5600, %v5601
      %v5651 = vsel %vm400, %v5599, %v5600
      %v5652 = vsel %vm400, %v5598, %v5599
      %v5653 = vsel %vm400, %v5597, %v5598
      %v5654 = vsel %vm400, %v5596, %v5597
      %v5655 = vsel %vm400, %v5595, %v5596
      %v5656 = vsel %vm400, %v5594, %v5595
      %v5657 = vsel %vm400, %v5593, %v5594
      %v5658 = vsel %vm400, %v5592, %v5593
      %v5659 = vsel %vm400, %v5591, %v5592
      %v5660 = vsel %vm400, %v5590, %v5591
      %v5661 = vsel %vm400, %v5589, %v5590
      %v5662 = vsel %vm400, %v5588, %v5589
      %v5663 = vsel %vm400, %v5587, %v5588
      %v5664 = vsel %vm400, %v5586, %v5587
      %v5665 = vsel %vm400, %v5585, %v5586
      %v5666 = vsel %vm400, %v5584, %v5585
      %v5667 = vsel %vm400, %v5583, %v5584
      %v5668 = vsel %vm400, %v5582, %v5583
      %v5669 = vsel %vm400, %v5581, %v5582
      %v5670 = vsel %vm400, %v5580, %v5581
      %v5671 = vsel %vm400, %v5579, %v5580
      %v5672 = vsel %vm400, %v5578, %v5579
      %v5673 = vsel %vm400, %v5625, %v5578
      %v5674 = vpack.c.bf16 %v5576, %v5577
      %v5675 = vpack.c.bf16 %v5574, %v5575
      %v5676 = vpack.c.bf16 %v5572, %v5573
      %v5677 = vpack.c.bf16 %v5570, %v5571
      %v5678 = vpack.c.bf16 %v5568, %v5569
      %v5679 = vpack.c.bf16 %v5566, %v5567
      %v5680 = vpack.c.bf16 %v5564, %v5565
      %v5681 = vpack.c.bf16 %v5562, %v5563
      %v5682 = vpack.c.bf16 %v5560, %v5561
      %v5683 = vpack.c.bf16 %v5558, %v5559
      %v5684 = vpack.c.bf16 %v5556, %v5557
      %v5685 = vpack.c.bf16 %v5554, %v5555
      %v5686 = vpack.c.bf16 %v5552, %v5553
      %v5687 = vpack.c.bf16 %v5550, %v5551
      %v5688 = vpack.c.bf16 %v5548, %v5549
      %v5689 = vpack.c.bf16 %v5546, %v5547
      %v5690 = vpack.c.bf16 %v5544, %v5545
      %v5691 = vpack.c.bf16 %v5542, %v5543
      %v5692 = vpack.c.bf16 %v5540, %v5541
      %v5693 = vpack.c.bf16 %v5538, %v5539
      %v5694 = vpack.c.bf16 %v5536, %v5537
      %v5695 = vpack.c.bf16 %v5534, %v5535
      %v5696 = vpack.c.bf16 %v5532, %v5533
      %v5697 = vpack.c.bf16 %v5530, %v5531
      %v5698 = vld [vmem:[%s2] sm:$0xf]
      %v5699 = vld [vmem:[%s2 + $0x4] sm:$0xf]
      %v5700 = vld [vmem:[%s2 + $0x8] sm:$0xf]
      %v5701 = vld [vmem:[%s2 + $0xc] sm:$0xf]
      %v5702 = vld [vmem:[%s2 + $0x10] sm:$0xf]
      %v5703 = vld [vmem:[%s2 + $0x14] sm:$0xf]
      %v5704 = vld [vmem:[%s2 + $0x18] sm:$0xf]
      %v5705 = vld [vmem:[%s2 + $0x1c] sm:$0xf]
      %v5706 = vld [vmem:[%s2 + $0x20] sm:$0xf]
      %v5707 = vld [vmem:[%s2 + $0x24] sm:$0xf]
      %v5708 = vld [vmem:[%s2 + $0x28] sm:$0xf]
      %v5709 = vld [vmem:[%s2 + $0x2c] sm:$0xf]
      %v5710 = vld [vmem:[%s2 + $0x30] sm:$0xf]
      %v5711 = vld [vmem:[%s2 + $0x34] sm:$0xf]
      %v5712 = vld [vmem:[%s2 + $0x38] sm:$0xf]
      %v5713 = vld [vmem:[%s2 + $0x3c] sm:$0xf]
      %v5730 = vunpack.c.l.b16 %v5698
      %v5731 = vunpack.c.l.b16 %v5699
      %v5732 = vunpack.c.l.b16 %v5700
      %v5733 = vunpack.c.l.b16 %v5701
      %v5734 = vunpack.c.l.b16 %v5702
      %v5735 = vunpack.c.l.b16 %v5703
      %v5736 = vunpack.c.l.b16 %v5704
      %v5737 = vunpack.c.l.b16 %v5705
      %v5738 = vunpack.c.l.b16 %v5706
      %v5739 = vunpack.c.l.b16 %v5707
      %v5740 = vunpack.c.l.b16 %v5708
      %v5741 = vunpack.c.l.b16 %v5709
      %v5742 = vunpack.c.l.b16 %v5710
      %v5743 = vunpack.c.l.b16 %v5711
      %v5744 = vunpack.c.l.b16 %v5712
      %v5745 = vunpack.c.l.b16 %v5713
      %v5746 = vpack.c.b16 %v5731, %v5730
      %v5747 = vpack.c.b16 %v5733, %v5732
      %v5748 = vpack.c.b16 %v5735, %v5734
      %v5749 = vpack.c.b16 %v5737, %v5736
      %v5750 = vpack.c.b16 %v5739, %v5738
      %v5751 = vpack.c.b16 %v5741, %v5740
      %v5752 = vpack.c.b16 %v5743, %v5742
      %v5753 = vpack.c.b16 %v5745, %v5744
      %5762 = vmatprep.subr.bf16.mxu0 0
      %5763 = vmatpush1.bf16.msra.mxu0 %v5753
      %5764 = vmatprep.subr.bf16.mxu0 0
      %5765 = vmatpush1.bf16.msra.mxu0 %v5752
      %5766 = vmatprep.subr.bf16.mxu0 0
      %5767 = vmatpush1.bf16.msra.mxu0 %v5751
      %5768 = vmatprep.subr.bf16.mxu0 0
      %5769 = vmatpush1.bf16.msra.mxu0 %v5750
      %5770 = vmatprep.subr.bf16.mxu0 0
      %5771 = vmatpush1.bf16.msra.mxu0 %v5749
      %5772 = vmatprep.subr.bf16.mxu0 0
      %5773 = vmatpush1.bf16.msra.mxu0 %v5748
      %5774 = vmatprep.subr.bf16.mxu0 0
      %5775 = vmatpush1.bf16.msra.mxu0 %v5747
      %5776 = vmatprep.subr.bf16.mxu0 0
      %5777 = vmatpush1.bf16.msra.mxu0 %v5746
      %5778 = vmatprep.subr.bf16.mxu0 0
      %5779 = vmatpush2.bf16.msra.mxu0 0
      %5780 = vmatprep.subr.bf16.mxu0 0
      %5781 = vmatpush2.bf16.msra.mxu0 0
      %5782 = vmatprep.subr.bf16.mxu0 0
      %5783 = vmatpush2.bf16.msra.mxu0 0
      %5784 = vmatprep.subr.bf16.mxu0 0
      %5785 = vmatpush2.bf16.msra.mxu0 0
      %5786 = vmatprep.subr.bf16.mxu0 0
      %5787 = vmatpush2.bf16.msra.mxu0 0
      %5788 = vmatprep.subr.bf16.mxu0 0
      %5789 = vmatpush2.bf16.msra.mxu0 0
      %5790 = vmatprep.subr.bf16.mxu0 0
      %5791 = vmatpush2.bf16.msra.mxu0 0
      %5792 = vmatprep.subr.bf16.mxu0 0
      %5793 = vmatpush2.bf16.msra.mxu0 0
      %5794 = vmatprep.mubr.bf16.mxu0 0
      %5795 = vmatmul.mubr.bf16.gmra.mxu0 %v5674
      %v5796 = vpop.f32.mrf.mxu0
      %v5797 = vadd.f32 0.0, %v5796
      %v5798 = vpop.f32.mrf.mxu0
      %v5799 = vpop.f32.mrf.mxu0
      %v5800 = vadd.f32 0.0, %v5799
      %v5801 = vpop.f32.mrf.mxu0
      %5802 = vmatprep.mubr.bf16.mxu0 0
      %5803 = vmatmul.mubr.bf16.gmra.mxu0 %v5675
      %v5804 = vpop.f32.mrf.mxu0
      %v5805 = vadd.f32 0.0, %v5804
      %v5806 = vpop.f32.mrf.mxu0
      %v5807 = vpop.f32.mrf.mxu0
      %v5808 = vadd.f32 0.0, %v5807
      %v5809 = vpop.f32.mrf.mxu0
      %5810 = vmatprep.mubr.bf16.mxu0 0
      %5811 = vmatmul.mubr.bf16.gmra.mxu0 %v5676
      %v5812 = vpop.f32.mrf.mxu0
      %v5813 = vadd.f32 0.0, %v5812
      %v5814 = vpop.f32.mrf.mxu0
      %v5815 = vpop.f32.mrf.mxu0
      %v5816 = vadd.f32 0.0, %v5815
      %v5817 = vpop.f32.mrf.mxu0
      %5818 = vmatprep.mubr.bf16.mxu0 0
      %5819 = vmatmul.mubr.bf16.gmra.mxu0 %v5677
      %v5820 = vpop.f32.mrf.mxu0
      %v5821 = vadd.f32 0.0, %v5820
      %v5822 = vpop.f32.mrf.mxu0
      %v5823 = vpop.f32.mrf.mxu0
      %v5824 = vadd.f32 0.0, %v5823
      %v5825 = vpop.f32.mrf.mxu0
      %5826 = vmatprep.mubr.bf16.mxu0 0
      %5827 = vmatmul.mubr.bf16.gmra.mxu0 %v5678
      %v5828 = vpop.f32.mrf.mxu0
      %v5829 = vadd.f32 0.0, %v5828
      %v5830 = vpop.f32.mrf.mxu0
      %v5831 = vpop.f32.mrf.mxu0
      %v5832 = vadd.f32 0.0, %v5831
      %v5833 = vpop.f32.mrf.mxu0
      %5834 = vmatprep.mubr.bf16.mxu0 0
      %5835 = vmatmul.mubr.bf16.gmra.mxu0 %v5679
      %v5836 = vpop.f32.mrf.mxu0
      %v5837 = vadd.f32 0.0, %v5836
      %v5838 = vpop.f32.mrf.mxu0
      %v5839 = vpop.f32.mrf.mxu0
      %v5840 = vadd.f32 0.0, %v5839
      %v5841 = vpop.f32.mrf.mxu0
      %5842 = vmatprep.mubr.bf16.mxu0 0
      %5843 = vmatmul.mubr.bf16.gmra.mxu0 %v5680
      %v5844 = vpop.f32.mrf.mxu0
      %v5845 = vadd.f32 0.0, %v5844
      %v5846 = vpop.f32.mrf.mxu0
      %v5847 = vpop.f32.mrf.mxu0
      %v5848 = vadd.f32 0.0, %v5847
      %v5849 = vpop.f32.mrf.mxu0
      %5850 = vmatprep.mubr.bf16.mxu0 0
      %5851 = vmatmul.mubr.bf16.gmra.mxu0 %v5681
      %v5852 = vpop.f32.mrf.mxu0
      %v5853 = vadd.f32 0.0, %v5852
      %v5854 = vpop.f32.mrf.mxu0
      %v5855 = vpop.f32.mrf.mxu0
      %v5856 = vadd.f32 0.0, %v5855
      %v5857 = vpop.f32.mrf.mxu0
      %5858 = vmatprep.mubr.bf16.mxu0 0
      %5859 = vmatmul.mubr.bf16.gmra.mxu0 %v5682
      %v5860 = vpop.f32.mrf.mxu0
      %v5861 = vadd.f32 0.0, %v5860
      %v5862 = vpop.f32.mrf.mxu0
      %v5863 = vpop.f32.mrf.mxu0
      %v5864 = vadd.f32 0.0, %v5863
      %v5865 = vpop.f32.mrf.mxu0
      %5866 = vmatprep.mubr.bf16.mxu0 0
      %5867 = vmatmul.mubr.bf16.gmra.mxu0 %v5683
      %v5868 = vpop.f32.mrf.mxu0
      %v5869 = vadd.f32 0.0, %v5868
      %v5870 = vpop.f32.mrf.mxu0
      %v5871 = vpop.f32.mrf.mxu0
      %v5872 = vadd.f32 0.0, %v5871
      %v5873 = vpop.f32.mrf.mxu0
      %5874 = vmatprep.mubr.bf16.mxu0 0
      %5875 = vmatmul.mubr.bf16.gmra.mxu0 %v5684
      %v5876 = vpop.f32.mrf.mxu0
      %v5877 = vadd.f32 0.0, %v5876
      %v5878 = vpop.f32.mrf.mxu0
      %v5879 = vpop.f32.mrf.mxu0
      %v5880 = vadd.f32 0.0, %v5879
      %v5881 = vpop.f32.mrf.mxu0
      %5882 = vmatprep.mubr.bf16.mxu0 0
      %5883 = vmatmul.mubr.bf16.gmra.mxu0 %v5685
      %v5884 = vpop.f32.mrf.mxu0
      %v5885 = vadd.f32 0.0, %v5884
      %v5886 = vpop.f32.mrf.mxu0
      %v5887 = vpop.f32.mrf.mxu0
      %v5888 = vadd.f32 0.0, %v5887
      %v5889 = vpop.f32.mrf.mxu0
      %5890 = vmatprep.mubr.bf16.mxu0 0
      %5891 = vmatmul.mubr.bf16.gmra.mxu0 %v5686
      %v5892 = vpop.f32.mrf.mxu0
      %v5893 = vadd.f32 0.0, %v5892
      %v5894 = vpop.f32.mrf.mxu0
      %v5895 = vpop.f32.mrf.mxu0
      %v5896 = vadd.f32 0.0, %v5895
      %v5897 = vpop.f32.mrf.mxu0
      %5898 = vmatprep.mubr.bf16.mxu0 0
      %5899 = vmatmul.mubr.bf16.gmra.mxu0 %v5687
      %v5900 = vpop.f32.mrf.mxu0
      %v5901 = vadd.f32 0.0, %v5900
      %v5902 = vpop.f32.mrf.mxu0
      %v5903 = vpop.f32.mrf.mxu0
      %v5904 = vadd.f32 0.0, %v5903
      %v5905 = vpop.f32.mrf.mxu0
      %5906 = vmatprep.mubr.bf16.mxu0 0
      %5907 = vmatmul.mubr.bf16.gmra.mxu0 %v5688
      %v5908 = vpop.f32.mrf.mxu0
      %v5909 = vadd.f32 0.0, %v5908
      %v5910 = vpop.f32.mrf.mxu0
      %v5911 = vpop.f32.mrf.mxu0
      %v5912 = vadd.f32 0.0, %v5911
      %v5913 = vpop.f32.mrf.mxu0
      %5914 = vmatprep.mubr.bf16.mxu0 0
      %5915 = vmatmul.mubr.bf16.gmra.mxu0 %v5689
      %v5916 = vpop.f32.mrf.mxu0
      %v5917 = vadd.f32 0.0, %v5916
      %v5918 = vpop.f32.mrf.mxu0
      %v5919 = vpop.f32.mrf.mxu0
      %v5920 = vadd.f32 0.0, %v5919
      %v5921 = vpop.f32.mrf.mxu0
      %5922 = vmatprep.mubr.bf16.mxu0 0
      %5923 = vmatmul.mubr.bf16.gmra.mxu0 %v5690
      %v5924 = vpop.f32.mrf.mxu0
      %v5925 = vadd.f32 0.0, %v5924
      %v5926 = vpop.f32.mrf.mxu0
      %v5927 = vpop.f32.mrf.mxu0
      %v5928 = vadd.f32 0.0, %v5927
      %v5929 = vpop.f32.mrf.mxu0
      %5930 = vmatprep.mubr.bf16.mxu0 0
      %5931 = vmatmul.mubr.bf16.gmra.mxu0 %v5691
      %v5932 = vpop.f32.mrf.mxu0
      %v5933 = vadd.f32 0.0, %v5932
      %v5934 = vpop.f32.mrf.mxu0
      %v5935 = vpop.f32.mrf.mxu0
      %v5936 = vadd.f32 0.0, %v5935
      %v5937 = vpop.f32.mrf.mxu0
      %5938 = vmatprep.mubr.bf16.mxu0 0
      %5939 = vmatmul.mubr.bf16.gmra.mxu0 %v5692
      %v5940 = vpop.f32.mrf.mxu0
      %v5941 = vadd.f32 0.0, %v5940
      %v5942 = vpop.f32.mrf.mxu0
      %v5943 = vpop.f32.mrf.mxu0
      %v5944 = vadd.f32 0.0, %v5943
      %v5945 = vpop.f32.mrf.mxu0
      %5946 = vmatprep.mubr.bf16.mxu0 0
      %5947 = vmatmul.mubr.bf16.gmra.mxu0 %v5693
      %v5948 = vpop.f32.mrf.mxu0
      %v5949 = vadd.f32 0.0, %v5948
      %v5950 = vpop.f32.mrf.mxu0
      %v5951 = vpop.f32.mrf.mxu0
      %v5952 = vadd.f32 0.0, %v5951
      %v5953 = vpop.f32.mrf.mxu0
      %5954 = vmatprep.mubr.bf16.mxu0 0
      %5955 = vmatmul.mubr.bf16.gmra.mxu0 %v5694
      %v5956 = vpop.f32.mrf.mxu0
      %v5957 = vadd.f32 0.0, %v5956
      %v5958 = vpop.f32.mrf.mxu0
      %v5959 = vpop.f32.mrf.mxu0
      %v5960 = vadd.f32 0.0, %v5959
      %v5961 = vpop.f32.mrf.mxu0
      %5962 = vmatprep.mubr.bf16.mxu0 0
      %5963 = vmatmul.mubr.bf16.gmra.mxu0 %v5695
      %v5964 = vpop.f32.mrf.mxu0
      %v5965 = vadd.f32 0.0, %v5964
      %v5966 = vpop.f32.mrf.mxu0
      %v5967 = vpop.f32.mrf.mxu0
      %v5968 = vadd.f32 0.0, %v5967
      %v5969 = vpop.f32.mrf.mxu0
      %5970 = vmatprep.mubr.bf16.mxu0 0
      %5971 = vmatmul.mubr.bf16.gmra.mxu0 %v5696
      %v5972 = vpop.f32.mrf.mxu0
      %v5973 = vadd.f32 0.0, %v5972
      %v5974 = vpop.f32.mrf.mxu0
      %v5975 = vpop.f32.mrf.mxu0
      %v5976 = vadd.f32 0.0, %v5975
      %v5977 = vpop.f32.mrf.mxu0
      %5978 = vmatprep.mubr.bf16.mxu0 0
      %5979 = vmatmul.mubr.bf16.gmra.mxu0 %v5697
      %v5980 = vpop.f32.mrf.mxu0
      %v5981 = vadd.f32 0.0, %v5980
      %v5982 = vpop.f32.mrf.mxu0
      %v5983 = vpop.f32.mrf.mxu0
      %v5984 = vadd.f32 0.0, %v5983
      %v5985 = vpop.f32.mrf.mxu0
      %5986 = vdwg.mxu0
      %5987 = vst [vmem:[#allocation3] sm:$0xff] %v5797
      %5988 = vst [vmem:[#allocation3 + $0x8] sm:$0xff] %v5800
      %5989 = vst [vmem:[#allocation3 + $0x10] sm:$0xff] %v5805
      %5990 = vst [vmem:[#allocation3 + $0x18] sm:$0xff] %v5808
      %5991 = vst [vmem:[#allocation3 + $0x20] sm:$0xff] %v5813
      %5992 = vst [vmem:[#allocation3 + $0x28] sm:$0xff] %v5816
      %5993 = vst [vmem:[#allocation3 + $0x30] sm:$0xff] %v5821
      %5994 = vst [vmem:[#allocation3 + $0x38] sm:$0xff] %v5824
      %5995 = vst [vmem:[#allocation3 + $0x40] sm:$0xff] %v5829
      %5996 = vst [vmem:[#allocation3 + $0x48] sm:$0xff] %v5832
      %5997 = vst [vmem:[#allocation3 + $0x50] sm:$0xff] %v5837
      %5998 = vst [vmem:[#allocation3 + $0x58] sm:$0xff] %v5840
      %5999 = vst [vmem:[#allocation3 + $0x60] sm:$0xff] %v5845
      %6000 = vst [vmem:[#allocation3 + $0x68] sm:$0xff] %v5848
      %6001 = vst [vmem:[#allocation3 + $0x70] sm:$0xff] %v5853
      %6002 = vst [vmem:[#allocation3 + $0x78] sm:$0xff] %v5856
      %6003 = vst [vmem:[#allocation3 + $0x80] sm:$0xff] %v5861
      %6004 = vst [vmem:[#allocation3 + $0x88] sm:$0xff] %v5864
      %6005 = vst [vmem:[#allocation3 + $0x90] sm:$0xff] %v5869
      %6006 = vst [vmem:[#allocation3 + $0x98] sm:$0xff] %v5872
      %6007 = vst [vmem:[#allocation3 + $0xa0] sm:$0xff] %v5877
      %6008 = vst [vmem:[#allocation3 + $0xa8] sm:$0xff] %v5880
      %6009 = vst [vmem:[#allocation3 + $0xb0] sm:$0xff] %v5885
      %6010 = vst [vmem:[#allocation3 + $0xb8] sm:$0xff] %v5888
      %6011 = vst [vmem:[#allocation3 + $0xc0] sm:$0xff] %v5893
      %6012 = vst [vmem:[#allocation3 + $0xc8] sm:$0xff] %v5896
      %6013 = vst [vmem:[#allocation3 + $0xd0] sm:$0xff] %v5901
      %6014 = vst [vmem:[#allocation3 + $0xd8] sm:$0xff] %v5904
      %6015 = vst [vmem:[#allocation3 + $0xe0] sm:$0xff] %v5909
      %6016 = vst [vmem:[#allocation3 + $0xe8] sm:$0xff] %v5912
      %6017 = vst [vmem:[#allocation3 + $0xf0] sm:$0xff] %v5917
      %6018 = vst [vmem:[#allocation3 + $0xf8] sm:$0xff] %v5920
      %6019 = vst [vmem:[#allocation3 + $0x100] sm:$0xff] %v5925
      %6020 = vst [vmem:[#allocation3 + $0x108] sm:$0xff] %v5928
      %6021 = vst [vmem:[#allocation3 + $0x110] sm:$0xff] %v5933
      %6022 = vst [vmem:[#allocation3 + $0x118] sm:$0xff] %v5936
      %6023 = vst [vmem:[#allocation3 + $0x120] sm:$0xff] %v5941
      %6024 = vst [vmem:[#allocation3 + $0x128] sm:$0xff] %v5944
      %6025 = vst [vmem:[#allocation3 + $0x130] sm:$0xff] %v5949
      %6026 = vst [vmem:[#allocation3 + $0x138] sm:$0xff] %v5952
      %6027 = vst [vmem:[#allocation3 + $0x140] sm:$0xff] %v5957
      %6028 = vst [vmem:[#allocation3 + $0x148] sm:$0xff] %v5960
      %6029 = vst [vmem:[#allocation3 + $0x150] sm:$0xff] %v5965
      %6030 = vst [vmem:[#allocation3 + $0x158] sm:$0xff] %v5968
      %6031 = vst [vmem:[#allocation3 + $0x160] sm:$0xff] %v5973
      %6032 = vst [vmem:[#allocation3 + $0x168] sm:$0xff] %v5976
      %6033 = vst [vmem:[#allocation3 + $0x170] sm:$0xff] %v5981
      %6034 = vst [vmem:[#allocation3 + $0x178] sm:$0xff] %v5984
      %v6035 = vpack.c.bf16 %v5435, %v5434
      %v6036 = vpack.c.bf16 %v5437, %v5436
      %v6037 = vpack.c.bf16 %v5439, %v5438
      %v6038 = vpack.c.bf16 %v5441, %v5440
      %v6039 = vpack.c.bf16 %v5443, %v5442
      %v6040 = vpack.c.bf16 %v5445, %v5444
      %v6041 = vpack.c.bf16 %v5447, %v5446
      %v6042 = vpack.c.bf16 %v5449, %v5448
      %v6043 = vpack.c.bf16 %v5451, %v5450
      %v6044 = vpack.c.bf16 %v5453, %v5452
      %v6045 = vpack.c.bf16 %v5455, %v5454
      %v6046 = vpack.c.bf16 %v5457, %v5456
      %v6047 = vpack.c.bf16 %v5459, %v5458
      %v6048 = vpack.c.bf16 %v5461, %v5460
      %v6049 = vpack.c.bf16 %v5463, %v5462
      %v6050 = vpack.c.bf16 %v5465, %v5464
      %v6051 = vpack.c.bf16 %v5467, %v5466
      %v6052 = vpack.c.bf16 %v5469, %v5468
      %v6053 = vpack.c.bf16 %v5471, %v5470
      %v6054 = vpack.c.bf16 %v5473, %v5472
      %v6055 = vpack.c.bf16 %v5475, %v5474
      %v6056 = vpack.c.bf16 %v5477, %v5476
      %v6057 = vpack.c.bf16 %v5479, %v5478
      %v6058 = vpack.c.bf16 %v5481, %v5480
      %s6059 = scalar_lea.vmem %s2, 64
      %v6060 = vld [vmem:[%s6059] sm:$0xf]
      %v6061 = vld [vmem:[%s6059 + $0x4] sm:$0xf]
      %v6062 = vld [vmem:[%s6059 + $0x8] sm:$0xf]
      %v6063 = vld [vmem:[%s6059 + $0xc] sm:$0xf]
      %v6064 = vld [vmem:[%s6059 + $0x10] sm:$0xf]
      %v6065 = vld [vmem:[%s6059 + $0x14] sm:$0xf]
      %v6066 = vld [vmem:[%s6059 + $0x18] sm:$0xf]
      %v6067 = vld [vmem:[%s6059 + $0x1c] sm:$0xf]
      %v6068 = vld [vmem:[%s6059 + $0x20] sm:$0xf]
      %v6069 = vld [vmem:[%s6059 + $0x24] sm:$0xf]
      %v6070 = vld [vmem:[%s6059 + $0x28] sm:$0xf]
      %v6071 = vld [vmem:[%s6059 + $0x2c] sm:$0xf]
      %v6072 = vld [vmem:[%s6059 + $0x30] sm:$0xf]
      %v6073 = vld [vmem:[%s6059 + $0x34] sm:$0xf]
      %v6074 = vld [vmem:[%s6059 + $0x38] sm:$0xf]
      %v6075 = vld [vmem:[%s6059 + $0x3c] sm:$0xf]
      %v6092 = vunpack.c.l.b16 %v6060
      %v6093 = vunpack.c.l.b16 %v6061
      %v6094 = vunpack.c.l.b16 %v6062
      %v6095 = vunpack.c.l.b16 %v6063
      %v6096 = vunpack.c.l.b16 %v6064
      %v6097 = vunpack.c.l.b16 %v6065
      %v6098 = vunpack.c.l.b16 %v6066
      %v6099 = vunpack.c.l.b16 %v6067
      %v6100 = vunpack.c.l.b16 %v6068
      %v6101 = vunpack.c.l.b16 %v6069
      %v6102 = vunpack.c.l.b16 %v6070
      %v6103 = vunpack.c.l.b16 %v6071
      %v6104 = vunpack.c.l.b16 %v6072
      %v6105 = vunpack.c.l.b16 %v6073
      %v6106 = vunpack.c.l.b16 %v6074
      %v6107 = vunpack.c.l.b16 %v6075
      %v6108 = vpack.c.b16 %v6093, %v6092
      %v6109 = vpack.c.b16 %v6095, %v6094
      %v6110 = vpack.c.b16 %v6097, %v6096
      %v6111 = vpack.c.b16 %v6099, %v6098
      %v6112 = vpack.c.b16 %v6101, %v6100
      %v6113 = vpack.c.b16 %v6103, %v6102
      %v6114 = vpack.c.b16 %v6105, %v6104
      %v6115 = vpack.c.b16 %v6107, %v6106
      %6124 = vmatprep.subr.bf16.mxu0 0
      %6125 = vmatpush1.bf16.msra.mxu0 %v6115
      %6126 = vmatprep.subr.bf16.mxu0 0
      %6127 = vmatpush1.bf16.msra.mxu0 %v6114
      %6128 = vmatprep.subr.bf16.mxu0 0
      %6129 = vmatpush1.bf16.msra.mxu0 %v6113
      %6130 = vmatprep.subr.bf16.mxu0 0
      %6131 = vmatpush1.bf16.msra.mxu0 %v6112
      %6132 = vmatprep.subr.bf16.mxu0 0
      %6133 = vmatpush1.bf16.msra.mxu0 %v6111
      %6134 = vmatprep.subr.bf16.mxu0 0
      %6135 = vmatpush1.bf16.msra.mxu0 %v6110
      %6136 = vmatprep.subr.bf16.mxu0 0
      %6137 = vmatpush1.bf16.msra.mxu0 %v6109
      %6138 = vmatprep.subr.bf16.mxu0 0
      %6139 = vmatpush1.bf16.msra.mxu0 %v6108
      %6140 = vmatprep.subr.bf16.mxu0 0
      %6141 = vmatpush2.bf16.msra.mxu0 0
      %6142 = vmatprep.subr.bf16.mxu0 0
      %6143 = vmatpush2.bf16.msra.mxu0 0
      %6144 = vmatprep.subr.bf16.mxu0 0
      %6145 = vmatpush2.bf16.msra.mxu0 0
      %6146 = vmatprep.subr.bf16.mxu0 0
      %6147 = vmatpush2.bf16.msra.mxu0 0
      %6148 = vmatprep.subr.bf16.mxu0 0
      %6149 = vmatpush2.bf16.msra.mxu0 0
      %6150 = vmatprep.subr.bf16.mxu0 0
      %6151 = vmatpush2.bf16.msra.mxu0 0
      %6152 = vmatprep.subr.bf16.mxu0 0
      %6153 = vmatpush2.bf16.msra.mxu0 0
      %6154 = vmatprep.subr.bf16.mxu0 0
      %6155 = vmatpush2.bf16.msra.mxu0 0
      %6156 = vmatprep.mubr.bf16.mxu0 0
      %6157 = vmatmul.mubr.bf16.gmra.mxu0 %v6035
      %v6158 = vpop.f32.mrf.mxu0
      %v6159 = vadd.f32 0.0, %v6158
      %v6160 = vpop.f32.mrf.mxu0
      %v6161 = vpop.f32.mrf.mxu0
      %v6162 = vadd.f32 0.0, %v6161
      %v6163 = vpop.f32.mrf.mxu0
      %6164 = vmatprep.mubr.bf16.mxu0 0
      %6165 = vmatmul.mubr.bf16.gmra.mxu0 %v6036
      %v6166 = vpop.f32.mrf.mxu0
      %v6167 = vadd.f32 0.0, %v6166
      %v6168 = vpop.f32.mrf.mxu0
      %v6169 = vpop.f32.mrf.mxu0
      %v6170 = vadd.f32 0.0, %v6169
      %v6171 = vpop.f32.mrf.mxu0
      %6172 = vmatprep.mubr.bf16.mxu0 0
      %6173 = vmatmul.mubr.bf16.gmra.mxu0 %v6037
      %v6174 = vpop.f32.mrf.mxu0
      %v6175 = vadd.f32 0.0, %v6174
      %v6176 = vpop.f32.mrf.mxu0
      %v6177 = vpop.f32.mrf.mxu0
      %v6178 = vadd.f32 0.0, %v6177
      %v6179 = vpop.f32.mrf.mxu0
      %6180 = vmatprep.mubr.bf16.mxu0 0
      %6181 = vmatmul.mubr.bf16.gmra.mxu0 %v6038
      %v6182 = vpop.f32.mrf.mxu0
      %v6183 = vadd.f32 0.0, %v6182
      %v6184 = vpop.f32.mrf.mxu0
      %v6185 = vpop.f32.mrf.mxu0
      %v6186 = vadd.f32 0.0, %v6185
      %v6187 = vpop.f32.mrf.mxu0
      %6188 = vmatprep.mubr.bf16.mxu0 0
      %6189 = vmatmul.mubr.bf16.gmra.mxu0 %v6039
      %v6190 = vpop.f32.mrf.mxu0
      %v6191 = vadd.f32 0.0, %v6190
      %v6192 = vpop.f32.mrf.mxu0
      %v6193 = vpop.f32.mrf.mxu0
      %v6194 = vadd.f32 0.0, %v6193
      %v6195 = vpop.f32.mrf.mxu0
      %6196 = vmatprep.mubr.bf16.mxu0 0
      %6197 = vmatmul.mubr.bf16.gmra.mxu0 %v6040
      %v6198 = vpop.f32.mrf.mxu0
      %v6199 = vadd.f32 0.0, %v6198
      %v6200 = vpop.f32.mrf.mxu0
      %v6201 = vpop.f32.mrf.mxu0
      %v6202 = vadd.f32 0.0, %v6201
      %v6203 = vpop.f32.mrf.mxu0
      %6204 = vmatprep.mubr.bf16.mxu0 0
      %6205 = vmatmul.mubr.bf16.gmra.mxu0 %v6041
      %v6206 = vpop.f32.mrf.mxu0
      %v6207 = vadd.f32 0.0, %v6206
      %v6208 = vpop.f32.mrf.mxu0
      %v6209 = vpop.f32.mrf.mxu0
      %v6210 = vadd.f32 0.0, %v6209
      %v6211 = vpop.f32.mrf.mxu0
      %6212 = vmatprep.mubr.bf16.mxu0 0
      %6213 = vmatmul.mubr.bf16.gmra.mxu0 %v6042
      %v6214 = vpop.f32.mrf.mxu0
      %v6215 = vadd.f32 0.0, %v6214
      %v6216 = vpop.f32.mrf.mxu0
      %v6217 = vpop.f32.mrf.mxu0
      %v6218 = vadd.f32 0.0, %v6217
      %v6219 = vpop.f32.mrf.mxu0
      %6220 = vmatprep.mubr.bf16.mxu0 0
      %6221 = vmatmul.mubr.bf16.gmra.mxu0 %v6043
      %v6222 = vpop.f32.mrf.mxu0
      %v6223 = vadd.f32 0.0, %v6222
      %v6224 = vpop.f32.mrf.mxu0
      %v6225 = vpop.f32.mrf.mxu0
      %v6226 = vadd.f32 0.0, %v6225
      %v6227 = vpop.f32.mrf.mxu0
      %6228 = vmatprep.mubr.bf16.mxu0 0
      %6229 = vmatmul.mubr.bf16.gmra.mxu0 %v6044
      %v6230 = vpop.f32.mrf.mxu0
      %v6231 = vadd.f32 0.0, %v6230
      %v6232 = vpop.f32.mrf.mxu0
      %v6233 = vpop.f32.mrf.mxu0
      %v6234 = vadd.f32 0.0, %v6233
      %v6235 = vpop.f32.mrf.mxu0
      %6236 = vmatprep.mubr.bf16.mxu0 0
      %6237 = vmatmul.mubr.bf16.gmra.mxu0 %v6045
      %v6238 = vpop.f32.mrf.mxu0
      %v6239 = vadd.f32 0.0, %v6238
      %v6240 = vpop.f32.mrf.mxu0
      %v6241 = vpop.f32.mrf.mxu0
      %v6242 = vadd.f32 0.0, %v6241
      %v6243 = vpop.f32.mrf.mxu0
      %6244 = vmatprep.mubr.bf16.mxu0 0
      %6245 = vmatmul.mubr.bf16.gmra.mxu0 %v6046
      %v6246 = vpop.f32.mrf.mxu0
      %v6247 = vadd.f32 0.0, %v6246
      %v6248 = vpop.f32.mrf.mxu0
      %v6249 = vpop.f32.mrf.mxu0
      %v6250 = vadd.f32 0.0, %v6249
      %v6251 = vpop.f32.mrf.mxu0
      %6252 = vmatprep.mubr.bf16.mxu0 0
      %6253 = vmatmul.mubr.bf16.gmra.mxu0 %v6047
      %v6254 = vpop.f32.mrf.mxu0
      %v6255 = vadd.f32 0.0, %v6254
      %v6256 = vpop.f32.mrf.mxu0
      %v6257 = vpop.f32.mrf.mxu0
      %v6258 = vadd.f32 0.0, %v6257
      %v6259 = vpop.f32.mrf.mxu0
      %6260 = vmatprep.mubr.bf16.mxu0 0
      %6261 = vmatmul.mubr.bf16.gmra.mxu0 %v6048
      %v6262 = vpop.f32.mrf.mxu0
      %v6263 = vadd.f32 0.0, %v6262
      %v6264 = vpop.f32.mrf.mxu0
      %v6265 = vpop.f32.mrf.mxu0
      %v6266 = vadd.f32 0.0, %v6265
      %v6267 = vpop.f32.mrf.mxu0
      %6268 = vmatprep.mubr.bf16.mxu0 0
      %6269 = vmatmul.mubr.bf16.gmra.mxu0 %v6049
      %v6270 = vpop.f32.mrf.mxu0
      %v6271 = vadd.f32 0.0, %v6270
      %v6272 = vpop.f32.mrf.mxu0
      %v6273 = vpop.f32.mrf.mxu0
      %v6274 = vadd.f32 0.0, %v6273
      %v6275 = vpop.f32.mrf.mxu0
      %6276 = vmatprep.mubr.bf16.mxu0 0
      %6277 = vmatmul.mubr.bf16.gmra.mxu0 %v6050
      %v6278 = vpop.f32.mrf.mxu0
      %v6279 = vadd.f32 0.0, %v6278
      %v6280 = vpop.f32.mrf.mxu0
      %v6281 = vpop.f32.mrf.mxu0
      %v6282 = vadd.f32 0.0, %v6281
      %v6283 = vpop.f32.mrf.mxu0
      %6284 = vmatprep.mubr.bf16.mxu0 0
      %6285 = vmatmul.mubr.bf16.gmra.mxu0 %v6051
      %v6286 = vpop.f32.mrf.mxu0
      %v6287 = vadd.f32 0.0, %v6286
      %v6288 = vpop.f32.mrf.mxu0
      %v6289 = vpop.f32.mrf.mxu0
      %v6290 = vadd.f32 0.0, %v6289
      %v6291 = vpop.f32.mrf.mxu0
      %6292 = vmatprep.mubr.bf16.mxu0 0
      %6293 = vmatmul.mubr.bf16.gmra.mxu0 %v6052
      %v6294 = vpop.f32.mrf.mxu0
      %v6295 = vadd.f32 0.0, %v6294
      %v6296 = vpop.f32.mrf.mxu0
      %v6297 = vpop.f32.mrf.mxu0
      %v6298 = vadd.f32 0.0, %v6297
      %v6299 = vpop.f32.mrf.mxu0
      %6300 = vmatprep.mubr.bf16.mxu0 0
      %6301 = vmatmul.mubr.bf16.gmra.mxu0 %v6053
      %v6302 = vpop.f32.mrf.mxu0
      %v6303 = vadd.f32 0.0, %v6302
      %v6304 = vpop.f32.mrf.mxu0
      %v6305 = vpop.f32.mrf.mxu0
      %v6306 = vadd.f32 0.0, %v6305
      %v6307 = vpop.f32.mrf.mxu0
      %6308 = vmatprep.mubr.bf16.mxu0 0
      %6309 = vmatmul.mubr.bf16.gmra.mxu0 %v6054
      %v6310 = vpop.f32.mrf.mxu0
      %v6311 = vadd.f32 0.0, %v6310
      %v6312 = vpop.f32.mrf.mxu0
      %v6313 = vpop.f32.mrf.mxu0
      %v6314 = vadd.f32 0.0, %v6313
      %v6315 = vpop.f32.mrf.mxu0
      %6316 = vmatprep.mubr.bf16.mxu0 0
      %6317 = vmatmul.mubr.bf16.gmra.mxu0 %v6055
      %v6318 = vpop.f32.mrf.mxu0
      %v6319 = vadd.f32 0.0, %v6318
      %v6320 = vpop.f32.mrf.mxu0
      %v6321 = vpop.f32.mrf.mxu0
      %v6322 = vadd.f32 0.0, %v6321
      %v6323 = vpop.f32.mrf.mxu0
      %6324 = vmatprep.mubr.bf16.mxu0 0
      %6325 = vmatmul.mubr.bf16.gmra.mxu0 %v6056
      %v6326 = vpop.f32.mrf.mxu0
      %v6327 = vadd.f32 0.0, %v6326
      %v6328 = vpop.f32.mrf.mxu0
      %v6329 = vpop.f32.mrf.mxu0
      %v6330 = vadd.f32 0.0, %v6329
      %v6331 = vpop.f32.mrf.mxu0
      %6332 = vmatprep.mubr.bf16.mxu0 0
      %6333 = vmatmul.mubr.bf16.gmra.mxu0 %v6057
      %v6334 = vpop.f32.mrf.mxu0
      %v6335 = vadd.f32 0.0, %v6334
      %v6336 = vpop.f32.mrf.mxu0
      %v6337 = vpop.f32.mrf.mxu0
      %v6338 = vadd.f32 0.0, %v6337
      %v6339 = vpop.f32.mrf.mxu0
      %6340 = vmatprep.mubr.bf16.mxu0 0
      %6341 = vmatmul.mubr.bf16.gmra.mxu0 %v6058
      %v6342 = vpop.f32.mrf.mxu0
      %v6343 = vadd.f32 0.0, %v6342
      %v6344 = vpop.f32.mrf.mxu0
      %v6345 = vpop.f32.mrf.mxu0
      %v6346 = vadd.f32 0.0, %v6345
      %v6347 = vpop.f32.mrf.mxu0
      %6348 = vdwg.mxu0
      %v6349 = vld [vmem:[#allocation3] sm:$0xff]
      %v6350 = vld [vmem:[#allocation3 + $0x8] sm:$0xff]
      %v6351 = vld [vmem:[#allocation3 + $0x10] sm:$0xff]
      %v6352 = vld [vmem:[#allocation3 + $0x18] sm:$0xff]
      %v6353 = vld [vmem:[#allocation3 + $0x20] sm:$0xff]
      %v6354 = vld [vmem:[#allocation3 + $0x28] sm:$0xff]
      %v6355 = vld [vmem:[#allocation3 + $0x30] sm:$0xff]
      %v6356 = vld [vmem:[#allocation3 + $0x38] sm:$0xff]
      %v6357 = vld [vmem:[#allocation3 + $0x40] sm:$0xff]
      %v6358 = vld [vmem:[#allocation3 + $0x48] sm:$0xff]
      %v6359 = vld [vmem:[#allocation3 + $0x50] sm:$0xff]
      %v6360 = vld [vmem:[#allocation3 + $0x58] sm:$0xff]
      %v6361 = vld [vmem:[#allocation3 + $0x60] sm:$0xff]
      %v6362 = vld [vmem:[#allocation3 + $0x68] sm:$0xff]
      %v6363 = vld [vmem:[#allocation3 + $0x70] sm:$0xff]
      %v6364 = vld [vmem:[#allocation3 + $0x78] sm:$0xff]
      %v6365 = vld [vmem:[#allocation3 + $0x80] sm:$0xff]
      %v6366 = vld [vmem:[#allocation3 + $0x88] sm:$0xff]
      %v6367 = vld [vmem:[#allocation3 + $0x90] sm:$0xff]
      %v6368 = vld [vmem:[#allocation3 + $0x98] sm:$0xff]
      %v6369 = vld [vmem:[#allocation3 + $0xa0] sm:$0xff]
      %v6370 = vld [vmem:[#allocation3 + $0xa8] sm:$0xff]
      %v6371 = vld [vmem:[#allocation3 + $0xb0] sm:$0xff]
      %v6372 = vld [vmem:[#allocation3 + $0xb8] sm:$0xff]
      %v6373 = vld [vmem:[#allocation3 + $0xc0] sm:$0xff]
      %v6374 = vld [vmem:[#allocation3 + $0xc8] sm:$0xff]
      %v6375 = vld [vmem:[#allocation3 + $0xd0] sm:$0xff]
      %v6376 = vld [vmem:[#allocation3 + $0xd8] sm:$0xff]
      %v6377 = vld [vmem:[#allocation3 + $0xe0] sm:$0xff]
      %v6378 = vld [vmem:[#allocation3 + $0xe8] sm:$0xff]
      %v6379 = vld [vmem:[#allocation3 + $0xf0] sm:$0xff]
      %v6380 = vld [vmem:[#allocation3 + $0xf8] sm:$0xff]
      %v6381 = vld [vmem:[#allocation3 + $0x100] sm:$0xff]
      %v6382 = vld [vmem:[#allocation3 + $0x108] sm:$0xff]
      %v6383 = vld [vmem:[#allocation3 + $0x110] sm:$0xff]
      %v6384 = vld [vmem:[#allocation3 + $0x118] sm:$0xff]
      %v6385 = vld [vmem:[#allocation3 + $0x120] sm:$0xff]
      %v6386 = vld [vmem:[#allocation3 + $0x128] sm:$0xff]
      %v6387 = vld [vmem:[#allocation3 + $0x130] sm:$0xff]
      %v6388 = vld [vmem:[#allocation3 + $0x138] sm:$0xff]
      %v6389 = vld [vmem:[#allocation3 + $0x140] sm:$0xff]
      %v6390 = vld [vmem:[#allocation3 + $0x148] sm:$0xff]
      %v6391 = vld [vmem:[#allocation3 + $0x150] sm:$0xff]
      %v6392 = vld [vmem:[#allocation3 + $0x158] sm:$0xff]
      %v6393 = vld [vmem:[#allocation3 + $0x160] sm:$0xff]
      %v6394 = vld [vmem:[#allocation3 + $0x168] sm:$0xff]
      %v6395 = vld [vmem:[#allocation3 + $0x170] sm:$0xff]
      %v6396 = vld [vmem:[#allocation3 + $0x178] sm:$0xff]
      %v6397 = vadd.f32 %v6349, %v6159
      %v6398 = vadd.f32 %v6350, %v6162
      %v6399 = vadd.f32 %v6351, %v6167
      %v6400 = vadd.f32 %v6352, %v6170
      %v6401 = vadd.f32 %v6353, %v6175
      %v6402 = vadd.f32 %v6354, %v6178
      %v6403 = vadd.f32 %v6355, %v6183
      %v6404 = vadd.f32 %v6356, %v6186
      %v6405 = vadd.f32 %v6357, %v6191
      %v6406 = vadd.f32 %v6358, %v6194
      %v6407 = vadd.f32 %v6359, %v6199
      %v6408 = vadd.f32 %v6360, %v6202
      %v6409 = vadd.f32 %v6361, %v6207
      %v6410 = vadd.f32 %v6362, %v6210
      %v6411 = vadd.f32 %v6363, %v6215
      %v6412 = vadd.f32 %v6364, %v6218
      %v6413 = vadd.f32 %v6365, %v6223
      %v6414 = vadd.f32 %v6366, %v6226
      %v6415 = vadd.f32 %v6367, %v6231
      %v6416 = vadd.f32 %v6368, %v6234
      %v6417 = vadd.f32 %v6369, %v6239
      %v6418 = vadd.f32 %v6370, %v6242
      %v6419 = vadd.f32 %v6371, %v6247
      %v6420 = vadd.f32 %v6372, %v6250
      %v6421 = vadd.f32 %v6373, %v6255
      %v6422 = vadd.f32 %v6374, %v6258
      %v6423 = vadd.f32 %v6375, %v6263
      %v6424 = vadd.f32 %v6376, %v6266
      %v6425 = vadd.f32 %v6377, %v6271
      %v6426 = vadd.f32 %v6378, %v6274
      %v6427 = vadd.f32 %v6379, %v6279
      %v6428 = vadd.f32 %v6380, %v6282
      %v6429 = vadd.f32 %v6381, %v6287
      %v6430 = vadd.f32 %v6382, %v6290
      %v6431 = vadd.f32 %v6383, %v6295
      %v6432 = vadd.f32 %v6384, %v6298
      %v6433 = vadd.f32 %v6385, %v6303
      %v6434 = vadd.f32 %v6386, %v6306
      %v6435 = vadd.f32 %v6387, %v6311
      %v6436 = vadd.f32 %v6388, %v6314
      %v6437 = vadd.f32 %v6389, %v6319
      %v6438 = vadd.f32 %v6390, %v6322
      %v6439 = vadd.f32 %v6391, %v6327
      %v6440 = vadd.f32 %v6392, %v6330
      %v6441 = vadd.f32 %v6393, %v6335
      %v6442 = vadd.f32 %v6394, %v6338
      %v6443 = vadd.f32 %v6395, %v6343
      %v6444 = vadd.f32 %v6396, %v6346
      %6445 = vst [vmem:[#allocation3] sm:$0xff] %v6397
      %6446 = vst [vmem:[#allocation3 + $0x8] sm:$0xff] %v6398
      %6447 = vst [vmem:[#allocation3 + $0x10] sm:$0xff] %v6399
      %6448 = vst [vmem:[#allocation3 + $0x18] sm:$0xff] %v6400
      %6449 = vst [vmem:[#allocation3 + $0x20] sm:$0xff] %v6401
      %6450 = vst [vmem:[#allocation3 + $0x28] sm:$0xff] %v6402
      %6451 = vst [vmem:[#allocation3 + $0x30] sm:$0xff] %v6403
      %6452 = vst [vmem:[#allocation3 + $0x38] sm:$0xff] %v6404
      %6453 = vst [vmem:[#allocation3 + $0x40] sm:$0xff] %v6405
      %6454 = vst [vmem:[#allocation3 + $0x48] sm:$0xff] %v6406
      %6455 = vst [vmem:[#allocation3 + $0x50] sm:$0xff] %v6407
      %6456 = vst [vmem:[#allocation3 + $0x58] sm:$0xff] %v6408
      %6457 = vst [vmem:[#allocation3 + $0x60] sm:$0xff] %v6409
      %6458 = vst [vmem:[#allocation3 + $0x68] sm:$0xff] %v6410
      %6459 = vst [vmem:[#allocation3 + $0x70] sm:$0xff] %v6411
      %6460 = vst [vmem:[#allocation3 + $0x78] sm:$0xff] %v6412
      %6461 = vst [vmem:[#allocation3 + $0x80] sm:$0xff] %v6413
      %6462 = vst [vmem:[#allocation3 + $0x88] sm:$0xff] %v6414
      %6463 = vst [vmem:[#allocation3 + $0x90] sm:$0xff] %v6415
      %6464 = vst [vmem:[#allocation3 + $0x98] sm:$0xff] %v6416
      %6465 = vst [vmem:[#allocation3 + $0xa0] sm:$0xff] %v6417
      %6466 = vst [vmem:[#allocation3 + $0xa8] sm:$0xff] %v6418
      %6467 = vst [vmem:[#allocation3 + $0xb0] sm:$0xff] %v6419
      %6468 = vst [vmem:[#allocation3 + $0xb8] sm:$0xff] %v6420
      %6469 = vst [vmem:[#allocation3 + $0xc0] sm:$0xff] %v6421
      %6470 = vst [vmem:[#allocation3 + $0xc8] sm:$0xff] %v6422
      %6471 = vst [vmem:[#allocation3 + $0xd0] sm:$0xff] %v6423
      %6472 = vst [vmem:[#allocation3 + $0xd8] sm:$0xff] %v6424
      %6473 = vst [vmem:[#allocation3 + $0xe0] sm:$0xff] %v6425
      %6474 = vst [vmem:[#allocation3 + $0xe8] sm:$0xff] %v6426
      %6475 = vst [vmem:[#allocation3 + $0xf0] sm:$0xff] %v6427
      %6476 = vst [vmem:[#allocation3 + $0xf8] sm:$0xff] %v6428
      %6477 = vst [vmem:[#allocation3 + $0x100] sm:$0xff] %v6429
      %6478 = vst [vmem:[#allocation3 + $0x108] sm:$0xff] %v6430
      %6479 = vst [vmem:[#allocation3 + $0x110] sm:$0xff] %v6431
      %6480 = vst [vmem:[#allocation3 + $0x118] sm:$0xff] %v6432
      %6481 = vst [vmem:[#allocation3 + $0x120] sm:$0xff] %v6433
      %6482 = vst [vmem:[#allocation3 + $0x128] sm:$0xff] %v6434
      %6483 = vst [vmem:[#allocation3 + $0x130] sm:$0xff] %v6435
      %6484 = vst [vmem:[#allocation3 + $0x138] sm:$0xff] %v6436
      %6485 = vst [vmem:[#allocation3 + $0x140] sm:$0xff] %v6437
      %6486 = vst [vmem:[#allocation3 + $0x148] sm:$0xff] %v6438
      %6487 = vst [vmem:[#allocation3 + $0x150] sm:$0xff] %v6439
      %6488 = vst [vmem:[#allocation3 + $0x158] sm:$0xff] %v6440
      %6489 = vst [vmem:[#allocation3 + $0x160] sm:$0xff] %v6441
      %6490 = vst [vmem:[#allocation3 + $0x168] sm:$0xff] %v6442
      %6491 = vst [vmem:[#allocation3 + $0x170] sm:$0xff] %v6443
      %6492 = vst [vmem:[#allocation3 + $0x178] sm:$0xff] %v6444
      %v6493 = vpack.c.bf16 %v5671, %v5672
      %v6494 = vpack.c.bf16 %v5669, %v5670
      %v6495 = vpack.c.bf16 %v5667, %v5668
      %v6496 = vpack.c.bf16 %v5665, %v5666
      %v6497 = vpack.c.bf16 %v5663, %v5664
      %v6498 = vpack.c.bf16 %v5661, %v5662
      %v6499 = vpack.c.bf16 %v5659, %v5660
      %v6500 = vpack.c.bf16 %v5657, %v5658
      %v6501 = vpack.c.bf16 %v5655, %v5656
      %v6502 = vpack.c.bf16 %v5653, %v5654
      %v6503 = vpack.c.bf16 %v5651, %v5652
      %v6504 = vpack.c.bf16 %v5649, %v5650
      %v6505 = vpack.c.bf16 %v5647, %v5648
      %v6506 = vpack.c.bf16 %v5645, %v5646
      %v6507 = vpack.c.bf16 %v5643, %v5644
      %v6508 = vpack.c.bf16 %v5641, %v5642
      %v6509 = vpack.c.bf16 %v5639, %v5640
      %v6510 = vpack.c.bf16 %v5637, %v5638
      %v6511 = vpack.c.bf16 %v5635, %v5636
      %v6512 = vpack.c.bf16 %v5633, %v5634
      %v6513 = vpack.c.bf16 %v5631, %v5632
      %v6514 = vpack.c.bf16 %v5629, %v5630
      %v6515 = vpack.c.bf16 %v5627, %v5628
      %v6516 = vpack.c.bf16 %v5673, %v5626
      %s6517 = scalar_lea.vmem %s2, 128
      %v6518 = vld [vmem:[%s6517] sm:$0xf]
      %v6519 = vld [vmem:[%s6517 + $0x4] sm:$0xf]
      %v6520 = vld [vmem:[%s6517 + $0x8] sm:$0xf]
      %v6521 = vld [vmem:[%s6517 + $0xc] sm:$0xf]
      %v6522 = vld [vmem:[%s6517 + $0x10] sm:$0xf]
      %v6523 = vld [vmem:[%s6517 + $0x14] sm:$0xf]
      %v6524 = vld [vmem:[%s6517 + $0x18] sm:$0xf]
      %v6525 = vld [vmem:[%s6517 + $0x1c] sm:$0xf]
      %v6526 = vld [vmem:[%s6517 + $0x20] sm:$0xf]
      %v6527 = vld [vmem:[%s6517 + $0x24] sm:$0xf]
      %v6528 = vld [vmem:[%s6517 + $0x28] sm:$0xf]
      %v6529 = vld [vmem:[%s6517 + $0x2c] sm:$0xf]
      %v6530 = vld [vmem:[%s6517 + $0x30] sm:$0xf]
      %v6531 = vld [vmem:[%s6517 + $0x34] sm:$0xf]
      %v6532 = vld [vmem:[%s6517 + $0x38] sm:$0xf]
      %v6533 = vld [vmem:[%s6517 + $0x3c] sm:$0xf]
      %v6550 = vunpack.c.l.b16 %v6518
      %v6551 = vunpack.c.l.b16 %v6519
      %v6552 = vunpack.c.l.b16 %v6520
      %v6553 = vunpack.c.l.b16 %v6521
      %v6554 = vunpack.c.l.b16 %v6522
      %v6555 = vunpack.c.l.b16 %v6523
      %v6556 = vunpack.c.l.b16 %v6524
      %v6557 = vunpack.c.l.b16 %v6525
      %v6558 = vunpack.c.l.b16 %v6526
      %v6559 = vunpack.c.l.b16 %v6527
      %v6560 = vunpack.c.l.b16 %v6528
      %v6561 = vunpack.c.l.b16 %v6529
      %v6562 = vunpack.c.l.b16 %v6530
      %v6563 = vunpack.c.l.b16 %v6531
      %v6564 = vunpack.c.l.b16 %v6532
      %v6565 = vunpack.c.l.b16 %v6533
      %v6566 = vpack.c.b16 %v6551, %v6550
      %v6567 = vpack.c.b16 %v6553, %v6552
      %v6568 = vpack.c.b16 %v6555, %v6554
      %v6569 = vpack.c.b16 %v6557, %v6556
      %v6570 = vpack.c.b16 %v6559, %v6558
      %v6571 = vpack.c.b16 %v6561, %v6560
      %v6572 = vpack.c.b16 %v6563, %v6562
      %v6573 = vpack.c.b16 %v6565, %v6564
      %6582 = vmatprep.subr.bf16.mxu0 0
      %6583 = vmatpush1.bf16.msra.mxu0 %v6573
      %6584 = vmatprep.subr.bf16.mxu0 0
      %6585 = vmatpush1.bf16.msra.mxu0 %v6572
      %6586 = vmatprep.subr.bf16.mxu0 0
      %6587 = vmatpush1.bf16.msra.mxu0 %v6571
      %6588 = vmatprep.subr.bf16.mxu0 0
      %6589 = vmatpush1.bf16.msra.mxu0 %v6570
      %6590 = vmatprep.subr.bf16.mxu0 0
      %6591 = vmatpush1.bf16.msra.mxu0 %v6569
      %6592 = vmatprep.subr.bf16.mxu0 0
      %6593 = vmatpush1.bf16.msra.mxu0 %v6568
      %6594 = vmatprep.subr.bf16.mxu0 0
      %6595 = vmatpush1.bf16.msra.mxu0 %v6567
      %6596 = vmatprep.subr.bf16.mxu0 0
      %6597 = vmatpush1.bf16.msra.mxu0 %v6566
      %6598 = vmatprep.subr.bf16.mxu0 0
      %6599 = vmatpush2.bf16.msra.mxu0 0
      %6600 = vmatprep.subr.bf16.mxu0 0
      %6601 = vmatpush2.bf16.msra.mxu0 0
      %6602 = vmatprep.subr.bf16.mxu0 0
      %6603 = vmatpush2.bf16.msra.mxu0 0
      %6604 = vmatprep.subr.bf16.mxu0 0
      %6605 = vmatpush2.bf16.msra.mxu0 0
      %6606 = vmatprep.subr.bf16.mxu0 0
      %6607 = vmatpush2.bf16.msra.mxu0 0
      %6608 = vmatprep.subr.bf16.mxu0 0
      %6609 = vmatpush2.bf16.msra.mxu0 0
      %6610 = vmatprep.subr.bf16.mxu0 0
      %6611 = vmatpush2.bf16.msra.mxu0 0
      %6612 = vmatprep.subr.bf16.mxu0 0
      %6613 = vmatpush2.bf16.msra.mxu0 0
      %6614 = vmatprep.mubr.bf16.mxu0 0
      %6615 = vmatmul.mubr.bf16.gmra.mxu0 %v6493
      %v6616 = vpop.f32.mrf.mxu0
      %v6617 = vadd.f32 0.0, %v6616
      %v6618 = vpop.f32.mrf.mxu0
      %v6619 = vpop.f32.mrf.mxu0
      %v6620 = vadd.f32 0.0, %v6619
      %v6621 = vpop.f32.mrf.mxu0
      %6622 = vmatprep.mubr.bf16.mxu0 0
      %6623 = vmatmul.mubr.bf16.gmra.mxu0 %v6494
      %v6624 = vpop.f32.mrf.mxu0
      %v6625 = vadd.f32 0.0, %v6624
      %v6626 = vpop.f32.mrf.mxu0
      %v6627 = vpop.f32.mrf.mxu0
      %v6628 = vadd.f32 0.0, %v6627
      %v6629 = vpop.f32.mrf.mxu0
      %6630 = vmatprep.mubr.bf16.mxu0 0
      %6631 = vmatmul.mubr.bf16.gmra.mxu0 %v6495
      %v6632 = vpop.f32.mrf.mxu0
      %v6633 = vadd.f32 0.0, %v6632
      %v6634 = vpop.f32.mrf.mxu0
      %v6635 = vpop.f32.mrf.mxu0
      %v6636 = vadd.f32 0.0, %v6635
      %v6637 = vpop.f32.mrf.mxu0
      %6638 = vmatprep.mubr.bf16.mxu0 0
      %6639 = vmatmul.mubr.bf16.gmra.mxu0 %v6496
      %v6640 = vpop.f32.mrf.mxu0
      %v6641 = vadd.f32 0.0, %v6640
      %v6642 = vpop.f32.mrf.mxu0
      %v6643 = vpop.f32.mrf.mxu0
      %v6644 = vadd.f32 0.0, %v6643
      %v6645 = vpop.f32.mrf.mxu0
      %6646 = vmatprep.mubr.bf16.mxu0 0
      %6647 = vmatmul.mubr.bf16.gmra.mxu0 %v6497
      %v6648 = vpop.f32.mrf.mxu0
      %v6649 = vadd.f32 0.0, %v6648
      %v6650 = vpop.f32.mrf.mxu0
      %v6651 = vpop.f32.mrf.mxu0
      %v6652 = vadd.f32 0.0, %v6651
      %v6653 = vpop.f32.mrf.mxu0
      %6654 = vmatprep.mubr.bf16.mxu0 0
      %6655 = vmatmul.mubr.bf16.gmra.mxu0 %v6498
      %v6656 = vpop.f32.mrf.mxu0
      %v6657 = vadd.f32 0.0, %v6656
      %v6658 = vpop.f32.mrf.mxu0
      %v6659 = vpop.f32.mrf.mxu0
      %v6660 = vadd.f32 0.0, %v6659
      %v6661 = vpop.f32.mrf.mxu0
      %6662 = vmatprep.mubr.bf16.mxu0 0
      %6663 = vmatmul.mubr.bf16.gmra.mxu0 %v6499
      %v6664 = vpop.f32.mrf.mxu0
      %v6665 = vadd.f32 0.0, %v6664
      %v6666 = vpop.f32.mrf.mxu0
      %v6667 = vpop.f32.mrf.mxu0
      %v6668 = vadd.f32 0.0, %v6667
      %v6669 = vpop.f32.mrf.mxu0
      %6670 = vmatprep.mubr.bf16.mxu0 0
      %6671 = vmatmul.mubr.bf16.gmra.mxu0 %v6500
      %v6672 = vpop.f32.mrf.mxu0
      %v6673 = vadd.f32 0.0, %v6672
      %v6674 = vpop.f32.mrf.mxu0
      %v6675 = vpop.f32.mrf.mxu0
      %v6676 = vadd.f32 0.0, %v6675
      %v6677 = vpop.f32.mrf.mxu0
      %6678 = vmatprep.mubr.bf16.mxu0 0
      %6679 = vmatmul.mubr.bf16.gmra.mxu0 %v6501
      %v6680 = vpop.f32.mrf.mxu0
      %v6681 = vadd.f32 0.0, %v6680
      %v6682 = vpop.f32.mrf.mxu0
      %v6683 = vpop.f32.mrf.mxu0
      %v6684 = vadd.f32 0.0, %v6683
      %v6685 = vpop.f32.mrf.mxu0
      %6686 = vmatprep.mubr.bf16.mxu0 0
      %6687 = vmatmul.mubr.bf16.gmra.mxu0 %v6502
      %v6688 = vpop.f32.mrf.mxu0
      %v6689 = vadd.f32 0.0, %v6688
      %v6690 = vpop.f32.mrf.mxu0
      %v6691 = vpop.f32.mrf.mxu0
      %v6692 = vadd.f32 0.0, %v6691
      %v6693 = vpop.f32.mrf.mxu0
      %6694 = vmatprep.mubr.bf16.mxu0 0
      %6695 = vmatmul.mubr.bf16.gmra.mxu0 %v6503
      %v6696 = vpop.f32.mrf.mxu0
      %v6697 = vadd.f32 0.0, %v6696
      %v6698 = vpop.f32.mrf.mxu0
      %v6699 = vpop.f32.mrf.mxu0
      %v6700 = vadd.f32 0.0, %v6699
      %v6701 = vpop.f32.mrf.mxu0
      %6702 = vmatprep.mubr.bf16.mxu0 0
      %6703 = vmatmul.mubr.bf16.gmra.mxu0 %v6504
      %v6704 = vpop.f32.mrf.mxu0
      %v6705 = vadd.f32 0.0, %v6704
      %v6706 = vpop.f32.mrf.mxu0
      %v6707 = vpop.f32.mrf.mxu0
      %v6708 = vadd.f32 0.0, %v6707
      %v6709 = vpop.f32.mrf.mxu0
      %6710 = vmatprep.mubr.bf16.mxu0 0
      %6711 = vmatmul.mubr.bf16.gmra.mxu0 %v6505
      %v6712 = vpop.f32.mrf.mxu0
      %v6713 = vadd.f32 0.0, %v6712
      %v6714 = vpop.f32.mrf.mxu0
      %v6715 = vpop.f32.mrf.mxu0
      %v6716 = vadd.f32 0.0, %v6715
      %v6717 = vpop.f32.mrf.mxu0
      %6718 = vmatprep.mubr.bf16.mxu0 0
      %6719 = vmatmul.mubr.bf16.gmra.mxu0 %v6506
      %v6720 = vpop.f32.mrf.mxu0
      %v6721 = vadd.f32 0.0, %v6720
      %v6722 = vpop.f32.mrf.mxu0
      %v6723 = vpop.f32.mrf.mxu0
      %v6724 = vadd.f32 0.0, %v6723
      %v6725 = vpop.f32.mrf.mxu0
      %6726 = vmatprep.mubr.bf16.mxu0 0
      %6727 = vmatmul.mubr.bf16.gmra.mxu0 %v6507
      %v6728 = vpop.f32.mrf.mxu0
      %v6729 = vadd.f32 0.0, %v6728
      %v6730 = vpop.f32.mrf.mxu0
      %v6731 = vpop.f32.mrf.mxu0
      %v6732 = vadd.f32 0.0, %v6731
      %v6733 = vpop.f32.mrf.mxu0
      %6734 = vmatprep.mubr.bf16.mxu0 0
      %6735 = vmatmul.mubr.bf16.gmra.mxu0 %v6508
      %v6736 = vpop.f32.mrf.mxu0
      %v6737 = vadd.f32 0.0, %v6736
      %v6738 = vpop.f32.mrf.mxu0
      %v6739 = vpop.f32.mrf.mxu0
      %v6740 = vadd.f32 0.0, %v6739
      %v6741 = vpop.f32.mrf.mxu0
      %6742 = vmatprep.mubr.bf16.mxu0 0
      %6743 = vmatmul.mubr.bf16.gmra.mxu0 %v6509
      %v6744 = vpop.f32.mrf.mxu0
      %v6745 = vadd.f32 0.0, %v6744
      %v6746 = vpop.f32.mrf.mxu0
      %v6747 = vpop.f32.mrf.mxu0
      %v6748 = vadd.f32 0.0, %v6747
      %v6749 = vpop.f32.mrf.mxu0
      %6750 = vmatprep.mubr.bf16.mxu0 0
      %6751 = vmatmul.mubr.bf16.gmra.mxu0 %v6510
      %v6752 = vpop.f32.mrf.mxu0
      %v6753 = vadd.f32 0.0, %v6752
      %v6754 = vpop.f32.mrf.mxu0
      %v6755 = vpop.f32.mrf.mxu0
      %v6756 = vadd.f32 0.0, %v6755
      %v6757 = vpop.f32.mrf.mxu0
      %6758 = vmatprep.mubr.bf16.mxu0 0
      %6759 = vmatmul.mubr.bf16.gmra.mxu0 %v6511
      %v6760 = vpop.f32.mrf.mxu0
      %v6761 = vadd.f32 0.0, %v6760
      %v6762 = vpop.f32.mrf.mxu0
      %v6763 = vpop.f32.mrf.mxu0
      %v6764 = vadd.f32 0.0, %v6763
      %v6765 = vpop.f32.mrf.mxu0
      %6766 = vmatprep.mubr.bf16.mxu0 0
      %6767 = vmatmul.mubr.bf16.gmra.mxu0 %v6512
      %v6768 = vpop.f32.mrf.mxu0
      %v6769 = vadd.f32 0.0, %v6768
      %v6770 = vpop.f32.mrf.mxu0
      %v6771 = vpop.f32.mrf.mxu0
      %v6772 = vadd.f32 0.0, %v6771
      %v6773 = vpop.f32.mrf.mxu0
      %6774 = vmatprep.mubr.bf16.mxu0 0
      %6775 = vmatmul.mubr.bf16.gmra.mxu0 %v6513
      %v6776 = vpop.f32.mrf.mxu0
      %v6777 = vadd.f32 0.0, %v6776
      %v6778 = vpop.f32.mrf.mxu0
      %v6779 = vpop.f32.mrf.mxu0
      %v6780 = vadd.f32 0.0, %v6779
      %v6781 = vpop.f32.mrf.mxu0
      %6782 = vmatprep.mubr.bf16.mxu0 0
      %6783 = vmatmul.mubr.bf16.gmra.mxu0 %v6514
      %v6784 = vpop.f32.mrf.mxu0
      %v6785 = vadd.f32 0.0, %v6784
      %v6786 = vpop.f32.mrf.mxu0
      %v6787 = vpop.f32.mrf.mxu0
      %v6788 = vadd.f32 0.0, %v6787
      %v6789 = vpop.f32.mrf.mxu0
      %6790 = vmatprep.mubr.bf16.mxu0 0
      %6791 = vmatmul.mubr.bf16.gmra.mxu0 %v6515
      %v6792 = vpop.f32.mrf.mxu0
      %v6793 = vadd.f32 0.0, %v6792
      %v6794 = vpop.f32.mrf.mxu0
      %v6795 = vpop.f32.mrf.mxu0
      %v6796 = vadd.f32 0.0, %v6795
      %v6797 = vpop.f32.mrf.mxu0
      %6798 = vmatprep.mubr.bf16.mxu0 0
      %6799 = vmatmul.mubr.bf16.gmra.mxu0 %v6516
      %v6800 = vpop.f32.mrf.mxu0
      %v6801 = vadd.f32 0.0, %v6800
      %v6802 = vpop.f32.mrf.mxu0
      %v6803 = vpop.f32.mrf.mxu0
      %v6804 = vadd.f32 0.0, %v6803
      %v6805 = vpop.f32.mrf.mxu0
      %6806 = vdwg.mxu0
      %v6807 = vld [vmem:[#allocation3] sm:$0xff]
      %v6808 = vld [vmem:[#allocation3 + $0x8] sm:$0xff]
      %v6809 = vld [vmem:[#allocation3 + $0x10] sm:$0xff]
      %v6810 = vld [vmem:[#allocation3 + $0x18] sm:$0xff]
      %v6811 = vld [vmem:[#allocation3 + $0x20] sm:$0xff]
      %v6812 = vld [vmem:[#allocation3 + $0x28] sm:$0xff]
      %v6813 = vld [vmem:[#allocation3 + $0x30] sm:$0xff]
      %v6814 = vld [vmem:[#allocation3 + $0x38] sm:$0xff]
      %v6815 = vld [vmem:[#allocation3 + $0x40] sm:$0xff]
      %v6816 = vld [vmem:[#allocation3 + $0x48] sm:$0xff]
      %v6817 = vld [vmem:[#allocation3 + $0x50] sm:$0xff]
      %v6818 = vld [vmem:[#allocation3 + $0x58] sm:$0xff]
      %v6819 = vld [vmem:[#allocation3 + $0x60] sm:$0xff]
      %v6820 = vld [vmem:[#allocation3 + $0x68] sm:$0xff]
      %v6821 = vld [vmem:[#allocation3 + $0x70] sm:$0xff]
      %v6822 = vld [vmem:[#allocation3 + $0x78] sm:$0xff]
      %v6823 = vld [vmem:[#allocation3 + $0x80] sm:$0xff]
      %v6824 = vld [vmem:[#allocation3 + $0x88] sm:$0xff]
      %v6825 = vld [vmem:[#allocation3 + $0x90] sm:$0xff]
      %v6826 = vld [vmem:[#allocation3 + $0x98] sm:$0xff]
      %v6827 = vld [vmem:[#allocation3 + $0xa0] sm:$0xff]
      %v6828 = vld [vmem:[#allocation3 + $0xa8] sm:$0xff]
      %v6829 = vld [vmem:[#allocation3 + $0xb0] sm:$0xff]
      %v6830 = vld [vmem:[#allocation3 + $0xb8] sm:$0xff]
      %v6831 = vld [vmem:[#allocation3 + $0xc0] sm:$0xff]
      %v6832 = vld [vmem:[#allocation3 + $0xc8] sm:$0xff]
      %v6833 = vld [vmem:[#allocation3 + $0xd0] sm:$0xff]
      %v6834 = vld [vmem:[#allocation3 + $0xd8] sm:$0xff]
      %v6835 = vld [vmem:[#allocation3 + $0xe0] sm:$0xff]
      %v6836 = vld [vmem:[#allocation3 + $0xe8] sm:$0xff]
      %v6837 = vld [vmem:[#allocation3 + $0xf0] sm:$0xff]
      %v6838 = vld [vmem:[#allocation3 + $0xf8] sm:$0xff]
      %v6839 = vld [vmem:[#allocation3 + $0x100] sm:$0xff]
      %v6840 = vld [vmem:[#allocation3 + $0x108] sm:$0xff]
      %v6841 = vld [vmem:[#allocation3 + $0x110] sm:$0xff]
      %v6842 = vld [vmem:[#allocation3 + $0x118] sm:$0xff]
      %v6843 = vld [vmem:[#allocation3 + $0x120] sm:$0xff]
      %v6844 = vld [vmem:[#allocation3 + $0x128] sm:$0xff]
      %v6845 = vld [vmem:[#allocation3 + $0x130] sm:$0xff]
      %v6846 = vld [vmem:[#allocation3 + $0x138] sm:$0xff]
      %v6847 = vld [vmem:[#allocation3 + $0x140] sm:$0xff]
      %v6848 = vld [vmem:[#allocation3 + $0x148] sm:$0xff]
      %v6849 = vld [vmem:[#allocation3 + $0x150] sm:$0xff]
      %v6850 = vld [vmem:[#allocation3 + $0x158] sm:$0xff]
      %v6851 = vld [vmem:[#allocation3 + $0x160] sm:$0xff]
      %v6852 = vld [vmem:[#allocation3 + $0x168] sm:$0xff]
      %v6853 = vld [vmem:[#allocation3 + $0x170] sm:$0xff]
      %v6854 = vld [vmem:[#allocation3 + $0x178] sm:$0xff]
      %v6855 = vadd.f32 %v6807, %v6617
      %v6856 = vadd.f32 %v6808, %v6620
      %v6857 = vadd.f32 %v6809, %v6625
      %v6858 = vadd.f32 %v6810, %v6628
      %v6859 = vadd.f32 %v6811, %v6633
      %v6860 = vadd.f32 %v6812, %v6636
      %v6861 = vadd.f32 %v6813, %v6641
      %v6862 = vadd.f32 %v6814, %v6644
      %v6863 = vadd.f32 %v6815, %v6649
      %v6864 = vadd.f32 %v6816, %v6652
      %v6865 = vadd.f32 %v6817, %v6657
      %v6866 = vadd.f32 %v6818, %v6660
      %v6867 = vadd.f32 %v6819, %v6665
      %v6868 = vadd.f32 %v6820, %v6668
      %v6869 = vadd.f32 %v6821, %v6673
      %v6870 = vadd.f32 %v6822, %v6676
      %v6871 = vadd.f32 %v6823, %v6681
      %v6872 = vadd.f32 %v6824, %v6684
      %v6873 = vadd.f32 %v6825, %v6689
      %v6874 = vadd.f32 %v6826, %v6692
      %v6875 = vadd.f32 %v6827, %v6697
      %v6876 = vadd.f32 %v6828, %v6700
      %v6877 = vadd.f32 %v6829, %v6705
      %v6878 = vadd.f32 %v6830, %v6708
      %v6879 = vadd.f32 %v6831, %v6713
      %v6880 = vadd.f32 %v6832, %v6716
      %v6881 = vadd.f32 %v6833, %v6721
      %v6882 = vadd.f32 %v6834, %v6724
      %v6883 = vadd.f32 %v6835, %v6729
      %v6884 = vadd.f32 %v6836, %v6732
      %v6885 = vadd.f32 %v6837, %v6737
      %v6886 = vadd.f32 %v6838, %v6740
      %v6887 = vadd.f32 %v6839, %v6745
      %v6888 = vadd.f32 %v6840, %v6748
      %v6889 = vadd.f32 %v6841, %v6753
      %v6890 = vadd.f32 %v6842, %v6756
      %v6891 = vadd.f32 %v6843, %v6761
      %v6892 = vadd.f32 %v6844, %v6764
      %v6893 = vadd.f32 %v6845, %v6769
      %v6894 = vadd.f32 %v6846, %v6772
      %v6895 = vadd.f32 %v6847, %v6777
      %v6896 = vadd.f32 %v6848, %v6780
      %v6897 = vadd.f32 %v6849, %v6785
      %v6898 = vadd.f32 %v6850, %v6788
      %v6899 = vadd.f32 %v6851, %v6793
      %v6900 = vadd.f32 %v6852, %v6796
      %v6901 = vadd.f32 %v6853, %v6801
      %v6902 = vadd.f32 %v6854, %v6804
      %6903 = vst [vmem:[#allocation3] sm:$0xff] %v6855
      %6904 = vst [vmem:[#allocation3 + $0x8] sm:$0xff] %v6856
      %6905 = vst [vmem:[#allocation3 + $0x10] sm:$0xff] %v6857
      %6906 = vst [vmem:[#allocation3 + $0x18] sm:$0xff] %v6858
      %6907 = vst [vmem:[#allocation3 + $0x20] sm:$0xff] %v6859
      %6908 = vst [vmem:[#allocation3 + $0x28] sm:$0xff] %v6860
      %6909 = vst [vmem:[#allocation3 + $0x30] sm:$0xff] %v6861
      %6910 = vst [vmem:[#allocation3 + $0x38] sm:$0xff] %v6862
      %6911 = vst [vmem:[#allocation3 + $0x40] sm:$0xff] %v6863
      %6912 = vst [vmem:[#allocation3 + $0x48] sm:$0xff] %v6864
      %6913 = vst [vmem:[#allocation3 + $0x50] sm:$0xff] %v6865
      %6914 = vst [vmem:[#allocation3 + $0x58] sm:$0xff] %v6866
      %6915 = vst [vmem:[#allocation3 + $0x60] sm:$0xff] %v6867
      %6916 = vst [vmem:[#allocation3 + $0x68] sm:$0xff] %v6868
      %6917 = vst [vmem:[#allocation3 + $0x70] sm:$0xff] %v6869
      %6918 = vst [vmem:[#allocation3 + $0x78] sm:$0xff] %v6870
      %6919 = vst [vmem:[#allocation3 + $0x80] sm:$0xff] %v6871
      %6920 = vst [vmem:[#allocation3 + $0x88] sm:$0xff] %v6872
      %6921 = vst [vmem:[#allocation3 + $0x90] sm:$0xff] %v6873
      %6922 = vst [vmem:[#allocation3 + $0x98] sm:$0xff] %v6874
      %6923 = vst [vmem:[#allocation3 + $0xa0] sm:$0xff] %v6875
      %6924 = vst [vmem:[#allocation3 + $0xa8] sm:$0xff] %v6876
      %6925 = vst [vmem:[#allocation3 + $0xb0] sm:$0xff] %v6877
      %6926 = vst [vmem:[#allocation3 + $0xb8] sm:$0xff] %v6878
      %6927 = vst [vmem:[#allocation3 + $0xc0] sm:$0xff] %v6879
      %6928 = vst [vmem:[#allocation3 + $0xc8] sm:$0xff] %v6880
      %6929 = vst [vmem:[#allocation3 + $0xd0] sm:$0xff] %v6881
      %6930 = vst [vmem:[#allocation3 + $0xd8] sm:$0xff] %v6882
      %6931 = vst [vmem:[#allocation3 + $0xe0] sm:$0xff] %v6883
      %6932 = vst [vmem:[#allocation3 + $0xe8] sm:$0xff] %v6884
      %6933 = vst [vmem:[#allocation3 + $0xf0] sm:$0xff] %v6885
      %6934 = vst [vmem:[#allocation3 + $0xf8] sm:$0xff] %v6886
      %6935 = vst [vmem:[#allocation3 + $0x100] sm:$0xff] %v6887
      %6936 = vst [vmem:[#allocation3 + $0x108] sm:$0xff] %v6888
      %6937 = vst [vmem:[#allocation3 + $0x110] sm:$0xff] %v6889
      %6938 = vst [vmem:[#allocation3 + $0x118] sm:$0xff] %v6890
      %6939 = vst [vmem:[#allocation3 + $0x120] sm:$0xff] %v6891
      %6940 = vst [vmem:[#allocation3 + $0x128] sm:$0xff] %v6892
      %6941 = vst [vmem:[#allocation3 + $0x130] sm:$0xff] %v6893
      %6942 = vst [vmem:[#allocation3 + $0x138] sm:$0xff] %v6894
      %6943 = vst [vmem:[#allocation3 + $0x140] sm:$0xff] %v6895
      %6944 = vst [vmem:[#allocation3 + $0x148] sm:$0xff] %v6896
      %6945 = vst [vmem:[#allocation3 + $0x150] sm:$0xff] %v6897
      %6946 = vst [vmem:[#allocation3 + $0x158] sm:$0xff] %v6898
      %6947 = vst [vmem:[#allocation3 + $0x160] sm:$0xff] %v6899
      %6948 = vst [vmem:[#allocation3 + $0x168] sm:$0xff] %v6900
      %6949 = vst [vmem:[#allocation3 + $0x170] sm:$0xff] %v6901
      %6950 = vst [vmem:[#allocation3 + $0x178] sm:$0xff] %v6902
      %v6951 = vld [vmem:[#allocation2 + $0x18] sm:$0xff]
      %v6952 = vld [vmem:[#allocation2 + $0x20] sm:$0xff]
      %v6953 = vld [vmem:[#allocation2 + $0x28] sm:$0xff]
      %v6954 = vld [vmem:[#allocation2 + $0x30] sm:$0xff]
      %v6955 = vld [vmem:[#allocation2 + $0x38] sm:$0xff]
      %v6956 = vld [vmem:[#allocation2 + $0x40] sm:$0xff]
      %v6957 = vld [vmem:[#allocation2 + $0x48] sm:$0xff]
      %v6958 = vld [vmem:[#allocation2 + $0x50] sm:$0xff]
      %v6959 = vld [vmem:[#allocation2 + $0x58] sm:$0xff]
      %v6960 = vld [vmem:[#allocation2 + $0x60] sm:$0xff]
      %v6961 = vld [vmem:[#allocation2 + $0x68] sm:$0xff]
      %v6962 = vld [vmem:[#allocation2 + $0x70] sm:$0xff]
      %v6963 = vld [vmem:[#allocation2 + $0x78] sm:$0xff]
      %v6964 = vld [vmem:[#allocation2 + $0x80] sm:$0xff]
      %v6965 = vld [vmem:[#allocation2 + $0x88] sm:$0xff]
      %v6966 = vld [vmem:[#allocation2 + $0x90] sm:$0xff]
      %v6967 = vld [vmem:[#allocation2 + $0x98] sm:$0xff]
      %v6968 = vld [vmem:[#allocation2 + $0xa0] sm:$0xff]
      %v6969 = vld [vmem:[#allocation2 + $0xa8] sm:$0xff]
      %v6970 = vld [vmem:[#allocation2 + $0xb0] sm:$0xff]
      %v6971 = vld [vmem:[#allocation2 + $0xb8] sm:$0xff]
      %v6972 = vld [vmem:[#allocation2 + $0xc0] sm:$0xff]
      %v6973 = vld [vmem:[#allocation2 + $0xc8] sm:$0xff]
      %v6974 = vld [vmem:[#allocation2 + $0xd0] sm:$0xff]
      %v6975 = vld [vmem:[#allocation2 + $0xd8] sm:$0xff]
      %v6976 = vld [vmem:[#allocation2 + $0xe0] sm:$0xff]
      %v6977 = vld [vmem:[#allocation2 + $0xe8] sm:$0xff]
      %v6978 = vld [vmem:[#allocation2 + $0xf0] sm:$0xff]
      %v6979 = vld [vmem:[#allocation2 + $0xf8] sm:$0xff]
      %v6980 = vld [vmem:[#allocation2 + $0x100] sm:$0xff]
      %v6981 = vld [vmem:[#allocation2 + $0x108] sm:$0xff]
      %v6982 = vld [vmem:[#allocation2 + $0x110] sm:$0xff]
      %v6983 = vld [vmem:[#allocation2 + $0x118] sm:$0xff]
      %v6984 = vld [vmem:[#allocation2 + $0x120] sm:$0xff]
      %v6985 = vld [vmem:[#allocation2 + $0x128] sm:$0xff]
      %v6986 = vld [vmem:[#allocation2 + $0x130] sm:$0xff]
      %v6987 = vld [vmem:[#allocation2 + $0x138] sm:$0xff]
      %v6988 = vld [vmem:[#allocation2 + $0x140] sm:$0xff]
      %v6989 = vld [vmem:[#allocation2 + $0x148] sm:$0xff]
      %v6990 = vld [vmem:[#allocation2 + $0x150] sm:$0xff]
      %v6991 = vld [vmem:[#allocation2 + $0x158] sm:$0xff]
      %v6992 = vld [vmem:[#allocation2 + $0x160] sm:$0xff]
      %v6993 = vld [vmem:[#allocation2 + $0x168] sm:$0xff]
      %v6994 = vld [vmem:[#allocation2 + $0x170] sm:$0xff]
      %v6995 = vld [vmem:[#allocation2 + $0x178] sm:$0xff]
      %v6996 = vld [vmem:[#allocation2 + $0x180] sm:$0xff]
      %v6997 = vld [vmem:[#allocation2 + $0x188] sm:$0xff]
      %v6998 = vld [vmem:[#allocation2 + $0x190] sm:$0xff]
      %v6999 = vrot.slane %v6951, 7
      %v7000 = vrot.slane %v6952, 7
      %v7001 = vrot.slane %v6953, 7
      %v7002 = vrot.slane %v6954, 7
      %v7003 = vrot.slane %v6955, 7
      %v7004 = vrot.slane %v6956, 7
      %v7005 = vrot.slane %v6957, 7
      %v7006 = vrot.slane %v6958, 7
      %v7007 = vrot.slane %v6959, 7
      %v7008 = vrot.slane %v6960, 7
      %v7009 = vrot.slane %v6961, 7
      %v7010 = vrot.slane %v6962, 7
      %v7011 = vrot.slane %v6963, 7
      %v7012 = vrot.slane %v6964, 7
      %v7013 = vrot.slane %v6965, 7
      %v7014 = vrot.slane %v6966, 7
      %v7015 = vrot.slane %v6967, 7
      %v7016 = vrot.slane %v6968, 7
      %v7017 = vrot.slane %v6969, 7
      %v7018 = vrot.slane %v6970, 7
      %v7019 = vrot.slane %v6971, 7
      %v7020 = vrot.slane %v6972, 7
      %v7021 = vrot.slane %v6973, 7
      %v7022 = vrot.slane %v6974, 7
      %v7023 = vrot.slane %v6975, 7
      %v7024 = vrot.slane %v6976, 7
      %v7025 = vrot.slane %v6977, 7
      %v7026 = vrot.slane %v6978, 7
      %v7027 = vrot.slane %v6979, 7
      %v7028 = vrot.slane %v6980, 7
      %v7029 = vrot.slane %v6981, 7
      %v7030 = vrot.slane %v6982, 7
      %v7031 = vrot.slane %v6983, 7
      %v7032 = vrot.slane %v6984, 7
      %v7033 = vrot.slane %v6985, 7
      %v7034 = vrot.slane %v6986, 7
      %v7035 = vrot.slane %v6987, 7
      %v7036 = vrot.slane %v6988, 7
      %v7037 = vrot.slane %v6989, 7
      %v7038 = vrot.slane %v6990, 7
      %v7039 = vrot.slane %v6991, 7
      %v7040 = vrot.slane %v6992, 7
      %v7041 = vrot.slane %v6993, 7
      %v7042 = vrot.slane %v6994, 7
      %v7043 = vrot.slane %v6995, 7
      %v7044 = vrot.slane %v6996, 7
      %v7045 = vrot.slane %v6997, 7
      %v7046 = vrot.slane %v6998, 7
      %v7047 = vsel %vm303, %v7045, %v7046
      %v7048 = vsel %vm303, %v7044, %v7045
      %v7049 = vsel %vm303, %v7043, %v7044
      %v7050 = vsel %vm303, %v7042, %v7043
      %v7051 = vsel %vm303, %v7041, %v7042
      %v7052 = vsel %vm303, %v7040, %v7041
      %v7053 = vsel %vm303, %v7039, %v7040
      %v7054 = vsel %vm303, %v7038, %v7039
      %v7055 = vsel %vm303, %v7037, %v7038
      %v7056 = vsel %vm303, %v7036, %v7037
      %v7057 = vsel %vm303, %v7035, %v7036
      %v7058 = vsel %vm303, %v7034, %v7035
      %v7059 = vsel %vm303, %v7033, %v7034
      %v7060 = vsel %vm303, %v7032, %v7033
      %v7061 = vsel %vm303, %v7031, %v7032
      %v7062 = vsel %vm303, %v7030, %v7031
      %v7063 = vsel %vm303, %v7029, %v7030
      %v7064 = vsel %vm303, %v7028, %v7029
      %v7065 = vsel %vm303, %v7027, %v7028
      %v7066 = vsel %vm303, %v7026, %v7027
      %v7067 = vsel %vm303, %v7025, %v7026
      %v7068 = vsel %vm303, %v7024, %v7025
      %v7069 = vsel %vm303, %v7023, %v7024
      %v7070 = vsel %vm303, %v7022, %v7023
      %v7071 = vsel %vm303, %v7021, %v7022
      %v7072 = vsel %vm303, %v7020, %v7021
      %v7073 = vsel %vm303, %v7019, %v7020
      %v7074 = vsel %vm303, %v7018, %v7019
      %v7075 = vsel %vm303, %v7017, %v7018
      %v7076 = vsel %vm303, %v7016, %v7017
      %v7077 = vsel %vm303, %v7015, %v7016
      %v7078 = vsel %vm303, %v7014, %v7015
      %v7079 = vsel %vm303, %v7013, %v7014
      %v7080 = vsel %vm303, %v7012, %v7013
      %v7081 = vsel %vm303, %v7011, %v7012
      %v7082 = vsel %vm303, %v7010, %v7011
      %v7083 = vsel %vm303, %v7009, %v7010
      %v7084 = vsel %vm303, %v7008, %v7009
      %v7085 = vsel %vm303, %v7007, %v7008
      %v7086 = vsel %vm303, %v7006, %v7007
      %v7087 = vsel %vm303, %v7005, %v7006
      %v7088 = vsel %vm303, %v7004, %v7005
      %v7089 = vsel %vm303, %v7003, %v7004
      %v7090 = vsel %vm303, %v7002, %v7003
      %v7091 = vsel %vm303, %v7001, %v7002
      %v7092 = vsel %vm303, %v7000, %v7001
      %v7093 = vsel %vm303, %v6999, %v7000
      %v7094 = vsel %vm303, %v7046, %v6999
      %v7095 = vrot.slane %v6951, 1
      %v7096 = vrot.slane %v6952, 1
      %v7097 = vrot.slane %v6953, 1
      %v7098 = vrot.slane %v6954, 1
      %v7099 = vrot.slane %v6955, 1
      %v7100 = vrot.slane %v6956, 1
      %v7101 = vrot.slane %v6957, 1
      %v7102 = vrot.slane %v6958, 1
      %v7103 = vrot.slane %v6959, 1
      %v7104 = vrot.slane %v6960, 1
      %v7105 = vrot.slane %v6961, 1
      %v7106 = vrot.slane %v6962, 1
      %v7107 = vrot.slane %v6963, 1
      %v7108 = vrot.slane %v6964, 1
      %v7109 = vrot.slane %v6965, 1
      %v7110 = vrot.slane %v6966, 1
      %v7111 = vrot.slane %v6967, 1
      %v7112 = vrot.slane %v6968, 1
      %v7113 = vrot.slane %v6969, 1
      %v7114 = vrot.slane %v6970, 1
      %v7115 = vrot.slane %v6971, 1
      %v7116 = vrot.slane %v6972, 1
      %v7117 = vrot.slane %v6973, 1
      %v7118 = vrot.slane %v6974, 1
      %v7119 = vrot.slane %v6975, 1
      %v7120 = vrot.slane %v6976, 1
      %v7121 = vrot.slane %v6977, 1
      %v7122 = vrot.slane %v6978, 1
      %v7123 = vrot.slane %v6979, 1
      %v7124 = vrot.slane %v6980, 1
      %v7125 = vrot.slane %v6981, 1
      %v7126 = vrot.slane %v6982, 1
      %v7127 = vrot.slane %v6983, 1
      %v7128 = vrot.slane %v6984, 1
      %v7129 = vrot.slane %v6985, 1
      %v7130 = vrot.slane %v6986, 1
      %v7131 = vrot.slane %v6987, 1
      %v7132 = vrot.slane %v6988, 1
      %v7133 = vrot.slane %v6989, 1
      %v7134 = vrot.slane %v6990, 1
      %v7135 = vrot.slane %v6991, 1
      %v7136 = vrot.slane %v6992, 1
      %v7137 = vrot.slane %v6993, 1
      %v7138 = vrot.slane %v6994, 1
      %v7139 = vrot.slane %v6995, 1
      %v7140 = vrot.slane %v6996, 1
      %v7141 = vrot.slane %v6997, 1
      %v7142 = vrot.slane %v6998, 1
      %v7143 = vsel %vm400, %v7141, %v7142
      %v7144 = vsel %vm400, %v7140, %v7141
      %v7145 = vsel %vm400, %v7139, %v7140
      %v7146 = vsel %vm400, %v7138, %v7139
      %v7147 = vsel %vm400, %v7137, %v7138
      %v7148 = vsel %vm400, %v7136, %v7137
      %v7149 = vsel %vm400, %v7135, %v7136
      %v7150 = vsel %vm400, %v7134, %v7135
      %v7151 = vsel %vm400, %v7133, %v7134
      %v7152 = vsel %vm400, %v7132, %v7133
      %v7153 = vsel %vm400, %v7131, %v7132
      %v7154 = vsel %vm400, %v7130, %v7131
      %v7155 = vsel %vm400, %v7129, %v7130
      %v7156 = vsel %vm400, %v7128, %v7129
      %v7157 = vsel %vm400, %v7127, %v7128
      %v7158 = vsel %vm400, %v7126, %v7127
      %v7159 = vsel %vm400, %v7125, %v7126
      %v7160 = vsel %vm400, %v7124, %v7125
      %v7161 = vsel %vm400, %v7123, %v7124
      %v7162 = vsel %vm400, %v7122, %v7123
      %v7163 = vsel %vm400, %v7121, %v7122
      %v7164 = vsel %vm400, %v7120, %v7121
      %v7165 = vsel %vm400, %v7119, %v7120
      %v7166 = vsel %vm400, %v7118, %v7119
      %v7167 = vsel %vm400, %v7117, %v7118
      %v7168 = vsel %vm400, %v7116, %v7117
      %v7169 = vsel %vm400, %v7115, %v7116
      %v7170 = vsel %vm400, %v7114, %v7115
      %v7171 = vsel %vm400, %v7113, %v7114
      %v7172 = vsel %vm400, %v7112, %v7113
      %v7173 = vsel %vm400, %v7111, %v7112
      %v7174 = vsel %vm400, %v7110, %v7111
      %v7175 = vsel %vm400, %v7109, %v7110
      %v7176 = vsel %vm400, %v7108, %v7109
      %v7177 = vsel %vm400, %v7107, %v7108
      %v7178 = vsel %vm400, %v7106, %v7107
      %v7179 = vsel %vm400, %v7105, %v7106
      %v7180 = vsel %vm400, %v7104, %v7105
      %v7181 = vsel %vm400, %v7103, %v7104
      %v7182 = vsel %vm400, %v7102, %v7103
      %v7183 = vsel %vm400, %v7101, %v7102
      %v7184 = vsel %vm400, %v7100, %v7101
      %v7185 = vsel %vm400, %v7099, %v7100
      %v7186 = vsel %vm400, %v7098, %v7099
      %v7187 = vsel %vm400, %v7097, %v7098
      %v7188 = vsel %vm400, %v7096, %v7097
      %v7189 = vsel %vm400, %v7095, %v7096
      %v7190 = vsel %vm400, %v7142, %v7095
      %v7191 = vpack.c.bf16 %v7093, %v7094
      %v7192 = vpack.c.bf16 %v7091, %v7092
      %v7193 = vpack.c.bf16 %v7089, %v7090
      %v7194 = vpack.c.bf16 %v7087, %v7088
      %v7195 = vpack.c.bf16 %v7085, %v7086
      %v7196 = vpack.c.bf16 %v7083, %v7084
      %v7197 = vpack.c.bf16 %v7081, %v7082
      %v7198 = vpack.c.bf16 %v7079, %v7080
      %v7199 = vpack.c.bf16 %v7077, %v7078
      %v7200 = vpack.c.bf16 %v7075, %v7076
      %v7201 = vpack.c.bf16 %v7073, %v7074
      %v7202 = vpack.c.bf16 %v7071, %v7072
      %v7203 = vpack.c.bf16 %v7069, %v7070
      %v7204 = vpack.c.bf16 %v7067, %v7068
      %v7205 = vpack.c.bf16 %v7065, %v7066
      %v7206 = vpack.c.bf16 %v7063, %v7064
      %v7207 = vpack.c.bf16 %v7061, %v7062
      %v7208 = vpack.c.bf16 %v7059, %v7060
      %v7209 = vpack.c.bf16 %v7057, %v7058
      %v7210 = vpack.c.bf16 %v7055, %v7056
      %v7211 = vpack.c.bf16 %v7053, %v7054
      %v7212 = vpack.c.bf16 %v7051, %v7052
      %v7213 = vpack.c.bf16 %v7049, %v7050
      %v7214 = vpack.c.bf16 %v7047, %v7048
      %s7215 = scalar_lea.vmem %s2, 192
      %v7216 = vld [vmem:[%s7215] sm:$0xf]
      %v7217 = vld [vmem:[%s7215 + $0x4] sm:$0xf]
      %v7218 = vld [vmem:[%s7215 + $0x8] sm:$0xf]
      %v7219 = vld [vmem:[%s7215 + $0xc] sm:$0xf]
      %v7220 = vld [vmem:[%s7215 + $0x10] sm:$0xf]
      %v7221 = vld [vmem:[%s7215 + $0x14] sm:$0xf]
      %v7222 = vld [vmem:[%s7215 + $0x18] sm:$0xf]
      %v7223 = vld [vmem:[%s7215 + $0x1c] sm:$0xf]
      %v7224 = vld [vmem:[%s7215 + $0x20] sm:$0xf]
      %v7225 = vld [vmem:[%s7215 + $0x24] sm:$0xf]
      %v7226 = vld [vmem:[%s7215 + $0x28] sm:$0xf]
      %v7227 = vld [vmem:[%s7215 + $0x2c] sm:$0xf]
      %v7228 = vld [vmem:[%s7215 + $0x30] sm:$0xf]
      %v7229 = vld [vmem:[%s7215 + $0x34] sm:$0xf]
      %v7230 = vld [vmem:[%s7215 + $0x38] sm:$0xf]
      %v7231 = vld [vmem:[%s7215 + $0x3c] sm:$0xf]
      %v7248 = vunpack.c.l.b16 %v7216
      %v7249 = vunpack.c.l.b16 %v7217
      %v7250 = vunpack.c.l.b16 %v7218
      %v7251 = vunpack.c.l.b16 %v7219
      %v7252 = vunpack.c.l.b16 %v7220
      %v7253 = vunpack.c.l.b16 %v7221
      %v7254 = vunpack.c.l.b16 %v7222
      %v7255 = vunpack.c.l.b16 %v7223
      %v7256 = vunpack.c.l.b16 %v7224
      %v7257 = vunpack.c.l.b16 %v7225
      %v7258 = vunpack.c.l.b16 %v7226
      %v7259 = vunpack.c.l.b16 %v7227
      %v7260 = vunpack.c.l.b16 %v7228
      %v7261 = vunpack.c.l.b16 %v7229
      %v7262 = vunpack.c.l.b16 %v7230
      %v7263 = vunpack.c.l.b16 %v7231
      %v7264 = vpack.c.b16 %v7249, %v7248
      %v7265 = vpack.c.b16 %v7251, %v7250
      %v7266 = vpack.c.b16 %v7253, %v7252
      %v7267 = vpack.c.b16 %v7255, %v7254
      %v7268 = vpack.c.b16 %v7257, %v7256
      %v7269 = vpack.c.b16 %v7259, %v7258
      %v7270 = vpack.c.b16 %v7261, %v7260
      %v7271 = vpack.c.b16 %v7263, %v7262
      %7280 = vmatprep.subr.bf16.mxu0 0
      %7281 = vmatpush1.bf16.msra.mxu0 %v7271
      %7282 = vmatprep.subr.bf16.mxu0 0
      %7283 = vmatpush1.bf16.msra.mxu0 %v7270
      %7284 = vmatprep.subr.bf16.mxu0 0
      %7285 = vmatpush1.bf16.msra.mxu0 %v7269
      %7286 = vmatprep.subr.bf16.mxu0 0
      %7287 = vmatpush1.bf16.msra.mxu0 %v7268
      %7288 = vmatprep.subr.bf16.mxu0 0
      %7289 = vmatpush1.bf16.msra.mxu0 %v7267
      %7290 = vmatprep.subr.bf16.mxu0 0
      %7291 = vmatpush1.bf16.msra.mxu0 %v7266
      %7292 = vmatprep.subr.bf16.mxu0 0
      %7293 = vmatpush1.bf16.msra.mxu0 %v7265
      %7294 = vmatprep.subr.bf16.mxu0 0
      %7295 = vmatpush1.bf16.msra.mxu0 %v7264
      %7296 = vmatprep.subr.bf16.mxu0 0
      %7297 = vmatpush2.bf16.msra.mxu0 0
      %7298 = vmatprep.subr.bf16.mxu0 0
      %7299 = vmatpush2.bf16.msra.mxu0 0
      %7300 = vmatprep.subr.bf16.mxu0 0
      %7301 = vmatpush2.bf16.msra.mxu0 0
      %7302 = vmatprep.subr.bf16.mxu0 0
      %7303 = vmatpush2.bf16.msra.mxu0 0
      %7304 = vmatprep.subr.bf16.mxu0 0
      %7305 = vmatpush2.bf16.msra.mxu0 0
      %7306 = vmatprep.subr.bf16.mxu0 0
      %7307 = vmatpush2.bf16.msra.mxu0 0
      %7308 = vmatprep.subr.bf16.mxu0 0
      %7309 = vmatpush2.bf16.msra.mxu0 0
      %7310 = vmatprep.subr.bf16.mxu0 0
      %7311 = vmatpush2.bf16.msra.mxu0 0
      %7312 = vmatprep.mubr.bf16.mxu0 0
      %7313 = vmatmul.mubr.bf16.gmra.mxu0 %v7191
      %v7314 = vpop.f32.mrf.mxu0
      %v7315 = vadd.f32 0.0, %v7314
      %v7316 = vpop.f32.mrf.mxu0
      %v7317 = vpop.f32.mrf.mxu0
      %v7318 = vadd.f32 0.0, %v7317
      %v7319 = vpop.f32.mrf.mxu0
      %7320 = vmatprep.mubr.bf16.mxu0 0
      %7321 = vmatmul.mubr.bf16.gmra.mxu0 %v7192
      %v7322 = vpop.f32.mrf.mxu0
      %v7323 = vadd.f32 0.0, %v7322
      %v7324 = vpop.f32.mrf.mxu0
      %v7325 = vpop.f32.mrf.mxu0
      %v7326 = vadd.f32 0.0, %v7325
      %v7327 = vpop.f32.mrf.mxu0
      %7328 = vmatprep.mubr.bf16.mxu0 0
      %7329 = vmatmul.mubr.bf16.gmra.mxu0 %v7193
      %v7330 = vpop.f32.mrf.mxu0
      %v7331 = vadd.f32 0.0, %v7330
      %v7332 = vpop.f32.mrf.mxu0
      %v7333 = vpop.f32.mrf.mxu0
      %v7334 = vadd.f32 0.0, %v7333
      %v7335 = vpop.f32.mrf.mxu0
      %7336 = vmatprep.mubr.bf16.mxu0 0
      %7337 = vmatmul.mubr.bf16.gmra.mxu0 %v7194
      %v7338 = vpop.f32.mrf.mxu0
      %v7339 = vadd.f32 0.0, %v7338
      %v7340 = vpop.f32.mrf.mxu0
      %v7341 = vpop.f32.mrf.mxu0
      %v7342 = vadd.f32 0.0, %v7341
      %v7343 = vpop.f32.mrf.mxu0
      %7344 = vmatprep.mubr.bf16.mxu0 0
      %7345 = vmatmul.mubr.bf16.gmra.mxu0 %v7195
      %v7346 = vpop.f32.mrf.mxu0
      %v7347 = vadd.f32 0.0, %v7346
      %v7348 = vpop.f32.mrf.mxu0
      %v7349 = vpop.f32.mrf.mxu0
      %v7350 = vadd.f32 0.0, %v7349
      %v7351 = vpop.f32.mrf.mxu0
      %7352 = vmatprep.mubr.bf16.mxu0 0
      %7353 = vmatmul.mubr.bf16.gmra.mxu0 %v7196
      %v7354 = vpop.f32.mrf.mxu0
      %v7355 = vadd.f32 0.0, %v7354
      %v7356 = vpop.f32.mrf.mxu0
      %v7357 = vpop.f32.mrf.mxu0
      %v7358 = vadd.f32 0.0, %v7357
      %v7359 = vpop.f32.mrf.mxu0
      %7360 = vmatprep.mubr.bf16.mxu0 0
      %7361 = vmatmul.mubr.bf16.gmra.mxu0 %v7197
      %v7362 = vpop.f32.mrf.mxu0
      %v7363 = vadd.f32 0.0, %v7362
      %v7364 = vpop.f32.mrf.mxu0
      %v7365 = vpop.f32.mrf.mxu0
      %v7366 = vadd.f32 0.0, %v7365
      %v7367 = vpop.f32.mrf.mxu0
      %7368 = vmatprep.mubr.bf16.mxu0 0
      %7369 = vmatmul.mubr.bf16.gmra.mxu0 %v7198
      %v7370 = vpop.f32.mrf.mxu0
      %v7371 = vadd.f32 0.0, %v7370
      %v7372 = vpop.f32.mrf.mxu0
      %v7373 = vpop.f32.mrf.mxu0
      %v7374 = vadd.f32 0.0, %v7373
      %v7375 = vpop.f32.mrf.mxu0
      %7376 = vmatprep.mubr.bf16.mxu0 0
      %7377 = vmatmul.mubr.bf16.gmra.mxu0 %v7199
      %v7378 = vpop.f32.mrf.mxu0
      %v7379 = vadd.f32 0.0, %v7378
      %v7380 = vpop.f32.mrf.mxu0
      %v7381 = vpop.f32.mrf.mxu0
      %v7382 = vadd.f32 0.0, %v7381
      %v7383 = vpop.f32.mrf.mxu0
      %7384 = vmatprep.mubr.bf16.mxu0 0
      %7385 = vmatmul.mubr.bf16.gmra.mxu0 %v7200
      %v7386 = vpop.f32.mrf.mxu0
      %v7387 = vadd.f32 0.0, %v7386
      %v7388 = vpop.f32.mrf.mxu0
      %v7389 = vpop.f32.mrf.mxu0
      %v7390 = vadd.f32 0.0, %v7389
      %v7391 = vpop.f32.mrf.mxu0
      %7392 = vmatprep.mubr.bf16.mxu0 0
      %7393 = vmatmul.mubr.bf16.gmra.mxu0 %v7201
      %v7394 = vpop.f32.mrf.mxu0
      %v7395 = vadd.f32 0.0, %v7394
      %v7396 = vpop.f32.mrf.mxu0
      %v7397 = vpop.f32.mrf.mxu0
      %v7398 = vadd.f32 0.0, %v7397
      %v7399 = vpop.f32.mrf.mxu0
      %7400 = vmatprep.mubr.bf16.mxu0 0
      %7401 = vmatmul.mubr.bf16.gmra.mxu0 %v7202
      %v7402 = vpop.f32.mrf.mxu0
      %v7403 = vadd.f32 0.0, %v7402
      %v7404 = vpop.f32.mrf.mxu0
      %v7405 = vpop.f32.mrf.mxu0
      %v7406 = vadd.f32 0.0, %v7405
      %v7407 = vpop.f32.mrf.mxu0
      %7408 = vmatprep.mubr.bf16.mxu0 0
      %7409 = vmatmul.mubr.bf16.gmra.mxu0 %v7203
      %v7410 = vpop.f32.mrf.mxu0
      %v7411 = vadd.f32 0.0, %v7410
      %v7412 = vpop.f32.mrf.mxu0
      %v7413 = vpop.f32.mrf.mxu0
      %v7414 = vadd.f32 0.0, %v7413
      %v7415 = vpop.f32.mrf.mxu0
      %7416 = vmatprep.mubr.bf16.mxu0 0
      %7417 = vmatmul.mubr.bf16.gmra.mxu0 %v7204
      %v7418 = vpop.f32.mrf.mxu0
      %v7419 = vadd.f32 0.0, %v7418
      %v7420 = vpop.f32.mrf.mxu0
      %v7421 = vpop.f32.mrf.mxu0
      %v7422 = vadd.f32 0.0, %v7421
      %v7423 = vpop.f32.mrf.mxu0
      %7424 = vmatprep.mubr.bf16.mxu0 0
      %7425 = vmatmul.mubr.bf16.gmra.mxu0 %v7205
      %v7426 = vpop.f32.mrf.mxu0
      %v7427 = vadd.f32 0.0, %v7426
      %v7428 = vpop.f32.mrf.mxu0
      %v7429 = vpop.f32.mrf.mxu0
      %v7430 = vadd.f32 0.0, %v7429
      %v7431 = vpop.f32.mrf.mxu0
      %7432 = vmatprep.mubr.bf16.mxu0 0
      %7433 = vmatmul.mubr.bf16.gmra.mxu0 %v7206
      %v7434 = vpop.f32.mrf.mxu0
      %v7435 = vadd.f32 0.0, %v7434
      %v7436 = vpop.f32.mrf.mxu0
      %v7437 = vpop.f32.mrf.mxu0
      %v7438 = vadd.f32 0.0, %v7437
      %v7439 = vpop.f32.mrf.mxu0
      %7440 = vmatprep.mubr.bf16.mxu0 0
      %7441 = vmatmul.mubr.bf16.gmra.mxu0 %v7207
      %v7442 = vpop.f32.mrf.mxu0
      %v7443 = vadd.f32 0.0, %v7442
      %v7444 = vpop.f32.mrf.mxu0
      %v7445 = vpop.f32.mrf.mxu0
      %v7446 = vadd.f32 0.0, %v7445
      %v7447 = vpop.f32.mrf.mxu0
      %7448 = vmatprep.mubr.bf16.mxu0 0
      %7449 = vmatmul.mubr.bf16.gmra.mxu0 %v7208
      %v7450 = vpop.f32.mrf.mxu0
      %v7451 = vadd.f32 0.0, %v7450
      %v7452 = vpop.f32.mrf.mxu0
      %v7453 = vpop.f32.mrf.mxu0
      %v7454 = vadd.f32 0.0, %v7453
      %v7455 = vpop.f32.mrf.mxu0
      %7456 = vmatprep.mubr.bf16.mxu0 0
      %7457 = vmatmul.mubr.bf16.gmra.mxu0 %v7209
      %v7458 = vpop.f32.mrf.mxu0
      %v7459 = vadd.f32 0.0, %v7458
      %v7460 = vpop.f32.mrf.mxu0
      %v7461 = vpop.f32.mrf.mxu0
      %v7462 = vadd.f32 0.0, %v7461
      %v7463 = vpop.f32.mrf.mxu0
      %7464 = vmatprep.mubr.bf16.mxu0 0
      %7465 = vmatmul.mubr.bf16.gmra.mxu0 %v7210
      %v7466 = vpop.f32.mrf.mxu0
      %v7467 = vadd.f32 0.0, %v7466
      %v7468 = vpop.f32.mrf.mxu0
      %v7469 = vpop.f32.mrf.mxu0
      %v7470 = vadd.f32 0.0, %v7469
      %v7471 = vpop.f32.mrf.mxu0
      %7472 = vmatprep.mubr.bf16.mxu0 0
      %7473 = vmatmul.mubr.bf16.gmra.mxu0 %v7211
      %v7474 = vpop.f32.mrf.mxu0
      %v7475 = vadd.f32 0.0, %v7474
      %v7476 = vpop.f32.mrf.mxu0
      %v7477 = vpop.f32.mrf.mxu0
      %v7478 = vadd.f32 0.0, %v7477
      %v7479 = vpop.f32.mrf.mxu0
      %7480 = vmatprep.mubr.bf16.mxu0 0
      %7481 = vmatmul.mubr.bf16.gmra.mxu0 %v7212
      %v7482 = vpop.f32.mrf.mxu0
      %v7483 = vadd.f32 0.0, %v7482
      %v7484 = vpop.f32.mrf.mxu0
      %v7485 = vpop.f32.mrf.mxu0
      %v7486 = vadd.f32 0.0, %v7485
      %v7487 = vpop.f32.mrf.mxu0
      %7488 = vmatprep.mubr.bf16.mxu0 0
      %7489 = vmatmul.mubr.bf16.gmra.mxu0 %v7213
      %v7490 = vpop.f32.mrf.mxu0
      %v7491 = vadd.f32 0.0, %v7490
      %v7492 = vpop.f32.mrf.mxu0
      %v7493 = vpop.f32.mrf.mxu0
      %v7494 = vadd.f32 0.0, %v7493
      %v7495 = vpop.f32.mrf.mxu0
      %7496 = vmatprep.mubr.bf16.mxu0 0
      %7497 = vmatmul.mubr.bf16.gmra.mxu0 %v7214
      %v7498 = vpop.f32.mrf.mxu0
      %v7499 = vadd.f32 0.0, %v7498
      %v7500 = vpop.f32.mrf.mxu0
      %v7501 = vpop.f32.mrf.mxu0
      %v7502 = vadd.f32 0.0, %v7501
      %v7503 = vpop.f32.mrf.mxu0
      %7504 = vdwg.mxu0
      %v7505 = vld [vmem:[#allocation3] sm:$0xff]
      %v7506 = vld [vmem:[#allocation3 + $0x8] sm:$0xff]
      %v7507 = vld [vmem:[#allocation3 + $0x10] sm:$0xff]
      %v7508 = vld [vmem:[#allocation3 + $0x18] sm:$0xff]
      %v7509 = vld [vmem:[#allocation3 + $0x20] sm:$0xff]
      %v7510 = vld [vmem:[#allocation3 + $0x28] sm:$0xff]
      %v7511 = vld [vmem:[#allocation3 + $0x30] sm:$0xff]
      %v7512 = vld [vmem:[#allocation3 + $0x38] sm:$0xff]
      %v7513 = vld [vmem:[#allocation3 + $0x40] sm:$0xff]
      %v7514 = vld [vmem:[#allocation3 + $0x48] sm:$0xff]
      %v7515 = vld [vmem:[#allocation3 + $0x50] sm:$0xff]
      %v7516 = vld [vmem:[#allocation3 + $0x58] sm:$0xff]
      %v7517 = vld [vmem:[#allocation3 + $0x60] sm:$0xff]
      %v7518 = vld [vmem:[#allocation3 + $0x68] sm:$0xff]
      %v7519 = vld [vmem:[#allocation3 + $0x70] sm:$0xff]
      %v7520 = vld [vmem:[#allocation3 + $0x78] sm:$0xff]
      %v7521 = vld [vmem:[#allocation3 + $0x80] sm:$0xff]
      %v7522 = vld [vmem:[#allocation3 + $0x88] sm:$0xff]
      %v7523 = vld [vmem:[#allocation3 + $0x90] sm:$0xff]
      %v7524 = vld [vmem:[#allocation3 + $0x98] sm:$0xff]
      %v7525 = vld [vmem:[#allocation3 + $0xa0] sm:$0xff]
      %v7526 = vld [vmem:[#allocation3 + $0xa8] sm:$0xff]
      %v7527 = vld [vmem:[#allocation3 + $0xb0] sm:$0xff]
      %v7528 = vld [vmem:[#allocation3 + $0xb8] sm:$0xff]
      %v7529 = vld [vmem:[#allocation3 + $0xc0] sm:$0xff]
      %v7530 = vld [vmem:[#allocation3 + $0xc8] sm:$0xff]
      %v7531 = vld [vmem:[#allocation3 + $0xd0] sm:$0xff]
      %v7532 = vld [vmem:[#allocation3 + $0xd8] sm:$0xff]
      %v7533 = vld [vmem:[#allocation3 + $0xe0] sm:$0xff]
      %v7534 = vld [vmem:[#allocation3 + $0xe8] sm:$0xff]
      %v7535 = vld [vmem:[#allocation3 + $0xf0] sm:$0xff]
      %v7536 = vld [vmem:[#allocation3 + $0xf8] sm:$0xff]
      %v7537 = vld [vmem:[#allocation3 + $0x100] sm:$0xff]
      %v7538 = vld [vmem:[#allocation3 + $0x108] sm:$0xff]
      %v7539 = vld [vmem:[#allocation3 + $0x110] sm:$0xff]
      %v7540 = vld [vmem:[#allocation3 + $0x118] sm:$0xff]
      %v7541 = vld [vmem:[#allocation3 + $0x120] sm:$0xff]
      %v7542 = vld [vmem:[#allocation3 + $0x128] sm:$0xff]
      %v7543 = vld [vmem:[#allocation3 + $0x130] sm:$0xff]
      %v7544 = vld [vmem:[#allocation3 + $0x138] sm:$0xff]
      %v7545 = vld [vmem:[#allocation3 + $0x140] sm:$0xff]
      %v7546 = vld [vmem:[#allocation3 + $0x148] sm:$0xff]
      %v7547 = vld [vmem:[#allocation3 + $0x150] sm:$0xff]
      %v7548 = vld [vmem:[#allocation3 + $0x158] sm:$0xff]
      %v7549 = vld [vmem:[#allocation3 + $0x160] sm:$0xff]
      %v7550 = vld [vmem:[#allocation3 + $0x168] sm:$0xff]
      %v7551 = vld [vmem:[#allocation3 + $0x170] sm:$0xff]
      %v7552 = vld [vmem:[#allocation3 + $0x178] sm:$0xff]
      %v7553 = vadd.f32 %v7505, %v7315
      %v7554 = vadd.f32 %v7506, %v7318
      %v7555 = vadd.f32 %v7507, %v7323
      %v7556 = vadd.f32 %v7508, %v7326
      %v7557 = vadd.f32 %v7509, %v7331
      %v7558 = vadd.f32 %v7510, %v7334
      %v7559 = vadd.f32 %v7511, %v7339
      %v7560 = vadd.f32 %v7512, %v7342
      %v7561 = vadd.f32 %v7513, %v7347
      %v7562 = vadd.f32 %v7514, %v7350
      %v7563 = vadd.f32 %v7515, %v7355
      %v7564 = vadd.f32 %v7516, %v7358
      %v7565 = vadd.f32 %v7517, %v7363
      %v7566 = vadd.f32 %v7518, %v7366
      %v7567 = vadd.f32 %v7519, %v7371
      %v7568 = vadd.f32 %v7520, %v7374
      %v7569 = vadd.f32 %v7521, %v7379
      %v7570 = vadd.f32 %v7522, %v7382
      %v7571 = vadd.f32 %v7523, %v7387
      %v7572 = vadd.f32 %v7524, %v7390
      %v7573 = vadd.f32 %v7525, %v7395
      %v7574 = vadd.f32 %v7526, %v7398
      %v7575 = vadd.f32 %v7527, %v7403
      %v7576 = vadd.f32 %v7528, %v7406
      %v7577 = vadd.f32 %v7529, %v7411
      %v7578 = vadd.f32 %v7530, %v7414
      %v7579 = vadd.f32 %v7531, %v7419
      %v7580 = vadd.f32 %v7532, %v7422
      %v7581 = vadd.f32 %v7533, %v7427
      %v7582 = vadd.f32 %v7534, %v7430
      %v7583 = vadd.f32 %v7535, %v7435
      %v7584 = vadd.f32 %v7536, %v7438
      %v7585 = vadd.f32 %v7537, %v7443
      %v7586 = vadd.f32 %v7538, %v7446
      %v7587 = vadd.f32 %v7539, %v7451
      %v7588 = vadd.f32 %v7540, %v7454
      %v7589 = vadd.f32 %v7541, %v7459
      %v7590 = vadd.f32 %v7542, %v7462
      %v7591 = vadd.f32 %v7543, %v7467
      %v7592 = vadd.f32 %v7544, %v7470
      %v7593 = vadd.f32 %v7545, %v7475
      %v7594 = vadd.f32 %v7546, %v7478
      %v7595 = vadd.f32 %v7547, %v7483
      %v7596 = vadd.f32 %v7548, %v7486
      %v7597 = vadd.f32 %v7549, %v7491
      %v7598 = vadd.f32 %v7550, %v7494
      %v7599 = vadd.f32 %v7551, %v7499
      %v7600 = vadd.f32 %v7552, %v7502
      %7601 = vst [vmem:[#allocation3] sm:$0xff] %v7553
      %7602 = vst [vmem:[#allocation3 + $0x8] sm:$0xff] %v7554
      %7603 = vst [vmem:[#allocation3 + $0x10] sm:$0xff] %v7555
      %7604 = vst [vmem:[#allocation3 + $0x18] sm:$0xff] %v7556
      %7605 = vst [vmem:[#allocation3 + $0x20] sm:$0xff] %v7557
      %7606 = vst [vmem:[#allocation3 + $0x28] sm:$0xff] %v7558
      %7607 = vst [vmem:[#allocation3 + $0x30] sm:$0xff] %v7559
      %7608 = vst [vmem:[#allocation3 + $0x38] sm:$0xff] %v7560
      %7609 = vst [vmem:[#allocation3 + $0x40] sm:$0xff] %v7561
      %7610 = vst [vmem:[#allocation3 + $0x48] sm:$0xff] %v7562
      %7611 = vst [vmem:[#allocation3 + $0x50] sm:$0xff] %v7563
      %7612 = vst [vmem:[#allocation3 + $0x58] sm:$0xff] %v7564
      %7613 = vst [vmem:[#allocation3 + $0x60] sm:$0xff] %v7565
      %7614 = vst [vmem:[#allocation3 + $0x68] sm:$0xff] %v7566
      %7615 = vst [vmem:[#allocation3 + $0x70] sm:$0xff] %v7567
      %7616 = vst [vmem:[#allocation3 + $0x78] sm:$0xff] %v7568
      %7617 = vst [vmem:[#allocation3 + $0x80] sm:$0xff] %v7569
      %7618 = vst [vmem:[#allocation3 + $0x88] sm:$0xff] %v7570
      %7619 = vst [vmem:[#allocation3 + $0x90] sm:$0xff] %v7571
      %7620 = vst [vmem:[#allocation3 + $0x98] sm:$0xff] %v7572
      %7621 = vst [vmem:[#allocation3 + $0xa0] sm:$0xff] %v7573
      %7622 = vst [vmem:[#allocation3 + $0xa8] sm:$0xff] %v7574
      %7623 = vst [vmem:[#allocation3 + $0xb0] sm:$0xff] %v7575
      %7624 = vst [vmem:[#allocation3 + $0xb8] sm:$0xff] %v7576
      %7625 = vst [vmem:[#allocation3 + $0xc0] sm:$0xff] %v7577
      %7626 = vst [vmem:[#allocation3 + $0xc8] sm:$0xff] %v7578
      %7627 = vst [vmem:[#allocation3 + $0xd0] sm:$0xff] %v7579
      %7628 = vst [vmem:[#allocation3 + $0xd8] sm:$0xff] %v7580
      %7629 = vst [vmem:[#allocation3 + $0xe0] sm:$0xff] %v7581
      %7630 = vst [vmem:[#allocation3 + $0xe8] sm:$0xff] %v7582
      %7631 = vst [vmem:[#allocation3 + $0xf0] sm:$0xff] %v7583
      %7632 = vst [vmem:[#allocation3 + $0xf8] sm:$0xff] %v7584
      %7633 = vst [vmem:[#allocation3 + $0x100] sm:$0xff] %v7585
      %7634 = vst [vmem:[#allocation3 + $0x108] sm:$0xff] %v7586
      %7635 = vst [vmem:[#allocation3 + $0x110] sm:$0xff] %v7587
      %7636 = vst [vmem:[#allocation3 + $0x118] sm:$0xff] %v7588
      %7637 = vst [vmem:[#allocation3 + $0x120] sm:$0xff] %v7589
      %7638 = vst [vmem:[#allocation3 + $0x128] sm:$0xff] %v7590
      %7639 = vst [vmem:[#allocation3 + $0x130] sm:$0xff] %v7591
      %7640 = vst [vmem:[#allocation3 + $0x138] sm:$0xff] %v7592
      %7641 = vst [vmem:[#allocation3 + $0x140] sm:$0xff] %v7593
      %7642 = vst [vmem:[#allocation3 + $0x148] sm:$0xff] %v7594
      %7643 = vst [vmem:[#allocation3 + $0x150] sm:$0xff] %v7595
      %7644 = vst [vmem:[#allocation3 + $0x158] sm:$0xff] %v7596
      %7645 = vst [vmem:[#allocation3 + $0x160] sm:$0xff] %v7597
      %7646 = vst [vmem:[#allocation3 + $0x168] sm:$0xff] %v7598
      %7647 = vst [vmem:[#allocation3 + $0x170] sm:$0xff] %v7599
      %7648 = vst [vmem:[#allocation3 + $0x178] sm:$0xff] %v7600
      %v7649 = vpack.c.bf16 %v6952, %v6951
      %v7650 = vpack.c.bf16 %v6954, %v6953
      %v7651 = vpack.c.bf16 %v6956, %v6955
      %v7652 = vpack.c.bf16 %v6958, %v6957
      %v7653 = vpack.c.bf16 %v6960, %v6959
      %v7654 = vpack.c.bf16 %v6962, %v6961
      %v7655 = vpack.c.bf16 %v6964, %v6963
      %v7656 = vpack.c.bf16 %v6966, %v6965
      %v7657 = vpack.c.bf16 %v6968, %v6967
      %v7658 = vpack.c.bf16 %v6970, %v6969
      %v7659 = vpack.c.bf16 %v6972, %v6971
      %v7660 = vpack.c.bf16 %v6974, %v6973
      %v7661 = vpack.c.bf16 %v6976, %v6975
      %v7662 = vpack.c.bf16 %v6978, %v6977
      %v7663 = vpack.c.bf16 %v6980, %v6979
      %v7664 = vpack.c.bf16 %v6982, %v6981
      %v7665 = vpack.c.bf16 %v6984, %v6983
      %v7666 = vpack.c.bf16 %v6986, %v6985
      %v7667 = vpack.c.bf16 %v6988, %v6987
      %v7668 = vpack.c.bf16 %v6990, %v6989
      %v7669 = vpack.c.bf16 %v6992, %v6991
      %v7670 = vpack.c.bf16 %v6994, %v6993
      %v7671 = vpack.c.bf16 %v6996, %v6995
      %v7672 = vpack.c.bf16 %v6998, %v6997
      %s7673 = scalar_lea.vmem %s2, 256
      %v7674 = vld [vmem:[%s7673] sm:$0xf]
      %v7675 = vld [vmem:[%s7673 + $0x4] sm:$0xf]
      %v7676 = vld [vmem:[%s7673 + $0x8] sm:$0xf]
      %v7677 = vld [vmem:[%s7673 + $0xc] sm:$0xf]
      %v7678 = vld [vmem:[%s7673 + $0x10] sm:$0xf]
      %v7679 = vld [vmem:[%s7673 + $0x14] sm:$0xf]
      %v7680 = vld [vmem:[%s7673 + $0x18] sm:$0xf]
      %v7681 = vld [vmem:[%s7673 + $0x1c] sm:$0xf]
      %v7682 = vld [vmem:[%s7673 + $0x20] sm:$0xf]
      %v7683 = vld [vmem:[%s7673 + $0x24] sm:$0xf]
      %v7684 = vld [vmem:[%s7673 + $0x28] sm:$0xf]
      %v7685 = vld [vmem:[%s7673 + $0x2c] sm:$0xf]
      %v7686 = vld [vmem:[%s7673 + $0x30] sm:$0xf]
      %v7687 = vld [vmem:[%s7673 + $0x34] sm:$0xf]
      %v7688 = vld [vmem:[%s7673 + $0x38] sm:$0xf]
      %v7689 = vld [vmem:[%s7673 + $0x3c] sm:$0xf]
      %v7706 = vunpack.c.l.b16 %v7674
      %v7707 = vunpack.c.l.b16 %v7675
      %v7708 = vunpack.c.l.b16 %v7676
      %v7709 = vunpack.c.l.b16 %v7677
      %v7710 = vunpack.c.l.b16 %v7678
      %v7711 = vunpack.c.l.b16 %v7679
      %v7712 = vunpack.c.l.b16 %v7680
      %v7713 = vunpack.c.l.b16 %v7681
      %v7714 = vunpack.c.l.b16 %v7682
      %v7715 = vunpack.c.l.b16 %v7683
      %v7716 = vunpack.c.l.b16 %v7684
      %v7717 = vunpack.c.l.b16 %v7685
      %v7718 = vunpack.c.l.b16 %v7686
      %v7719 = vunpack.c.l.b16 %v7687
      %v7720 = vunpack.c.l.b16 %v7688
      %v7721 = vunpack.c.l.b16 %v7689
      %v7722 = vpack.c.b16 %v7707, %v7706
      %v7723 = vpack.c.b16 %v7709, %v7708
      %v7724 = vpack.c.b16 %v7711, %v7710
      %v7725 = vpack.c.b16 %v7713, %v7712
      %v7726 = vpack.c.b16 %v7715, %v7714
      %v7727 = vpack.c.b16 %v7717, %v7716
      %v7728 = vpack.c.b16 %v7719, %v7718
      %v7729 = vpack.c.b16 %v7721, %v7720
      %7738 = vmatprep.subr.bf16.mxu0 0
      %7739 = vmatpush1.bf16.msra.mxu0 %v7729
      %7740 = vmatprep.subr.bf16.mxu0 0
      %7741 = vmatpush1.bf16.msra.mxu0 %v7728
      %7742 = vmatprep.subr.bf16.mxu0 0
      %7743 = vmatpush1.bf16.msra.mxu0 %v7727
      %7744 = vmatprep.subr.bf16.mxu0 0
      %7745 = vmatpush1.bf16.msra.mxu0 %v7726
      %7746 = vmatprep.subr.bf16.mxu0 0
      %7747 = vmatpush1.bf16.msra.mxu0 %v7725
      %7748 = vmatprep.subr.bf16.mxu0 0
      %7749 = vmatpush1.bf16.msra.mxu0 %v7724
      %7750 = vmatprep.subr.bf16.mxu0 0
      %7751 = vmatpush1.bf16.msra.mxu0 %v7723
      %7752 = vmatprep.subr.bf16.mxu0 0
      %7753 = vmatpush1.bf16.msra.mxu0 %v7722
      %7754 = vmatprep.subr.bf16.mxu0 0
      %7755 = vmatpush2.bf16.msra.mxu0 0
      %7756 = vmatprep.subr.bf16.mxu0 0
      %7757 = vmatpush2.bf16.msra.mxu0 0
      %7758 = vmatprep.subr.bf16.mxu0 0
      %7759 = vmatpush2.bf16.msra.mxu0 0
      %7760 = vmatprep.subr.bf16.mxu0 0
      %7761 = vmatpush2.bf16.msra.mxu0 0
      %7762 = vmatprep.subr.bf16.mxu0 0
      %7763 = vmatpush2.bf16.msra.mxu0 0
      %7764 = vmatprep.subr.bf16.mxu0 0
      %7765 = vmatpush2.bf16.msra.mxu0 0
      %7766 = vmatprep.subr.bf16.mxu0 0
      %7767 = vmatpush2.bf16.msra.mxu0 0
      %7768 = vmatprep.subr.bf16.mxu0 0
      %7769 = vmatpush2.bf16.msra.mxu0 0
      %7770 = vmatprep.mubr.bf16.mxu0 0
      %7771 = vmatmul.mubr.bf16.gmra.mxu0 %v7649
      %v7772 = vpop.f32.mrf.mxu0
      %v7773 = vadd.f32 0.0, %v7772
      %v7774 = vpop.f32.mrf.mxu0
      %v7775 = vpop.f32.mrf.mxu0
      %v7776 = vadd.f32 0.0, %v7775
      %v7777 = vpop.f32.mrf.mxu0
      %7778 = vmatprep.mubr.bf16.mxu0 0
      %7779 = vmatmul.mubr.bf16.gmra.mxu0 %v7650
      %v7780 = vpop.f32.mrf.mxu0
      %v7781 = vadd.f32 0.0, %v7780
      %v7782 = vpop.f32.mrf.mxu0
      %v7783 = vpop.f32.mrf.mxu0
      %v7784 = vadd.f32 0.0, %v7783
      %v7785 = vpop.f32.mrf.mxu0
      %7786 = vmatprep.mubr.bf16.mxu0 0
      %7787 = vmatmul.mubr.bf16.gmra.mxu0 %v7651
      %v7788 = vpop.f32.mrf.mxu0
      %v7789 = vadd.f32 0.0, %v7788
      %v7790 = vpop.f32.mrf.mxu0
      %v7791 = vpop.f32.mrf.mxu0
      %v7792 = vadd.f32 0.0, %v7791
      %v7793 = vpop.f32.mrf.mxu0
      %7794 = vmatprep.mubr.bf16.mxu0 0
      %7795 = vmatmul.mubr.bf16.gmra.mxu0 %v7652
      %v7796 = vpop.f32.mrf.mxu0
      %v7797 = vadd.f32 0.0, %v7796
      %v7798 = vpop.f32.mrf.mxu0
      %v7799 = vpop.f32.mrf.mxu0
      %v7800 = vadd.f32 0.0, %v7799
      %v7801 = vpop.f32.mrf.mxu0
      %7802 = vmatprep.mubr.bf16.mxu0 0
      %7803 = vmatmul.mubr.bf16.gmra.mxu0 %v7653
      %v7804 = vpop.f32.mrf.mxu0
      %v7805 = vadd.f32 0.0, %v7804
      %v7806 = vpop.f32.mrf.mxu0
      %v7807 = vpop.f32.mrf.mxu0
      %v7808 = vadd.f32 0.0, %v7807
      %v7809 = vpop.f32.mrf.mxu0
      %7810 = vmatprep.mubr.bf16.mxu0 0
      %7811 = vmatmul.mubr.bf16.gmra.mxu0 %v7654
      %v7812 = vpop.f32.mrf.mxu0
      %v7813 = vadd.f32 0.0, %v7812
      %v7814 = vpop.f32.mrf.mxu0
      %v7815 = vpop.f32.mrf.mxu0
      %v7816 = vadd.f32 0.0, %v7815
      %v7817 = vpop.f32.mrf.mxu0
      %7818 = vmatprep.mubr.bf16.mxu0 0
      %7819 = vmatmul.mubr.bf16.gmra.mxu0 %v7655
      %v7820 = vpop.f32.mrf.mxu0
      %v7821 = vadd.f32 0.0, %v7820
      %v7822 = vpop.f32.mrf.mxu0
      %v7823 = vpop.f32.mrf.mxu0
      %v7824 = vadd.f32 0.0, %v7823
      %v7825 = vpop.f32.mrf.mxu0
      %7826 = vmatprep.mubr.bf16.mxu0 0
      %7827 = vmatmul.mubr.bf16.gmra.mxu0 %v7656
      %v7828 = vpop.f32.mrf.mxu0
      %v7829 = vadd.f32 0.0, %v7828
      %v7830 = vpop.f32.mrf.mxu0
      %v7831 = vpop.f32.mrf.mxu0
      %v7832 = vadd.f32 0.0, %v7831
      %v7833 = vpop.f32.mrf.mxu0
      %7834 = vmatprep.mubr.bf16.mxu0 0
      %7835 = vmatmul.mubr.bf16.gmra.mxu0 %v7657
      %v7836 = vpop.f32.mrf.mxu0
      %v7837 = vadd.f32 0.0, %v7836
      %v7838 = vpop.f32.mrf.mxu0
      %v7839 = vpop.f32.mrf.mxu0
      %v7840 = vadd.f32 0.0, %v7839
      %v7841 = vpop.f32.mrf.mxu0
      %7842 = vmatprep.mubr.bf16.mxu0 0
      %7843 = vmatmul.mubr.bf16.gmra.mxu0 %v7658
      %v7844 = vpop.f32.mrf.mxu0
      %v7845 = vadd.f32 0.0, %v7844
      %v7846 = vpop.f32.mrf.mxu0
      %v7847 = vpop.f32.mrf.mxu0
      %v7848 = vadd.f32 0.0, %v7847
      %v7849 = vpop.f32.mrf.mxu0
      %7850 = vmatprep.mubr.bf16.mxu0 0
      %7851 = vmatmul.mubr.bf16.gmra.mxu0 %v7659
      %v7852 = vpop.f32.mrf.mxu0
      %v7853 = vadd.f32 0.0, %v7852
      %v7854 = vpop.f32.mrf.mxu0
      %v7855 = vpop.f32.mrf.mxu0
      %v7856 = vadd.f32 0.0, %v7855
      %v7857 = vpop.f32.mrf.mxu0
      %7858 = vmatprep.mubr.bf16.mxu0 0
      %7859 = vmatmul.mubr.bf16.gmra.mxu0 %v7660
      %v7860 = vpop.f32.mrf.mxu0
      %v7861 = vadd.f32 0.0, %v7860
      %v7862 = vpop.f32.mrf.mxu0
      %v7863 = vpop.f32.mrf.mxu0
      %v7864 = vadd.f32 0.0, %v7863
      %v7865 = vpop.f32.mrf.mxu0
      %7866 = vmatprep.mubr.bf16.mxu0 0
      %7867 = vmatmul.mubr.bf16.gmra.mxu0 %v7661
      %v7868 = vpop.f32.mrf.mxu0
      %v7869 = vadd.f32 0.0, %v7868
      %v7870 = vpop.f32.mrf.mxu0
      %v7871 = vpop.f32.mrf.mxu0
      %v7872 = vadd.f32 0.0, %v7871
      %v7873 = vpop.f32.mrf.mxu0
      %7874 = vmatprep.mubr.bf16.mxu0 0
      %7875 = vmatmul.mubr.bf16.gmra.mxu0 %v7662
      %v7876 = vpop.f32.mrf.mxu0
      %v7877 = vadd.f32 0.0, %v7876
      %v7878 = vpop.f32.mrf.mxu0
      %v7879 = vpop.f32.mrf.mxu0
      %v7880 = vadd.f32 0.0, %v7879
      %v7881 = vpop.f32.mrf.mxu0
      %7882 = vmatprep.mubr.bf16.mxu0 0
      %7883 = vmatmul.mubr.bf16.gmra.mxu0 %v7663
      %v7884 = vpop.f32.mrf.mxu0
      %v7885 = vadd.f32 0.0, %v7884
      %v7886 = vpop.f32.mrf.mxu0
      %v7887 = vpop.f32.mrf.mxu0
      %v7888 = vadd.f32 0.0, %v7887
      %v7889 = vpop.f32.mrf.mxu0
      %7890 = vmatprep.mubr.bf16.mxu0 0
      %7891 = vmatmul.mubr.bf16.gmra.mxu0 %v7664
      %v7892 = vpop.f32.mrf.mxu0
      %v7893 = vadd.f32 0.0, %v7892
      %v7894 = vpop.f32.mrf.mxu0
      %v7895 = vpop.f32.mrf.mxu0
      %v7896 = vadd.f32 0.0, %v7895
      %v7897 = vpop.f32.mrf.mxu0
      %7898 = vmatprep.mubr.bf16.mxu0 0
      %7899 = vmatmul.mubr.bf16.gmra.mxu0 %v7665
      %v7900 = vpop.f32.mrf.mxu0
      %v7901 = vadd.f32 0.0, %v7900
      %v7902 = vpop.f32.mrf.mxu0
      %v7903 = vpop.f32.mrf.mxu0
      %v7904 = vadd.f32 0.0, %v7903
      %v7905 = vpop.f32.mrf.mxu0
      %7906 = vmatprep.mubr.bf16.mxu0 0
      %7907 = vmatmul.mubr.bf16.gmra.mxu0 %v7666
      %v7908 = vpop.f32.mrf.mxu0
      %v7909 = vadd.f32 0.0, %v7908
      %v7910 = vpop.f32.mrf.mxu0
      %v7911 = vpop.f32.mrf.mxu0
      %v7912 = vadd.f32 0.0, %v7911
      %v7913 = vpop.f32.mrf.mxu0
      %7914 = vmatprep.mubr.bf16.mxu0 0
      %7915 = vmatmul.mubr.bf16.gmra.mxu0 %v7667
      %v7916 = vpop.f32.mrf.mxu0
      %v7917 = vadd.f32 0.0, %v7916
      %v7918 = vpop.f32.mrf.mxu0
      %v7919 = vpop.f32.mrf.mxu0
      %v7920 = vadd.f32 0.0, %v7919
      %v7921 = vpop.f32.mrf.mxu0
      %7922 = vmatprep.mubr.bf16.mxu0 0
      %7923 = vmatmul.mubr.bf16.gmra.mxu0 %v7668
      %v7924 = vpop.f32.mrf.mxu0
      %v7925 = vadd.f32 0.0, %v7924
      %v7926 = vpop.f32.mrf.mxu0
      %v7927 = vpop.f32.mrf.mxu0
      %v7928 = vadd.f32 0.0, %v7927
      %v7929 = vpop.f32.mrf.mxu0
      %7930 = vmatprep.mubr.bf16.mxu0 0
      %7931 = vmatmul.mubr.bf16.gmra.mxu0 %v7669
      %v7932 = vpop.f32.mrf.mxu0
      %v7933 = vadd.f32 0.0, %v7932
      %v7934 = vpop.f32.mrf.mxu0
      %v7935 = vpop.f32.mrf.mxu0
      %v7936 = vadd.f32 0.0, %v7935
      %v7937 = vpop.f32.mrf.mxu0
      %7938 = vmatprep.mubr.bf16.mxu0 0
      %7939 = vmatmul.mubr.bf16.gmra.mxu0 %v7670
      %v7940 = vpop.f32.mrf.mxu0
      %v7941 = vadd.f32 0.0, %v7940
      %v7942 = vpop.f32.mrf.mxu0
      %v7943 = vpop.f32.mrf.mxu0
      %v7944 = vadd.f32 0.0, %v7943
      %v7945 = vpop.f32.mrf.mxu0
      %7946 = vmatprep.mubr.bf16.mxu0 0
      %7947 = vmatmul.mubr.bf16.gmra.mxu0 %v7671
      %v7948 = vpop.f32.mrf.mxu0
      %v7949 = vadd.f32 0.0, %v7948
      %v7950 = vpop.f32.mrf.mxu0
      %v7951 = vpop.f32.mrf.mxu0
      %v7952 = vadd.f32 0.0, %v7951
      %v7953 = vpop.f32.mrf.mxu0
      %7954 = vmatprep.mubr.bf16.mxu0 0
      %7955 = vmatmul.mubr.bf16.gmra.mxu0 %v7672
      %v7956 = vpop.f32.mrf.mxu0
      %v7957 = vadd.f32 0.0, %v7956
      %v7958 = vpop.f32.mrf.mxu0
      %v7959 = vpop.f32.mrf.mxu0
      %v7960 = vadd.f32 0.0, %v7959
      %v7961 = vpop.f32.mrf.mxu0
      %7962 = vdwg.mxu0
      %v7963 = vld [vmem:[#allocation3] sm:$0xff]
      %v7964 = vld [vmem:[#allocation3 + $0x8] sm:$0xff]
      %v7965 = vld [vmem:[#allocation3 + $0x10] sm:$0xff]
      %v7966 = vld [vmem:[#allocation3 + $0x18] sm:$0xff]
      %v7967 = vld [vmem:[#allocation3 + $0x20] sm:$0xff]
      %v7968 = vld [vmem:[#allocation3 + $0x28] sm:$0xff]
      %v7969 = vld [vmem:[#allocation3 + $0x30] sm:$0xff]
      %v7970 = vld [vmem:[#allocation3 + $0x38] sm:$0xff]
      %v7971 = vld [vmem:[#allocation3 + $0x40] sm:$0xff]
      %v7972 = vld [vmem:[#allocation3 + $0x48] sm:$0xff]
      %v7973 = vld [vmem:[#allocation3 + $0x50] sm:$0xff]
      %v7974 = vld [vmem:[#allocation3 + $0x58] sm:$0xff]
      %v7975 = vld [vmem:[#allocation3 + $0x60] sm:$0xff]
      %v7976 = vld [vmem:[#allocation3 + $0x68] sm:$0xff]
      %v7977 = vld [vmem:[#allocation3 + $0x70] sm:$0xff]
      %v7978 = vld [vmem:[#allocation3 + $0x78] sm:$0xff]
      %v7979 = vld [vmem:[#allocation3 + $0x80] sm:$0xff]
      %v7980 = vld [vmem:[#allocation3 + $0x88] sm:$0xff]
      %v7981 = vld [vmem:[#allocation3 + $0x90] sm:$0xff]
      %v7982 = vld [vmem:[#allocation3 + $0x98] sm:$0xff]
      %v7983 = vld [vmem:[#allocation3 + $0xa0] sm:$0xff]
      %v7984 = vld [vmem:[#allocation3 + $0xa8] sm:$0xff]
      %v7985 = vld [vmem:[#allocation3 + $0xb0] sm:$0xff]
      %v7986 = vld [vmem:[#allocation3 + $0xb8] sm:$0xff]
      %v7987 = vld [vmem:[#allocation3 + $0xc0] sm:$0xff]
      %v7988 = vld [vmem:[#allocation3 + $0xc8] sm:$0xff]
      %v7989 = vld [vmem:[#allocation3 + $0xd0] sm:$0xff]
      %v7990 = vld [vmem:[#allocation3 + $0xd8] sm:$0xff]
      %v7991 = vld [vmem:[#allocation3 + $0xe0] sm:$0xff]
      %v7992 = vld [vmem:[#allocation3 + $0xe8] sm:$0xff]
      %v7993 = vld [vmem:[#allocation3 + $0xf0] sm:$0xff]
      %v7994 = vld [vmem:[#allocation3 + $0xf8] sm:$0xff]
      %v7995 = vld [vmem:[#allocation3 + $0x100] sm:$0xff]
      %v7996 = vld [vmem:[#allocation3 + $0x108] sm:$0xff]
      %v7997 = vld [vmem:[#allocation3 + $0x110] sm:$0xff]
      %v7998 = vld [vmem:[#allocation3 + $0x118] sm:$0xff]
      %v7999 = vld [vmem:[#allocation3 + $0x120] sm:$0xff]
      %v8000 = vld [vmem:[#allocation3 + $0x128] sm:$0xff]
      %v8001 = vld [vmem:[#allocation3 + $0x130] sm:$0xff]
      %v8002 = vld [vmem:[#allocation3 + $0x138] sm:$0xff]
      %v8003 = vld [vmem:[#allocation3 + $0x140] sm:$0xff]
      %v8004 = vld [vmem:[#allocation3 + $0x148] sm:$0xff]
      %v8005 = vld [vmem:[#allocation3 + $0x150] sm:$0xff]
      %v8006 = vld [vmem:[#allocation3 + $0x158] sm:$0xff]
      %v8007 = vld [vmem:[#allocation3 + $0x160] sm:$0xff]
      %v8008 = vld [vmem:[#allocation3 + $0x168] sm:$0xff]
      %v8009 = vld [vmem:[#allocation3 + $0x170] sm:$0xff]
      %v8010 = vld [vmem:[#allocation3 + $0x178] sm:$0xff]
      %v8011 = vadd.f32 %v7963, %v7773
      %v8012 = vadd.f32 %v7964, %v7776
      %v8013 = vadd.f32 %v7965, %v7781
      %v8014 = vadd.f32 %v7966, %v7784
      %v8015 = vadd.f32 %v7967, %v7789
      %v8016 = vadd.f32 %v7968, %v7792
      %v8017 = vadd.f32 %v7969, %v7797
      %v8018 = vadd.f32 %v7970, %v7800
      %v8019 = vadd.f32 %v7971, %v7805
      %v8020 = vadd.f32 %v7972, %v7808
      %v8021 = vadd.f32 %v7973, %v7813
      %v8022 = vadd.f32 %v7974, %v7816
      %v8023 = vadd.f32 %v7975, %v7821
      %v8024 = vadd.f32 %v7976, %v7824
      %v8025 = vadd.f32 %v7977, %v7829
      %v8026 = vadd.f32 %v7978, %v7832
      %v8027 = vadd.f32 %v7979, %v7837
      %v8028 = vadd.f32 %v7980, %v7840
      %v8029 = vadd.f32 %v7981, %v7845
      %v8030 = vadd.f32 %v7982, %v7848
      %v8031 = vadd.f32 %v7983, %v7853
      %v8032 = vadd.f32 %v7984, %v7856
      %v8033 = vadd.f32 %v7985, %v7861
      %v8034 = vadd.f32 %v7986, %v7864
      %v8035 = vadd.f32 %v7987, %v7869
      %v8036 = vadd.f32 %v7988, %v7872
      %v8037 = vadd.f32 %v7989, %v7877
      %v8038 = vadd.f32 %v7990, %v7880
      %v8039 = vadd.f32 %v7991, %v7885
      %v8040 = vadd.f32 %v7992, %v7888
      %v8041 = vadd.f32 %v7993, %v7893
      %v8042 = vadd.f32 %v7994, %v7896
      %v8043 = vadd.f32 %v7995, %v7901
      %v8044 = vadd.f32 %v7996, %v7904
      %v8045 = vadd.f32 %v7997, %v7909
      %v8046 = vadd.f32 %v7998, %v7912
      %v8047 = vadd.f32 %v7999, %v7917
      %v8048 = vadd.f32 %v8000, %v7920
      %v8049 = vadd.f32 %v8001, %v7925
      %v8050 = vadd.f32 %v8002, %v7928
      %v8051 = vadd.f32 %v8003, %v7933
      %v8052 = vadd.f32 %v8004, %v7936
      %v8053 = vadd.f32 %v8005, %v7941
      %v8054 = vadd.f32 %v8006, %v7944
      %v8055 = vadd.f32 %v8007, %v7949
      %v8056 = vadd.f32 %v8008, %v7952
      %v8057 = vadd.f32 %v8009, %v7957
      %v8058 = vadd.f32 %v8010, %v7960
      %8059 = vst [vmem:[#allocation3] sm:$0xff] %v8011
      %8060 = vst [vmem:[#allocation3 + $0x8] sm:$0xff] %v8012
      %8061 = vst [vmem:[#allocation3 + $0x10] sm:$0xff] %v8013
      %8062 = vst [vmem:[#allocation3 + $0x18] sm:$0xff] %v8014
      %8063 = vst [vmem:[#allocation3 + $0x20] sm:$0xff] %v8015
      %8064 = vst [vmem:[#allocation3 + $0x28] sm:$0xff] %v8016
      %8065 = vst [vmem:[#allocation3 + $0x30] sm:$0xff] %v8017
      %8066 = vst [vmem:[#allocation3 + $0x38] sm:$0xff] %v8018
      %8067 = vst [vmem:[#allocation3 + $0x40] sm:$0xff] %v8019
      %8068 = vst [vmem:[#allocation3 + $0x48] sm:$0xff] %v8020
      %8069 = vst [vmem:[#allocation3 + $0x50] sm:$0xff] %v8021
      %8070 = vst [vmem:[#allocation3 + $0x58] sm:$0xff] %v8022
      %8071 = vst [vmem:[#allocation3 + $0x60] sm:$0xff] %v8023
      %8072 = vst [vmem:[#allocation3 + $0x68] sm:$0xff] %v8024
      %8073 = vst [vmem:[#allocation3 + $0x70] sm:$0xff] %v8025
      %8074 = vst [vmem:[#allocation3 + $0x78] sm:$0xff] %v8026
      %8075 = vst [vmem:[#allocation3 + $0x80] sm:$0xff] %v8027
      %8076 = vst [vmem:[#allocation3 + $0x88] sm:$0xff] %v8028
      %8077 = vst [vmem:[#allocation3 + $0x90] sm:$0xff] %v8029
      %8078 = vst [vmem:[#allocation3 + $0x98] sm:$0xff] %v8030
      %8079 = vst [vmem:[#allocation3 + $0xa0] sm:$0xff] %v8031
      %8080 = vst [vmem:[#allocation3 + $0xa8] sm:$0xff] %v8032
      %8081 = vst [vmem:[#allocation3 + $0xb0] sm:$0xff] %v8033
      %8082 = vst [vmem:[#allocation3 + $0xb8] sm:$0xff] %v8034
      %8083 = vst [vmem:[#allocation3 + $0xc0] sm:$0xff] %v8035
      %8084 = vst [vmem:[#allocation3 + $0xc8] sm:$0xff] %v8036
      %8085 = vst [vmem:[#allocation3 + $0xd0] sm:$0xff] %v8037
      %8086 = vst [vmem:[#allocation3 + $0xd8] sm:$0xff] %v8038
      %8087 = vst [vmem:[#allocation3 + $0xe0] sm:$0xff] %v8039
      %8088 = vst [vmem:[#allocation3 + $0xe8] sm:$0xff] %v8040
      %8089 = vst [vmem:[#allocation3 + $0xf0] sm:$0xff] %v8041
      %8090 = vst [vmem:[#allocation3 + $0xf8] sm:$0xff] %v8042
      %8091 = vst [vmem:[#allocation3 + $0x100] sm:$0xff] %v8043
      %8092 = vst [vmem:[#allocation3 + $0x108] sm:$0xff] %v8044
      %8093 = vst [vmem:[#allocation3 + $0x110] sm:$0xff] %v8045
      %8094 = vst [vmem:[#allocation3 + $0x118] sm:$0xff] %v8046
      %8095 = vst [vmem:[#allocation3 + $0x120] sm:$0xff] %v8047
      %8096 = vst [vmem:[#allocation3 + $0x128] sm:$0xff] %v8048
      %8097 = vst [vmem:[#allocation3 + $0x130] sm:$0xff] %v8049
      %8098 = vst [vmem:[#allocation3 + $0x138] sm:$0xff] %v8050
      %8099 = vst [vmem:[#allocation3 + $0x140] sm:$0xff] %v8051
      %8100 = vst [vmem:[#allocation3 + $0x148] sm:$0xff] %v8052
      %8101 = vst [vmem:[#allocation3 + $0x150] sm:$0xff] %v8053
      %8102 = vst [vmem:[#allocation3 + $0x158] sm:$0xff] %v8054
      %8103 = vst [vmem:[#allocation3 + $0x160] sm:$0xff] %v8055
      %8104 = vst [vmem:[#allocation3 + $0x168] sm:$0xff] %v8056
      %8105 = vst [vmem:[#allocation3 + $0x170] sm:$0xff] %v8057
      %8106 = vst [vmem:[#allocation3 + $0x178] sm:$0xff] %v8058
      %v8107 = vpack.c.bf16 %v7188, %v7189
      %v8108 = vpack.c.bf16 %v7186, %v7187
      %v8109 = vpack.c.bf16 %v7184, %v7185
      %v8110 = vpack.c.bf16 %v7182, %v7183
      %v8111 = vpack.c.bf16 %v7180, %v7181
      %v8112 = vpack.c.bf16 %v7178, %v7179
      %v8113 = vpack.c.bf16 %v7176, %v7177
      %v8114 = vpack.c.bf16 %v7174, %v7175
      %v8115 = vpack.c.bf16 %v7172, %v7173
      %v8116 = vpack.c.bf16 %v7170, %v7171
      %v8117 = vpack.c.bf16 %v7168, %v7169
      %v8118 = vpack.c.bf16 %v7166, %v7167
      %v8119 = vpack.c.bf16 %v7164, %v7165
      %v8120 = vpack.c.bf16 %v7162, %v7163
      %v8121 = vpack.c.bf16 %v7160, %v7161
      %v8122 = vpack.c.bf16 %v7158, %v7159
      %v8123 = vpack.c.bf16 %v7156, %v7157
      %v8124 = vpack.c.bf16 %v7154, %v7155
      %v8125 = vpack.c.bf16 %v7152, %v7153
      %v8126 = vpack.c.bf16 %v7150, %v7151
      %v8127 = vpack.c.bf16 %v7148, %v7149
      %v8128 = vpack.c.bf16 %v7146, %v7147
      %v8129 = vpack.c.bf16 %v7144, %v7145
      %v8130 = vpack.c.bf16 %v7190, %v7143
      %s8131 = scalar_lea.vmem %s2, 320
      %v8132 = vld [vmem:[%s8131] sm:$0xf]
      %v8133 = vld [vmem:[%s8131 + $0x4] sm:$0xf]
      %v8134 = vld [vmem:[%s8131 + $0x8] sm:$0xf]
      %v8135 = vld [vmem:[%s8131 + $0xc] sm:$0xf]
      %v8136 = vld [vmem:[%s8131 + $0x10] sm:$0xf]
      %v8137 = vld [vmem:[%s8131 + $0x14] sm:$0xf]
      %v8138 = vld [vmem:[%s8131 + $0x18] sm:$0xf]
      %v8139 = vld [vmem:[%s8131 + $0x1c] sm:$0xf]
      %v8140 = vld [vmem:[%s8131 + $0x20] sm:$0xf]
      %v8141 = vld [vmem:[%s8131 + $0x24] sm:$0xf]
      %v8142 = vld [vmem:[%s8131 + $0x28] sm:$0xf]
      %v8143 = vld [vmem:[%s8131 + $0x2c] sm:$0xf]
      %v8144 = vld [vmem:[%s8131 + $0x30] sm:$0xf]
      %v8145 = vld [vmem:[%s8131 + $0x34] sm:$0xf]
      %v8146 = vld [vmem:[%s8131 + $0x38] sm:$0xf]
      %v8147 = vld [vmem:[%s8131 + $0x3c] sm:$0xf]
      %v8164 = vunpack.c.l.b16 %v8132
      %v8165 = vunpack.c.l.b16 %v8133
      %v8166 = vunpack.c.l.b16 %v8134
      %v8167 = vunpack.c.l.b16 %v8135
      %v8168 = vunpack.c.l.b16 %v8136
      %v8169 = vunpack.c.l.b16 %v8137
      %v8170 = vunpack.c.l.b16 %v8138
      %v8171 = vunpack.c.l.b16 %v8139
      %v8172 = vunpack.c.l.b16 %v8140
      %v8173 = vunpack.c.l.b16 %v8141
      %v8174 = vunpack.c.l.b16 %v8142
      %v8175 = vunpack.c.l.b16 %v8143
      %v8176 = vunpack.c.l.b16 %v8144
      %v8177 = vunpack.c.l.b16 %v8145
      %v8178 = vunpack.c.l.b16 %v8146
      %v8179 = vunpack.c.l.b16 %v8147
      %v8180 = vpack.c.b16 %v8165, %v8164
      %v8181 = vpack.c.b16 %v8167, %v8166
      %v8182 = vpack.c.b16 %v8169, %v8168
      %v8183 = vpack.c.b16 %v8171, %v8170
      %v8184 = vpack.c.b16 %v8173, %v8172
      %v8185 = vpack.c.b16 %v8175, %v8174
      %v8186 = vpack.c.b16 %v8177, %v8176
      %v8187 = vpack.c.b16 %v8179, %v8178
      %8196 = vmatprep.subr.bf16.mxu0 0
      %8197 = vmatpush1.bf16.msra.mxu0 %v8187
      %8198 = vmatprep.subr.bf16.mxu0 0
      %8199 = vmatpush1.bf16.msra.mxu0 %v8186
      %8200 = vmatprep.subr.bf16.mxu0 0
      %8201 = vmatpush1.bf16.msra.mxu0 %v8185
      %8202 = vmatprep.subr.bf16.mxu0 0
      %8203 = vmatpush1.bf16.msra.mxu0 %v8184
      %8204 = vmatprep.subr.bf16.mxu0 0
      %8205 = vmatpush1.bf16.msra.mxu0 %v8183
      %8206 = vmatprep.subr.bf16.mxu0 0
      %8207 = vmatpush1.bf16.msra.mxu0 %v8182
      %8208 = vmatprep.subr.bf16.mxu0 0
      %8209 = vmatpush1.bf16.msra.mxu0 %v8181
      %8210 = vmatprep.subr.bf16.mxu0 0
      %8211 = vmatpush1.bf16.msra.mxu0 %v8180
      %8212 = vmatprep.subr.bf16.mxu0 0
      %8213 = vmatpush2.bf16.msra.mxu0 0
      %8214 = vmatprep.subr.bf16.mxu0 0
      %8215 = vmatpush2.bf16.msra.mxu0 0
      %8216 = vmatprep.subr.bf16.mxu0 0
      %8217 = vmatpush2.bf16.msra.mxu0 0
      %8218 = vmatprep.subr.bf16.mxu0 0
      %8219 = vmatpush2.bf16.msra.mxu0 0
      %8220 = vmatprep.subr.bf16.mxu0 0
      %8221 = vmatpush2.bf16.msra.mxu0 0
      %8222 = vmatprep.subr.bf16.mxu0 0
      %8223 = vmatpush2.bf16.msra.mxu0 0
      %8224 = vmatprep.subr.bf16.mxu0 0
      %8225 = vmatpush2.bf16.msra.mxu0 0
      %8226 = vmatprep.subr.bf16.mxu0 0
      %8227 = vmatpush2.bf16.msra.mxu0 0
      %8228 = vmatprep.mubr.bf16.mxu0 0
      %8229 = vmatmul.mubr.bf16.gmra.mxu0 %v8107
      %v8230 = vpop.f32.mrf.mxu0
      %v8231 = vadd.f32 0.0, %v8230
      %v8232 = vpop.f32.mrf.mxu0
      %v8233 = vpop.f32.mrf.mxu0
      %v8234 = vadd.f32 0.0, %v8233
      %v8235 = vpop.f32.mrf.mxu0
      %8236 = vmatprep.mubr.bf16.mxu0 0
      %8237 = vmatmul.mubr.bf16.gmra.mxu0 %v8108
      %v8238 = vpop.f32.mrf.mxu0
      %v8239 = vadd.f32 0.0, %v8238
      %v8240 = vpop.f32.mrf.mxu0
      %v8241 = vpop.f32.mrf.mxu0
      %v8242 = vadd.f32 0.0, %v8241
      %v8243 = vpop.f32.mrf.mxu0
      %8244 = vmatprep.mubr.bf16.mxu0 0
      %8245 = vmatmul.mubr.bf16.gmra.mxu0 %v8109
      %v8246 = vpop.f32.mrf.mxu0
      %v8247 = vadd.f32 0.0, %v8246
      %v8248 = vpop.f32.mrf.mxu0
      %v8249 = vpop.f32.mrf.mxu0
      %v8250 = vadd.f32 0.0, %v8249
      %v8251 = vpop.f32.mrf.mxu0
      %8252 = vmatprep.mubr.bf16.mxu0 0
      %8253 = vmatmul.mubr.bf16.gmra.mxu0 %v8110
      %v8254 = vpop.f32.mrf.mxu0
      %v8255 = vadd.f32 0.0, %v8254
      %v8256 = vpop.f32.mrf.mxu0
      %v8257 = vpop.f32.mrf.mxu0
      %v8258 = vadd.f32 0.0, %v8257
      %v8259 = vpop.f32.mrf.mxu0
      %8260 = vmatprep.mubr.bf16.mxu0 0
      %8261 = vmatmul.mubr.bf16.gmra.mxu0 %v8111
      %v8262 = vpop.f32.mrf.mxu0
      %v8263 = vadd.f32 0.0, %v8262
      %v8264 = vpop.f32.mrf.mxu0
      %v8265 = vpop.f32.mrf.mxu0
      %v8266 = vadd.f32 0.0, %v8265
      %v8267 = vpop.f32.mrf.mxu0
      %8268 = vmatprep.mubr.bf16.mxu0 0
      %8269 = vmatmul.mubr.bf16.gmra.mxu0 %v8112
      %v8270 = vpop.f32.mrf.mxu0
      %v8271 = vadd.f32 0.0, %v8270
      %v8272 = vpop.f32.mrf.mxu0
      %v8273 = vpop.f32.mrf.mxu0
      %v8274 = vadd.f32 0.0, %v8273
      %v8275 = vpop.f32.mrf.mxu0
      %8276 = vmatprep.mubr.bf16.mxu0 0
      %8277 = vmatmul.mubr.bf16.gmra.mxu0 %v8113
      %v8278 = vpop.f32.mrf.mxu0
      %v8279 = vadd.f32 0.0, %v8278
      %v8280 = vpop.f32.mrf.mxu0
      %v8281 = vpop.f32.mrf.mxu0
      %v8282 = vadd.f32 0.0, %v8281
      %v8283 = vpop.f32.mrf.mxu0
      %8284 = vmatprep.mubr.bf16.mxu0 0
      %8285 = vmatmul.mubr.bf16.gmra.mxu0 %v8114
      %v8286 = vpop.f32.mrf.mxu0
      %v8287 = vadd.f32 0.0, %v8286
      %v8288 = vpop.f32.mrf.mxu0
      %v8289 = vpop.f32.mrf.mxu0
      %v8290 = vadd.f32 0.0, %v8289
      %v8291 = vpop.f32.mrf.mxu0
      %8292 = vmatprep.mubr.bf16.mxu0 0
      %8293 = vmatmul.mubr.bf16.gmra.mxu0 %v8115
      %v8294 = vpop.f32.mrf.mxu0
      %v8295 = vadd.f32 0.0, %v8294
      %v8296 = vpop.f32.mrf.mxu0
      %v8297 = vpop.f32.mrf.mxu0
      %v8298 = vadd.f32 0.0, %v8297
      %v8299 = vpop.f32.mrf.mxu0
      %8300 = vmatprep.mubr.bf16.mxu0 0
      %8301 = vmatmul.mubr.bf16.gmra.mxu0 %v8116
      %v8302 = vpop.f32.mrf.mxu0
      %v8303 = vadd.f32 0.0, %v8302
      %v8304 = vpop.f32.mrf.mxu0
      %v8305 = vpop.f32.mrf.mxu0
      %v8306 = vadd.f32 0.0, %v8305
      %v8307 = vpop.f32.mrf.mxu0
      %8308 = vmatprep.mubr.bf16.mxu0 0
      %8309 = vmatmul.mubr.bf16.gmra.mxu0 %v8117
      %v8310 = vpop.f32.mrf.mxu0
      %v8311 = vadd.f32 0.0, %v8310
      %v8312 = vpop.f32.mrf.mxu0
      %v8313 = vpop.f32.mrf.mxu0
      %v8314 = vadd.f32 0.0, %v8313
      %v8315 = vpop.f32.mrf.mxu0
      %8316 = vmatprep.mubr.bf16.mxu0 0
      %8317 = vmatmul.mubr.bf16.gmra.mxu0 %v8118
      %v8318 = vpop.f32.mrf.mxu0
      %v8319 = vadd.f32 0.0, %v8318
      %v8320 = vpop.f32.mrf.mxu0
      %v8321 = vpop.f32.mrf.mxu0
      %v8322 = vadd.f32 0.0, %v8321
      %v8323 = vpop.f32.mrf.mxu0
      %8324 = vmatprep.mubr.bf16.mxu0 0
      %8325 = vmatmul.mubr.bf16.gmra.mxu0 %v8119
      %v8326 = vpop.f32.mrf.mxu0
      %v8327 = vadd.f32 0.0, %v8326
      %v8328 = vpop.f32.mrf.mxu0
      %v8329 = vpop.f32.mrf.mxu0
      %v8330 = vadd.f32 0.0, %v8329
      %v8331 = vpop.f32.mrf.mxu0
      %8332 = vmatprep.mubr.bf16.mxu0 0
      %8333 = vmatmul.mubr.bf16.gmra.mxu0 %v8120
      %v8334 = vpop.f32.mrf.mxu0
      %v8335 = vadd.f32 0.0, %v8334
      %v8336 = vpop.f32.mrf.mxu0
      %v8337 = vpop.f32.mrf.mxu0
      %v8338 = vadd.f32 0.0, %v8337
      %v8339 = vpop.f32.mrf.mxu0
      %8340 = vmatprep.mubr.bf16.mxu0 0
      %8341 = vmatmul.mubr.bf16.gmra.mxu0 %v8121
      %v8342 = vpop.f32.mrf.mxu0
      %v8343 = vadd.f32 0.0, %v8342
      %v8344 = vpop.f32.mrf.mxu0
      %v8345 = vpop.f32.mrf.mxu0
      %v8346 = vadd.f32 0.0, %v8345
      %v8347 = vpop.f32.mrf.mxu0
      %8348 = vmatprep.mubr.bf16.mxu0 0
      %8349 = vmatmul.mubr.bf16.gmra.mxu0 %v8122
      %v8350 = vpop.f32.mrf.mxu0
      %v8351 = vadd.f32 0.0, %v8350
      %v8352 = vpop.f32.mrf.mxu0
      %v8353 = vpop.f32.mrf.mxu0
      %v8354 = vadd.f32 0.0, %v8353
      %v8355 = vpop.f32.mrf.mxu0
      %8356 = vmatprep.mubr.bf16.mxu0 0
      %8357 = vmatmul.mubr.bf16.gmra.mxu0 %v8123
      %v8358 = vpop.f32.mrf.mxu0
      %v8359 = vadd.f32 0.0, %v8358
      %v8360 = vpop.f32.mrf.mxu0
      %v8361 = vpop.f32.mrf.mxu0
      %v8362 = vadd.f32 0.0, %v8361
      %v8363 = vpop.f32.mrf.mxu0
      %8364 = vmatprep.mubr.bf16.mxu0 0
      %8365 = vmatmul.mubr.bf16.gmra.mxu0 %v8124
      %v8366 = vpop.f32.mrf.mxu0
      %v8367 = vadd.f32 0.0, %v8366
      %v8368 = vpop.f32.mrf.mxu0
      %v8369 = vpop.f32.mrf.mxu0
      %v8370 = vadd.f32 0.0, %v8369
      %v8371 = vpop.f32.mrf.mxu0
      %8372 = vmatprep.mubr.bf16.mxu0 0
      %8373 = vmatmul.mubr.bf16.gmra.mxu0 %v8125
      %v8374 = vpop.f32.mrf.mxu0
      %v8375 = vadd.f32 0.0, %v8374
      %v8376 = vpop.f32.mrf.mxu0
      %v8377 = vpop.f32.mrf.mxu0
      %v8378 = vadd.f32 0.0, %v8377
      %v8379 = vpop.f32.mrf.mxu0
      %8380 = vmatprep.mubr.bf16.mxu0 0
      %8381 = vmatmul.mubr.bf16.gmra.mxu0 %v8126
      %v8382 = vpop.f32.mrf.mxu0
      %v8383 = vadd.f32 0.0, %v8382
      %v8384 = vpop.f32.mrf.mxu0
      %v8385 = vpop.f32.mrf.mxu0
      %v8386 = vadd.f32 0.0, %v8385
      %v8387 = vpop.f32.mrf.mxu0
      %8388 = vmatprep.mubr.bf16.mxu0 0
      %8389 = vmatmul.mubr.bf16.gmra.mxu0 %v8127
      %v8390 = vpop.f32.mrf.mxu0
      %v8391 = vadd.f32 0.0, %v8390
      %v8392 = vpop.f32.mrf.mxu0
      %v8393 = vpop.f32.mrf.mxu0
      %v8394 = vadd.f32 0.0, %v8393
      %v8395 = vpop.f32.mrf.mxu0
      %8396 = vmatprep.mubr.bf16.mxu0 0
      %8397 = vmatmul.mubr.bf16.gmra.mxu0 %v8128
      %v8398 = vpop.f32.mrf.mxu0
      %v8399 = vadd.f32 0.0, %v8398
      %v8400 = vpop.f32.mrf.mxu0
      %v8401 = vpop.f32.mrf.mxu0
      %v8402 = vadd.f32 0.0, %v8401
      %v8403 = vpop.f32.mrf.mxu0
      %8404 = vmatprep.mubr.bf16.mxu0 0
      %8405 = vmatmul.mubr.bf16.gmra.mxu0 %v8129
      %v8406 = vpop.f32.mrf.mxu0
      %v8407 = vadd.f32 0.0, %v8406
      %v8408 = vpop.f32.mrf.mxu0
      %v8409 = vpop.f32.mrf.mxu0
      %v8410 = vadd.f32 0.0, %v8409
      %v8411 = vpop.f32.mrf.mxu0
      %8412 = vmatprep.mubr.bf16.mxu0 0
      %8413 = vmatmul.mubr.bf16.gmra.mxu0 %v8130
      %v8414 = vpop.f32.mrf.mxu0
      %v8415 = vadd.f32 0.0, %v8414
      %v8416 = vpop.f32.mrf.mxu0
      %v8417 = vpop.f32.mrf.mxu0
      %v8418 = vadd.f32 0.0, %v8417
      %v8419 = vpop.f32.mrf.mxu0
      %8420 = vdwg.mxu0
      %v8421 = vld [vmem:[#allocation3] sm:$0xff]
      %v8422 = vld [vmem:[#allocation3 + $0x8] sm:$0xff]
      %v8423 = vld [vmem:[#allocation3 + $0x10] sm:$0xff]
      %v8424 = vld [vmem:[#allocation3 + $0x18] sm:$0xff]
      %v8425 = vld [vmem:[#allocation3 + $0x20] sm:$0xff]
      %v8426 = vld [vmem:[#allocation3 + $0x28] sm:$0xff]
      %v8427 = vld [vmem:[#allocation3 + $0x30] sm:$0xff]
      %v8428 = vld [vmem:[#allocation3 + $0x38] sm:$0xff]
      %v8429 = vld [vmem:[#allocation3 + $0x40] sm:$0xff]
      %v8430 = vld [vmem:[#allocation3 + $0x48] sm:$0xff]
      %v8431 = vld [vmem:[#allocation3 + $0x50] sm:$0xff]
      %v8432 = vld [vmem:[#allocation3 + $0x58] sm:$0xff]
      %v8433 = vld [vmem:[#allocation3 + $0x60] sm:$0xff]
      %v8434 = vld [vmem:[#allocation3 + $0x68] sm:$0xff]
      %v8435 = vld [vmem:[#allocation3 + $0x70] sm:$0xff]
      %v8436 = vld [vmem:[#allocation3 + $0x78] sm:$0xff]
      %v8437 = vld [vmem:[#allocation3 + $0x80] sm:$0xff]
      %v8438 = vld [vmem:[#allocation3 + $0x88] sm:$0xff]
      %v8439 = vld [vmem:[#allocation3 + $0x90] sm:$0xff]
      %v8440 = vld [vmem:[#allocation3 + $0x98] sm:$0xff]
      %v8441 = vld [vmem:[#allocation3 + $0xa0] sm:$0xff]
      %v8442 = vld [vmem:[#allocation3 + $0xa8] sm:$0xff]
      %v8443 = vld [vmem:[#allocation3 + $0xb0] sm:$0xff]
      %v8444 = vld [vmem:[#allocation3 + $0xb8] sm:$0xff]
      %v8445 = vld [vmem:[#allocation3 + $0xc0] sm:$0xff]
      %v8446 = vld [vmem:[#allocation3 + $0xc8] sm:$0xff]
      %v8447 = vld [vmem:[#allocation3 + $0xd0] sm:$0xff]
      %v8448 = vld [vmem:[#allocation3 + $0xd8] sm:$0xff]
      %v8449 = vld [vmem:[#allocation3 + $0xe0] sm:$0xff]
      %v8450 = vld [vmem:[#allocation3 + $0xe8] sm:$0xff]
      %v8451 = vld [vmem:[#allocation3 + $0xf0] sm:$0xff]
      %v8452 = vld [vmem:[#allocation3 + $0xf8] sm:$0xff]
      %v8453 = vld [vmem:[#allocation3 + $0x100] sm:$0xff]
      %v8454 = vld [vmem:[#allocation3 + $0x108] sm:$0xff]
      %v8455 = vld [vmem:[#allocation3 + $0x110] sm:$0xff]
      %v8456 = vld [vmem:[#allocation3 + $0x118] sm:$0xff]
      %v8457 = vld [vmem:[#allocation3 + $0x120] sm:$0xff]
      %v8458 = vld [vmem:[#allocation3 + $0x128] sm:$0xff]
      %v8459 = vld [vmem:[#allocation3 + $0x130] sm:$0xff]
      %v8460 = vld [vmem:[#allocation3 + $0x138] sm:$0xff]
      %v8461 = vld [vmem:[#allocation3 + $0x140] sm:$0xff]
      %v8462 = vld [vmem:[#allocation3 + $0x148] sm:$0xff]
      %v8463 = vld [vmem:[#allocation3 + $0x150] sm:$0xff]
      %v8464 = vld [vmem:[#allocation3 + $0x158] sm:$0xff]
      %v8465 = vld [vmem:[#allocation3 + $0x160] sm:$0xff]
      %v8466 = vld [vmem:[#allocation3 + $0x168] sm:$0xff]
      %v8467 = vld [vmem:[#allocation3 + $0x170] sm:$0xff]
      %v8468 = vld [vmem:[#allocation3 + $0x178] sm:$0xff]
      %v8469 = vadd.f32 %v8421, %v8231
      %v8470 = vadd.f32 %v8422, %v8234
      %v8471 = vadd.f32 %v8423, %v8239
      %v8472 = vadd.f32 %v8424, %v8242
      %v8473 = vadd.f32 %v8425, %v8247
      %v8474 = vadd.f32 %v8426, %v8250
      %v8475 = vadd.f32 %v8427, %v8255
      %v8476 = vadd.f32 %v8428, %v8258
      %v8477 = vadd.f32 %v8429, %v8263
      %v8478 = vadd.f32 %v8430, %v8266
      %v8479 = vadd.f32 %v8431, %v8271
      %v8480 = vadd.f32 %v8432, %v8274
      %v8481 = vadd.f32 %v8433, %v8279
      %v8482 = vadd.f32 %v8434, %v8282
      %v8483 = vadd.f32 %v8435, %v8287
      %v8484 = vadd.f32 %v8436, %v8290
      %v8485 = vadd.f32 %v8437, %v8295
      %v8486 = vadd.f32 %v8438, %v8298
      %v8487 = vadd.f32 %v8439, %v8303
      %v8488 = vadd.f32 %v8440, %v8306
      %v8489 = vadd.f32 %v8441, %v8311
      %v8490 = vadd.f32 %v8442, %v8314
      %v8491 = vadd.f32 %v8443, %v8319
      %v8492 = vadd.f32 %v8444, %v8322
      %v8493 = vadd.f32 %v8445, %v8327
      %v8494 = vadd.f32 %v8446, %v8330
      %v8495 = vadd.f32 %v8447, %v8335
      %v8496 = vadd.f32 %v8448, %v8338
      %v8497 = vadd.f32 %v8449, %v8343
      %v8498 = vadd.f32 %v8450, %v8346
      %v8499 = vadd.f32 %v8451, %v8351
      %v8500 = vadd.f32 %v8452, %v8354
      %v8501 = vadd.f32 %v8453, %v8359
      %v8502 = vadd.f32 %v8454, %v8362
      %v8503 = vadd.f32 %v8455, %v8367
      %v8504 = vadd.f32 %v8456, %v8370
      %v8505 = vadd.f32 %v8457, %v8375
      %v8506 = vadd.f32 %v8458, %v8378
      %v8507 = vadd.f32 %v8459, %v8383
      %v8508 = vadd.f32 %v8460, %v8386
      %v8509 = vadd.f32 %v8461, %v8391
      %v8510 = vadd.f32 %v8462, %v8394
      %v8511 = vadd.f32 %v8463, %v8399
      %v8512 = vadd.f32 %v8464, %v8402
      %v8513 = vadd.f32 %v8465, %v8407
      %v8514 = vadd.f32 %v8466, %v8410
      %v8515 = vadd.f32 %v8467, %v8415
      %v8516 = vadd.f32 %v8468, %v8418
      %8517 = vst [vmem:[#allocation3] sm:$0xff] %v8469
      %8518 = vst [vmem:[#allocation3 + $0x8] sm:$0xff] %v8470
      %8519 = vst [vmem:[#allocation3 + $0x10] sm:$0xff] %v8471
      %8520 = vst [vmem:[#allocation3 + $0x18] sm:$0xff] %v8472
      %8521 = vst [vmem:[#allocation3 + $0x20] sm:$0xff] %v8473
      %8522 = vst [vmem:[#allocation3 + $0x28] sm:$0xff] %v8474
      %8523 = vst [vmem:[#allocation3 + $0x30] sm:$0xff] %v8475
      %8524 = vst [vmem:[#allocation3 + $0x38] sm:$0xff] %v8476
      %8525 = vst [vmem:[#allocation3 + $0x40] sm:$0xff] %v8477
      %8526 = vst [vmem:[#allocation3 + $0x48] sm:$0xff] %v8478
      %8527 = vst [vmem:[#allocation3 + $0x50] sm:$0xff] %v8479
      %8528 = vst [vmem:[#allocation3 + $0x58] sm:$0xff] %v8480
      %8529 = vst [vmem:[#allocation3 + $0x60] sm:$0xff] %v8481
      %8530 = vst [vmem:[#allocation3 + $0x68] sm:$0xff] %v8482
      %8531 = vst [vmem:[#allocation3 + $0x70] sm:$0xff] %v8483
      %8532 = vst [vmem:[#allocation3 + $0x78] sm:$0xff] %v8484
      %8533 = vst [vmem:[#allocation3 + $0x80] sm:$0xff] %v8485
      %8534 = vst [vmem:[#allocation3 + $0x88] sm:$0xff] %v8486
      %8535 = vst [vmem:[#allocation3 + $0x90] sm:$0xff] %v8487
      %8536 = vst [vmem:[#allocation3 + $0x98] sm:$0xff] %v8488
      %8537 = vst [vmem:[#allocation3 + $0xa0] sm:$0xff] %v8489
      %8538 = vst [vmem:[#allocation3 + $0xa8] sm:$0xff] %v8490
      %8539 = vst [vmem:[#allocation3 + $0xb0] sm:$0xff] %v8491
      %8540 = vst [vmem:[#allocation3 + $0xb8] sm:$0xff] %v8492
      %8541 = vst [vmem:[#allocation3 + $0xc0] sm:$0xff] %v8493
      %8542 = vst [vmem:[#allocation3 + $0xc8] sm:$0xff] %v8494
      %8543 = vst [vmem:[#allocation3 + $0xd0] sm:$0xff] %v8495
      %8544 = vst [vmem:[#allocation3 + $0xd8] sm:$0xff] %v8496
      %8545 = vst [vmem:[#allocation3 + $0xe0] sm:$0xff] %v8497
      %8546 = vst [vmem:[#allocation3 + $0xe8] sm:$0xff] %v8498
      %8547 = vst [vmem:[#allocation3 + $0xf0] sm:$0xff] %v8499
      %8548 = vst [vmem:[#allocation3 + $0xf8] sm:$0xff] %v8500
      %8549 = vst [vmem:[#allocation3 + $0x100] sm:$0xff] %v8501
      %8550 = vst [vmem:[#allocation3 + $0x108] sm:$0xff] %v8502
      %8551 = vst [vmem:[#allocation3 + $0x110] sm:$0xff] %v8503
      %8552 = vst [vmem:[#allocation3 + $0x118] sm:$0xff] %v8504
      %8553 = vst [vmem:[#allocation3 + $0x120] sm:$0xff] %v8505
      %8554 = vst [vmem:[#allocation3 + $0x128] sm:$0xff] %v8506
      %8555 = vst [vmem:[#allocation3 + $0x130] sm:$0xff] %v8507
      %8556 = vst [vmem:[#allocation3 + $0x138] sm:$0xff] %v8508
      %8557 = vst [vmem:[#allocation3 + $0x140] sm:$0xff] %v8509
      %8558 = vst [vmem:[#allocation3 + $0x148] sm:$0xff] %v8510
      %8559 = vst [vmem:[#allocation3 + $0x150] sm:$0xff] %v8511
      %8560 = vst [vmem:[#allocation3 + $0x158] sm:$0xff] %v8512
      %8561 = vst [vmem:[#allocation3 + $0x160] sm:$0xff] %v8513
      %8562 = vst [vmem:[#allocation3 + $0x168] sm:$0xff] %v8514
      %8563 = vst [vmem:[#allocation3 + $0x170] sm:$0xff] %v8515
      %8564 = vst [vmem:[#allocation3 + $0x178] sm:$0xff] %v8516
      %v8565 = vld [vmem:[#allocation2 + $0x30] sm:$0xff]
      %v8566 = vld [vmem:[#allocation2 + $0x38] sm:$0xff]
      %v8567 = vld [vmem:[#allocation2 + $0x40] sm:$0xff]
      %v8568 = vld [vmem:[#allocation2 + $0x48] sm:$0xff]
      %v8569 = vld [vmem:[#allocation2 + $0x50] sm:$0xff]
      %v8570 = vld [vmem:[#allocation2 + $0x58] sm:$0xff]
      %v8571 = vld [vmem:[#allocation2 + $0x60] sm:$0xff]
      %v8572 = vld [vmem:[#allocation2 + $0x68] sm:$0xff]
      %v8573 = vld [vmem:[#allocation2 + $0x70] sm:$0xff]
      %v8574 = vld [vmem:[#allocation2 + $0x78] sm:$0xff]
      %v8575 = vld [vmem:[#allocation2 + $0x80] sm:$0xff]
      %v8576 = vld [vmem:[#allocation2 + $0x88] sm:$0xff]
      %v8577 = vld [vmem:[#allocation2 + $0x90] sm:$0xff]
      %v8578 = vld [vmem:[#allocation2 + $0x98] sm:$0xff]
      %v8579 = vld [vmem:[#allocation2 + $0xa0] sm:$0xff]
      %v8580 = vld [vmem:[#allocation2 + $0xa8] sm:$0xff]
      %v8581 = vld [vmem:[#allocation2 + $0xb0] sm:$0xff]
      %v8582 = vld [vmem:[#allocation2 + $0xb8] sm:$0xff]
      %v8583 = vld [vmem:[#allocation2 + $0xc0] sm:$0xff]
      %v8584 = vld [vmem:[#allocation2 + $0xc8] sm:$0xff]
      %v8585 = vld [vmem:[#allocation2 + $0xd0] sm:$0xff]
      %v8586 = vld [vmem:[#allocation2 + $0xd8] sm:$0xff]
      %v8587 = vld [vmem:[#allocation2 + $0xe0] sm:$0xff]
      %v8588 = vld [vmem:[#allocation2 + $0xe8] sm:$0xff]
      %v8589 = vld [vmem:[#allocation2 + $0xf0] sm:$0xff]
      %v8590 = vld [vmem:[#allocation2 + $0xf8] sm:$0xff]
      %v8591 = vld [vmem:[#allocation2 + $0x100] sm:$0xff]
      %v8592 = vld [vmem:[#allocation2 + $0x108] sm:$0xff]
      %v8593 = vld [vmem:[#allocation2 + $0x110] sm:$0xff]
      %v8594 = vld [vmem:[#allocation2 + $0x118] sm:$0xff]
      %v8595 = vld [vmem:[#allocation2 + $0x120] sm:$0xff]
      %v8596 = vld [vmem:[#allocation2 + $0x128] sm:$0xff]
      %v8597 = vld [vmem:[#allocation2 + $0x130] sm:$0xff]
      %v8598 = vld [vmem:[#allocation2 + $0x138] sm:$0xff]
      %v8599 = vld [vmem:[#allocation2 + $0x140] sm:$0xff]
      %v8600 = vld [vmem:[#allocation2 + $0x148] sm:$0xff]
      %v8601 = vld [vmem:[#allocation2 + $0x150] sm:$0xff]
      %v8602 = vld [vmem:[#allocation2 + $0x158] sm:$0xff]
      %v8603 = vld [vmem:[#allocation2 + $0x160] sm:$0xff]
      %v8604 = vld [vmem:[#allocation2 + $0x168] sm:$0xff]
      %v8605 = vld [vmem:[#allocation2 + $0x170] sm:$0xff]
      %v8606 = vld [vmem:[#allocation2 + $0x178] sm:$0xff]
      %v8607 = vld [vmem:[#allocation2 + $0x180] sm:$0xff]
      %v8608 = vld [vmem:[#allocation2 + $0x188] sm:$0xff]
      %v8609 = vld [vmem:[#allocation2 + $0x190] sm:$0xff]
      %v8610 = vld [vmem:[#allocation2 + $0x198] sm:$0xff]
      %v8611 = vld [vmem:[#allocation2 + $0x1a0] sm:$0xff]
      %v8612 = vld [vmem:[#allocation2 + $0x1a8] sm:$0xff]
      %v8613 = vrot.slane %v8565, 7
      %v8614 = vrot.slane %v8566, 7
      %v8615 = vrot.slane %v8567, 7
      %v8616 = vrot.slane %v8568, 7
      %v8617 = vrot.slane %v8569, 7
      %v8618 = vrot.slane %v8570, 7
      %v8619 = vrot.slane %v8571, 7
      %v8620 = vrot.slane %v8572, 7
      %v8621 = vrot.slane %v8573, 7
      %v8622 = vrot.slane %v8574, 7
      %v8623 = vrot.slane %v8575, 7
      %v8624 = vrot.slane %v8576, 7
      %v8625 = vrot.slane %v8577, 7
      %v8626 = vrot.slane %v8578, 7
      %v8627 = vrot.slane %v8579, 7
      %v8628 = vrot.slane %v8580, 7
      %v8629 = vrot.slane %v8581, 7
      %v8630 = vrot.slane %v8582, 7
      %v8631 = vrot.slane %v8583, 7
      %v8632 = vrot.slane %v8584, 7
      %v8633 = vrot.slane %v8585, 7
      %v8634 = vrot.slane %v8586, 7
      %v8635 = vrot.slane %v8587, 7
      %v8636 = vrot.slane %v8588, 7
      %v8637 = vrot.slane %v8589, 7
      %v8638 = vrot.slane %v8590, 7
      %v8639 = vrot.slane %v8591, 7
      %v8640 = vrot.slane %v8592, 7
      %v8641 = vrot.slane %v8593, 7
      %v8642 = vrot.slane %v8594, 7
      %v8643 = vrot.slane %v8595, 7
      %v8644 = vrot.slane %v8596, 7
      %v8645 = vrot.slane %v8597, 7
      %v8646 = vrot.slane %v8598, 7
      %v8647 = vrot.slane %v8599, 7
      %v8648 = vrot.slane %v8600, 7
      %v8649 = vrot.slane %v8601, 7
      %v8650 = vrot.slane %v8602, 7
      %v8651 = vrot.slane %v8603, 7
      %v8652 = vrot.slane %v8604, 7
      %v8653 = vrot.slane %v8605, 7
      %v8654 = vrot.slane %v8606, 7
      %v8655 = vrot.slane %v8607, 7
      %v8656 = vrot.slane %v8608, 7
      %v8657 = vrot.slane %v8609, 7
      %v8658 = vrot.slane %v8610, 7
      %v8659 = vrot.slane %v8611, 7
      %v8660 = vrot.slane %v8612, 7
      %v8661 = vsel %vm303, %v8659, %v8660
      %v8662 = vsel %vm303, %v8658, %v8659
      %v8663 = vsel %vm303, %v8657, %v8658
      %v8664 = vsel %vm303, %v8656, %v8657
      %v8665 = vsel %vm303, %v8655, %v8656
      %v8666 = vsel %vm303, %v8654, %v8655
      %v8667 = vsel %vm303, %v8653, %v8654
      %v8668 = vsel %vm303, %v8652, %v8653
      %v8669 = vsel %vm303, %v8651, %v8652
      %v8670 = vsel %vm303, %v8650, %v8651
      %v8671 = vsel %vm303, %v8649, %v8650
      %v8672 = vsel %vm303, %v8648, %v8649
      %v8673 = vsel %vm303, %v8647, %v8648
      %v8674 = vsel %vm303, %v8646, %v8647
      %v8675 = vsel %vm303, %v8645, %v8646
      %v8676 = vsel %vm303, %v8644, %v8645
      %v8677 = vsel %vm303, %v8643, %v8644
      %v8678 = vsel %vm303, %v8642, %v8643
      %v8679 = vsel %vm303, %v8641, %v8642
      %v8680 = vsel %vm303, %v8640, %v8641
      %v8681 = vsel %vm303, %v8639, %v8640
      %v8682 = vsel %vm303, %v8638, %v8639
      %v8683 = vsel %vm303, %v8637, %v8638
      %v8684 = vsel %vm303, %v8636, %v8637
      %v8685 = vsel %vm303, %v8635, %v8636
      %v8686 = vsel %vm303, %v8634, %v8635
      %v8687 = vsel %vm303, %v8633, %v8634
      %v8688 = vsel %vm303, %v8632, %v8633
      %v8689 = vsel %vm303, %v8631, %v8632
      %v8690 = vsel %vm303, %v8630, %v8631
      %v8691 = vsel %vm303, %v8629, %v8630
      %v8692 = vsel %vm303, %v8628, %v8629
      %v8693 = vsel %vm303, %v8627, %v8628
      %v8694 = vsel %vm303, %v8626, %v8627
      %v8695 = vsel %vm303, %v8625, %v8626
      %v8696 = vsel %vm303, %v8624, %v8625
      %v8697 = vsel %vm303, %v8623, %v8624
      %v8698 = vsel %vm303, %v8622, %v8623
      %v8699 = vsel %vm303, %v8621, %v8622
      %v8700 = vsel %vm303, %v8620, %v8621
      %v8701 = vsel %vm303, %v8619, %v8620
      %v8702 = vsel %vm303, %v8618, %v8619
      %v8703 = vsel %vm303, %v8617, %v8618
      %v8704 = vsel %vm303, %v8616, %v8617
      %v8705 = vsel %vm303, %v8615, %v8616
      %v8706 = vsel %vm303, %v8614, %v8615
      %v8707 = vsel %vm303, %v8613, %v8614
      %v8708 = vsel %vm303, %v8660, %v8613
      %v8709 = vrot.slane %v8565, 1
      %v8710 = vrot.slane %v8566, 1
      %v8711 = vrot.slane %v8567, 1
      %v8712 = vrot.slane %v8568, 1
      %v8713 = vrot.slane %v8569, 1
      %v8714 = vrot.slane %v8570, 1
      %v8715 = vrot.slane %v8571, 1
      %v8716 = vrot.slane %v8572, 1
      %v8717 = vrot.slane %v8573, 1
      %v8718 = vrot.slane %v8574, 1
      %v8719 = vrot.slane %v8575, 1
      %v8720 = vrot.slane %v8576, 1
      %v8721 = vrot.slane %v8577, 1
      %v8722 = vrot.slane %v8578, 1
      %v8723 = vrot.slane %v8579, 1
      %v8724 = vrot.slane %v8580, 1
      %v8725 = vrot.slane %v8581, 1
      %v8726 = vrot.slane %v8582, 1
      %v8727 = vrot.slane %v8583, 1
      %v8728 = vrot.slane %v8584, 1
      %v8729 = vrot.slane %v8585, 1
      %v8730 = vrot.slane %v8586, 1
      %v8731 = vrot.slane %v8587, 1
      %v8732 = vrot.slane %v8588, 1
      %v8733 = vrot.slane %v8589, 1
      %v8734 = vrot.slane %v8590, 1
      %v8735 = vrot.slane %v8591, 1
      %v8736 = vrot.slane %v8592, 1
      %v8737 = vrot.slane %v8593, 1
      %v8738 = vrot.slane %v8594, 1
      %v8739 = vrot.slane %v8595, 1
      %v8740 = vrot.slane %v8596, 1
      %v8741 = vrot.slane %v8597, 1
      %v8742 = vrot.slane %v8598, 1
      %v8743 = vrot.slane %v8599, 1
      %v8744 = vrot.slane %v8600, 1
      %v8745 = vrot.slane %v8601, 1
      %v8746 = vrot.slane %v8602, 1
      %v8747 = vrot.slane %v8603, 1
      %v8748 = vrot.slane %v8604, 1
      %v8749 = vrot.slane %v8605, 1
      %v8750 = vrot.slane %v8606, 1
      %v8751 = vrot.slane %v8607, 1
      %v8752 = vrot.slane %v8608, 1
      %v8753 = vrot.slane %v8609, 1
      %v8754 = vrot.slane %v8610, 1
      %v8755 = vrot.slane %v8611, 1
      %v8756 = vrot.slane %v8612, 1
      %v8757 = vsel %vm400, %v8755, %v8756
      %v8758 = vsel %vm400, %v8754, %v8755
      %v8759 = vsel %vm400, %v8753, %v8754
      %v8760 = vsel %vm400, %v8752, %v8753
      %v8761 = vsel %vm400, %v8751, %v8752
      %v8762 = vsel %vm400, %v8750, %v8751
      %v8763 = vsel %vm400, %v8749, %v8750
      %v8764 = vsel %vm400, %v8748, %v8749
      %v8765 = vsel %vm400, %v8747, %v8748
      %v8766 = vsel %vm400, %v8746, %v8747
      %v8767 = vsel %vm400, %v8745, %v8746
      %v8768 = vsel %vm400, %v8744, %v8745
      %v8769 = vsel %vm400, %v8743, %v8744
      %v8770 = vsel %vm400, %v8742, %v8743
      %v8771 = vsel %vm400, %v8741, %v8742
      %v8772 = vsel %vm400, %v8740, %v8741
      %v8773 = vsel %vm400, %v8739, %v8740
      %v8774 = vsel %vm400, %v8738, %v8739
      %v8775 = vsel %vm400, %v8737, %v8738
      %v8776 = vsel %vm400, %v8736, %v8737
      %v8777 = vsel %vm400, %v8735, %v8736
      %v8778 = vsel %vm400, %v8734, %v8735
      %v8779 = vsel %vm400, %v8733, %v8734
      %v8780 = vsel %vm400, %v8732, %v8733
      %v8781 = vsel %vm400, %v8731, %v8732
      %v8782 = vsel %vm400, %v8730, %v8731
      %v8783 = vsel %vm400, %v8729, %v8730
      %v8784 = vsel %vm400, %v8728, %v8729
      %v8785 = vsel %vm400, %v8727, %v8728
      %v8786 = vsel %vm400, %v8726, %v8727
      %v8787 = vsel %vm400, %v8725, %v8726
      %v8788 = vsel %vm400, %v8724, %v8725
      %v8789 = vsel %vm400, %v8723, %v8724
      %v8790 = vsel %vm400, %v8722, %v8723
      %v8791 = vsel %vm400, %v8721, %v8722
      %v8792 = vsel %vm400, %v8720, %v8721
      %v8793 = vsel %vm400, %v8719, %v8720
      %v8794 = vsel %vm400, %v8718, %v8719
      %v8795 = vsel %vm400, %v8717, %v8718
      %v8796 = vsel %vm400, %v8716, %v8717
      %v8797 = vsel %vm400, %v8715, %v8716
      %v8798 = vsel %vm400, %v8714, %v8715
      %v8799 = vsel %vm400, %v8713, %v8714
      %v8800 = vsel %vm400, %v8712, %v8713
      %v8801 = vsel %vm400, %v8711, %v8712
      %v8802 = vsel %vm400, %v8710, %v8711
      %v8803 = vsel %vm400, %v8709, %v8710
      %v8804 = vsel %vm400, %v8756, %v8709
      %v8805 = vpack.c.bf16 %v8707, %v8708
      %v8806 = vpack.c.bf16 %v8705, %v8706
      %v8807 = vpack.c.bf16 %v8703, %v8704
      %v8808 = vpack.c.bf16 %v8701, %v8702
      %v8809 = vpack.c.bf16 %v8699, %v8700
      %v8810 = vpack.c.bf16 %v8697, %v8698
      %v8811 = vpack.c.bf16 %v8695, %v8696
      %v8812 = vpack.c.bf16 %v8693, %v8694
      %v8813 = vpack.c.bf16 %v8691, %v8692
      %v8814 = vpack.c.bf16 %v8689, %v8690
      %v8815 = vpack.c.bf16 %v8687, %v8688
      %v8816 = vpack.c.bf16 %v8685, %v8686
      %v8817 = vpack.c.bf16 %v8683, %v8684
      %v8818 = vpack.c.bf16 %v8681, %v8682
      %v8819 = vpack.c.bf16 %v8679, %v8680
      %v8820 = vpack.c.bf16 %v8677, %v8678
      %v8821 = vpack.c.bf16 %v8675, %v8676
      %v8822 = vpack.c.bf16 %v8673, %v8674
      %v8823 = vpack.c.bf16 %v8671, %v8672
      %v8824 = vpack.c.bf16 %v8669, %v8670
      %v8825 = vpack.c.bf16 %v8667, %v8668
      %v8826 = vpack.c.bf16 %v8665, %v8666
      %v8827 = vpack.c.bf16 %v8663, %v8664
      %v8828 = vpack.c.bf16 %v8661, %v8662
      %s8829 = scalar_lea.vmem %s2, 384
      %v8830 = vld [vmem:[%s8829] sm:$0xf]
      %v8831 = vld [vmem:[%s8829 + $0x4] sm:$0xf]
      %v8832 = vld [vmem:[%s8829 + $0x8] sm:$0xf]
      %v8833 = vld [vmem:[%s8829 + $0xc] sm:$0xf]
      %v8834 = vld [vmem:[%s8829 + $0x10] sm:$0xf]
      %v8835 = vld [vmem:[%s8829 + $0x14] sm:$0xf]
      %v8836 = vld [vmem:[%s8829 + $0x18] sm:$0xf]
      %v8837 = vld [vmem:[%s8829 + $0x1c] sm:$0xf]
      %v8838 = vld [vmem:[%s8829 + $0x20] sm:$0xf]
      %v8839 = vld [vmem:[%s8829 + $0x24] sm:$0xf]
      %v8840 = vld [vmem:[%s8829 + $0x28] sm:$0xf]
      %v8841 = vld [vmem:[%s8829 + $0x2c] sm:$0xf]
      %v8842 = vld [vmem:[%s8829 + $0x30] sm:$0xf]
      %v8843 = vld [vmem:[%s8829 + $0x34] sm:$0xf]
      %v8844 = vld [vmem:[%s8829 + $0x38] sm:$0xf]
      %v8845 = vld [vmem:[%s8829 + $0x3c] sm:$0xf]
      %v8862 = vunpack.c.l.b16 %v8830
      %v8863 = vunpack.c.l.b16 %v8831
      %v8864 = vunpack.c.l.b16 %v8832
      %v8865 = vunpack.c.l.b16 %v8833
      %v8866 = vunpack.c.l.b16 %v8834
      %v8867 = vunpack.c.l.b16 %v8835
      %v8868 = vunpack.c.l.b16 %v8836
      %v8869 = vunpack.c.l.b16 %v8837
      %v8870 = vunpack.c.l.b16 %v8838
      %v8871 = vunpack.c.l.b16 %v8839
      %v8872 = vunpack.c.l.b16 %v8840
      %v8873 = vunpack.c.l.b16 %v8841
      %v8874 = vunpack.c.l.b16 %v8842
      %v8875 = vunpack.c.l.b16 %v8843
      %v8876 = vunpack.c.l.b16 %v8844
      %v8877 = vunpack.c.l.b16 %v8845
      %v8878 = vpack.c.b16 %v8863, %v8862
      %v8879 = vpack.c.b16 %v8865, %v8864
      %v8880 = vpack.c.b16 %v8867, %v8866
      %v8881 = vpack.c.b16 %v8869, %v8868
      %v8882 = vpack.c.b16 %v8871, %v8870
      %v8883 = vpack.c.b16 %v8873, %v8872
      %v8884 = vpack.c.b16 %v8875, %v8874
      %v8885 = vpack.c.b16 %v8877, %v8876
      %8894 = vmatprep.subr.bf16.mxu0 0
      %8895 = vmatpush1.bf16.msra.mxu0 %v8885
      %8896 = vmatprep.subr.bf16.mxu0 0
      %8897 = vmatpush1.bf16.msra.mxu0 %v8884
      %8898 = vmatprep.subr.bf16.mxu0 0
      %8899 = vmatpush1.bf16.msra.mxu0 %v8883
      %8900 = vmatprep.subr.bf16.mxu0 0
      %8901 = vmatpush1.bf16.msra.mxu0 %v8882
      %8902 = vmatprep.subr.bf16.mxu0 0
      %8903 = vmatpush1.bf16.msra.mxu0 %v8881
      %8904 = vmatprep.subr.bf16.mxu0 0
      %8905 = vmatpush1.bf16.msra.mxu0 %v8880
      %8906 = vmatprep.subr.bf16.mxu0 0
      %8907 = vmatpush1.bf16.msra.mxu0 %v8879
      %8908 = vmatprep.subr.bf16.mxu0 0
      %8909 = vmatpush1.bf16.msra.mxu0 %v8878
      %8910 = vmatprep.subr.bf16.mxu0 0
      %8911 = vmatpush2.bf16.msra.mxu0 0
      %8912 = vmatprep.subr.bf16.mxu0 0
      %8913 = vmatpush2.bf16.msra.mxu0 0
      %8914 = vmatprep.subr.bf16.mxu0 0
      %8915 = vmatpush2.bf16.msra.mxu0 0
      %8916 = vmatprep.subr.bf16.mxu0 0
      %8917 = vmatpush2.bf16.msra.mxu0 0
      %8918 = vmatprep.subr.bf16.mxu0 0
      %8919 = vmatpush2.bf16.msra.mxu0 0
      %8920 = vmatprep.subr.bf16.mxu0 0
      %8921 = vmatpush2.bf16.msra.mxu0 0
      %8922 = vmatprep.subr.bf16.mxu0 0
      %8923 = vmatpush2.bf16.msra.mxu0 0
      %8924 = vmatprep.subr.bf16.mxu0 0
      %8925 = vmatpush2.bf16.msra.mxu0 0
      %8926 = vmatprep.mubr.bf16.mxu0 0
      %8927 = vmatmul.mubr.bf16.gmra.mxu0 %v8805
      %v8928 = vpop.f32.mrf.mxu0
      %v8929 = vadd.f32 0.0, %v8928
      %v8930 = vpop.f32.mrf.mxu0
      %v8931 = vpop.f32.mrf.mxu0
      %v8932 = vadd.f32 0.0, %v8931
      %v8933 = vpop.f32.mrf.mxu0
      %8934 = vmatprep.mubr.bf16.mxu0 0
      %8935 = vmatmul.mubr.bf16.gmra.mxu0 %v8806
      %v8936 = vpop.f32.mrf.mxu0
      %v8937 = vadd.f32 0.0, %v8936
      %v8938 = vpop.f32.mrf.mxu0
      %v8939 = vpop.f32.mrf.mxu0
      %v8940 = vadd.f32 0.0, %v8939
      %v8941 = vpop.f32.mrf.mxu0
      %8942 = vmatprep.mubr.bf16.mxu0 0
      %8943 = vmatmul.mubr.bf16.gmra.mxu0 %v8807
      %v8944 = vpop.f32.mrf.mxu0
      %v8945 = vadd.f32 0.0, %v8944
      %v8946 = vpop.f32.mrf.mxu0
      %v8947 = vpop.f32.mrf.mxu0
      %v8948 = vadd.f32 0.0, %v8947
      %v8949 = vpop.f32.mrf.mxu0
      %8950 = vmatprep.mubr.bf16.mxu0 0
      %8951 = vmatmul.mubr.bf16.gmra.mxu0 %v8808
      %v8952 = vpop.f32.mrf.mxu0
      %v8953 = vadd.f32 0.0, %v8952
      %v8954 = vpop.f32.mrf.mxu0
      %v8955 = vpop.f32.mrf.mxu0
      %v8956 = vadd.f32 0.0, %v8955
      %v8957 = vpop.f32.mrf.mxu0
      %8958 = vmatprep.mubr.bf16.mxu0 0
      %8959 = vmatmul.mubr.bf16.gmra.mxu0 %v8809
      %v8960 = vpop.f32.mrf.mxu0
      %v8961 = vadd.f32 0.0, %v8960
      %v8962 = vpop.f32.mrf.mxu0
      %v8963 = vpop.f32.mrf.mxu0
      %v8964 = vadd.f32 0.0, %v8963
      %v8965 = vpop.f32.mrf.mxu0
      %8966 = vmatprep.mubr.bf16.mxu0 0
      %8967 = vmatmul.mubr.bf16.gmra.mxu0 %v8810
      %v8968 = vpop.f32.mrf.mxu0
      %v8969 = vadd.f32 0.0, %v8968
      %v8970 = vpop.f32.mrf.mxu0
      %v8971 = vpop.f32.mrf.mxu0
      %v8972 = vadd.f32 0.0, %v8971
      %v8973 = vpop.f32.mrf.mxu0
      %8974 = vmatprep.mubr.bf16.mxu0 0
      %8975 = vmatmul.mubr.bf16.gmra.mxu0 %v8811
      %v8976 = vpop.f32.mrf.mxu0
      %v8977 = vadd.f32 0.0, %v8976
      %v8978 = vpop.f32.mrf.mxu0
      %v8979 = vpop.f32.mrf.mxu0
      %v8980 = vadd.f32 0.0, %v8979
      %v8981 = vpop.f32.mrf.mxu0
      %8982 = vmatprep.mubr.bf16.mxu0 0
      %8983 = vmatmul.mubr.bf16.gmra.mxu0 %v8812
      %v8984 = vpop.f32.mrf.mxu0
      %v8985 = vadd.f32 0.0, %v8984
      %v8986 = vpop.f32.mrf.mxu0
      %v8987 = vpop.f32.mrf.mxu0
      %v8988 = vadd.f32 0.0, %v8987
      %v8989 = vpop.f32.mrf.mxu0
      %8990 = vmatprep.mubr.bf16.mxu0 0
      %8991 = vmatmul.mubr.bf16.gmra.mxu0 %v8813
      %v8992 = vpop.f32.mrf.mxu0
      %v8993 = vadd.f32 0.0, %v8992
      %v8994 = vpop.f32.mrf.mxu0
      %v8995 = vpop.f32.mrf.mxu0
      %v8996 = vadd.f32 0.0, %v8995
      %v8997 = vpop.f32.mrf.mxu0
      %8998 = vmatprep.mubr.bf16.mxu0 0
      %8999 = vmatmul.mubr.bf16.gmra.mxu0 %v8814
      %v9000 = vpop.f32.mrf.mxu0
      %v9001 = vadd.f32 0.0, %v9000
      %v9002 = vpop.f32.mrf.mxu0
      %v9003 = vpop.f32.mrf.mxu0
      %v9004 = vadd.f32 0.0, %v9003
      %v9005 = vpop.f32.mrf.mxu0
      %9006 = vmatprep.mubr.bf16.mxu0 0
      %9007 = vmatmul.mubr.bf16.gmra.mxu0 %v8815
      %v9008 = vpop.f32.mrf.mxu0
      %v9009 = vadd.f32 0.0, %v9008
      %v9010 = vpop.f32.mrf.mxu0
      %v9011 = vpop.f32.mrf.mxu0
      %v9012 = vadd.f32 0.0, %v9011
      %v9013 = vpop.f32.mrf.mxu0
      %9014 = vmatprep.mubr.bf16.mxu0 0
      %9015 = vmatmul.mubr.bf16.gmra.mxu0 %v8816
      %v9016 = vpop.f32.mrf.mxu0
      %v9017 = vadd.f32 0.0, %v9016
      %v9018 = vpop.f32.mrf.mxu0
      %v9019 = vpop.f32.mrf.mxu0
      %v9020 = vadd.f32 0.0, %v9019
      %v9021 = vpop.f32.mrf.mxu0
      %9022 = vmatprep.mubr.bf16.mxu0 0
      %9023 = vmatmul.mubr.bf16.gmra.mxu0 %v8817
      %v9024 = vpop.f32.mrf.mxu0
      %v9025 = vadd.f32 0.0, %v9024
      %v9026 = vpop.f32.mrf.mxu0
      %v9027 = vpop.f32.mrf.mxu0
      %v9028 = vadd.f32 0.0, %v9027
      %v9029 = vpop.f32.mrf.mxu0
      %9030 = vmatprep.mubr.bf16.mxu0 0
      %9031 = vmatmul.mubr.bf16.gmra.mxu0 %v8818
      %v9032 = vpop.f32.mrf.mxu0
      %v9033 = vadd.f32 0.0, %v9032
      %v9034 = vpop.f32.mrf.mxu0
      %v9035 = vpop.f32.mrf.mxu0
      %v9036 = vadd.f32 0.0, %v9035
      %v9037 = vpop.f32.mrf.mxu0
      %9038 = vmatprep.mubr.bf16.mxu0 0
      %9039 = vmatmul.mubr.bf16.gmra.mxu0 %v8819
      %v9040 = vpop.f32.mrf.mxu0
      %v9041 = vadd.f32 0.0, %v9040
      %v9042 = vpop.f32.mrf.mxu0
      %v9043 = vpop.f32.mrf.mxu0
      %v9044 = vadd.f32 0.0, %v9043
      %v9045 = vpop.f32.mrf.mxu0
      %9046 = vmatprep.mubr.bf16.mxu0 0
      %9047 = vmatmul.mubr.bf16.gmra.mxu0 %v8820
      %v9048 = vpop.f32.mrf.mxu0
      %v9049 = vadd.f32 0.0, %v9048
      %v9050 = vpop.f32.mrf.mxu0
      %v9051 = vpop.f32.mrf.mxu0
      %v9052 = vadd.f32 0.0, %v9051
      %v9053 = vpop.f32.mrf.mxu0
      %9054 = vmatprep.mubr.bf16.mxu0 0
      %9055 = vmatmul.mubr.bf16.gmra.mxu0 %v8821
      %v9056 = vpop.f32.mrf.mxu0
      %v9057 = vadd.f32 0.0, %v9056
      %v9058 = vpop.f32.mrf.mxu0
      %v9059 = vpop.f32.mrf.mxu0
      %v9060 = vadd.f32 0.0, %v9059
      %v9061 = vpop.f32.mrf.mxu0
      %9062 = vmatprep.mubr.bf16.mxu0 0
      %9063 = vmatmul.mubr.bf16.gmra.mxu0 %v8822
      %v9064 = vpop.f32.mrf.mxu0
      %v9065 = vadd.f32 0.0, %v9064
      %v9066 = vpop.f32.mrf.mxu0
      %v9067 = vpop.f32.mrf.mxu0
      %v9068 = vadd.f32 0.0, %v9067
      %v9069 = vpop.f32.mrf.mxu0
      %9070 = vmatprep.mubr.bf16.mxu0 0
      %9071 = vmatmul.mubr.bf16.gmra.mxu0 %v8823
      %v9072 = vpop.f32.mrf.mxu0
      %v9073 = vadd.f32 0.0, %v9072
      %v9074 = vpop.f32.mrf.mxu0
      %v9075 = vpop.f32.mrf.mxu0
      %v9076 = vadd.f32 0.0, %v9075
      %v9077 = vpop.f32.mrf.mxu0
      %9078 = vmatprep.mubr.bf16.mxu0 0
      %9079 = vmatmul.mubr.bf16.gmra.mxu0 %v8824
      %v9080 = vpop.f32.mrf.mxu0
      %v9081 = vadd.f32 0.0, %v9080
      %v9082 = vpop.f32.mrf.mxu0
      %v9083 = vpop.f32.mrf.mxu0
      %v9084 = vadd.f32 0.0, %v9083
      %v9085 = vpop.f32.mrf.mxu0
      %9086 = vmatprep.mubr.bf16.mxu0 0
      %9087 = vmatmul.mubr.bf16.gmra.mxu0 %v8825
      %v9088 = vpop.f32.mrf.mxu0
      %v9089 = vadd.f32 0.0, %v9088
      %v9090 = vpop.f32.mrf.mxu0
      %v9091 = vpop.f32.mrf.mxu0
      %v9092 = vadd.f32 0.0, %v9091
      %v9093 = vpop.f32.mrf.mxu0
      %9094 = vmatprep.mubr.bf16.mxu0 0
      %9095 = vmatmul.mubr.bf16.gmra.mxu0 %v8826
      %v9096 = vpop.f32.mrf.mxu0
      %v9097 = vadd.f32 0.0, %v9096
      %v9098 = vpop.f32.mrf.mxu0
      %v9099 = vpop.f32.mrf.mxu0
      %v9100 = vadd.f32 0.0, %v9099
      %v9101 = vpop.f32.mrf.mxu0
      %9102 = vmatprep.mubr.bf16.mxu0 0
      %9103 = vmatmul.mubr.bf16.gmra.mxu0 %v8827
      %v9104 = vpop.f32.mrf.mxu0
      %v9105 = vadd.f32 0.0, %v9104
      %v9106 = vpop.f32.mrf.mxu0
      %v9107 = vpop.f32.mrf.mxu0
      %v9108 = vadd.f32 0.0, %v9107
      %v9109 = vpop.f32.mrf.mxu0
      %9110 = vmatprep.mubr.bf16.mxu0 0
      %9111 = vmatmul.mubr.bf16.gmra.mxu0 %v8828
      %v9112 = vpop.f32.mrf.mxu0
      %v9113 = vadd.f32 0.0, %v9112
      %v9114 = vpop.f32.mrf.mxu0
      %v9115 = vpop.f32.mrf.mxu0
      %v9116 = vadd.f32 0.0, %v9115
      %v9117 = vpop.f32.mrf.mxu0
      %9118 = vdwg.mxu0
      %v9119 = vld [vmem:[#allocation3] sm:$0xff]
      %v9120 = vld [vmem:[#allocation3 + $0x8] sm:$0xff]
      %v9121 = vld [vmem:[#allocation3 + $0x10] sm:$0xff]
      %v9122 = vld [vmem:[#allocation3 + $0x18] sm:$0xff]
      %v9123 = vld [vmem:[#allocation3 + $0x20] sm:$0xff]
      %v9124 = vld [vmem:[#allocation3 + $0x28] sm:$0xff]
      %v9125 = vld [vmem:[#allocation3 + $0x30] sm:$0xff]
      %v9126 = vld [vmem:[#allocation3 + $0x38] sm:$0xff]
      %v9127 = vld [vmem:[#allocation3 + $0x40] sm:$0xff]
      %v9128 = vld [vmem:[#allocation3 + $0x48] sm:$0xff]
      %v9129 = vld [vmem:[#allocation3 + $0x50] sm:$0xff]
      %v9130 = vld [vmem:[#allocation3 + $0x58] sm:$0xff]
      %v9131 = vld [vmem:[#allocation3 + $0x60] sm:$0xff]
      %v9132 = vld [vmem:[#allocation3 + $0x68] sm:$0xff]
      %v9133 = vld [vmem:[#allocation3 + $0x70] sm:$0xff]
      %v9134 = vld [vmem:[#allocation3 + $0x78] sm:$0xff]
      %v9135 = vld [vmem:[#allocation3 + $0x80] sm:$0xff]
      %v9136 = vld [vmem:[#allocation3 + $0x88] sm:$0xff]
      %v9137 = vld [vmem:[#allocation3 + $0x90] sm:$0xff]
      %v9138 = vld [vmem:[#allocation3 + $0x98] sm:$0xff]
      %v9139 = vld [vmem:[#allocation3 + $0xa0] sm:$0xff]
      %v9140 = vld [vmem:[#allocation3 + $0xa8] sm:$0xff]
      %v9141 = vld [vmem:[#allocation3 + $0xb0] sm:$0xff]
      %v9142 = vld [vmem:[#allocation3 + $0xb8] sm:$0xff]
      %v9143 = vld [vmem:[#allocation3 + $0xc0] sm:$0xff]
      %v9144 = vld [vmem:[#allocation3 + $0xc8] sm:$0xff]
      %v9145 = vld [vmem:[#allocation3 + $0xd0] sm:$0xff]
      %v9146 = vld [vmem:[#allocation3 + $0xd8] sm:$0xff]
      %v9147 = vld [vmem:[#allocation3 + $0xe0] sm:$0xff]
      %v9148 = vld [vmem:[#allocation3 + $0xe8] sm:$0xff]
      %v9149 = vld [vmem:[#allocation3 + $0xf0] sm:$0xff]
      %v9150 = vld [vmem:[#allocation3 + $0xf8] sm:$0xff]
      %v9151 = vld [vmem:[#allocation3 + $0x100] sm:$0xff]
      %v9152 = vld [vmem:[#allocation3 + $0x108] sm:$0xff]
      %v9153 = vld [vmem:[#allocation3 + $0x110] sm:$0xff]
      %v9154 = vld [vmem:[#allocation3 + $0x118] sm:$0xff]
      %v9155 = vld [vmem:[#allocation3 + $0x120] sm:$0xff]
      %v9156 = vld [vmem:[#allocation3 + $0x128] sm:$0xff]
      %v9157 = vld [vmem:[#allocation3 + $0x130] sm:$0xff]
      %v9158 = vld [vmem:[#allocation3 + $0x138] sm:$0xff]
      %v9159 = vld [vmem:[#allocation3 + $0x140] sm:$0xff]
      %v9160 = vld [vmem:[#allocation3 + $0x148] sm:$0xff]
      %v9161 = vld [vmem:[#allocation3 + $0x150] sm:$0xff]
      %v9162 = vld [vmem:[#allocation3 + $0x158] sm:$0xff]
      %v9163 = vld [vmem:[#allocation3 + $0x160] sm:$0xff]
      %v9164 = vld [vmem:[#allocation3 + $0x168] sm:$0xff]
      %v9165 = vld [vmem:[#allocation3 + $0x170] sm:$0xff]
      %v9166 = vld [vmem:[#allocation3 + $0x178] sm:$0xff]
      %v9167 = vadd.f32 %v9119, %v8929
      %v9168 = vadd.f32 %v9120, %v8932
      %v9169 = vadd.f32 %v9121, %v8937
      %v9170 = vadd.f32 %v9122, %v8940
      %v9171 = vadd.f32 %v9123, %v8945
      %v9172 = vadd.f32 %v9124, %v8948
      %v9173 = vadd.f32 %v9125, %v8953
      %v9174 = vadd.f32 %v9126, %v8956
      %v9175 = vadd.f32 %v9127, %v8961
      %v9176 = vadd.f32 %v9128, %v8964
      %v9177 = vadd.f32 %v9129, %v8969
      %v9178 = vadd.f32 %v9130, %v8972
      %v9179 = vadd.f32 %v9131, %v8977
      %v9180 = vadd.f32 %v9132, %v8980
      %v9181 = vadd.f32 %v9133, %v8985
      %v9182 = vadd.f32 %v9134, %v8988
      %v9183 = vadd.f32 %v9135, %v8993
      %v9184 = vadd.f32 %v9136, %v8996
      %v9185 = vadd.f32 %v9137, %v9001
      %v9186 = vadd.f32 %v9138, %v9004
      %v9187 = vadd.f32 %v9139, %v9009
      %v9188 = vadd.f32 %v9140, %v9012
      %v9189 = vadd.f32 %v9141, %v9017
      %v9190 = vadd.f32 %v9142, %v9020
      %v9191 = vadd.f32 %v9143, %v9025
      %v9192 = vadd.f32 %v9144, %v9028
      %v9193 = vadd.f32 %v9145, %v9033
      %v9194 = vadd.f32 %v9146, %v9036
      %v9195 = vadd.f32 %v9147, %v9041
      %v9196 = vadd.f32 %v9148, %v9044
      %v9197 = vadd.f32 %v9149, %v9049
      %v9198 = vadd.f32 %v9150, %v9052
      %v9199 = vadd.f32 %v9151, %v9057
      %v9200 = vadd.f32 %v9152, %v9060
      %v9201 = vadd.f32 %v9153, %v9065
      %v9202 = vadd.f32 %v9154, %v9068
      %v9203 = vadd.f32 %v9155, %v9073
      %v9204 = vadd.f32 %v9156, %v9076
      %v9205 = vadd.f32 %v9157, %v9081
      %v9206 = vadd.f32 %v9158, %v9084
      %v9207 = vadd.f32 %v9159, %v9089
      %v9208 = vadd.f32 %v9160, %v9092
      %v9209 = vadd.f32 %v9161, %v9097
      %v9210 = vadd.f32 %v9162, %v9100
      %v9211 = vadd.f32 %v9163, %v9105
      %v9212 = vadd.f32 %v9164, %v9108
      %v9213 = vadd.f32 %v9165, %v9113
      %v9214 = vadd.f32 %v9166, %v9116
      %9215 = vst [vmem:[#allocation3] sm:$0xff] %v9167
      %9216 = vst [vmem:[#allocation3 + $0x8] sm:$0xff] %v9168
      %9217 = vst [vmem:[#allocation3 + $0x10] sm:$0xff] %v9169
      %9218 = vst [vmem:[#allocation3 + $0x18] sm:$0xff] %v9170
      %9219 = vst [vmem:[#allocation3 + $0x20] sm:$0xff] %v9171
      %9220 = vst [vmem:[#allocation3 + $0x28] sm:$0xff] %v9172
      %9221 = vst [vmem:[#allocation3 + $0x30] sm:$0xff] %v9173
      %9222 = vst [vmem:[#allocation3 + $0x38] sm:$0xff] %v9174
      %9223 = vst [vmem:[#allocation3 + $0x40] sm:$0xff] %v9175
      %9224 = vst [vmem:[#allocation3 + $0x48] sm:$0xff] %v9176
      %9225 = vst [vmem:[#allocation3 + $0x50] sm:$0xff] %v9177
      %9226 = vst [vmem:[#allocation3 + $0x58] sm:$0xff] %v9178
      %9227 = vst [vmem:[#allocation3 + $0x60] sm:$0xff] %v9179
      %9228 = vst [vmem:[#allocation3 + $0x68] sm:$0xff] %v9180
      %9229 = vst [vmem:[#allocation3 + $0x70] sm:$0xff] %v9181
      %9230 = vst [vmem:[#allocation3 + $0x78] sm:$0xff] %v9182
      %9231 = vst [vmem:[#allocation3 + $0x80] sm:$0xff] %v9183
      %9232 = vst [vmem:[#allocation3 + $0x88] sm:$0xff] %v9184
      %9233 = vst [vmem:[#allocation3 + $0x90] sm:$0xff] %v9185
      %9234 = vst [vmem:[#allocation3 + $0x98] sm:$0xff] %v9186
      %9235 = vst [vmem:[#allocation3 + $0xa0] sm:$0xff] %v9187
      %9236 = vst [vmem:[#allocation3 + $0xa8] sm:$0xff] %v9188
      %9237 = vst [vmem:[#allocation3 + $0xb0] sm:$0xff] %v9189
      %9238 = vst [vmem:[#allocation3 + $0xb8] sm:$0xff] %v9190
      %9239 = vst [vmem:[#allocation3 + $0xc0] sm:$0xff] %v9191
      %9240 = vst [vmem:[#allocation3 + $0xc8] sm:$0xff] %v9192
      %9241 = vst [vmem:[#allocation3 + $0xd0] sm:$0xff] %v9193
      %9242 = vst [vmem:[#allocation3 + $0xd8] sm:$0xff] %v9194
      %9243 = vst [vmem:[#allocation3 + $0xe0] sm:$0xff] %v9195
      %9244 = vst [vmem:[#allocation3 + $0xe8] sm:$0xff] %v9196
      %9245 = vst [vmem:[#allocation3 + $0xf0] sm:$0xff] %v9197
      %9246 = vst [vmem:[#allocation3 + $0xf8] sm:$0xff] %v9198
      %9247 = vst [vmem:[#allocation3 + $0x100] sm:$0xff] %v9199
      %9248 = vst [vmem:[#allocation3 + $0x108] sm:$0xff] %v9200
      %9249 = vst [vmem:[#allocation3 + $0x110] sm:$0xff] %v9201
      %9250 = vst [vmem:[#allocation3 + $0x118] sm:$0xff] %v9202
      %9251 = vst [vmem:[#allocation3 + $0x120] sm:$0xff] %v9203
      %9252 = vst [vmem:[#allocation3 + $0x128] sm:$0xff] %v9204
      %9253 = vst [vmem:[#allocation3 + $0x130] sm:$0xff] %v9205
      %9254 = vst [vmem:[#allocation3 + $0x138] sm:$0xff] %v9206
      %9255 = vst [vmem:[#allocation3 + $0x140] sm:$0xff] %v9207
      %9256 = vst [vmem:[#allocation3 + $0x148] sm:$0xff] %v9208
      %9257 = vst [vmem:[#allocation3 + $0x150] sm:$0xff] %v9209
      %9258 = vst [vmem:[#allocation3 + $0x158] sm:$0xff] %v9210
      %9259 = vst [vmem:[#allocation3 + $0x160] sm:$0xff] %v9211
      %9260 = vst [vmem:[#allocation3 + $0x168] sm:$0xff] %v9212
      %9261 = vst [vmem:[#allocation3 + $0x170] sm:$0xff] %v9213
      %9262 = vst [vmem:[#allocation3 + $0x178] sm:$0xff] %v9214
      %v9263 = vpack.c.bf16 %v8566, %v8565
      %v9264 = vpack.c.bf16 %v8568, %v8567
      %v9265 = vpack.c.bf16 %v8570, %v8569
      %v9266 = vpack.c.bf16 %v8572, %v8571
      %v9267 = vpack.c.bf16 %v8574, %v8573
      %v9268 = vpack.c.bf16 %v8576, %v8575
      %v9269 = vpack.c.bf16 %v8578, %v8577
      %v9270 = vpack.c.bf16 %v8580, %v8579
      %v9271 = vpack.c.bf16 %v8582, %v8581
      %v9272 = vpack.c.bf16 %v8584, %v8583
      %v9273 = vpack.c.bf16 %v8586, %v8585
      %v9274 = vpack.c.bf16 %v8588, %v8587
      %v9275 = vpack.c.bf16 %v8590, %v8589
      %v9276 = vpack.c.bf16 %v8592, %v8591
      %v9277 = vpack.c.bf16 %v8594, %v8593
      %v9278 = vpack.c.bf16 %v8596, %v8595
      %v9279 = vpack.c.bf16 %v8598, %v8597
      %v9280 = vpack.c.bf16 %v8600, %v8599
      %v9281 = vpack.c.bf16 %v8602, %v8601
      %v9282 = vpack.c.bf16 %v8604, %v8603
      %v9283 = vpack.c.bf16 %v8606, %v8605
      %v9284 = vpack.c.bf16 %v8608, %v8607
      %v9285 = vpack.c.bf16 %v8610, %v8609
      %v9286 = vpack.c.bf16 %v8612, %v8611
      %s9287 = scalar_lea.vmem %s2, 448
      %v9288 = vld [vmem:[%s9287] sm:$0xf]
      %v9289 = vld [vmem:[%s9287 + $0x4] sm:$0xf]
      %v9290 = vld [vmem:[%s9287 + $0x8] sm:$0xf]
      %v9291 = vld [vmem:[%s9287 + $0xc] sm:$0xf]
      %v9292 = vld [vmem:[%s9287 + $0x10] sm:$0xf]
      %v9293 = vld [vmem:[%s9287 + $0x14] sm:$0xf]
      %v9294 = vld [vmem:[%s9287 + $0x18] sm:$0xf]
      %v9295 = vld [vmem:[%s9287 + $0x1c] sm:$0xf]
      %v9296 = vld [vmem:[%s9287 + $0x20] sm:$0xf]
      %v9297 = vld [vmem:[%s9287 + $0x24] sm:$0xf]
      %v9298 = vld [vmem:[%s9287 + $0x28] sm:$0xf]
      %v9299 = vld [vmem:[%s9287 + $0x2c] sm:$0xf]
      %v9300 = vld [vmem:[%s9287 + $0x30] sm:$0xf]
      %v9301 = vld [vmem:[%s9287 + $0x34] sm:$0xf]
      %v9302 = vld [vmem:[%s9287 + $0x38] sm:$0xf]
      %v9303 = vld [vmem:[%s9287 + $0x3c] sm:$0xf]
      %v9320 = vunpack.c.l.b16 %v9288
      %v9321 = vunpack.c.l.b16 %v9289
      %v9322 = vunpack.c.l.b16 %v9290
      %v9323 = vunpack.c.l.b16 %v9291
      %v9324 = vunpack.c.l.b16 %v9292
      %v9325 = vunpack.c.l.b16 %v9293
      %v9326 = vunpack.c.l.b16 %v9294
      %v9327 = vunpack.c.l.b16 %v9295
      %v9328 = vunpack.c.l.b16 %v9296
      %v9329 = vunpack.c.l.b16 %v9297
      %v9330 = vunpack.c.l.b16 %v9298
      %v9331 = vunpack.c.l.b16 %v9299
      %v9332 = vunpack.c.l.b16 %v9300
      %v9333 = vunpack.c.l.b16 %v9301
      %v9334 = vunpack.c.l.b16 %v9302
      %v9335 = vunpack.c.l.b16 %v9303
      %v9336 = vpack.c.b16 %v9321, %v9320
      %v9337 = vpack.c.b16 %v9323, %v9322
      %v9338 = vpack.c.b16 %v9325, %v9324
      %v9339 = vpack.c.b16 %v9327, %v9326
      %v9340 = vpack.c.b16 %v9329, %v9328
      %v9341 = vpack.c.b16 %v9331, %v9330
      %v9342 = vpack.c.b16 %v9333, %v9332
      %v9343 = vpack.c.b16 %v9335, %v9334
      %9352 = vmatprep.subr.bf16.mxu0 0
      %9353 = vmatpush1.bf16.msra.mxu0 %v9343
      %9354 = vmatprep.subr.bf16.mxu0 0
      %9355 = vmatpush1.bf16.msra.mxu0 %v9342
      %9356 = vmatprep.subr.bf16.mxu0 0
      %9357 = vmatpush1.bf16.msra.mxu0 %v9341
      %9358 = vmatprep.subr.bf16.mxu0 0
      %9359 = vmatpush1.bf16.msra.mxu0 %v9340
      %9360 = vmatprep.subr.bf16.mxu0 0
      %9361 = vmatpush1.bf16.msra.mxu0 %v9339
      %9362 = vmatprep.subr.bf16.mxu0 0
      %9363 = vmatpush1.bf16.msra.mxu0 %v9338
      %9364 = vmatprep.subr.bf16.mxu0 0
      %9365 = vmatpush1.bf16.msra.mxu0 %v9337
      %9366 = vmatprep.subr.bf16.mxu0 0
      %9367 = vmatpush1.bf16.msra.mxu0 %v9336
      %9368 = vmatprep.subr.bf16.mxu0 0
      %9369 = vmatpush2.bf16.msra.mxu0 0
      %9370 = vmatprep.subr.bf16.mxu0 0
      %9371 = vmatpush2.bf16.msra.mxu0 0
      %9372 = vmatprep.subr.bf16.mxu0 0
      %9373 = vmatpush2.bf16.msra.mxu0 0
      %9374 = vmatprep.subr.bf16.mxu0 0
      %9375 = vmatpush2.bf16.msra.mxu0 0
      %9376 = vmatprep.subr.bf16.mxu0 0
      %9377 = vmatpush2.bf16.msra.mxu0 0
      %9378 = vmatprep.subr.bf16.mxu0 0
      %9379 = vmatpush2.bf16.msra.mxu0 0
      %9380 = vmatprep.subr.bf16.mxu0 0
      %9381 = vmatpush2.bf16.msra.mxu0 0
      %9382 = vmatprep.subr.bf16.mxu0 0
      %9383 = vmatpush2.bf16.msra.mxu0 0
      %9384 = vmatprep.mubr.bf16.mxu0 0
      %9385 = vmatmul.mubr.bf16.gmra.mxu0 %v9263
      %v9386 = vpop.f32.mrf.mxu0
      %v9387 = vadd.f32 0.0, %v9386
      %v9388 = vpop.f32.mrf.mxu0
      %v9389 = vpop.f32.mrf.mxu0
      %v9390 = vadd.f32 0.0, %v9389
      %v9391 = vpop.f32.mrf.mxu0
      %9392 = vmatprep.mubr.bf16.mxu0 0
      %9393 = vmatmul.mubr.bf16.gmra.mxu0 %v9264
      %v9394 = vpop.f32.mrf.mxu0
      %v9395 = vadd.f32 0.0, %v9394
      %v9396 = vpop.f32.mrf.mxu0
      %v9397 = vpop.f32.mrf.mxu0
      %v9398 = vadd.f32 0.0, %v9397
      %v9399 = vpop.f32.mrf.mxu0
      %9400 = vmatprep.mubr.bf16.mxu0 0
      %9401 = vmatmul.mubr.bf16.gmra.mxu0 %v9265
      %v9402 = vpop.f32.mrf.mxu0
      %v9403 = vadd.f32 0.0, %v9402
      %v9404 = vpop.f32.mrf.mxu0
      %v9405 = vpop.f32.mrf.mxu0
      %v9406 = vadd.f32 0.0, %v9405
      %v9407 = vpop.f32.mrf.mxu0
      %9408 = vmatprep.mubr.bf16.mxu0 0
      %9409 = vmatmul.mubr.bf16.gmra.mxu0 %v9266
      %v9410 = vpop.f32.mrf.mxu0
      %v9411 = vadd.f32 0.0, %v9410
      %v9412 = vpop.f32.mrf.mxu0
      %v9413 = vpop.f32.mrf.mxu0
      %v9414 = vadd.f32 0.0, %v9413
      %v9415 = vpop.f32.mrf.mxu0
      %9416 = vmatprep.mubr.bf16.mxu0 0
      %9417 = vmatmul.mubr.bf16.gmra.mxu0 %v9267
      %v9418 = vpop.f32.mrf.mxu0
      %v9419 = vadd.f32 0.0, %v9418
      %v9420 = vpop.f32.mrf.mxu0
      %v9421 = vpop.f32.mrf.mxu0
      %v9422 = vadd.f32 0.0, %v9421
      %v9423 = vpop.f32.mrf.mxu0
      %9424 = vmatprep.mubr.bf16.mxu0 0
      %9425 = vmatmul.mubr.bf16.gmra.mxu0 %v9268
      %v9426 = vpop.f32.mrf.mxu0
      %v9427 = vadd.f32 0.0, %v9426
      %v9428 = vpop.f32.mrf.mxu0
      %v9429 = vpop.f32.mrf.mxu0
      %v9430 = vadd.f32 0.0, %v9429
      %v9431 = vpop.f32.mrf.mxu0
      %9432 = vmatprep.mubr.bf16.mxu0 0
      %9433 = vmatmul.mubr.bf16.gmra.mxu0 %v9269
      %v9434 = vpop.f32.mrf.mxu0
      %v9435 = vadd.f32 0.0, %v9434
      %v9436 = vpop.f32.mrf.mxu0
      %v9437 = vpop.f32.mrf.mxu0
      %v9438 = vadd.f32 0.0, %v9437
      %v9439 = vpop.f32.mrf.mxu0
      %9440 = vmatprep.mubr.bf16.mxu0 0
      %9441 = vmatmul.mubr.bf16.gmra.mxu0 %v9270
      %v9442 = vpop.f32.mrf.mxu0
      %v9443 = vadd.f32 0.0, %v9442
      %v9444 = vpop.f32.mrf.mxu0
      %v9445 = vpop.f32.mrf.mxu0
      %v9446 = vadd.f32 0.0, %v9445
      %v9447 = vpop.f32.mrf.mxu0
      %9448 = vmatprep.mubr.bf16.mxu0 0
      %9449 = vmatmul.mubr.bf16.gmra.mxu0 %v9271
      %v9450 = vpop.f32.mrf.mxu0
      %v9451 = vadd.f32 0.0, %v9450
      %v9452 = vpop.f32.mrf.mxu0
      %v9453 = vpop.f32.mrf.mxu0
      %v9454 = vadd.f32 0.0, %v9453
      %v9455 = vpop.f32.mrf.mxu0
      %9456 = vmatprep.mubr.bf16.mxu0 0
      %9457 = vmatmul.mubr.bf16.gmra.mxu0 %v9272
      %v9458 = vpop.f32.mrf.mxu0
      %v9459 = vadd.f32 0.0, %v9458
      %v9460 = vpop.f32.mrf.mxu0
      %v9461 = vpop.f32.mrf.mxu0
      %v9462 = vadd.f32 0.0, %v9461
      %v9463 = vpop.f32.mrf.mxu0
      %9464 = vmatprep.mubr.bf16.mxu0 0
      %9465 = vmatmul.mubr.bf16.gmra.mxu0 %v9273
      %v9466 = vpop.f32.mrf.mxu0
      %v9467 = vadd.f32 0.0, %v9466
      %v9468 = vpop.f32.mrf.mxu0
      %v9469 = vpop.f32.mrf.mxu0
      %v9470 = vadd.f32 0.0, %v9469
      %v9471 = vpop.f32.mrf.mxu0
      %9472 = vmatprep.mubr.bf16.mxu0 0
      %9473 = vmatmul.mubr.bf16.gmra.mxu0 %v9274
      %v9474 = vpop.f32.mrf.mxu0
      %v9475 = vadd.f32 0.0, %v9474
      %v9476 = vpop.f32.mrf.mxu0
      %v9477 = vpop.f32.mrf.mxu0
      %v9478 = vadd.f32 0.0, %v9477
      %v9479 = vpop.f32.mrf.mxu0
      %9480 = vmatprep.mubr.bf16.mxu0 0
      %9481 = vmatmul.mubr.bf16.gmra.mxu0 %v9275
      %v9482 = vpop.f32.mrf.mxu0
      %v9483 = vadd.f32 0.0, %v9482
      %v9484 = vpop.f32.mrf.mxu0
      %v9485 = vpop.f32.mrf.mxu0
      %v9486 = vadd.f32 0.0, %v9485
      %v9487 = vpop.f32.mrf.mxu0
      %9488 = vmatprep.mubr.bf16.mxu0 0
      %9489 = vmatmul.mubr.bf16.gmra.mxu0 %v9276
      %v9490 = vpop.f32.mrf.mxu0
      %v9491 = vadd.f32 0.0, %v9490
      %v9492 = vpop.f32.mrf.mxu0
      %v9493 = vpop.f32.mrf.mxu0
      %v9494 = vadd.f32 0.0, %v9493
      %v9495 = vpop.f32.mrf.mxu0
      %9496 = vmatprep.mubr.bf16.mxu0 0
      %9497 = vmatmul.mubr.bf16.gmra.mxu0 %v9277
      %v9498 = vpop.f32.mrf.mxu0
      %v9499 = vadd.f32 0.0, %v9498
      %v9500 = vpop.f32.mrf.mxu0
      %v9501 = vpop.f32.mrf.mxu0
      %v9502 = vadd.f32 0.0, %v9501
      %v9503 = vpop.f32.mrf.mxu0
      %9504 = vmatprep.mubr.bf16.mxu0 0
      %9505 = vmatmul.mubr.bf16.gmra.mxu0 %v9278
      %v9506 = vpop.f32.mrf.mxu0
      %v9507 = vadd.f32 0.0, %v9506
      %v9508 = vpop.f32.mrf.mxu0
      %v9509 = vpop.f32.mrf.mxu0
      %v9510 = vadd.f32 0.0, %v9509
      %v9511 = vpop.f32.mrf.mxu0
      %9512 = vmatprep.mubr.bf16.mxu0 0
      %9513 = vmatmul.mubr.bf16.gmra.mxu0 %v9279
      %v9514 = vpop.f32.mrf.mxu0
      %v9515 = vadd.f32 0.0, %v9514
      %v9516 = vpop.f32.mrf.mxu0
      %v9517 = vpop.f32.mrf.mxu0
      %v9518 = vadd.f32 0.0, %v9517
      %v9519 = vpop.f32.mrf.mxu0
      %9520 = vmatprep.mubr.bf16.mxu0 0
      %9521 = vmatmul.mubr.bf16.gmra.mxu0 %v9280
      %v9522 = vpop.f32.mrf.mxu0
      %v9523 = vadd.f32 0.0, %v9522
      %v9524 = vpop.f32.mrf.mxu0
      %v9525 = vpop.f32.mrf.mxu0
      %v9526 = vadd.f32 0.0, %v9525
      %v9527 = vpop.f32.mrf.mxu0
      %9528 = vmatprep.mubr.bf16.mxu0 0
      %9529 = vmatmul.mubr.bf16.gmra.mxu0 %v9281
      %v9530 = vpop.f32.mrf.mxu0
      %v9531 = vadd.f32 0.0, %v9530
      %v9532 = vpop.f32.mrf.mxu0
      %v9533 = vpop.f32.mrf.mxu0
      %v9534 = vadd.f32 0.0, %v9533
      %v9535 = vpop.f32.mrf.mxu0
      %9536 = vmatprep.mubr.bf16.mxu0 0
      %9537 = vmatmul.mubr.bf16.gmra.mxu0 %v9282
      %v9538 = vpop.f32.mrf.mxu0
      %v9539 = vadd.f32 0.0, %v9538
      %v9540 = vpop.f32.mrf.mxu0
      %v9541 = vpop.f32.mrf.mxu0
      %v9542 = vadd.f32 0.0, %v9541
      %v9543 = vpop.f32.mrf.mxu0
      %9544 = vmatprep.mubr.bf16.mxu0 0
      %9545 = vmatmul.mubr.bf16.gmra.mxu0 %v9283
      %v9546 = vpop.f32.mrf.mxu0
      %v9547 = vadd.f32 0.0, %v9546
      %v9548 = vpop.f32.mrf.mxu0
      %v9549 = vpop.f32.mrf.mxu0
      %v9550 = vadd.f32 0.0, %v9549
      %v9551 = vpop.f32.mrf.mxu0
      %9552 = vmatprep.mubr.bf16.mxu0 0
      %9553 = vmatmul.mubr.bf16.gmra.mxu0 %v9284
      %v9554 = vpop.f32.mrf.mxu0
      %v9555 = vadd.f32 0.0, %v9554
      %v9556 = vpop.f32.mrf.mxu0
      %v9557 = vpop.f32.mrf.mxu0
      %v9558 = vadd.f32 0.0, %v9557
      %v9559 = vpop.f32.mrf.mxu0
      %9560 = vmatprep.mubr.bf16.mxu0 0
      %9561 = vmatmul.mubr.bf16.gmra.mxu0 %v9285
      %v9562 = vpop.f32.mrf.mxu0
      %v9563 = vadd.f32 0.0, %v9562
      %v9564 = vpop.f32.mrf.mxu0
      %v9565 = vpop.f32.mrf.mxu0
      %v9566 = vadd.f32 0.0, %v9565
      %v9567 = vpop.f32.mrf.mxu0
      %9568 = vmatprep.mubr.bf16.mxu0 0
      %9569 = vmatmul.mubr.bf16.gmra.mxu0 %v9286
      %v9570 = vpop.f32.mrf.mxu0
      %v9571 = vadd.f32 0.0, %v9570
      %v9572 = vpop.f32.mrf.mxu0
      %v9573 = vpop.f32.mrf.mxu0
      %v9574 = vadd.f32 0.0, %v9573
      %v9575 = vpop.f32.mrf.mxu0
      %9576 = vdwg.mxu0
      %v9577 = vld [vmem:[#allocation3] sm:$0xff]
      %v9578 = vld [vmem:[#allocation3 + $0x8] sm:$0xff]
      %v9579 = vld [vmem:[#allocation3 + $0x10] sm:$0xff]
      %v9580 = vld [vmem:[#allocation3 + $0x18] sm:$0xff]
      %v9581 = vld [vmem:[#allocation3 + $0x20] sm:$0xff]
      %v9582 = vld [vmem:[#allocation3 + $0x28] sm:$0xff]
      %v9583 = vld [vmem:[#allocation3 + $0x30] sm:$0xff]
      %v9584 = vld [vmem:[#allocation3 + $0x38] sm:$0xff]
      %v9585 = vld [vmem:[#allocation3 + $0x40] sm:$0xff]
      %v9586 = vld [vmem:[#allocation3 + $0x48] sm:$0xff]
      %v9587 = vld [vmem:[#allocation3 + $0x50] sm:$0xff]
      %v9588 = vld [vmem:[#allocation3 + $0x58] sm:$0xff]
      %v9589 = vld [vmem:[#allocation3 + $0x60] sm:$0xff]
      %v9590 = vld [vmem:[#allocation3 + $0x68] sm:$0xff]
      %v9591 = vld [vmem:[#allocation3 + $0x70] sm:$0xff]
      %v9592 = vld [vmem:[#allocation3 + $0x78] sm:$0xff]
      %v9593 = vld [vmem:[#allocation3 + $0x80] sm:$0xff]
      %v9594 = vld [vmem:[#allocation3 + $0x88] sm:$0xff]
      %v9595 = vld [vmem:[#allocation3 + $0x90] sm:$0xff]
      %v9596 = vld [vmem:[#allocation3 + $0x98] sm:$0xff]
      %v9597 = vld [vmem:[#allocation3 + $0xa0] sm:$0xff]
      %v9598 = vld [vmem:[#allocation3 + $0xa8] sm:$0xff]
      %v9599 = vld [vmem:[#allocation3 + $0xb0] sm:$0xff]
      %v9600 = vld [vmem:[#allocation3 + $0xb8] sm:$0xff]
      %v9601 = vld [vmem:[#allocation3 + $0xc0] sm:$0xff]
      %v9602 = vld [vmem:[#allocation3 + $0xc8] sm:$0xff]
      %v9603 = vld [vmem:[#allocation3 + $0xd0] sm:$0xff]
      %v9604 = vld [vmem:[#allocation3 + $0xd8] sm:$0xff]
      %v9605 = vld [vmem:[#allocation3 + $0xe0] sm:$0xff]
      %v9606 = vld [vmem:[#allocation3 + $0xe8] sm:$0xff]
      %v9607 = vld [vmem:[#allocation3 + $0xf0] sm:$0xff]
      %v9608 = vld [vmem:[#allocation3 + $0xf8] sm:$0xff]
      %v9609 = vld [vmem:[#allocation3 + $0x100] sm:$0xff]
      %v9610 = vld [vmem:[#allocation3 + $0x108] sm:$0xff]
      %v9611 = vld [vmem:[#allocation3 + $0x110] sm:$0xff]
      %v9612 = vld [vmem:[#allocation3 + $0x118] sm:$0xff]
      %v9613 = vld [vmem:[#allocation3 + $0x120] sm:$0xff]
      %v9614 = vld [vmem:[#allocation3 + $0x128] sm:$0xff]
      %v9615 = vld [vmem:[#allocation3 + $0x130] sm:$0xff]
      %v9616 = vld [vmem:[#allocation3 + $0x138] sm:$0xff]
      %v9617 = vld [vmem:[#allocation3 + $0x140] sm:$0xff]
      %v9618 = vld [vmem:[#allocation3 + $0x148] sm:$0xff]
      %v9619 = vld [vmem:[#allocation3 + $0x150] sm:$0xff]
      %v9620 = vld [vmem:[#allocation3 + $0x158] sm:$0xff]
      %v9621 = vld [vmem:[#allocation3 + $0x160] sm:$0xff]
      %v9622 = vld [vmem:[#allocation3 + $0x168] sm:$0xff]
      %v9623 = vld [vmem:[#allocation3 + $0x170] sm:$0xff]
      %v9624 = vld [vmem:[#allocation3 + $0x178] sm:$0xff]
      %v9625 = vadd.f32 %v9577, %v9387
      %v9626 = vadd.f32 %v9578, %v9390
      %v9627 = vadd.f32 %v9579, %v9395
      %v9628 = vadd.f32 %v9580, %v9398
      %v9629 = vadd.f32 %v9581, %v9403
      %v9630 = vadd.f32 %v9582, %v9406
      %v9631 = vadd.f32 %v9583, %v9411
      %v9632 = vadd.f32 %v9584, %v9414
      %v9633 = vadd.f32 %v9585, %v9419
      %v9634 = vadd.f32 %v9586, %v9422
      %v9635 = vadd.f32 %v9587, %v9427
      %v9636 = vadd.f32 %v9588, %v9430
      %v9637 = vadd.f32 %v9589, %v9435
      %v9638 = vadd.f32 %v9590, %v9438
      %v9639 = vadd.f32 %v9591, %v9443
      %v9640 = vadd.f32 %v9592, %v9446
      %v9641 = vadd.f32 %v9593, %v9451
      %v9642 = vadd.f32 %v9594, %v9454
      %v9643 = vadd.f32 %v9595, %v9459
      %v9644 = vadd.f32 %v9596, %v9462
      %v9645 = vadd.f32 %v9597, %v9467
      %v9646 = vadd.f32 %v9598, %v9470
      %v9647 = vadd.f32 %v9599, %v9475
      %v9648 = vadd.f32 %v9600, %v9478
      %v9649 = vadd.f32 %v9601, %v9483
      %v9650 = vadd.f32 %v9602, %v9486
      %v9651 = vadd.f32 %v9603, %v9491
      %v9652 = vadd.f32 %v9604, %v9494
      %v9653 = vadd.f32 %v9605, %v9499
      %v9654 = vadd.f32 %v9606, %v9502
      %v9655 = vadd.f32 %v9607, %v9507
      %v9656 = vadd.f32 %v9608, %v9510
      %v9657 = vadd.f32 %v9609, %v9515
      %v9658 = vadd.f32 %v9610, %v9518
      %v9659 = vadd.f32 %v9611, %v9523
      %v9660 = vadd.f32 %v9612, %v9526
      %v9661 = vadd.f32 %v9613, %v9531
      %v9662 = vadd.f32 %v9614, %v9534
      %v9663 = vadd.f32 %v9615, %v9539
      %v9664 = vadd.f32 %v9616, %v9542
      %v9665 = vadd.f32 %v9617, %v9547
      %v9666 = vadd.f32 %v9618, %v9550
      %v9667 = vadd.f32 %v9619, %v9555
      %v9668 = vadd.f32 %v9620, %v9558
      %v9669 = vadd.f32 %v9621, %v9563
      %v9670 = vadd.f32 %v9622, %v9566
      %v9671 = vadd.f32 %v9623, %v9571
      %v9672 = vadd.f32 %v9624, %v9574
      %9673 = vst [vmem:[#allocation3] sm:$0xff] %v9625
      %9674 = vst [vmem:[#allocation3 + $0x8] sm:$0xff] %v9626
      %9675 = vst [vmem:[#allocation3 + $0x10] sm:$0xff] %v9627
      %9676 = vst [vmem:[#allocation3 + $0x18] sm:$0xff] %v9628
      %9677 = vst [vmem:[#allocation3 + $0x20] sm:$0xff] %v9629
      %9678 = vst [vmem:[#allocation3 + $0x28] sm:$0xff] %v9630
      %9679 = vst [vmem:[#allocation3 + $0x30] sm:$0xff] %v9631
      %9680 = vst [vmem:[#allocation3 + $0x38] sm:$0xff] %v9632
      %9681 = vst [vmem:[#allocation3 + $0x40] sm:$0xff] %v9633
      %9682 = vst [vmem:[#allocation3 + $0x48] sm:$0xff] %v9634
      %9683 = vst [vmem:[#allocation3 + $0x50] sm:$0xff] %v9635
      %9684 = vst [vmem:[#allocation3 + $0x58] sm:$0xff] %v9636
      %9685 = vst [vmem:[#allocation3 + $0x60] sm:$0xff] %v9637
      %9686 = vst [vmem:[#allocation3 + $0x68] sm:$0xff] %v9638
      %9687 = vst [vmem:[#allocation3 + $0x70] sm:$0xff] %v9639
      %9688 = vst [vmem:[#allocation3 + $0x78] sm:$0xff] %v9640
      %9689 = vst [vmem:[#allocation3 + $0x80] sm:$0xff] %v9641
      %9690 = vst [vmem:[#allocation3 + $0x88] sm:$0xff] %v9642
      %9691 = vst [vmem:[#allocation3 + $0x90] sm:$0xff] %v9643
      %9692 = vst [vmem:[#allocation3 + $0x98] sm:$0xff] %v9644
      %9693 = vst [vmem:[#allocation3 + $0xa0] sm:$0xff] %v9645
      %9694 = vst [vmem:[#allocation3 + $0xa8] sm:$0xff] %v9646
      %9695 = vst [vmem:[#allocation3 + $0xb0] sm:$0xff] %v9647
      %9696 = vst [vmem:[#allocation3 + $0xb8] sm:$0xff] %v9648
      %9697 = vst [vmem:[#allocation3 + $0xc0] sm:$0xff] %v9649
      %9698 = vst [vmem:[#allocation3 + $0xc8] sm:$0xff] %v9650
      %9699 = vst [vmem:[#allocation3 + $0xd0] sm:$0xff] %v9651
      %9700 = vst [vmem:[#allocation3 + $0xd8] sm:$0xff] %v9652
      %9701 = vst [vmem:[#allocation3 + $0xe0] sm:$0xff] %v9653
      %9702 = vst [vmem:[#allocation3 + $0xe8] sm:$0xff] %v9654
      %9703 = vst [vmem:[#allocation3 + $0xf0] sm:$0xff] %v9655
      %9704 = vst [vmem:[#allocation3 + $0xf8] sm:$0xff] %v9656
      %9705 = vst [vmem:[#allocation3 + $0x100] sm:$0xff] %v9657
      %9706 = vst [vmem:[#allocation3 + $0x108] sm:$0xff] %v9658
      %9707 = vst [vmem:[#allocation3 + $0x110] sm:$0xff] %v9659
      %9708 = vst [vmem:[#allocation3 + $0x118] sm:$0xff] %v9660
      %9709 = vst [vmem:[#allocation3 + $0x120] sm:$0xff] %v9661
      %9710 = vst [vmem:[#allocation3 + $0x128] sm:$0xff] %v9662
      %9711 = vst [vmem:[#allocation3 + $0x130] sm:$0xff] %v9663
      %9712 = vst [vmem:[#allocation3 + $0x138] sm:$0xff] %v9664
      %9713 = vst [vmem:[#allocation3 + $0x140] sm:$0xff] %v9665
      %9714 = vst [vmem:[#allocation3 + $0x148] sm:$0xff] %v9666
      %9715 = vst [vmem:[#allocation3 + $0x150] sm:$0xff] %v9667
      %9716 = vst [vmem:[#allocation3 + $0x158] sm:$0xff] %v9668
      %9717 = vst [vmem:[#allocation3 + $0x160] sm:$0xff] %v9669
      %9718 = vst [vmem:[#allocation3 + $0x168] sm:$0xff] %v9670
      %9719 = vst [vmem:[#allocation3 + $0x170] sm:$0xff] %v9671
      %9720 = vst [vmem:[#allocation3 + $0x178] sm:$0xff] %v9672
      %v9721 = vpack.c.bf16 %v8802, %v8803
      %v9722 = vpack.c.bf16 %v8800, %v8801
      %v9723 = vpack.c.bf16 %v8798, %v8799
      %v9724 = vpack.c.bf16 %v8796, %v8797
      %v9725 = vpack.c.bf16 %v8794, %v8795
      %v9726 = vpack.c.bf16 %v8792, %v8793
      %v9727 = vpack.c.bf16 %v8790, %v8791
      %v9728 = vpack.c.bf16 %v8788, %v8789
      %v9729 = vpack.c.bf16 %v8786, %v8787
      %v9730 = vpack.c.bf16 %v8784, %v8785
      %v9731 = vpack.c.bf16 %v8782, %v8783
      %v9732 = vpack.c.bf16 %v8780, %v8781
      %v9733 = vpack.c.bf16 %v8778, %v8779
      %v9734 = vpack.c.bf16 %v8776, %v8777
      %v9735 = vpack.c.bf16 %v8774, %v8775
      %v9736 = vpack.c.bf16 %v8772, %v8773
      %v9737 = vpack.c.bf16 %v8770, %v8771
      %v9738 = vpack.c.bf16 %v8768, %v8769
      %v9739 = vpack.c.bf16 %v8766, %v8767
      %v9740 = vpack.c.bf16 %v8764, %v8765
      %v9741 = vpack.c.bf16 %v8762, %v8763
      %v9742 = vpack.c.bf16 %v8760, %v8761
      %v9743 = vpack.c.bf16 %v8758, %v8759
      %v9744 = vpack.c.bf16 %v8804, %v8757
      %s9745 = scalar_lea.vmem %s2, 512
      %v9746 = vld [vmem:[%s9745] sm:$0xf]
      %v9747 = vld [vmem:[%s9745 + $0x4] sm:$0xf]
      %v9748 = vld [vmem:[%s9745 + $0x8] sm:$0xf]
      %v9749 = vld [vmem:[%s9745 + $0xc] sm:$0xf]
      %v9750 = vld [vmem:[%s9745 + $0x10] sm:$0xf]
      %v9751 = vld [vmem:[%s9745 + $0x14] sm:$0xf]
      %v9752 = vld [vmem:[%s9745 + $0x18] sm:$0xf]
      %v9753 = vld [vmem:[%s9745 + $0x1c] sm:$0xf]
      %v9754 = vld [vmem:[%s9745 + $0x20] sm:$0xf]
      %v9755 = vld [vmem:[%s9745 + $0x24] sm:$0xf]
      %v9756 = vld [vmem:[%s9745 + $0x28] sm:$0xf]
      %v9757 = vld [vmem:[%s9745 + $0x2c] sm:$0xf]
      %v9758 = vld [vmem:[%s9745 + $0x30] sm:$0xf]
      %v9759 = vld [vmem:[%s9745 + $0x34] sm:$0xf]
      %v9760 = vld [vmem:[%s9745 + $0x38] sm:$0xf]
      %v9761 = vld [vmem:[%s9745 + $0x3c] sm:$0xf]
      %v9778 = vunpack.c.l.b16 %v9746
      %v9779 = vunpack.c.l.b16 %v9747
      %v9780 = vunpack.c.l.b16 %v9748
      %v9781 = vunpack.c.l.b16 %v9749
      %v9782 = vunpack.c.l.b16 %v9750
      %v9783 = vunpack.c.l.b16 %v9751
      %v9784 = vunpack.c.l.b16 %v9752
      %v9785 = vunpack.c.l.b16 %v9753
      %v9786 = vunpack.c.l.b16 %v9754
      %v9787 = vunpack.c.l.b16 %v9755
      %v9788 = vunpack.c.l.b16 %v9756
      %v9789 = vunpack.c.l.b16 %v9757
      %v9790 = vunpack.c.l.b16 %v9758
      %v9791 = vunpack.c.l.b16 %v9759
      %v9792 = vunpack.c.l.b16 %v9760
      %v9793 = vunpack.c.l.b16 %v9761
      %v9794 = vpack.c.b16 %v9779, %v9778
      %v9795 = vpack.c.b16 %v9781, %v9780
      %v9796 = vpack.c.b16 %v9783, %v9782
      %v9797 = vpack.c.b16 %v9785, %v9784
      %v9798 = vpack.c.b16 %v9787, %v9786
      %v9799 = vpack.c.b16 %v9789, %v9788
      %v9800 = vpack.c.b16 %v9791, %v9790
      %v9801 = vpack.c.b16 %v9793, %v9792
      %9810 = vmatprep.subr.bf16.mxu0 0
      %9811 = vmatpush1.bf16.msra.mxu0 %v9801
      %9812 = vmatprep.subr.bf16.mxu0 0
      %9813 = vmatpush1.bf16.msra.mxu0 %v9800
      %9814 = vmatprep.subr.bf16.mxu0 0
      %9815 = vmatpush1.bf16.msra.mxu0 %v9799
      %9816 = vmatprep.subr.bf16.mxu0 0
      %9817 = vmatpush1.bf16.msra.mxu0 %v9798
      %9818 = vmatprep.subr.bf16.mxu0 0
      %9819 = vmatpush1.bf16.msra.mxu0 %v9797
      %9820 = vmatprep.subr.bf16.mxu0 0
      %9821 = vmatpush1.bf16.msra.mxu0 %v9796
      %9822 = vmatprep.subr.bf16.mxu0 0
      %9823 = vmatpush1.bf16.msra.mxu0 %v9795
      %9824 = vmatprep.subr.bf16.mxu0 0
      %9825 = vmatpush1.bf16.msra.mxu0 %v9794
      %9826 = vmatprep.subr.bf16.mxu0 0
      %9827 = vmatpush2.bf16.msra.mxu0 0
      %9828 = vmatprep.subr.bf16.mxu0 0
      %9829 = vmatpush2.bf16.msra.mxu0 0
      %9830 = vmatprep.subr.bf16.mxu0 0
      %9831 = vmatpush2.bf16.msra.mxu0 0
      %9832 = vmatprep.subr.bf16.mxu0 0
      %9833 = vmatpush2.bf16.msra.mxu0 0
      %9834 = vmatprep.subr.bf16.mxu0 0
      %9835 = vmatpush2.bf16.msra.mxu0 0
      %9836 = vmatprep.subr.bf16.mxu0 0
      %9837 = vmatpush2.bf16.msra.mxu0 0
      %9838 = vmatprep.subr.bf16.mxu0 0
      %9839 = vmatpush2.bf16.msra.mxu0 0
      %9840 = vmatprep.subr.bf16.mxu0 0
      %9841 = vmatpush2.bf16.msra.mxu0 0
      %9842 = vmatprep.mubr.bf16.mxu0 0
      %9843 = vmatmul.mubr.bf16.gmra.mxu0 %v9721
      %v9844 = vpop.f32.mrf.mxu0
      %v9845 = vadd.f32 0.0, %v9844
      %v9846 = vpop.f32.mrf.mxu0
      %v9847 = vpop.f32.mrf.mxu0
      %v9848 = vadd.f32 0.0, %v9847
      %v9849 = vpop.f32.mrf.mxu0
      %9850 = vmatprep.mubr.bf16.mxu0 0
      %9851 = vmatmul.mubr.bf16.gmra.mxu0 %v9722
      %v9852 = vpop.f32.mrf.mxu0
      %v9853 = vadd.f32 0.0, %v9852
      %v9854 = vpop.f32.mrf.mxu0
      %v9855 = vpop.f32.mrf.mxu0
      %v9856 = vadd.f32 0.0, %v9855
      %v9857 = vpop.f32.mrf.mxu0
      %9858 = vmatprep.mubr.bf16.mxu0 0
      %9859 = vmatmul.mubr.bf16.gmra.mxu0 %v9723
      %v9860 = vpop.f32.mrf.mxu0
      %v9861 = vadd.f32 0.0, %v9860
      %v9862 = vpop.f32.mrf.mxu0
      %v9863 = vpop.f32.mrf.mxu0
      %v9864 = vadd.f32 0.0, %v9863
      %v9865 = vpop.f32.mrf.mxu0
      %9866 = vmatprep.mubr.bf16.mxu0 0
      %9867 = vmatmul.mubr.bf16.gmra.mxu0 %v9724
      %v9868 = vpop.f32.mrf.mxu0
      %v9869 = vadd.f32 0.0, %v9868
      %v9870 = vpop.f32.mrf.mxu0
      %v9871 = vpop.f32.mrf.mxu0
      %v9872 = vadd.f32 0.0, %v9871
      %v9873 = vpop.f32.mrf.mxu0
      %9874 = vmatprep.mubr.bf16.mxu0 0
      %9875 = vmatmul.mubr.bf16.gmra.mxu0 %v9725
      %v9876 = vpop.f32.mrf.mxu0
      %v9877 = vadd.f32 0.0, %v9876
      %v9878 = vpop.f32.mrf.mxu0
      %v9879 = vpop.f32.mrf.mxu0
      %v9880 = vadd.f32 0.0, %v9879
      %v9881 = vpop.f32.mrf.mxu0
      %9882 = vmatprep.mubr.bf16.mxu0 0
      %9883 = vmatmul.mubr.bf16.gmra.mxu0 %v9726
      %v9884 = vpop.f32.mrf.mxu0
      %v9885 = vadd.f32 0.0, %v9884
      %v9886 = vpop.f32.mrf.mxu0
      %v9887 = vpop.f32.mrf.mxu0
      %v9888 = vadd.f32 0.0, %v9887
      %v9889 = vpop.f32.mrf.mxu0
      %9890 = vmatprep.mubr.bf16.mxu0 0
      %9891 = vmatmul.mubr.bf16.gmra.mxu0 %v9727
      %v9892 = vpop.f32.mrf.mxu0
      %v9893 = vadd.f32 0.0, %v9892
      %v9894 = vpop.f32.mrf.mxu0
      %v9895 = vpop.f32.mrf.mxu0
      %v9896 = vadd.f32 0.0, %v9895
      %v9897 = vpop.f32.mrf.mxu0
      %9898 = vmatprep.mubr.bf16.mxu0 0
      %9899 = vmatmul.mubr.bf16.gmra.mxu0 %v9728
      %v9900 = vpop.f32.mrf.mxu0
      %v9901 = vadd.f32 0.0, %v9900
      %v9902 = vpop.f32.mrf.mxu0
      %v9903 = vpop.f32.mrf.mxu0
      %v9904 = vadd.f32 0.0, %v9903
      %v9905 = vpop.f32.mrf.mxu0
      %9906 = vmatprep.mubr.bf16.mxu0 0
      %9907 = vmatmul.mubr.bf16.gmra.mxu0 %v9729
      %v9908 = vpop.f32.mrf.mxu0
      %v9909 = vadd.f32 0.0, %v9908
      %v9910 = vpop.f32.mrf.mxu0
      %v9911 = vpop.f32.mrf.mxu0
      %v9912 = vadd.f32 0.0, %v9911
      %v9913 = vpop.f32.mrf.mxu0
      %9914 = vmatprep.mubr.bf16.mxu0 0
      %9915 = vmatmul.mubr.bf16.gmra.mxu0 %v9730
      %v9916 = vpop.f32.mrf.mxu0
      %v9917 = vadd.f32 0.0, %v9916
      %v9918 = vpop.f32.mrf.mxu0
      %v9919 = vpop.f32.mrf.mxu0
      %v9920 = vadd.f32 0.0, %v9919
      %v9921 = vpop.f32.mrf.mxu0
      %9922 = vmatprep.mubr.bf16.mxu0 0
      %9923 = vmatmul.mubr.bf16.gmra.mxu0 %v9731
      %v9924 = vpop.f32.mrf.mxu0
      %v9925 = vadd.f32 0.0, %v9924
      %v9926 = vpop.f32.mrf.mxu0
      %v9927 = vpop.f32.mrf.mxu0
      %v9928 = vadd.f32 0.0, %v9927
      %v9929 = vpop.f32.mrf.mxu0
      %9930 = vmatprep.mubr.bf16.mxu0 0
      %9931 = vmatmul.mubr.bf16.gmra.mxu0 %v9732
      %v9932 = vpop.f32.mrf.mxu0
      %v9933 = vadd.f32 0.0, %v9932
      %v9934 = vpop.f32.mrf.mxu0
      %v9935 = vpop.f32.mrf.mxu0
      %v9936 = vadd.f32 0.0, %v9935
      %v9937 = vpop.f32.mrf.mxu0
      %9938 = vmatprep.mubr.bf16.mxu0 0
      %9939 = vmatmul.mubr.bf16.gmra.mxu0 %v9733
      %v9940 = vpop.f32.mrf.mxu0
      %v9941 = vadd.f32 0.0, %v9940
      %v9942 = vpop.f32.mrf.mxu0
      %v9943 = vpop.f32.mrf.mxu0
      %v9944 = vadd.f32 0.0, %v9943
      %v9945 = vpop.f32.mrf.mxu0
      %9946 = vmatprep.mubr.bf16.mxu0 0
      %9947 = vmatmul.mubr.bf16.gmra.mxu0 %v9734
      %v9948 = vpop.f32.mrf.mxu0
      %v9949 = vadd.f32 0.0, %v9948
      %v9950 = vpop.f32.mrf.mxu0
      %v9951 = vpop.f32.mrf.mxu0
      %v9952 = vadd.f32 0.0, %v9951
      %v9953 = vpop.f32.mrf.mxu0
      %9954 = vmatprep.mubr.bf16.mxu0 0
      %9955 = vmatmul.mubr.bf16.gmra.mxu0 %v9735
      %v9956 = vpop.f32.mrf.mxu0
      %v9957 = vadd.f32 0.0, %v9956
      %v9958 = vpop.f32.mrf.mxu0
      %v9959 = vpop.f32.mrf.mxu0
      %v9960 = vadd.f32 0.0, %v9959
      %v9961 = vpop.f32.mrf.mxu0
      %9962 = vmatprep.mubr.bf16.mxu0 0
      %9963 = vmatmul.mubr.bf16.gmra.mxu0 %v9736
      %v9964 = vpop.f32.mrf.mxu0
      %v9965 = vadd.f32 0.0, %v9964
      %v9966 = vpop.f32.mrf.mxu0
      %v9967 = vpop.f32.mrf.mxu0
      %v9968 = vadd.f32 0.0, %v9967
      %v9969 = vpop.f32.mrf.mxu0
      %9970 = vmatprep.mubr.bf16.mxu0 0
      %9971 = vmatmul.mubr.bf16.gmra.mxu0 %v9737
      %v9972 = vpop.f32.mrf.mxu0
      %v9973 = vadd.f32 0.0, %v9972
      %v9974 = vpop.f32.mrf.mxu0
      %v9975 = vpop.f32.mrf.mxu0
      %v9976 = vadd.f32 0.0, %v9975
      %v9977 = vpop.f32.mrf.mxu0
      %9978 = vmatprep.mubr.bf16.mxu0 0
      %9979 = vmatmul.mubr.bf16.gmra.mxu0 %v9738
      %v9980 = vpop.f32.mrf.mxu0
      %v9981 = vadd.f32 0.0, %v9980
      %v9982 = vpop.f32.mrf.mxu0
      %v9983 = vpop.f32.mrf.mxu0
      %v9984 = vadd.f32 0.0, %v9983
      %v9985 = vpop.f32.mrf.mxu0
      %9986 = vmatprep.mubr.bf16.mxu0 0
      %9987 = vmatmul.mubr.bf16.gmra.mxu0 %v9739
      %v9988 = vpop.f32.mrf.mxu0
      %v9989 = vadd.f32 0.0, %v9988
      %v9990 = vpop.f32.mrf.mxu0
      %v9991 = vpop.f32.mrf.mxu0
      %v9992 = vadd.f32 0.0, %v9991
      %v9993 = vpop.f32.mrf.mxu0
      %9994 = vmatprep.mubr.bf16.mxu0 0
      %9995 = vmatmul.mubr.bf16.gmra.mxu0 %v9740
      %v9996 = vpop.f32.mrf.mxu0
      %v9997 = vadd.f32 0.0, %v9996
      %v9998 = vpop.f32.mrf.mxu0
      %v9999 = vpop.f32.mrf.mxu0
      %v10000 = vadd.f32 0.0, %v9999
      %v10001 = vpop.f32.mrf.mxu0
      %10002 = vmatprep.mubr.bf16.mxu0 0
      %10003 = vmatmul.mubr.bf16.gmra.mxu0 %v9741
      %v10004 = vpop.f32.mrf.mxu0
      %v10005 = vadd.f32 0.0, %v10004
      %v10006 = vpop.f32.mrf.mxu0
      %v10007 = vpop.f32.mrf.mxu0
      %v10008 = vadd.f32 0.0, %v10007
      %v10009 = vpop.f32.mrf.mxu0
      %10010 = vmatprep.mubr.bf16.mxu0 0
      %10011 = vmatmul.mubr.bf16.gmra.mxu0 %v9742
      %v10012 = vpop.f32.mrf.mxu0
      %v10013 = vadd.f32 0.0, %v10012
      %v10014 = vpop.f32.mrf.mxu0
      %v10015 = vpop.f32.mrf.mxu0
      %v10016 = vadd.f32 0.0, %v10015
      %v10017 = vpop.f32.mrf.mxu0
      %10018 = vmatprep.mubr.bf16.mxu0 0
      %10019 = vmatmul.mubr.bf16.gmra.mxu0 %v9743
      %v10020 = vpop.f32.mrf.mxu0
      %v10021 = vadd.f32 0.0, %v10020
      %v10022 = vpop.f32.mrf.mxu0
      %v10023 = vpop.f32.mrf.mxu0
      %v10024 = vadd.f32 0.0, %v10023
      %v10025 = vpop.f32.mrf.mxu0
      %10026 = vmatprep.mubr.bf16.mxu0 0
      %10027 = vmatmul.mubr.bf16.gmra.mxu0 %v9744
      %v10028 = vpop.f32.mrf.mxu0
      %v10029 = vadd.f32 0.0, %v10028
      %v10030 = vpop.f32.mrf.mxu0
      %v10031 = vpop.f32.mrf.mxu0
      %v10032 = vadd.f32 0.0, %v10031
      %v10033 = vpop.f32.mrf.mxu0
      %10034 = vdwg.mxu0
      %v10035 = vld [vmem:[#allocation3] sm:$0xff]
      %v10036 = vld [vmem:[#allocation3 + $0x8] sm:$0xff]
      %v10037 = vld [vmem:[#allocation3 + $0x10] sm:$0xff]
      %v10038 = vld [vmem:[#allocation3 + $0x18] sm:$0xff]
      %v10039 = vld [vmem:[#allocation3 + $0x20] sm:$0xff]
      %v10040 = vld [vmem:[#allocation3 + $0x28] sm:$0xff]
      %v10041 = vld [vmem:[#allocation3 + $0x30] sm:$0xff]
      %v10042 = vld [vmem:[#allocation3 + $0x38] sm:$0xff]
      %v10043 = vld [vmem:[#allocation3 + $0x40] sm:$0xff]
      %v10044 = vld [vmem:[#allocation3 + $0x48] sm:$0xff]
      %v10045 = vld [vmem:[#allocation3 + $0x50] sm:$0xff]
      %v10046 = vld [vmem:[#allocation3 + $0x58] sm:$0xff]
      %v10047 = vld [vmem:[#allocation3 + $0x60] sm:$0xff]
      %v10048 = vld [vmem:[#allocation3 + $0x68] sm:$0xff]
      %v10049 = vld [vmem:[#allocation3 + $0x70] sm:$0xff]
      %v10050 = vld [vmem:[#allocation3 + $0x78] sm:$0xff]
      %v10051 = vld [vmem:[#allocation3 + $0x80] sm:$0xff]
      %v10052 = vld [vmem:[#allocation3 + $0x88] sm:$0xff]
      %v10053 = vld [vmem:[#allocation3 + $0x90] sm:$0xff]
      %v10054 = vld [vmem:[#allocation3 + $0x98] sm:$0xff]
      %v10055 = vld [vmem:[#allocation3 + $0xa0] sm:$0xff]
      %v10056 = vld [vmem:[#allocation3 + $0xa8] sm:$0xff]
      %v10057 = vld [vmem:[#allocation3 + $0xb0] sm:$0xff]
      %v10058 = vld [vmem:[#allocation3 + $0xb8] sm:$0xff]
      %v10059 = vld [vmem:[#allocation3 + $0xc0] sm:$0xff]
      %v10060 = vld [vmem:[#allocation3 + $0xc8] sm:$0xff]
      %v10061 = vld [vmem:[#allocation3 + $0xd0] sm:$0xff]
      %v10062 = vld [vmem:[#allocation3 + $0xd8] sm:$0xff]
      %v10063 = vld [vmem:[#allocation3 + $0xe0] sm:$0xff]
      %v10064 = vld [vmem:[#allocation3 + $0xe8] sm:$0xff]
      %v10065 = vld [vmem:[#allocation3 + $0xf0] sm:$0xff]
      %v10066 = vld [vmem:[#allocation3 + $0xf8] sm:$0xff]
      %v10067 = vld [vmem:[#allocation3 + $0x100] sm:$0xff]
      %v10068 = vld [vmem:[#allocation3 + $0x108] sm:$0xff]
      %v10069 = vld [vmem:[#allocation3 + $0x110] sm:$0xff]
      %v10070 = vld [vmem:[#allocation3 + $0x118] sm:$0xff]
      %v10071 = vld [vmem:[#allocation3 + $0x120] sm:$0xff]
      %v10072 = vld [vmem:[#allocation3 + $0x128] sm:$0xff]
      %v10073 = vld [vmem:[#allocation3 + $0x130] sm:$0xff]
      %v10074 = vld [vmem:[#allocation3 + $0x138] sm:$0xff]
      %v10075 = vld [vmem:[#allocation3 + $0x140] sm:$0xff]
      %v10076 = vld [vmem:[#allocation3 + $0x148] sm:$0xff]
      %v10077 = vld [vmem:[#allocation3 + $0x150] sm:$0xff]
      %v10078 = vld [vmem:[#allocation3 + $0x158] sm:$0xff]
      %v10079 = vld [vmem:[#allocation3 + $0x160] sm:$0xff]
      %v10080 = vld [vmem:[#allocation3 + $0x168] sm:$0xff]
      %v10081 = vld [vmem:[#allocation3 + $0x170] sm:$0xff]
      %v10082 = vld [vmem:[#allocation3 + $0x178] sm:$0xff]
      %v10083 = vadd.f32 %v10035, %v9845
      %v10084 = vadd.f32 %v10036, %v9848
      %v10085 = vadd.f32 %v10037, %v9853
      %v10086 = vadd.f32 %v10038, %v9856
      %v10087 = vadd.f32 %v10039, %v9861
      %v10088 = vadd.f32 %v10040, %v9864
      %v10089 = vadd.f32 %v10041, %v9869
      %v10090 = vadd.f32 %v10042, %v9872
      %v10091 = vadd.f32 %v10043, %v9877
      %v10092 = vadd.f32 %v10044, %v9880
      %v10093 = vadd.f32 %v10045, %v9885
      %v10094 = vadd.f32 %v10046, %v9888
      %v10095 = vadd.f32 %v10047, %v9893
      %v10096 = vadd.f32 %v10048, %v9896
      %v10097 = vadd.f32 %v10049, %v9901
      %v10098 = vadd.f32 %v10050, %v9904
      %v10099 = vadd.f32 %v10051, %v9909
      %v10100 = vadd.f32 %v10052, %v9912
      %v10101 = vadd.f32 %v10053, %v9917
      %v10102 = vadd.f32 %v10054, %v9920
      %v10103 = vadd.f32 %v10055, %v9925
      %v10104 = vadd.f32 %v10056, %v9928
      %v10105 = vadd.f32 %v10057, %v9933
      %v10106 = vadd.f32 %v10058, %v9936
      %v10107 = vadd.f32 %v10059, %v9941
      %v10108 = vadd.f32 %v10060, %v9944
      %v10109 = vadd.f32 %v10061, %v9949
      %v10110 = vadd.f32 %v10062, %v9952
      %v10111 = vadd.f32 %v10063, %v9957
      %v10112 = vadd.f32 %v10064, %v9960
      %v10113 = vadd.f32 %v10065, %v9965
      %v10114 = vadd.f32 %v10066, %v9968
      %v10115 = vadd.f32 %v10067, %v9973
      %v10116 = vadd.f32 %v10068, %v9976
      %v10117 = vadd.f32 %v10069, %v9981
      %v10118 = vadd.f32 %v10070, %v9984
      %v10119 = vadd.f32 %v10071, %v9989
      %v10120 = vadd.f32 %v10072, %v9992
      %v10121 = vadd.f32 %v10073, %v9997
      %v10122 = vadd.f32 %v10074, %v10000
      %v10123 = vadd.f32 %v10075, %v10005
      %v10124 = vadd.f32 %v10076, %v10008
      %v10125 = vadd.f32 %v10077, %v10013
      %v10126 = vadd.f32 %v10078, %v10016
      %v10127 = vadd.f32 %v10079, %v10021
      %v10128 = vadd.f32 %v10080, %v10024
      %v10129 = vadd.f32 %v10081, %v10029
      %v10130 = vadd.f32 %v10082, %v10032
      %10131 = vst [vmem:[#allocation3] sm:$0xff] %v10083
      %10132 = vst [vmem:[#allocation3 + $0x8] sm:$0xff] %v10084
      %10133 = vst [vmem:[#allocation3 + $0x10] sm:$0xff] %v10085
      %10134 = vst [vmem:[#allocation3 + $0x18] sm:$0xff] %v10086
      %10135 = vst [vmem:[#allocation3 + $0x20] sm:$0xff] %v10087
      %10136 = vst [vmem:[#allocation3 + $0x28] sm:$0xff] %v10088
      %10137 = vst [vmem:[#allocation3 + $0x30] sm:$0xff] %v10089
      %10138 = vst [vmem:[#allocation3 + $0x38] sm:$0xff] %v10090
      %10139 = vst [vmem:[#allocation3 + $0x40] sm:$0xff] %v10091
      %10140 = vst [vmem:[#allocation3 + $0x48] sm:$0xff] %v10092
      %10141 = vst [vmem:[#allocation3 + $0x50] sm:$0xff] %v10093
      %10142 = vst [vmem:[#allocation3 + $0x58] sm:$0xff] %v10094
      %10143 = vst [vmem:[#allocation3 + $0x60] sm:$0xff] %v10095
      %10144 = vst [vmem:[#allocation3 + $0x68] sm:$0xff] %v10096
      %10145 = vst [vmem:[#allocation3 + $0x70] sm:$0xff] %v10097
      %10146 = vst [vmem:[#allocation3 + $0x78] sm:$0xff] %v10098
      %10147 = vst [vmem:[#allocation3 + $0x80] sm:$0xff] %v10099
      %10148 = vst [vmem:[#allocation3 + $0x88] sm:$0xff] %v10100
      %10149 = vst [vmem:[#allocation3 + $0x90] sm:$0xff] %v10101
      %10150 = vst [vmem:[#allocation3 + $0x98] sm:$0xff] %v10102
      %10151 = vst [vmem:[#allocation3 + $0xa0] sm:$0xff] %v10103
      %10152 = vst [vmem:[#allocation3 + $0xa8] sm:$0xff] %v10104
      %10153 = vst [vmem:[#allocation3 + $0xb0] sm:$0xff] %v10105
      %10154 = vst [vmem:[#allocation3 + $0xb8] sm:$0xff] %v10106
      %10155 = vst [vmem:[#allocation3 + $0xc0] sm:$0xff] %v10107
      %10156 = vst [vmem:[#allocation3 + $0xc8] sm:$0xff] %v10108
      %10157 = vst [vmem:[#allocation3 + $0xd0] sm:$0xff] %v10109
      %10158 = vst [vmem:[#allocation3 + $0xd8] sm:$0xff] %v10110
      %10159 = vst [vmem:[#allocation3 + $0xe0] sm:$0xff] %v10111
      %10160 = vst [vmem:[#allocation3 + $0xe8] sm:$0xff] %v10112
      %10161 = vst [vmem:[#allocation3 + $0xf0] sm:$0xff] %v10113
      %10162 = vst [vmem:[#allocation3 + $0xf8] sm:$0xff] %v10114
      %10163 = vst [vmem:[#allocation3 + $0x100] sm:$0xff] %v10115
      %10164 = vst [vmem:[#allocation3 + $0x108] sm:$0xff] %v10116
      %10165 = vst [vmem:[#allocation3 + $0x110] sm:$0xff] %v10117
      %10166 = vst [vmem:[#allocation3 + $0x118] sm:$0xff] %v10118
      %10167 = vst [vmem:[#allocation3 + $0x120] sm:$0xff] %v10119
      %10168 = vst [vmem:[#allocation3 + $0x128] sm:$0xff] %v10120
      %10169 = vst [vmem:[#allocation3 + $0x130] sm:$0xff] %v10121
      %10170 = vst [vmem:[#allocation3 + $0x138] sm:$0xff] %v10122
      %10171 = vst [vmem:[#allocation3 + $0x140] sm:$0xff] %v10123
      %10172 = vst [vmem:[#allocation3 + $0x148] sm:$0xff] %v10124
      %10173 = vst [vmem:[#allocation3 + $0x150] sm:$0xff] %v10125
      %10174 = vst [vmem:[#allocation3 + $0x158] sm:$0xff] %v10126
      %10175 = vst [vmem:[#allocation3 + $0x160] sm:$0xff] %v10127
      %10176 = vst [vmem:[#allocation3 + $0x168] sm:$0xff] %v10128
      %10177 = vst [vmem:[#allocation3 + $0x170] sm:$0xff] %v10129
      %10178 = vst [vmem:[#allocation3 + $0x178] sm:$0xff] %v10130
      %v10179 = vld [vmem:[#allocation3] sm:$0xff]
      %v10180 = vld [vmem:[#allocation3 + $0x8] sm:$0xff]
      %v10181 = vld [vmem:[#allocation3 + $0x10] sm:$0xff]
      %v10182 = vld [vmem:[#allocation3 + $0x18] sm:$0xff]
      %v10183 = vld [vmem:[#allocation3 + $0x20] sm:$0xff]
      %v10184 = vld [vmem:[#allocation3 + $0x28] sm:$0xff]
      %v10185 = vld [vmem:[#allocation3 + $0x30] sm:$0xff]
      %v10186 = vld [vmem:[#allocation3 + $0x38] sm:$0xff]
      %v10187 = vld [vmem:[#allocation3 + $0x40] sm:$0xff]
      %v10188 = vld [vmem:[#allocation3 + $0x48] sm:$0xff]
      %v10189 = vld [vmem:[#allocation3 + $0x50] sm:$0xff]
      %v10190 = vld [vmem:[#allocation3 + $0x58] sm:$0xff]
      %v10191 = vld [vmem:[#allocation3 + $0x60] sm:$0xff]
      %v10192 = vld [vmem:[#allocation3 + $0x68] sm:$0xff]
      %v10193 = vld [vmem:[#allocation3 + $0x70] sm:$0xff]
      %v10194 = vld [vmem:[#allocation3 + $0x78] sm:$0xff]
      %v10195 = vld [vmem:[#allocation3 + $0x80] sm:$0xff]
      %v10196 = vld [vmem:[#allocation3 + $0x88] sm:$0xff]
      %v10197 = vld [vmem:[#allocation3 + $0x90] sm:$0xff]
      %v10198 = vld [vmem:[#allocation3 + $0x98] sm:$0xff]
      %v10199 = vld [vmem:[#allocation3 + $0xa0] sm:$0xff]
      %v10200 = vld [vmem:[#allocation3 + $0xa8] sm:$0xff]
      %v10201 = vld [vmem:[#allocation3 + $0xb0] sm:$0xff]
      %v10202 = vld [vmem:[#allocation3 + $0xb8] sm:$0xff]
      %v10203 = vld [vmem:[#allocation3 + $0xc0] sm:$0xff]
      %v10204 = vld [vmem:[#allocation3 + $0xc8] sm:$0xff]
      %v10205 = vld [vmem:[#allocation3 + $0xd0] sm:$0xff]
      %v10206 = vld [vmem:[#allocation3 + $0xd8] sm:$0xff]
      %v10207 = vld [vmem:[#allocation3 + $0xe0] sm:$0xff]
      %v10208 = vld [vmem:[#allocation3 + $0xe8] sm:$0xff]
      %v10209 = vld [vmem:[#allocation3 + $0xf0] sm:$0xff]
      %v10210 = vld [vmem:[#allocation3 + $0xf8] sm:$0xff]
      %v10211 = vld [vmem:[#allocation3 + $0x100] sm:$0xff]
      %v10212 = vld [vmem:[#allocation3 + $0x108] sm:$0xff]
      %v10213 = vld [vmem:[#allocation3 + $0x110] sm:$0xff]
      %v10214 = vld [vmem:[#allocation3 + $0x118] sm:$0xff]
      %v10215 = vld [vmem:[#allocation3 + $0x120] sm:$0xff]
      %v10216 = vld [vmem:[#allocation3 + $0x128] sm:$0xff]
      %v10217 = vld [vmem:[#allocation3 + $0x130] sm:$0xff]
      %v10218 = vld [vmem:[#allocation3 + $0x138] sm:$0xff]
      %v10219 = vld [vmem:[#allocation3 + $0x140] sm:$0xff]
      %v10220 = vld [vmem:[#allocation3 + $0x148] sm:$0xff]
      %v10221 = vld [vmem:[#allocation3 + $0x150] sm:$0xff]
      %v10222 = vld [vmem:[#allocation3 + $0x158] sm:$0xff]
      %v10223 = vld [vmem:[#allocation3 + $0x160] sm:$0xff]
      %v10224 = vld [vmem:[#allocation3 + $0x168] sm:$0xff]
      %v10225 = vld [vmem:[#allocation3 + $0x170] sm:$0xff]
      %v10226 = vld [vmem:[#allocation3 + $0x178] sm:$0xff]
      %v10227 = vld [vmem:[%s192 + $0x18] sm:$0xff]
      %v10228 = vld [vmem:[%s192 + $0x20] sm:$0xff]
      %v10229 = vld [vmem:[%s192 + $0x28] sm:$0xff]
      %v10230 = vld [vmem:[%s192 + $0x30] sm:$0xff]
      %v10231 = vld [vmem:[%s192 + $0x38] sm:$0xff]
      %v10232 = vld [vmem:[%s192 + $0x40] sm:$0xff]
      %v10233 = vld [vmem:[%s192 + $0x48] sm:$0xff]
      %v10234 = vld [vmem:[%s192 + $0x50] sm:$0xff]
      %v10235 = vld [vmem:[%s192 + $0x58] sm:$0xff]
      %v10236 = vld [vmem:[%s192 + $0x60] sm:$0xff]
      %v10237 = vld [vmem:[%s192 + $0x68] sm:$0xff]
      %v10238 = vld [vmem:[%s192 + $0x70] sm:$0xff]
      %v10239 = vld [vmem:[%s192 + $0x78] sm:$0xff]
      %v10240 = vld [vmem:[%s192 + $0x80] sm:$0xff]
      %v10241 = vld [vmem:[%s192 + $0x88] sm:$0xff]
      %v10242 = vld [vmem:[%s192 + $0x90] sm:$0xff]
      %v10243 = vld [vmem:[%s192 + $0x98] sm:$0xff]
      %v10244 = vld [vmem:[%s192 + $0xa0] sm:$0xff]
      %v10245 = vld [vmem:[%s192 + $0xa8] sm:$0xff]
      %v10246 = vld [vmem:[%s192 + $0xb0] sm:$0xff]
      %v10247 = vld [vmem:[%s192 + $0xb8] sm:$0xff]
      %v10248 = vld [vmem:[%s192 + $0xc0] sm:$0xff]
      %v10249 = vld [vmem:[%s192 + $0xc8] sm:$0xff]
      %v10250 = vld [vmem:[%s192 + $0xd0] sm:$0xff]
      %v10251 = vld [vmem:[%s192 + $0xd8] sm:$0xff]
      %v10252 = vld [vmem:[%s192 + $0xe0] sm:$0xff]
      %v10253 = vld [vmem:[%s192 + $0xe8] sm:$0xff]
      %v10254 = vld [vmem:[%s192 + $0xf0] sm:$0xff]
      %v10255 = vld [vmem:[%s192 + $0xf8] sm:$0xff]
      %v10256 = vld [vmem:[%s192 + $0x100] sm:$0xff]
      %v10257 = vld [vmem:[%s192 + $0x108] sm:$0xff]
      %v10258 = vld [vmem:[%s192 + $0x110] sm:$0xff]
      %v10259 = vld [vmem:[%s192 + $0x118] sm:$0xff]
      %v10260 = vld [vmem:[%s192 + $0x120] sm:$0xff]
      %v10261 = vld [vmem:[%s192 + $0x128] sm:$0xff]
      %v10262 = vld [vmem:[%s192 + $0x130] sm:$0xff]
      %v10263 = vld [vmem:[%s192 + $0x138] sm:$0xff]
      %v10264 = vld [vmem:[%s192 + $0x140] sm:$0xff]
      %v10265 = vld [vmem:[%s192 + $0x148] sm:$0xff]
      %v10266 = vld [vmem:[%s192 + $0x150] sm:$0xff]
      %v10267 = vld [vmem:[%s192 + $0x158] sm:$0xff]
      %v10268 = vld [vmem:[%s192 + $0x160] sm:$0xff]
      %v10269 = vld [vmem:[%s192 + $0x168] sm:$0xff]
      %v10270 = vld [vmem:[%s192 + $0x170] sm:$0xff]
      %v10271 = vld [vmem:[%s192 + $0x178] sm:$0xff]
      %v10272 = vld [vmem:[%s192 + $0x180] sm:$0xff]
      %v10273 = vld [vmem:[%s192 + $0x188] sm:$0xff]
      %v10274 = vld [vmem:[%s192 + $0x190] sm:$0xff]
      %v10275 = vadd.f32 %v10179, %v10227
      %v10276 = vadd.f32 %v10180, %v10228
      %v10277 = vadd.f32 %v10181, %v10229
      %v10278 = vadd.f32 %v10182, %v10230
      %v10279 = vadd.f32 %v10183, %v10231
      %v10280 = vadd.f32 %v10184, %v10232
      %v10281 = vadd.f32 %v10185, %v10233
      %v10282 = vadd.f32 %v10186, %v10234
      %v10283 = vadd.f32 %v10187, %v10235
      %v10284 = vadd.f32 %v10188, %v10236
      %v10285 = vadd.f32 %v10189, %v10237
      %v10286 = vadd.f32 %v10190, %v10238
      %v10287 = vadd.f32 %v10191, %v10239
      %v10288 = vadd.f32 %v10192, %v10240
      %v10289 = vadd.f32 %v10193, %v10241
      %v10290 = vadd.f32 %v10194, %v10242
      %v10291 = vadd.f32 %v10195, %v10243
      %v10292 = vadd.f32 %v10196, %v10244
      %v10293 = vadd.f32 %v10197, %v10245
      %v10294 = vadd.f32 %v10198, %v10246
      %v10295 = vadd.f32 %v10199, %v10247
      %v10296 = vadd.f32 %v10200, %v10248
      %v10297 = vadd.f32 %v10201, %v10249
      %v10298 = vadd.f32 %v10202, %v10250
      %v10299 = vadd.f32 %v10203, %v10251
      %v10300 = vadd.f32 %v10204, %v10252
      %v10301 = vadd.f32 %v10205, %v10253
      %v10302 = vadd.f32 %v10206, %v10254
      %v10303 = vadd.f32 %v10207, %v10255
      %v10304 = vadd.f32 %v10208, %v10256
      %v10305 = vadd.f32 %v10209, %v10257
      %v10306 = vadd.f32 %v10210, %v10258
      %v10307 = vadd.f32 %v10211, %v10259
      %v10308 = vadd.f32 %v10212, %v10260
      %v10309 = vadd.f32 %v10213, %v10261
      %v10310 = vadd.f32 %v10214, %v10262
      %v10311 = vadd.f32 %v10215, %v10263
      %v10312 = vadd.f32 %v10216, %v10264
      %v10313 = vadd.f32 %v10217, %v10265
      %v10314 = vadd.f32 %v10218, %v10266
      %v10315 = vadd.f32 %v10219, %v10267
      %v10316 = vadd.f32 %v10220, %v10268
      %v10317 = vadd.f32 %v10221, %v10269
      %v10318 = vadd.f32 %v10222, %v10270
      %v10319 = vadd.f32 %v10223, %v10271
      %v10320 = vadd.f32 %v10224, %v10272
      %v10321 = vadd.f32 %v10225, %v10273
      %v10322 = vadd.f32 %v10226, %v10274
      %10323 = vst [vmem:[%s197] sm:$0xff] %v10275
      %10324 = vst [vmem:[%s197 + $0x8] sm:$0xff] %v10276
      %10325 = vst [vmem:[%s197 + $0x10] sm:$0xff] %v10277
      %10326 = vst [vmem:[%s197 + $0x18] sm:$0xff] %v10278
      %10327 = vst [vmem:[%s197 + $0x20] sm:$0xff] %v10279
      %10328 = vst [vmem:[%s197 + $0x28] sm:$0xff] %v10280
      %10329 = vst [vmem:[%s197 + $0x30] sm:$0xff] %v10281
      %10330 = vst [vmem:[%s197 + $0x38] sm:$0xff] %v10282
      %10331 = vst [vmem:[%s197 + $0x40] sm:$0xff] %v10283
      %10332 = vst [vmem:[%s197 + $0x48] sm:$0xff] %v10284
      %10333 = vst [vmem:[%s197 + $0x50] sm:$0xff] %v10285
      %10334 = vst [vmem:[%s197 + $0x58] sm:$0xff] %v10286
      %10335 = vst [vmem:[%s197 + $0x60] sm:$0xff] %v10287
      %10336 = vst [vmem:[%s197 + $0x68] sm:$0xff] %v10288
      %10337 = vst [vmem:[%s197 + $0x70] sm:$0xff] %v10289
      %10338 = vst [vmem:[%s197 + $0x78] sm:$0xff] %v10290
      %10339 = vst [vmem:[%s197 + $0x80] sm:$0xff] %v10291
      %10340 = vst [vmem:[%s197 + $0x88] sm:$0xff] %v10292
      %10341 = vst [vmem:[%s197 + $0x90] sm:$0xff] %v10293
      %10342 = vst [vmem:[%s197 + $0x98] sm:$0xff] %v10294
      %10343 = vst [vmem:[%s197 + $0xa0] sm:$0xff] %v10295
      %10344 = vst [vmem:[%s197 + $0xa8] sm:$0xff] %v10296
      %10345 = vst [vmem:[%s197 + $0xb0] sm:$0xff] %v10297
      %10346 = vst [vmem:[%s197 + $0xb8] sm:$0xff] %v10298
      %10347 = vst [vmem:[%s197 + $0xc0] sm:$0xff] %v10299
      %10348 = vst [vmem:[%s197 + $0xc8] sm:$0xff] %v10300
      %10349 = vst [vmem:[%s197 + $0xd0] sm:$0xff] %v10301
      %10350 = vst [vmem:[%s197 + $0xd8] sm:$0xff] %v10302
      %10351 = vst [vmem:[%s197 + $0xe0] sm:$0xff] %v10303
      %10352 = vst [vmem:[%s197 + $0xe8] sm:$0xff] %v10304
      %10353 = vst [vmem:[%s197 + $0xf0] sm:$0xff] %v10305
      %10354 = vst [vmem:[%s197 + $0xf8] sm:$0xff] %v10306
      %10355 = vst [vmem:[%s197 + $0x100] sm:$0xff] %v10307
      %10356 = vst [vmem:[%s197 + $0x108] sm:$0xff] %v10308
      %10357 = vst [vmem:[%s197 + $0x110] sm:$0xff] %v10309
      %10358 = vst [vmem:[%s197 + $0x118] sm:$0xff] %v10310
      %10359 = vst [vmem:[%s197 + $0x120] sm:$0xff] %v10311
      %10360 = vst [vmem:[%s197 + $0x128] sm:$0xff] %v10312
      %10361 = vst [vmem:[%s197 + $0x130] sm:$0xff] %v10313
      %10362 = vst [vmem:[%s197 + $0x138] sm:$0xff] %v10314
      %10363 = vst [vmem:[%s197 + $0x140] sm:$0xff] %v10315
      %10364 = vst [vmem:[%s197 + $0x148] sm:$0xff] %v10316
      %10365 = vst [vmem:[%s197 + $0x150] sm:$0xff] %v10317
      %10366 = vst [vmem:[%s197 + $0x158] sm:$0xff] %v10318
      %10367 = vst [vmem:[%s197 + $0x160] sm:$0xff] %v10319
      %10368 = vst [vmem:[%s197 + $0x168] sm:$0xff] %v10320
      %10369 = vst [vmem:[%s197 + $0x170] sm:$0xff] %v10321
      %10370 = vst [vmem:[%s197 + $0x178] sm:$0xff] %v10322
      %p10371 = scmp.lt.s32.totalorder %s15, 1
      %s10372 = scalar_select %p10371, %s15, 1
      %s10373 = smul.addr %s10372, 48
      %s10374 = smul.addr %s10373, 8
      %s10375 = scalar_lea.vmem %s4, %s10374
      // Predicated region
      $region37: #{residual_block_forward.1} parent=35 // pred_check
        %p10376 = pneg %p122
      $region38: #{residual_block_forward.1} parent=35 // pred_check_branch
        %10378 = sbr.rel (%p10376) target = $region40
      $region39: #{residual_block_forward.1} parent=35 // pred_region
        _
      $region40: #{residual_block_forward.1} parent=35 // pred_fallthru
        _
    $region36: #{residual_block_forward.1} parent=5 // pred_fallthru
      _
    %p10379 = scmp.le.s32.totalorder 2, %s10
    // Predicated region
    $region41: #{residual_block_forward.1} parent=5 // pred_check
      %p10380 = pneg %p10379
    $region42: #{residual_block_forward.1} parent=5 // pred_check_branch
      %10382 = sbr.rel (%p10380) target = $region44
    $region43: #{residual_block_forward.1} parent=5 // pred_region
      %s10383 = ssub.s32 %s10, 2
      // Predicated region
      $region45: #{residual_block_forward.1} parent=43 // pred_check
        %p10384 = pneg %p128
      $region46: #{residual_block_forward.1} parent=43 // pred_check_branch
        %10386 = sbr.rel (%p10384) target = $region48
      $region47: #{residual_block_forward.1} parent=43 // pred_region
        %p10387 = scmp.lt.s32.totalorder %s16, 1
        %s10388 = scalar_select %p10387, %s16, 1
        %s10389 = smul.addr %s10388, 48
        %s10390 = smul.addr %s10389, 8
        %s10391 = scalar_lea.vmem %s4, %s10390
      $region48: #{residual_block_forward.1} parent=43 // pred_fallthru
        _
    $region44: #{residual_block_forward.1} parent=5 // pred_fallthru
      _
  $region6: #{residual_block_forward.1} parent=0 // loop_footer
    %s14 = sadd.s32 1, %s10
  $region7: #{residual_block_forward.1} parent=0 // loop_footer_branch
    %9 = sbr.rel target = $region3
  $region8: #{residual_block_forward.1} parent=0 // loop_exit
    _

</llo_original>
